<compile_context>
chip_gen: v6e
topology: v6e:2x2x1
jax: 0.10.0
libtpu: 0.0.40
codegen_flags: <defaults>
</compile_context>

<pallas_src>
import functools
import math

import jax
import jax.numpy as jnp
from jax.experimental import pallas as pl
from jax.experimental.pallas import tpu as pltpu

# ---------------- small test configuration ----------------
CATEGORIES     = (3, 5)
NUM_CONTINUOUS = 3
DIM            = 32
DEPTH          = 1                 # Jamba n_layers = DEPTH * 2
HEADS          = 4
DIM_OUT        = 1
NUM_SPECIAL    = 2
CROSS_FF_MULT  = 2

# Mamba internals (standard Mamba defaults)
D_STATE  = 16
D_CONV   = 4
EXPAND   = 2
D_INNER  = EXPAND * DIM
DT_RANK  = math.ceil(DIM / 16)
MLP_SIZE = DIM * 2
D_HEAD   = DIM // HEADS
FF_HIDDEN = DIM * CROSS_FF_MULT

# The reference module hardcodes d_cross = 160*160 (= H*W of the conditioning feature
# maps).  For this small synthetic test we use 4*4 spatial maps, so d_cross = 16.
COND_H = COND_W = 4
D_CROSS = COND_H * COND_W


# ========================= Pallas kernels =========================

def _mamba_layer_kernel(x_ref, mix_g_ref, inproj_ref, convw_ref, convb_ref,
                        xproj_ref, dtw_ref, dtb_ref, a_ref, d_ref, outproj_ref,
                        mlp_g_ref, wgu_ref, wd_ref, o_ref,
                        *, seq_len, d_inner, d_state, d_conv, mlp_hidden, eps):
    """Fused Jamba Mamba layer: rmsnorm + in_proj + depthwise causal conv + SiLU +
    fused x_proj + dt_proj/softplus + fully-unrolled selective scan (per-step dA/dBx,
    nothing 3-D materialized) + D skip + SiLU(z) gate + out_proj + residual, then the
    gated MLP block (rmsnorm + gate|up + silu*up + down + residual).
    One batch element per grid step."""
    x0 = x_ref[0].astype(jnp.float32)                                  # (L, DIM)

    # --- mixer RMSNorm ---
    ms = jnp.mean(jnp.square(x0), axis=-1, keepdims=True)
    h = x0 * jax.lax.rsqrt(ms + eps) * mix_g_ref[...]

    # --- in_proj (fused x|z) ---
    xz = jnp.dot(h, inproj_ref[...], preferred_element_type=jnp.float32)  # (L, 2*Din)
    xm = xz[:, :d_inner]
    z = xz[:, d_inner:]

    # --- depthwise causal conv1d: static zero-padded row shifts (no (L,L) matmuls) ---
    acc = jnp.zeros((seq_len, d_inner), jnp.float32) + convb_ref[...]
    for kk in range(d_conv):
        shift = d_conv - 1 - kk
        if shift == 0:
            shifted = xm
        else:
            shifted = jnp.concatenate(
                [jnp.zeros((shift, d_inner), jnp.float32), xm[:seq_len - shift, :]],
                axis=0)
        acc = acc + shifted * convw_ref[kk:kk + 1, :]
    xc = acc * jax.nn.sigmoid(acc)                                     # silu(conv(x))

    # --- fused x_proj: [B | C | dt] ---
    xdbc = jnp.dot(xc, xproj_ref[...], preferred_element_type=jnp.float32)  # (L, 2S+R)
    bmat = xdbc[:, :d_state]                                           # (L, S)
    cmat = xdbc[:, d_state:2 * d_state]                                # (L, S)
    dt_in = xdbc[:, 2 * d_state:]                                      # (L, R)

    delta = jnp.dot(dt_in, dtw_ref[...], preferred_element_type=jnp.float32) + dtb_ref[...]
    delta = jnp.maximum(delta, 0.0) + jnp.log(1.0 + jnp.exp(-jnp.abs(delta)))  # softplus

    a = a_ref[...]                                                     # (S, Din) = A^T
    dx = delta * xc                                                    # (L, Din)
    bT = bmat.T                                                        # (S, L), one transpose

    # --- selective scan, fully unrolled (seq_len is static & small); per-step dA/dBx
    #     so no (L, S, Din) buffers exist (VMEM-safe at scale) ---
    hst = jnp.zeros((d_state, d_inner), jnp.float32)
    y_rows = []
    for t in range(seq_len):
        da_t = jnp.exp(delta[t:t + 1, :] * a)                          # (S, Din)
        dbx_t = bT[:, t:t + 1] * dx[t:t + 1, :]                        # (S, Din)
        hst = da_t * hst + dbx_t
        y_rows.append(jnp.dot(cmat[t:t + 1, :], hst,
                              preferred_element_type=jnp.float32))     # (1, Din)
    y = jnp.concatenate(y_rows, axis=0)                                # (L, Din)

    y = y + d_ref[...] * xc                                            # D skip
    y = y * (z * jax.nn.sigmoid(z))                                    # silu(z) gate
    x1 = x0 + jnp.dot(y, outproj_ref[...], preferred_element_type=jnp.float32)  # residual

    # --- fused gated MLP block (second residual sub-block of the Jamba layer) ---
    ms2 = jnp.mean(jnp.square(x1), axis=-1, keepdims=True)
    h2 = x1 * jax.lax.rsqrt(ms2 + eps) * mlp_g_ref[...]
    gu = jnp.dot(h2, wgu_ref[...], preferred_element_type=jnp.float32)  # (L, 2*hidden)
    gate = gu[:, :mlp_hidden]
    up = gu[:, mlp_hidden:]
    act = gate * jax.nn.sigmoid(gate) * up
    x2 = x1 + jnp.dot(act, wd_ref[...], preferred_element_type=jnp.float32)

    o_ref[0] = x2.astype(o_ref.dtype)


def _attn_layer_kernel(x_ref, mix_g_ref, wqkv_ref, wo_ref,
                       mlp_g_ref, wgu_ref, wd_ref, o_ref,
                       *, heads, mlp_hidden, eps):
    """Fused Jamba attention layer: rmsnorm + concatenated QKV matmul + per-head
    causal attention with the head concat folded into per-head out_proj partial
    matmuls + residual, then the gated MLP block."""
    x0 = x_ref[0].astype(jnp.float32)                                  # (L, D)
    seq_len, d = x0.shape
    dh = d // heads

    ms = jnp.mean(jnp.square(x0), axis=-1, keepdims=True)
    h = x0 * jax.lax.rsqrt(ms + eps) * mix_g_ref[...]

    qkv = jnp.dot(h, wqkv_ref[...], preferred_element_type=jnp.float32)  # (L, 3D)

    scale = 1.0 / math.sqrt(dh)
    qi = jax.lax.broadcasted_iota(jnp.int32, (seq_len, seq_len), 0)
    ki = jax.lax.broadcasted_iota(jnp.int32, (seq_len, seq_len), 1)
    mask = ki <= qi

    attn_out = jnp.zeros((seq_len, d), jnp.float32)
    for hh in range(heads):
        q = qkv[:, hh * dh:(hh + 1) * dh]
        k = qkv[:, d + hh * dh: d + (hh + 1) * dh]
        v = qkv[:, 2 * d + hh * dh: 2 * d + (hh + 1) * dh]
        s = jax.lax.dot_general(q, k, (((1,), (1,)), ((), ())),
                                preferred_element_type=jnp.float32) * scale
        s = jnp.where(mask, s, -1e30)
        m = jnp.max(s, axis=-1, keepdims=True)
        p = jnp.exp(s - m)
        denom = jnp.sum(p, axis=-1, keepdims=True)
        o_h = (jnp.dot(p, v, preferred_element_type=jnp.float32)
               * pl.reciprocal(denom, approx=True))                    # (L, dh)
        # head-concat fused into the output projection (per-head partial matmul)
        attn_out = attn_out + jnp.dot(o_h, wo_ref[hh * dh:(hh + 1) * dh, :],
                                      preferred_element_type=jnp.float32)
    x1 = x0 + attn_out                                                 # residual

    # --- fused gated MLP block ---
    ms2 = jnp.mean(jnp.square(x1), axis=-1, keepdims=True)
    h2 = x1 * jax.lax.rsqrt(ms2 + eps) * mlp_g_ref[...]
    gu = jnp.dot(h2, wgu_ref[...], preferred_element_type=jnp.float32)
    gate = gu[:, :mlp_hidden]
    up = gu[:, mlp_hidden:]
    act = gate * jax.nn.sigmoid(gate) * up
    x2 = x1 + jnp.dot(act, wd_ref[...], preferred_element_type=jnp.float32)

    o_ref[0] = x2.astype(o_ref.dtype)


def _tail_kernel(x_ref, ctx_ref,
                 qw_ref, qb_ref, kvw_ref, kvb_ref, ow_ref, ob_ref,
                 lng_ref, lnb_ref, w1_ref, b1_ref, w2_ref, b2_ref,
                 lg2_ref, lb2_ref, hw_ref, hb_ref,
                 o_ref, *, heads, ln_eps):
    """Fused tail: mean over sequence + cross-attention (fused K|V matmul, per-head
    out_proj accumulation, +residual) + GEGLU FF (+residual) + final LayerNorm +
    logits head."""
    x = x_ref[0].astype(jnp.float32)                                   # (L, D)
    ctx = ctx_ref[0].astype(jnp.float32)                               # (Lc, Dc)
    d = x.shape[-1]
    dh = d // heads

    # mean over sequence (fused, no standalone launch)
    xm = jnp.mean(x, axis=0, keepdims=True)                            # (1, D)

    # --- cross attention (fused K|V projection) ---
    q = jnp.dot(xm, qw_ref[...], preferred_element_type=jnp.float32) + qb_ref[...]
    kv = jnp.dot(ctx, kvw_ref[...], preferred_element_type=jnp.float32) + kvb_ref[...]
    k = kv[:, :d]
    v = kv[:, d:]
    scale = 1.0 / math.sqrt(dh)
    att = jnp.zeros((1, d), jnp.float32)
    for hh in range(heads):
        qh = q[:, hh * dh:(hh + 1) * dh]                               # (1, dh)
        kh = k[:, hh * dh:(hh + 1) * dh]                               # (Lc, dh)
        vh = v[:, hh * dh:(hh + 1) * dh]
        s = jax.lax.dot_general(qh, kh, (((1,), (1,)), ((), ())),
                                preferred_element_type=jnp.float32) * scale   # (1, Lc)
        m = jnp.max(s, axis=-1, keepdims=True)
        p = jnp.exp(s - m)
        denom = jnp.sum(p, axis=-1, keepdims=True)
        o_h = (jnp.dot(p, vh, preferred_element_type=jnp.float32)
               * pl.reciprocal(denom, approx=True))                    # (1, dh)
        att = att + jnp.dot(o_h, ow_ref[hh * dh:(hh + 1) * dh, :],
                            preferred_element_type=jnp.float32)
    att = att + ob_ref[...]
    x1 = att + xm                                                      # residual

    # --- FeedForward: LayerNorm + GEGLU + proj (dropout identity, eval mode) ---
    mu = jnp.mean(x1, axis=-1, keepdims=True)
    var = jnp.mean(jnp.square(x1 - mu), axis=-1, keepdims=True)
    hf = (x1 - mu) * jax.lax.rsqrt(var + ln_eps) * lng_ref[...] + lnb_ref[...]
    hf = jnp.dot(hf, w1_ref[...], preferred_element_type=jnp.float32) + b1_ref[...]
    f = hf.shape[-1] // 2
    a = hf[:, :f]
    g = hf[:, f:]
    # TODO(synk): PyTorch GEGLU uses exact erf GELU; tanh approximation used here.
    hf = a * jax.nn.gelu(g, approximate=True)
    hf = jnp.dot(hf, w2_ref[...], preferred_element_type=jnp.float32) + b2_ref[...]
    x2 = x1 + hf                                                       # residual

    # --- to_logits: LayerNorm + Linear head ---
    mu = jnp.mean(x2, axis=-1, keepdims=True)
    var = jnp.mean(jnp.square(x2 - mu), axis=-1, keepdims=True)
    hl = (x2 - mu) * jax.lax.rsqrt(var + ln_eps) * lg2_ref[...] + lb2_ref[...]
    o_ref[0] = (jnp.dot(hl, hw_ref[...], preferred_element_type=jnp.float32)
                + hb_ref[...]).astype(o_ref.dtype)


# ========================= thin wrappers =========================

_PAR = pltpu.CompilerParams(dimension_semantics=("parallel",))


def mamba_layer(layer, x):
    bsz, seq_len, _ = x.shape
    p = layer['mamba']
    kern = functools.partial(_mamba_layer_kernel, seq_len=seq_len, d_inner=D_INNER,
                             d_state=D_STATE, d_conv=D_CONV, mlp_hidden=MLP_SIZE,
                             eps=1e-6)
    return pl.pallas_call(
        kern,
        grid=(bsz,),
        in_specs=[
            pl.BlockSpec((1, seq_len, DIM), lambda b: (b, 0, 0)),
            pl.BlockSpec((1, DIM), lambda b: (0, 0)),                   # mixer rmsnorm g
            pl.BlockSpec((DIM, 2 * D_INNER), lambda b: (0, 0)),         # in_proj (x|z)
            pl.BlockSpec((D_CONV, D_INNER), lambda b: (0, 0)),          # conv weight
            pl.BlockSpec((1, D_INNER), lambda b: (0, 0)),               # conv bias
            pl.BlockSpec((D_INNER, 2 * D_STATE + DT_RANK), lambda b: (0, 0)),  # x_proj [B|C|dt]
            pl.BlockSpec((DT_RANK, D_INNER), lambda b: (0, 0)),         # dt_proj w
            pl.BlockSpec((1, D_INNER), lambda b: (0, 0)),               # dt_proj b
            pl.BlockSpec((D_STATE, D_INNER), lambda b: (0, 0)),         # A^T
            pl.BlockSpec((1, D_INNER), lambda b: (0, 0)),               # D
            pl.BlockSpec((D_INNER, DIM), lambda b: (0, 0)),             # out_proj
            pl.BlockSpec((1, DIM), lambda b: (0, 0)),                   # mlp rmsnorm g
            pl.BlockSpec((DIM, 2 * MLP_SIZE), lambda b: (0, 0)),        # mlp gate|up
            pl.BlockSpec((MLP_SIZE, DIM), lambda b: (0, 0)),            # mlp down
        ],
        out_specs=pl.BlockSpec((1, seq_len, DIM), lambda b: (b, 0, 0)),
        out_shape=jax.ShapeDtypeStruct((bsz, seq_len, DIM), jnp.float32),
        compiler_params=_PAR,
    )(x, layer['mixer_norm'].reshape(1, -1), p['in_proj'], p['conv_w'], p['conv_b'],
      p['xproj_fused'], p['dt_w'], p['dt_b'], p['A_T'], p['D'], p['out_proj'],
      layer['mlp_norm'].reshape(1, -1), layer['mlp_gate_up'], layer['mlp_down'])


def attn_layer(layer, x):
    bsz, seq_len, _ = x.shape
    p = layer['attn']
    kern = functools.partial(_attn_layer_kernel, heads=HEADS, mlp_hidden=MLP_SIZE,
                             eps=1e-6)
    return pl.pallas_call(
        kern,
        grid=(bsz,),
        in_specs=[
            pl.BlockSpec((1, seq_len, DIM), lambda b: (b, 0, 0)),
            pl.BlockSpec((1, DIM), lambda b: (0, 0)),                   # mixer rmsnorm g
            pl.BlockSpec((DIM, 3 * DIM), lambda b: (0, 0)),             # fused wqkv
            pl.BlockSpec((DIM, DIM), lambda b: (0, 0)),                 # wo
            pl.BlockSpec((1, DIM), lambda b: (0, 0)),                   # mlp rmsnorm g
            pl.BlockSpec((DIM, 2 * MLP_SIZE), lambda b: (0, 0)),        # mlp gate|up
            pl.BlockSpec((MLP_SIZE, DIM), lambda b: (0, 0)),            # mlp down
        ],
        out_specs=pl.BlockSpec((1, seq_len, DIM), lambda b: (b, 0, 0)),
        out_shape=jax.ShapeDtypeStruct((bsz, seq_len, DIM), jnp.float32),
        compiler_params=_PAR,
    )(x, layer['mixer_norm'].reshape(1, -1), p['wqkv'], p['wo'],
      layer['mlp_norm'].reshape(1, -1), layer['mlp_gate_up'], layer['mlp_down'])


def jamba_forward(p, x):
    # TODO(synk): exact Jamba layer schedule / MoE routing simplified to
    # alternating Mamba/attention mixers with a dense gated MLP per layer.
    for layer in p['layers']:
        if 'mamba' in layer:
            x = mamba_layer(layer, x)       # mixer + MLP fused: 1 pallas_call per layer
        else:
            x = attn_layer(layer, x)
    return x


def tail_block(params, x, ctx):
    bsz, seq_len, d = x.shape
    lc, dc = ctx.shape[1], ctx.shape[2]
    c = params['cross']
    f = params['ff']
    kern = functools.partial(_tail_kernel, heads=HEADS, ln_eps=1e-5)
    out = pl.pallas_call(
        kern,
        grid=(bsz,),
        in_specs=[
            pl.BlockSpec((1, seq_len, d), lambda b: (b, 0, 0)),
            pl.BlockSpec((1, lc, dc), lambda b: (b, 0, 0)),
            pl.BlockSpec((d, d), lambda b: (0, 0)),                     # q_w
            pl.BlockSpec((1, d), lambda b: (0, 0)),                     # q_b
            pl.BlockSpec((dc, 2 * d), lambda b: (0, 0)),                # fused k|v w
            pl.BlockSpec((1, 2 * d), lambda b: (0, 0)),                 # fused k|v b
            pl.BlockSpec((d, d), lambda b: (0, 0)),                     # out_w
            pl.BlockSpec((1, d), lambda b: (0, 0)),                     # out_b
            pl.BlockSpec((1, d), lambda b: (0, 0)),                     # ff ln g
            pl.BlockSpec((1, d), lambda b: (0, 0)),                     # ff ln b
            pl.BlockSpec((d, 2 * FF_HIDDEN), lambda b: (0, 0)),         # ff w1
            pl.BlockSpec((1, 2 * FF_HIDDEN), lambda b: (0, 0)),         # ff b1
            pl.BlockSpec((FF_HIDDEN, d), lambda b: (0, 0)),             # ff w2
            pl.BlockSpec((1, d), lambda b: (0, 0)),                     # ff b2
            pl.BlockSpec((1, d), lambda b: (0, 0)),                     # logits ln g
            pl.BlockSpec((1, d), lambda b: (0, 0)),                     # logits ln b
            pl.BlockSpec((d, DIM_OUT), lambda b: (0, 0)),               # head w
            pl.BlockSpec((1, DIM_OUT), lambda b: (0, 0)),               # head b
        ],
        out_specs=pl.BlockSpec((1, 1, DIM_OUT), lambda b: (b, 0, 0)),
        out_shape=jax.ShapeDtypeStruct((bsz, 1, DIM_OUT), jnp.float32),
        compiler_params=_PAR,
    )(x, ctx,
      c['q_w'], c['q_b'].reshape(1, -1), c['kv_w'], c['kv_b'].reshape(1, -1),
      c['out_w'], c['out_b'].reshape(1, -1),
      f['ln_g'].reshape(1, -1), f['ln_b'].reshape(1, -1),
      f['w1'], f['b1'].reshape(1, -1), f['w2'], f['b2'].reshape(1, -1),
      params['logits_ln_g'].reshape(1, -1), params['logits_ln_b'].reshape(1, -1),
      params['head_w'], params['head_b'].reshape(1, -1))
    return out.reshape(bsz, DIM_OUT)


def cross_jamba_both_forward(params, x_categ, x_numer, feature_img, image_condition):
    mri, pet = image_condition
    b_, c_, h_, w_, d_m = mri.shape
    d_p = pet.shape[-1]
    # rearrange 'b c h w d -> (b c) (h w) d' then transpose(1, 2)
    mri_c = mri.reshape(b_ * c_, h_ * w_, d_m).transpose(0, 2, 1)
    pet_c = pet.reshape(b_ * c_, h_ * w_, d_p).transpose(0, 2, 1)
    whole_condition = jnp.concatenate([mri_c, pet_c], axis=1)      # (b*c, d_m + d_p, h*w)

    # categorical / numerical embeddings (gather + affine = parameter glue)
    # TODO(synk): embedding gather kept in plain JAX (jnp.take), not a Pallas kernel.
    x_cat = x_categ + params['categories_offset'][None, :]
    cat_emb = jnp.take(params['categ_embed'], x_cat, axis=0)        # (b, ncat, dim)
    num_emb = x_numer[:, :, None] * params['num_w'][None] + params['num_b'][None]

    bsz = x_categ.shape[0]
    cls = jnp.broadcast_to(params['cls_token'], (bsz, 1, DIM))
    x = jnp.concatenate([cls, cat_emb, num_emb, feature_img], axis=1)

    x = jamba_forward(params['jamba'], x)            # transformer(x)[0]
    # mean over seq + cross-attention + FF + to_logits fused into one kernel
    return tail_block(params, x, whole_condition)


# ========================= deterministic parameter init =========================

def init_params(key):
    keys = iter(jax.random.split(key, 128))

    def nrm(shape, scale=0.02):
        return jax.random.normal(next(keys), shape, dtype=jnp.float32) * scale

    total_tokens = sum(CATEGORIES) + NUM_SPECIAL
    params = {
        'categories_offset': jnp.cumsum(
            jnp.array([NUM_SPECIAL] + list(CATEGORIES[:-1]), jnp.int32)),
        'categ_embed': nrm((total_tokens, DIM), 1.0),
        'num_w': nrm((NUM_CONTINUOUS, DIM), 1.0),
        'num_b': nrm((NUM_CONTINUOUS, DIM), 1.0),
        'cls_token': nrm((1, 1, DIM), 1.0),
    }

    a_log_t = jnp.log(jnp.broadcast_to(
        jnp.arange(1, D_STATE + 1, dtype=jnp.float32)[:, None], (D_STATE, D_INNER)))

    layers = []
    for i in range(DEPTH * 2):
        layer = {
            'mixer_norm': jnp.ones((DIM,), jnp.float32),
            'mlp_norm': jnp.ones((DIM,), jnp.float32),
            'mlp_gate_up': nrm((DIM, 2 * MLP_SIZE)),        # fused gate|up (128 lanes)
            'mlp_down': nrm((MLP_SIZE, DIM)),
        }
        if i % 2 == 0:
            layer['mamba'] = {
                'in_proj': nrm((DIM, 2 * D_INNER)),
                'conv_w': nrm((D_CONV, D_INNER), 0.1),
                'conv_b': nrm((1, D_INNER), 0.1),
                # fused x_proj columns ordered [B | C | dt]
                # TODO(synk): real Mamba checkpoints pack x_proj as [dt | B | C];
                # reorder columns when importing pretrained weights.
                'xproj_fused': nrm((D_INNER, 2 * D_STATE + DT_RANK)),
                'dt_w': nrm((DT_RANK, D_INNER), 0.1),
                'dt_b': nrm((1, D_INNER), 0.1),
                'A_T': -jnp.exp(a_log_t),                   # (D_STATE, D_INNER)
                'D': jnp.ones((1, D_INNER), jnp.float32),
                'out_proj': nrm((D_INNER, DIM)),
            }
        else:
            layer['attn'] = {'wqkv': nrm((DIM, 3 * DIM)),   # fused q|k|v
                             'wo': nrm((DIM, DIM))}
        layers.append(layer)
    params['jamba'] = {'layers': layers}

    params['cross'] = {
        'q_w': nrm((DIM, DIM)), 'q_b': jnp.zeros((DIM,), jnp.float32),
        'kv_w': nrm((D_CROSS, 2 * DIM)),                    # fused k|v projection
        'kv_b': jnp.zeros((2 * DIM,), jnp.float32),
        'out_w': nrm((DIM, DIM)), 'out_b': jnp.zeros((DIM,), jnp.float32),
    }
    params['ff'] = {
        'ln_g': jnp.ones((DIM,), jnp.float32), 'ln_b': jnp.zeros((DIM,), jnp.float32),
        'w1': nrm((DIM, FF_HIDDEN * 2)), 'b1': jnp.zeros((FF_HIDDEN * 2,), jnp.float32),
        'w2': nrm((FF_HIDDEN, DIM)), 'b2': jnp.zeros((DIM,), jnp.float32),
    }
    params['logits_ln_g'] = jnp.ones((DIM,), jnp.float32)
    params['logits_ln_b'] = jnp.zeros((DIM,), jnp.float32)
    params['head_w'] = nrm((DIM, DIM_OUT))
    params['head_b'] = jnp.zeros((DIM_OUT,), jnp.float32)
    return params


# ========================= main =========================

if __name__ == "__main__":
    key = jax.random.PRNGKey(0)
    k_par, k1, k2, k3, k4, k5, k6 = jax.random.split(key, 7)
    params = init_params(k_par)

    bsz = 2
    n_img_tokens = 4
    x_categ = jnp.stack(
        [jax.random.randint(k1, (bsz,), 0, CATEGORIES[0]),
         jax.random.randint(k2, (bsz,), 0, CATEGORIES[1])], axis=-1)          # (2, 2)
    x_numer = jax.random.normal(k3, (bsz, NUM_CONTINUOUS), jnp.float32)        # (2, 3)
    feature_img = jax.random.normal(k4, (bsz, n_img_tokens, DIM), jnp.float32)  # (2, 4, 32)
    mri = jax.random.normal(k5, (bsz, 1, COND_H, COND_W, 6), jnp.float32)      # (2,1,4,4,6)
    pet = jax.random.normal(k6, (bsz, 1, COND_H, COND_W, 6), jnp.float32)      # (2,1,4,4,6)

    fwd = jax.jit(cross_jamba_both_forward)
    logits = fwd(params, x_categ, x_numer, feature_img, (mri, pet))
    jax.block_until_ready(logits)
    assert logits.shape == (bsz, DIM_OUT), logits.shape
    assert bool(jnp.all(jnp.isfinite(logits)))
    print("KERNEL_OK")
</pallas_src>

<mosaic_0001>
module attributes {stable_mosaic.version = 11 : i64} {
  func.func @_mamba_layer_kernel(%arg0: i32, %arg1: memref<1x10x32xf32, #tpu.memory_space<vmem>>, %arg2: memref<1x32xf32, #tpu.memory_space<vmem>>, %arg3: memref<32x128xf32, #tpu.memory_space<vmem>>, %arg4: memref<4x64xf32, #tpu.memory_space<vmem>>, %arg5: memref<1x64xf32, #tpu.memory_space<vmem>>, %arg6: memref<64x34xf32, #tpu.memory_space<vmem>>, %arg7: memref<2x64xf32, #tpu.memory_space<vmem>>, %arg8: memref<1x64xf32, #tpu.memory_space<vmem>>, %arg9: memref<16x64xf32, #tpu.memory_space<vmem>>, %arg10: memref<1x64xf32, #tpu.memory_space<vmem>>, %arg11: memref<64x32xf32, #tpu.memory_space<vmem>>, %arg12: memref<1x32xf32, #tpu.memory_space<vmem>>, %arg13: memref<32x128xf32, #tpu.memory_space<vmem>>, %arg14: memref<64x32xf32, #tpu.memory_space<vmem>>, %arg15: memref<1x10x32xf32, #tpu.memory_space<vmem>>) attributes {dimension_semantics = [#tpu.dimension_semantics<parallel>], iteration_bounds = array<i64: 2>, scalar_prefetch = 0 : i64, scratch_operands = 0 : i64, tpu.core_type = #tpu.core_type<tc>, window_params = [{transform_indices = @transform_0, window_bounds = array<i64: 1, 10, 32>}, {pipeline_mode = #tpu.pipeline_mode<synchronous>, transform_indices = @transform_1, window_bounds = array<i64: 1, 32>}, {pipeline_mode = #tpu.pipeline_mode<synchronous>, transform_indices = @transform_2, window_bounds = array<i64: 32, 128>}, {pipeline_mode = #tpu.pipeline_mode<synchronous>, transform_indices = @transform_3, window_bounds = array<i64: 4, 64>}, {pipeline_mode = #tpu.pipeline_mode<synchronous>, transform_indices = @transform_4, window_bounds = array<i64: 1, 64>}, {pipeline_mode = #tpu.pipeline_mode<synchronous>, transform_indices = @transform_5, window_bounds = array<i64: 64, 34>}, {pipeline_mode = #tpu.pipeline_mode<synchronous>, transform_indices = @transform_6, window_bounds = array<i64: 2, 64>}, {pipeline_mode = #tpu.pipeline_mode<synchronous>, transform_indices = @transform_7, window_bounds = array<i64: 1, 64>}, {pipeline_mode = #tpu.pipeline_mode<synchronous>, transform_indices = @transform_8, window_bounds = array<i64: 16, 64>}, {pipeline_mode = #tpu.pipeline_mode<synchronous>, transform_indices = @transform_9, window_bounds = array<i64: 1, 64>}, {pipeline_mode = #tpu.pipeline_mode<synchronous>, transform_indices = @transform_10, window_bounds = array<i64: 64, 32>}, {pipeline_mode = #tpu.pipeline_mode<synchronous>, transform_indices = @transform_11, window_bounds = array<i64: 1, 32>}, {pipeline_mode = #tpu.pipeline_mode<synchronous>, transform_indices = @transform_12, window_bounds = array<i64: 32, 128>}, {pipeline_mode = #tpu.pipeline_mode<synchronous>, transform_indices = @transform_13, window_bounds = array<i64: 64, 32>}, {transform_indices = @transform_14, window_bounds = array<i64: 1, 10, 32>}]} {
    %c0 = arith.constant 0 : index
    %c0_0 = arith.constant 0 : index
    %c0_1 = arith.constant 0 : index
    %0 = vector.load %arg1[%c0, %c0_0, %c0_1] : memref<1x10x32xf32, #tpu.memory_space<vmem>>, vector<1x10x32xf32>
    %1 = vector.shape_cast %0 : vector<1x10x32xf32> to vector<10x32xf32>
    %2 = arith.mulf %1, %1 : vector<10x32xf32>
    %cst = arith.constant dense<0.000000e+00> : vector<10xf32>
    %3 = vector.multi_reduction <add>, %2, %cst [1] : vector<10x32xf32> to vector<10xf32>
    %4 = vector.shape_cast %3 : vector<10xf32> to vector<10x1xf32>
    %cst_2 = arith.constant 3.200000e+01 : f32
    %5 = vector.broadcast %cst_2 : f32 to vector<10x1xf32>
    %6 = arith.divf %4, %5 : vector<10x1xf32>
    %cst_3 = arith.constant 9.99999997E-7 : f32
    %7 = vector.broadcast %cst_3 : f32 to vector<10x1xf32>
    %8 = arith.addf %6, %7 : vector<10x1xf32>
    %9 = math.rsqrt %8 : vector<10x1xf32>
    %10 = vector.broadcast %9 : vector<10x1xf32> to vector<10x32xf32>
    %11 = arith.mulf %1, %10 : vector<10x32xf32>
    %c0_4 = arith.constant 0 : index
    %c0_5 = arith.constant 0 : index
    %12 = vector.load %arg2[%c0_4, %c0_5] : memref<1x32xf32, #tpu.memory_space<vmem>>, vector<1x32xf32>
    %13 = vector.broadcast %12 : vector<1x32xf32> to vector<10x32xf32>
    %14 = arith.mulf %11, %13 : vector<10x32xf32>
    %c0_6 = arith.constant 0 : index
    %c0_7 = arith.constant 0 : index
    %15 = vector.load %arg3[%c0_6, %c0_7] : memref<32x128xf32, #tpu.memory_space<vmem>>, vector<32x128xf32>
    %cst_8 = arith.constant dense<0.000000e+00> : vector<10x128xf32>
    %16 = tpu.matmul %14, %15, %cst_8 {dimension_numbers = #tpu.dot_dimension_numbers<[1], [0], [0], [1], [0, 0, 1, 1], [], []>} : vector<10x32xf32>, vector<32x128xf32>, vector<10x128xf32> -> vector<10x128xf32>
    %17 = vector.extract_strided_slice %16 {offsets = [0, 0], sizes = [10, 64], strides = [1, 1]} : vector<10x128xf32> to vector<10x64xf32>
    %18 = vector.extract_strided_slice %16 {offsets = [0, 64], sizes = [10, 64], strides = [1, 1]} : vector<10x128xf32> to vector<10x64xf32>
    %cst_9 = arith.constant 0.000000e+00 : f32
    %19 = vector.broadcast %cst_9 : f32 to vector<10x64xf32>
    %c0_10 = arith.constant 0 : index
    %c0_11 = arith.constant 0 : index
    %20 = vector.load %arg5[%c0_10, %c0_11] : memref<1x64xf32, #tpu.memory_space<vmem>>, vector<1x64xf32>
    %21 = vector.broadcast %20 : vector<1x64xf32> to vector<10x64xf32>
    %22 = arith.addf %19, %21 : vector<10x64xf32>
    %cst_12 = arith.constant 0.000000e+00 : f32
    %23 = vector.broadcast %cst_12 : f32 to vector<3x64xf32>
    %24 = vector.extract_strided_slice %17 {offsets = [0, 0], sizes = [7, 64], strides = [1, 1]} : vector<10x64xf32> to vector<7x64xf32>
    %25 = tpu.concatenate %23, %24 in 0 : vector<3x64xf32>, vector<7x64xf32> -> vector<10x64xf32>
    %c0_13 = arith.constant 0 : index
    %c0_14 = arith.constant 0 : index
    %26 = vector.load %arg4[%c0_13, %c0_14] : memref<4x64xf32, #tpu.memory_space<vmem>>, vector<1x64xf32>
    %27 = vector.broadcast %26 : vector<1x64xf32> to vector<10x64xf32>
    %28 = arith.mulf %25, %27 : vector<10x64xf32>
    %29 = arith.addf %22, %28 : vector<10x64xf32>
    %cst_15 = arith.constant 0.000000e+00 : f32
    %30 = vector.broadcast %cst_15 : f32 to vector<2x64xf32>
    %31 = vector.extract_strided_slice %17 {offsets = [0, 0], sizes = [8, 64], strides = [1, 1]} : vector<10x64xf32> to vector<8x64xf32>
    %32 = tpu.concatenate %30, %31 in 0 : vector<2x64xf32>, vector<8x64xf32> -> vector<10x64xf32>
    %c1 = arith.constant 1 : index
    %c0_16 = arith.constant 0 : index
    %33 = vector.load %arg4[%c1, %c0_16] : memref<4x64xf32, #tpu.memory_space<vmem>>, vector<1x64xf32>
    %34 = vector.broadcast %33 : vector<1x64xf32> to vector<10x64xf32>
    %35 = arith.mulf %32, %34 : vector<10x64xf32>
    %36 = arith.addf %29, %35 : vector<10x64xf32>
    %cst_17 = arith.constant 0.000000e+00 : f32
    %37 = vector.broadcast %cst_17 : f32 to vector<1x64xf32>
    %38 = vector.extract_strided_slice %17 {offsets = [0, 0], sizes = [9, 64], strides = [1, 1]} : vector<10x64xf32> to vector<9x64xf32>
    %39 = tpu.concatenate %37, %38 in 0 : vector<1x64xf32>, vector<9x64xf32> -> vector<10x64xf32>
    %c2 = arith.constant 2 : index
    %c0_18 = arith.constant 0 : index
    %40 = vector.load %arg4[%c2, %c0_18] : memref<4x64xf32, #tpu.memory_space<vmem>>, vector<1x64xf32>
    %41 = vector.broadcast %40 : vector<1x64xf32> to vector<10x64xf32>
    %42 = arith.mulf %39, %41 : vector<10x64xf32>
    %43 = arith.addf %36, %42 : vector<10x64xf32>
    %c3 = arith.constant 3 : index
    %c0_19 = arith.constant 0 : index
    %44 = vector.load %arg4[%c3, %c0_19] : memref<4x64xf32, #tpu.memory_space<vmem>>, vector<1x64xf32>
    %45 = vector.broadcast %44 : vector<1x64xf32> to vector<10x64xf32>
    %46 = arith.mulf %17, %45 : vector<10x64xf32>
    %47 = arith.addf %43, %46 : vector<10x64xf32>
    %48 = arith.negf %47 : vector<10x64xf32>
    %49 = math.exp %48 : vector<10x64xf32>
    %cst_20 = arith.constant 1.000000e+00 : f32
    %50 = vector.broadcast %cst_20 : f32 to vector<10x64xf32>
    %51 = arith.addf %50, %49 : vector<10x64xf32>
    %52 = arith.divf %50, %51 : vector<10x64xf32>
    %53 = arith.mulf %47, %52 : vector<10x64xf32>
    %c0_21 = arith.constant 0 : index
    %c0_22 = arith.constant 0 : index
    %54 = vector.load %arg6[%c0_21, %c0_22] : memref<64x34xf32, #tpu.memory_space<vmem>>, vector<64x34xf32>
    %cst_23 = arith.constant dense<0.000000e+00> : vector<10x34xf32>
    %55 = tpu.matmul %53, %54, %cst_23 {dimension_numbers = #tpu.dot_dimension_numbers<[1], [0], [0], [1], [0, 0, 1, 1], [], []>} : vector<10x64xf32>, vector<64x34xf32>, vector<10x34xf32> -> vector<10x34xf32>
    %56 = vector.extract_strided_slice %55 {offsets = [0, 0], sizes = [10, 16], strides = [1, 1]} : vector<10x34xf32> to vector<10x16xf32>
    %57 = vector.extract_strided_slice %55 {offsets = [0, 16], sizes = [10, 16], strides = [1, 1]} : vector<10x34xf32> to vector<10x16xf32>
    %58 = vector.extract_strided_slice %55 {offsets = [0, 32], sizes = [10, 2], strides = [1, 1]} : vector<10x34xf32> to vector<10x2xf32>
    %c0_24 = arith.constant 0 : index
    %c0_25 = arith.constant 0 : index
    %59 = vector.load %arg7[%c0_24, %c0_25] : memref<2x64xf32, #tpu.memory_space<vmem>>, vector<2x64xf32>
    %cst_26 = arith.constant dense<0.000000e+00> : vector<10x64xf32>
    %60 = tpu.matmul %58, %59, %cst_26 {dimension_numbers = #tpu.dot_dimension_numbers<[1], [0], [0], [1], [0, 0, 1, 1], [], []>} : vector<10x2xf32>, vector<2x64xf32>, vector<10x64xf32> -> vector<10x64xf32>
    %c0_27 = arith.constant 0 : index
    %c0_28 = arith.constant 0 : index
    %61 = vector.load %arg8[%c0_27, %c0_28] : memref<1x64xf32, #tpu.memory_space<vmem>>, vector<1x64xf32>
    %62 = vector.broadcast %61 : vector<1x64xf32> to vector<10x64xf32>
    %63 = arith.addf %60, %62 : vector<10x64xf32>
    %cst_29 = arith.constant 0.000000e+00 : f32
    %64 = vector.broadcast %cst_29 : f32 to vector<10x64xf32>
    %65 = arith.maximumf %63, %64 : vector<10x64xf32>
    %66 = math.absf %63 : vector<10x64xf32>
    %cst_30 = arith.constant 0.000000e+00 : f32
    %67 = vector.broadcast %cst_30 : f32 to vector<10x64xf32>
    %68 = arith.subf %67, %66 : vector<10x64xf32>
    %69 = math.exp %68 : vector<10x64xf32>
    %cst_31 = arith.constant 1.000000e+00 : f32
    %70 = vector.broadcast %cst_31 : f32 to vector<10x64xf32>
    %71 = arith.addf %70, %69 : vector<10x64xf32>
    %72 = math.log %71 : vector<10x64xf32>
    %73 = arith.addf %65, %72 : vector<10x64xf32>
    %c0_32 = arith.constant 0 : index
    %c0_33 = arith.constant 0 : index
    %74 = vector.load %arg9[%c0_32, %c0_33] : memref<16x64xf32, #tpu.memory_space<vmem>>, vector<16x64xf32>
    %75 = arith.mulf %73, %53 : vector<10x64xf32>
    %76 = tpu.transpose %56, [1, 0] : vector<10x16xf32> -> vector<16x10xf32>
    %cst_34 = arith.constant 0.000000e+00 : f32
    %77 = vector.broadcast %cst_34 : f32 to vector<16x64xf32>
    %78 = vector.extract_strided_slice %73 {offsets = [0, 0], sizes = [1, 64], strides = [1, 1]} : vector<10x64xf32> to vector<1x64xf32>
    %79 = vector.broadcast %78 : vector<1x64xf32> to vector<16x64xf32>
    %80 = arith.mulf %79, %74 : vector<16x64xf32>
    %81 = math.exp %80 : vector<16x64xf32>
    %82 = vector.extract_strided_slice %76 {offsets = [0, 0], sizes = [16, 1], strides = [1, 1]} : vector<16x10xf32> to vector<16x1xf32>
    %83 = vector.extract_strided_slice %75 {offsets = [0, 0], sizes = [1, 64], strides = [1, 1]} : vector<10x64xf32> to vector<1x64xf32>
    %84 = vector.broadcast %82 : vector<16x1xf32> to vector<16x64xf32>
    %85 = vector.broadcast %83 : vector<1x64xf32> to vector<16x64xf32>
    %86 = arith.mulf %84, %85 : vector<16x64xf32>
    %87 = arith.mulf %81, %77 : vector<16x64xf32>
    %88 = arith.addf %87, %86 : vector<16x64xf32>
    %89 = vector.extract_strided_slice %57 {offsets = [0, 0], sizes = [1, 16], strides = [1, 1]} : vector<10x16xf32> to vector<1x16xf32>
    %cst_35 = arith.constant dense<0.000000e+00> : vector<1x64xf32>
    %90 = tpu.matmul %89, %88, %cst_35 {dimension_numbers = #tpu.dot_dimension_numbers<[1], [0], [0], [1], [0, 0, 1, 1], [], []>} : vector<1x16xf32>, vector<16x64xf32>, vector<1x64xf32> -> vector<1x64xf32>
    %91 = vector.extract_strided_slice %73 {offsets = [1, 0], sizes = [1, 64], strides = [1, 1]} : vector<10x64xf32> to vector<1x64xf32>
    %92 = vector.broadcast %91 : vector<1x64xf32> to vector<16x64xf32>
    %93 = arith.mulf %92, %74 : vector<16x64xf32>
    %94 = math.exp %93 : vector<16x64xf32>
    %95 = vector.extract_strided_slice %76 {offsets = [0, 1], sizes = [16, 1], strides = [1, 1]} : vector<16x10xf32> to vector<16x1xf32>
    %96 = vector.extract_strided_slice %75 {offsets = [1, 0], sizes = [1, 64], strides = [1, 1]} : vector<10x64xf32> to vector<1x64xf32>
    %97 = vector.broadcast %95 : vector<16x1xf32> to vector<16x64xf32>
    %98 = vector.broadcast %96 : vector<1x64xf32> to vector<16x64xf32>
    %99 = arith.mulf %97, %98 : vector<16x64xf32>
    %100 = arith.mulf %94, %88 : vector<16x64xf32>
    %101 = arith.addf %100, %99 : vector<16x64xf32>
    %102 = vector.extract_strided_slice %57 {offsets = [1, 0], sizes = [1, 16], strides = [1, 1]} : vector<10x16xf32> to vector<1x16xf32>
    %cst_36 = arith.constant dense<0.000000e+00> : vector<1x64xf32>
    %103 = tpu.matmul %102, %101, %cst_36 {dimension_numbers = #tpu.dot_dimension_numbers<[1], [0], [0], [1], [0, 0, 1, 1], [], []>} : vector<1x16xf32>, vector<16x64xf32>, vector<1x64xf32> -> vector<1x64xf32>
    %104 = vector.extract_strided_slice %73 {offsets = [2, 0], sizes = [1, 64], strides = [1, 1]} : vector<10x64xf32> to vector<1x64xf32>
    %105 = vector.broadcast %104 : vector<1x64xf32> to vector<16x64xf32>
    %106 = arith.mulf %105, %74 : vector<16x64xf32>
    %107 = math.exp %106 : vector<16x64xf32>
    %108 = vector.extract_strided_slice %76 {offsets = [0, 2], sizes = [16, 1], strides = [1, 1]} : vector<16x10xf32> to vector<16x1xf32>
    %109 = vector.extract_strided_slice %75 {offsets = [2, 0], sizes = [1, 64], strides = [1, 1]} : vector<10x64xf32> to vector<1x64xf32>
    %110 = vector.broadcast %108 : vector<16x1xf32> to vector<16x64xf32>
    %111 = vector.broadcast %109 : vector<1x64xf32> to vector<16x64xf32>
    %112 = arith.mulf %110, %111 : vector<16x64xf32>
    %113 = arith.mulf %107, %101 : vector<16x64xf32>
    %114 = arith.addf %113, %112 : vector<16x64xf32>
    %115 = vector.extract_strided_slice %57 {offsets = [2, 0], sizes = [1, 16], strides = [1, 1]} : vector<10x16xf32> to vector<1x16xf32>
    %cst_37 = arith.constant dense<0.000000e+00> : vector<1x64xf32>
    %116 = tpu.matmul %115, %114, %cst_37 {dimension_numbers = #tpu.dot_dimension_numbers<[1], [0], [0], [1], [0, 0, 1, 1], [], []>} : vector<1x16xf32>, vector<16x64xf32>, vector<1x64xf32> -> vector<1x64xf32>
    %117 = vector.extract_strided_slice %73 {offsets = [3, 0], sizes = [1, 64], strides = [1, 1]} : vector<10x64xf32> to vector<1x64xf32>
    %118 = vector.broadcast %117 : vector<1x64xf32> to vector<16x64xf32>
    %119 = arith.mulf %118, %74 : vector<16x64xf32>
    %120 = math.exp %119 : vector<16x64xf32>
    %121 = vector.extract_strided_slice %76 {offsets = [0, 3], sizes = [16, 1], strides = [1, 1]} : vector<16x10xf32> to vector<16x1xf32>
    %122 = vector.extract_strided_slice %75 {offsets = [3, 0], sizes = [1, 64], strides = [1, 1]} : vector<10x64xf32> to vector<1x64xf32>
    %123 = vector.broadcast %121 : vector<16x1xf32> to vector<16x64xf32>
    %124 = vector.broadcast %122 : vector<1x64xf32> to vector<16x64xf32>
    %125 = arith.mulf %123, %124 : vector<16x64xf32>
    %126 = arith.mulf %120, %114 : vector<16x64xf32>
    %127 = arith.addf %126, %125 : vector<16x64xf32>
    %128 = vector.extract_strided_slice %57 {offsets = [3, 0], sizes = [1, 16], strides = [1, 1]} : vector<10x16xf32> to vector<1x16xf32>
    %cst_38 = arith.constant dense<0.000000e+00> : vector<1x64xf32>
    %129 = tpu.matmul %128, %127, %cst_38 {dimension_numbers = #tpu.dot_dimension_numbers<[1], [0], [0], [1], [0, 0, 1, 1], [], []>} : vector<1x16xf32>, vector<16x64xf32>, vector<1x64xf32> -> vector<1x64xf32>
    %130 = vector.extract_strided_slice %73 {offsets = [4, 0], sizes = [1, 64], strides = [1, 1]} : vector<10x64xf32> to vector<1x64xf32>
    %131 = vector.broadcast %130 : vector<1x64xf32> to vector<16x64xf32>
    %132 = arith.mulf %131, %74 : vector<16x64xf32>
    %133 = math.exp %132 : vector<16x64xf32>
    %134 = vector.extract_strided_slice %76 {offsets = [0, 4], sizes = [16, 1], strides = [1, 1]} : vector<16x10xf32> to vector<16x1xf32>
    %135 = vector.extract_strided_slice %75 {offsets = [4, 0], sizes = [1, 64], strides = [1, 1]} : vector<10x64xf32> to vector<1x64xf32>
    %136 = vector.broadcast %134 : vector<16x1xf32> to vector<16x64xf32>
    %137 = vector.broadcast %135 : vector<1x64xf32> to vector<16x64xf32>
    %138 = arith.mulf %136, %137 : vector<16x64xf32>
    %139 = arith.mulf %133, %127 : vector<16x64xf32>
    %140 = arith.addf %139, %138 : vector<16x64xf32>
    %141 = vector.extract_strided_slice %57 {offsets = [4, 0], sizes = [1, 16], strides = [1, 1]} : vector<10x16xf32> to vector<1x16xf32>
    %cst_39 = arith.constant dense<0.000000e+00> : vector<1x64xf32>
    %142 = tpu.matmul %141, %140, %cst_39 {dimension_numbers = #tpu.dot_dimension_numbers<[1], [0], [0], [1], [0, 0, 1, 1], [], []>} : vector<1x16xf32>, vector<16x64xf32>, vector<1x64xf32> -> vector<1x64xf32>
    %143 = vector.extract_strided_slice %73 {offsets = [5, 0], sizes = [1, 64], strides = [1, 1]} : vector<10x64xf32> to vector<1x64xf32>
    %144 = vector.broadcast %143 : vector<1x64xf32> to vector<16x64xf32>
    %145 = arith.mulf %144, %74 : vector<16x64xf32>
    %146 = math.exp %145 : vector<16x64xf32>
    %147 = vector.extract_strided_slice %76 {offsets = [0, 5], sizes = [16, 1], strides = [1, 1]} : vector<16x10xf32> to vector<16x1xf32>
    %148 = vector.extract_strided_slice %75 {offsets = [5, 0], sizes = [1, 64], strides = [1, 1]} : vector<10x64xf32> to vector<1x64xf32>
    %149 = vector.broadcast %147 : vector<16x1xf32> to vector<16x64xf32>
    %150 = vector.broadcast %148 : vector<1x64xf32> to vector<16x64xf32>
    %151 = arith.mulf %149, %150 : vector<16x64xf32>
    %152 = arith.mulf %146, %140 : vector<16x64xf32>
    %153 = arith.addf %152, %151 : vector<16x64xf32>
    %154 = vector.extract_strided_slice %57 {offsets = [5, 0], sizes = [1, 16], strides = [1, 1]} : vector<10x16xf32> to vector<1x16xf32>
    %cst_40 = arith.constant dense<0.000000e+00> : vector<1x64xf32>
    %155 = tpu.matmul %154, %153, %cst_40 {dimension_numbers = #tpu.dot_dimension_numbers<[1], [0], [0], [1], [0, 0, 1, 1], [], []>} : vector<1x16xf32>, vector<16x64xf32>, vector<1x64xf32> -> vector<1x64xf32>
    %156 = vector.extract_strided_slice %73 {offsets = [6, 0], sizes = [1, 64], strides = [1, 1]} : vector<10x64xf32> to vector<1x64xf32>
    %157 = vector.broadcast %156 : vector<1x64xf32> to vector<16x64xf32>
    %158 = arith.mulf %157, %74 : vector<16x64xf32>
    %159 = math.exp %158 : vector<16x64xf32>
    %160 = vector.extract_strided_slice %76 {offsets = [0, 6], sizes = [16, 1], strides = [1, 1]} : vector<16x10xf32> to vector<16x1xf32>
    %161 = vector.extract_strided_slice %75 {offsets = [6, 0], sizes = [1, 64], strides = [1, 1]} : vector<10x64xf32> to vector<1x64xf32>
    %162 = vector.broadcast %160 : vector<16x1xf32> to vector<16x64xf32>
    %163 = vector.broadcast %161 : vector<1x64xf32> to vector<16x64xf32>
    %164 = arith.mulf %162, %163 : vector<16x64xf32>
    %165 = arith.mulf %159, %153 : vector<16x64xf32>
    %166 = arith.addf %165, %164 : vector<16x64xf32>
    %167 = vector.extract_strided_slice %57 {offsets = [6, 0], sizes = [1, 16], strides = [1, 1]} : vector<10x16xf32> to vector<1x16xf32>
    %cst_41 = arith.constant dense<0.000000e+00> : vector<1x64xf32>
    %168 = tpu.matmul %167, %166, %cst_41 {dimension_numbers = #tpu.dot_dimension_numbers<[1], [0], [0], [1], [0, 0, 1, 1], [], []>} : vector<1x16xf32>, vector<16x64xf32>, vector<1x64xf32> -> vector<1x64xf32>
    %169 = vector.extract_strided_slice %73 {offsets = [7, 0], sizes = [1, 64], strides = [1, 1]} : vector<10x64xf32> to vector<1x64xf32>
    %170 = vector.broadcast %169 : vector<1x64xf32> to vector<16x64xf32>
    %171 = arith.mulf %170, %74 : vector<16x64xf32>
    %172 = math.exp %171 : vector<16x64xf32>
    %173 = vector.extract_strided_slice %76 {offsets = [0, 7], sizes = [16, 1], strides = [1, 1]} : vector<16x10xf32> to vector<16x1xf32>
    %174 = vector.extract_strided_slice %75 {offsets = [7, 0], sizes = [1, 64], strides = [1, 1]} : vector<10x64xf32> to vector<1x64xf32>
    %175 = vector.broadcast %173 : vector<16x1xf32> to vector<16x64xf32>
    %176 = vector.broadcast %174 : vector<1x64xf32> to vector<16x64xf32>
    %177 = arith.mulf %175, %176 : vector<16x64xf32>
    %178 = arith.mulf %172, %166 : vector<16x64xf32>
    %179 = arith.addf %178, %177 : vector<16x64xf32>
    %180 = vector.extract_strided_slice %57 {offsets = [7, 0], sizes = [1, 16], strides = [1, 1]} : vector<10x16xf32> to vector<1x16xf32>
    %cst_42 = arith.constant dense<0.000000e+00> : vector<1x64xf32>
    %181 = tpu.matmul %180, %179, %cst_42 {dimension_numbers = #tpu.dot_dimension_numbers<[1], [0], [0], [1], [0, 0, 1, 1], [], []>} : vector<1x16xf32>, vector<16x64xf32>, vector<1x64xf32> -> vector<1x64xf32>
    %182 = vector.extract_strided_slice %73 {offsets = [8, 0], sizes = [1, 64], strides = [1, 1]} : vector<10x64xf32> to vector<1x64xf32>
    %183 = vector.broadcast %182 : vector<1x64xf32> to vector<16x64xf32>
    %184 = arith.mulf %183, %74 : vector<16x64xf32>
    %185 = math.exp %184 : vector<16x64xf32>
    %186 = vector.extract_strided_slice %76 {offsets = [0, 8], sizes = [16, 1], strides = [1, 1]} : vector<16x10xf32> to vector<16x1xf32>
    %187 = vector.extract_strided_slice %75 {offsets = [8, 0], sizes = [1, 64], strides = [1, 1]} : vector<10x64xf32> to vector<1x64xf32>
    %188 = vector.broadcast %186 : vector<16x1xf32> to vector<16x64xf32>
    %189 = vector.broadcast %187 : vector<1x64xf32> to vector<16x64xf32>
    %190 = arith.mulf %188, %189 : vector<16x64xf32>
    %191 = arith.mulf %185, %179 : vector<16x64xf32>
    %192 = arith.addf %191, %190 : vector<16x64xf32>
    %193 = vector.extract_strided_slice %57 {offsets = [8, 0], sizes = [1, 16], strides = [1, 1]} : vector<10x16xf32> to vector<1x16xf32>
    %cst_43 = arith.constant dense<0.000000e+00> : vector<1x64xf32>
    %194 = tpu.matmul %193, %192, %cst_43 {dimension_numbers = #tpu.dot_dimension_numbers<[1], [0], [0], [1], [0, 0, 1, 1], [], []>} : vector<1x16xf32>, vector<16x64xf32>, vector<1x64xf32> -> vector<1x64xf32>
    %195 = vector.extract_strided_slice %73 {offsets = [9, 0], sizes = [1, 64], strides = [1, 1]} : vector<10x64xf32> to vector<1x64xf32>
    %196 = vector.broadcast %195 : vector<1x64xf32> to vector<16x64xf32>
    %197 = arith.mulf %196, %74 : vector<16x64xf32>
    %198 = math.exp %197 : vector<16x64xf32>
    %199 = vector.extract_strided_slice %76 {offsets = [0, 9], sizes = [16, 1], strides = [1, 1]} : vector<16x10xf32> to vector<16x1xf32>
    %200 = vector.extract_strided_slice %75 {offsets = [9, 0], sizes = [1, 64], strides = [1, 1]} : vector<10x64xf32> to vector<1x64xf32>
    %201 = vector.broadcast %199 : vector<16x1xf32> to vector<16x64xf32>
    %202 = vector.broadcast %200 : vector<1x64xf32> to vector<16x64xf32>
    %203 = arith.mulf %201, %202 : vector<16x64xf32>
    %204 = arith.mulf %198, %192 : vector<16x64xf32>
    %205 = arith.addf %204, %203 : vector<16x64xf32>
    %206 = vector.extract_strided_slice %57 {offsets = [9, 0], sizes = [1, 16], strides = [1, 1]} : vector<10x16xf32> to vector<1x16xf32>
    %cst_44 = arith.constant dense<0.000000e+00> : vector<1x64xf32>
    %207 = tpu.matmul %206, %205, %cst_44 {dimension_numbers = #tpu.dot_dimension_numbers<[1], [0], [0], [1], [0, 0, 1, 1], [], []>} : vector<1x16xf32>, vector<16x64xf32>, vector<1x64xf32> -> vector<1x64xf32>
    %208 = tpu.concatenate %90, %103, %116, %129, %142, %155, %168, %181, %194, %207 in 0 : vector<1x64xf32>, vector<1x64xf32>, vector<1x64xf32>, vector<1x64xf32>, vector<1x64xf32>, vector<1x64xf32>, vector<1x64xf32>, vector<1x64xf32>, vector<1x64xf32>, vector<1x64xf32> -> vector<10x64xf32>
    %c0_45 = arith.constant 0 : index
    %c0_46 = arith.constant 0 : index
    %209 = vector.load %arg10[%c0_45, %c0_46] : memref<1x64xf32, #tpu.memory_space<vmem>>, vector<1x64xf32>
    %210 = vector.broadcast %209 : vector<1x64xf32> to vector<10x64xf32>
    %211 = arith.mulf %210, %53 : vector<10x64xf32>
    %212 = arith.addf %208, %211 : vector<10x64xf32>
    %213 = arith.negf %18 : vector<10x64xf32>
    %214 = math.exp %213 : vector<10x64xf32>
    %cst_47 = arith.constant 1.000000e+00 : f32
    %215 = vector.broadcast %cst_47 : f32 to vector<10x64xf32>
    %216 = arith.addf %215, %214 : vector<10x64xf32>
    %217 = arith.divf %215, %216 : vector<10x64xf32>
    %218 = arith.mulf %18, %217 : vector<10x64xf32>
    %219 = arith.mulf %212, %218 : vector<10x64xf32>
    %c0_48 = arith.constant 0 : index
    %c0_49 = arith.constant 0 : index
    %220 = vector.load %arg11[%c0_48, %c0_49] : memref<64x32xf32, #tpu.memory_space<vmem>>, vector<64x32xf32>
    %cst_50 = arith.constant dense<0.000000e+00> : vector<10x32xf32>
    %221 = tpu.matmul %219, %220, %cst_50 {dimension_numbers = #tpu.dot_dimension_numbers<[1], [0], [0], [1], [0, 0, 1, 1], [], []>} : vector<10x64xf32>, vector<64x32xf32>, vector<10x32xf32> -> vector<10x32xf32>
    %222 = arith.addf %1, %221 : vector<10x32xf32>
    %223 = arith.mulf %222, %222 : vector<10x32xf32>
    %cst_51 = arith.constant dense<0.000000e+00> : vector<10xf32>
    %224 = vector.multi_reduction <add>, %223, %cst_51 [1] : vector<10x32xf32> to vector<10xf32>
    %225 = vector.shape_cast %224 : vector<10xf32> to vector<10x1xf32>
    %cst_52 = arith.constant 3.200000e+01 : f32
    %226 = vector.broadcast %cst_52 : f32 to vector<10x1xf32>
    %227 = arith.divf %225, %226 : vector<10x1xf32>
    %cst_53 = arith.constant 9.99999997E-7 : f32
    %228 = vector.broadcast %cst_53 : f32 to vector<10x1xf32>
    %229 = arith.addf %227, %228 : vector<10x1xf32>
    %230 = math.rsqrt %229 : vector<10x1xf32>
    %231 = vector.broadcast %230 : vector<10x1xf32> to vector<10x32xf32>
    %232 = arith.mulf %222, %231 : vector<10x32xf32>
    %c0_54 = arith.constant 0 : index
    %c0_55 = arith.constant 0 : index
    %233 = vector.load %arg12[%c0_54, %c0_55] : memref<1x32xf32, #tpu.memory_space<vmem>>, vector<1x32xf32>
    %234 = vector.broadcast %233 : vector<1x32xf32> to vector<10x32xf32>
    %235 = arith.mulf %232, %234 : vector<10x32xf32>
    %c0_56 = arith.constant 0 : index
    %c0_57 = arith.constant 0 : index
    %236 = vector.load %arg13[%c0_56, %c0_57] : memref<32x128xf32, #tpu.memory_space<vmem>>, vector<32x128xf32>
    %cst_58 = arith.constant dense<0.000000e+00> : vector<10x128xf32>
    %237 = tpu.matmul %235, %236, %cst_58 {dimension_numbers = #tpu.dot_dimension_numbers<[1], [0], [0], [1], [0, 0, 1, 1], [], []>} : vector<10x32xf32>, vector<32x128xf32>, vector<10x128xf32> -> vector<10x128xf32>
    %238 = vector.extract_strided_slice %237 {offsets = [0, 0], sizes = [10, 64], strides = [1, 1]} : vector<10x128xf32> to vector<10x64xf32>
    %239 = vector.extract_strided_slice %237 {offsets = [0, 64], sizes = [10, 64], strides = [1, 1]} : vector<10x128xf32> to vector<10x64xf32>
    %240 = arith.negf %238 : vector<10x64xf32>
    %241 = math.exp %240 : vector<10x64xf32>
    %cst_59 = arith.constant 1.000000e+00 : f32
    %242 = vector.broadcast %cst_59 : f32 to vector<10x64xf32>
    %243 = arith.addf %242, %241 : vector<10x64xf32>
    %244 = arith.divf %242, %243 : vector<10x64xf32>
    %245 = arith.mulf %238, %244 : vector<10x64xf32>
    %246 = arith.mulf %245, %239 : vector<10x64xf32>
    %c0_60 = arith.constant 0 : index
    %c0_61 = arith.constant 0 : index
    %247 = vector.load %arg14[%c0_60, %c0_61] : memref<64x32xf32, #tpu.memory_space<vmem>>, vector<64x32xf32>
    %cst_62 = arith.constant dense<0.000000e+00> : vector<10x32xf32>
    %248 = tpu.matmul %246, %247, %cst_62 {dimension_numbers = #tpu.dot_dimension_numbers<[1], [0], [0], [1], [0, 0, 1, 1], [], []>} : vector<10x64xf32>, vector<64x32xf32>, vector<10x32xf32> -> vector<10x32xf32>
    %249 = arith.addf %222, %248 : vector<10x32xf32>
    %c0_63 = arith.constant 0 : index
    %c0_64 = arith.constant 0 : index
    %c0_65 = arith.constant 0 : index
    %250 = vector.load %arg15[%c0_63, %c0_64, %c0_65] : memref<1x10x32xf32, #tpu.memory_space<vmem>>, vector<1x10x32xf32>
    %251 = vector.shape_cast %250 : vector<1x10x32xf32> to vector<10x32xf32>
    %252 = vector.shape_cast %249 : vector<10x32xf32> to vector<1x10x32xf32>
    tpu.vector_store %arg15[%c0_63, %c0_64, %c0_65], %252 {strides = array<i32>} : memref<1x10x32xf32, #tpu.memory_space<vmem>>, vector<1x10x32xf32>,
    return
  }
  func.func @transform_0(%arg0: i32) -> (i32, i32, i32) {
    %c0_i32 = arith.constant 0 : i32
    %c0_i32_0 = arith.constant 0 : i32
    %c0_i32_1 = arith.constant 0 : i32
    return %arg0, %c0_i32, %c0_i32_0 : i32, i32, i32
  }
  func.func @transform_1(%arg0: i32) -> (i32, i32) {
    %c0_i32 = arith.constant 0 : i32
    %c0_i32_0 = arith.constant 0 : i32
    %c0_i32_1 = arith.constant 0 : i32
    return %c0_i32, %c0_i32_0 : i32, i32
  }
  func.func @transform_2(%arg0: i32) -> (i32, i32) {
    %c0_i32 = arith.constant 0 : i32
    %c0_i32_0 = arith.constant 0 : i32
    %c0_i32_1 = arith.constant 0 : i32
    return %c0_i32, %c0_i32_0 : i32, i32
  }
  func.func @transform_3(%arg0: i32) -> (i32, i32) {
    %c0_i32 = arith.constant 0 : i32
    %c0_i32_0 = arith.constant 0 : i32
    %c0_i32_1 = arith.constant 0 : i32
    return %c0_i32, %c0_i32_0 : i32, i32
  }
  func.func @transform_4(%arg0: i32) -> (i32, i32) {
    %c0_i32 = arith.constant 0 : i32
    %c0_i32_0 = arith.constant 0 : i32
    %c0_i32_1 = arith.constant 0 : i32
    return %c0_i32, %c0_i32_0 : i32, i32
  }
  func.func @transform_5(%arg0: i32) -> (i32, i32) {
    %c0_i32 = arith.constant 0 : i32
    %c0_i32_0 = arith.constant 0 : i32
    %c0_i32_1 = arith.constant 0 : i32
    return %c0_i32, %c0_i32_0 : i32, i32
  }
  func.func @transform_6(%arg0: i32) -> (i32, i32) {
    %c0_i32 = arith.constant 0 : i32
    %c0_i32_0 = arith.constant 0 : i32
    %c0_i32_1 = arith.constant 0 : i32
    return %c0_i32, %c0_i32_0 : i32, i32
  }
  func.func @transform_7(%arg0: i32) -> (i32, i32) {
    %c0_i32 = arith.constant 0 : i32
    %c0_i32_0 = arith.constant 0 : i32
    %c0_i32_1 = arith.constant 0 : i32
    return %c0_i32, %c0_i32_0 : i32, i32
  }
  func.func @transform_8(%arg0: i32) -> (i32, i32) {
    %c0_i32 = arith.constant 0 : i32
    %c0_i32_0 = arith.constant 0 : i32
    %c0_i32_1 = arith.constant 0 : i32
    return %c0_i32, %c0_i32_0 : i32, i32
  }
  func.func @transform_9(%arg0: i32) -> (i32, i32) {
    %c0_i32 = arith.constant 0 : i32
    %c0_i32_0 = arith.constant 0 : i32
    %c0_i32_1 = arith.constant 0 : i32
    return %c0_i32, %c0_i32_0 : i32, i32
  }
  func.func @transform_10(%arg0: i32) -> (i32, i32) {
    %c0_i32 = arith.constant 0 : i32
    %c0_i32_0 = arith.constant 0 : i32
    %c0_i32_1 = arith.constant 0 : i32
    return %c0_i32, %c0_i32_0 : i32, i32
  }
  func.func @transform_11(%arg0: i32) -> (i32, i32) {
    %c0_i32 = arith.constant 0 : i32
    %c0_i32_0 = arith.constant 0 : i32
    %c0_i32_1 = arith.constant 0 : i32
    return %c0_i32, %c0_i32_0 : i32, i32
  }
  func.func @transform_12(%arg0: i32) -> (i32, i32) {
    %c0_i32 = arith.constant 0 : i32
    %c0_i32_0 = arith.constant 0 : i32
    %c0_i32_1 = arith.constant 0 : i32
    return %c0_i32, %c0_i32_0 : i32, i32
  }
  func.func @transform_13(%arg0: i32) -> (i32, i32) {
    %c0_i32 = arith.constant 0 : i32
    %c0_i32_0 = arith.constant 0 : i32
    %c0_i32_1 = arith.constant 0 : i32
    return %c0_i32, %c0_i32_0 : i32, i32
  }
  func.func @transform_14(%arg0: i32) -> (i32, i32, i32) {
    %c0_i32 = arith.constant 0 : i32
    %c0_i32_0 = arith.constant 0 : i32
    %c0_i32_1 = arith.constant 0 : i32
    return %arg0, %c0_i32, %c0_i32_0 : i32, i32, i32
  }
}

module attributes {stable_mosaic.version = 11 : i64} {
  func.func @_attn_layer_kernel(%arg0: i32, %arg1: memref<1x10x32xf32, #tpu.memory_space<vmem>>, %arg2: memref<1x32xf32, #tpu.memory_space<vmem>>, %arg3: memref<32x96xf32, #tpu.memory_space<vmem>>, %arg4: memref<32x32xf32, #tpu.memory_space<vmem>>, %arg5: memref<1x32xf32, #tpu.memory_space<vmem>>, %arg6: memref<32x128xf32, #tpu.memory_space<vmem>>, %arg7: memref<64x32xf32, #tpu.memory_space<vmem>>, %arg8: memref<1x10x32xf32, #tpu.memory_space<vmem>>) attributes {dimension_semantics = [#tpu.dimension_semantics<parallel>], iteration_bounds = array<i64: 2>, scalar_prefetch = 0 : i64, scratch_operands = 0 : i64, tpu.core_type = #tpu.core_type<tc>, window_params = [{transform_indices = @transform_0, window_bounds = array<i64: 1, 10, 32>}, {pipeline_mode = #tpu.pipeline_mode<synchronous>, transform_indices = @transform_1, window_bounds = array<i64: 1, 32>}, {pipeline_mode = #tpu.pipeline_mode<synchronous>, transform_indices = @transform_2, window_bounds = array<i64: 32, 96>}, {pipeline_mode = #tpu.pipeline_mode<synchronous>, transform_indices = @transform_3, window_bounds = array<i64: 32, 32>}, {pipeline_mode = #tpu.pipeline_mode<synchronous>, transform_indices = @transform_4, window_bounds = array<i64: 1, 32>}, {pipeline_mode = #tpu.pipeline_mode<synchronous>, transform_indices = @transform_5, window_bounds = array<i64: 32, 128>}, {pipeline_mode = #tpu.pipeline_mode<synchronous>, transform_indices = @transform_6, window_bounds = array<i64: 64, 32>}, {transform_indices = @transform_7, window_bounds = array<i64: 1, 10, 32>}]} {
    %c0 = arith.constant 0 : index
    %c0_0 = arith.constant 0 : index
    %c0_1 = arith.constant 0 : index
    %0 = vector.load %arg1[%c0, %c0_0, %c0_1] : memref<1x10x32xf32, #tpu.memory_space<vmem>>, vector<1x10x32xf32>
    %1 = vector.shape_cast %0 : vector<1x10x32xf32> to vector<10x32xf32>
    %2 = arith.mulf %1, %1 : vector<10x32xf32>
    %cst = arith.constant dense<0.000000e+00> : vector<10xf32>
    %3 = vector.multi_reduction <add>, %2, %cst [1] : vector<10x32xf32> to vector<10xf32>
    %4 = vector.shape_cast %3 : vector<10xf32> to vector<10x1xf32>
    %cst_2 = arith.constant 3.200000e+01 : f32
    %5 = vector.broadcast %cst_2 : f32 to vector<10x1xf32>
    %6 = arith.divf %4, %5 : vector<10x1xf32>
    %cst_3 = arith.constant 9.99999997E-7 : f32
    %7 = vector.broadcast %cst_3 : f32 to vector<10x1xf32>
    %8 = arith.addf %6, %7 : vector<10x1xf32>
    %9 = math.rsqrt %8 : vector<10x1xf32>
    %10 = vector.broadcast %9 : vector<10x1xf32> to vector<10x32xf32>
    %11 = arith.mulf %1, %10 : vector<10x32xf32>
    %c0_4 = arith.constant 0 : index
    %c0_5 = arith.constant 0 : index
    %12 = vector.load %arg2[%c0_4, %c0_5] : memref<1x32xf32, #tpu.memory_space<vmem>>, vector<1x32xf32>
    %13 = vector.broadcast %12 : vector<1x32xf32> to vector<10x32xf32>
    %14 = arith.mulf %11, %13 : vector<10x32xf32>
    %c0_6 = arith.constant 0 : index
    %c0_7 = arith.constant 0 : index
    %15 = vector.load %arg3[%c0_6, %c0_7] : memref<32x96xf32, #tpu.memory_space<vmem>>, vector<32x96xf32>
    %cst_8 = arith.constant dense<0.000000e+00> : vector<10x96xf32>
    %16 = tpu.matmul %14, %15, %cst_8 {dimension_numbers = #tpu.dot_dimension_numbers<[1], [0], [0], [1], [0, 0, 1, 1], [], []>} : vector<10x32xf32>, vector<32x96xf32>, vector<10x96xf32> -> vector<10x96xf32>
    %17 = tpu.iota {dimensions = array<i32: 0>} : vector<10x10xi32>
    %18 = tpu.iota {dimensions = array<i32: 1>} : vector<10x10xi32>
    %19 = arith.cmpi sle, %18, %17 : vector<10x10xi32>
    %cst_9 = arith.constant 0.000000e+00 : f32
    %20 = vector.broadcast %cst_9 : f32 to vector<10x32xf32>
    %21 = vector.extract_strided_slice %16 {offsets = [0, 0], sizes = [10, 8], strides = [1, 1]} : vector<10x96xf32> to vector<10x8xf32>
    %22 = vector.extract_strided_slice %16 {offsets = [0, 32], sizes = [10, 8], strides = [1, 1]} : vector<10x96xf32> to vector<10x8xf32>
    %23 = vector.extract_strided_slice %16 {offsets = [0, 64], sizes = [10, 8], strides = [1, 1]} : vector<10x96xf32> to vector<10x8xf32>
    %cst_10 = arith.constant dense<0.000000e+00> : vector<10x10xf32>
    %24 = tpu.matmul %21, %22, %cst_10 {dimension_numbers = #tpu.dot_dimension_numbers<[1], [1], [0], [0], [0, 0, 1, 0], [], []>} : vector<10x8xf32>, vector<10x8xf32>, vector<10x10xf32> -> vector<10x10xf32>
    %cst_11 = arith.constant 0.353553385 : f32
    %25 = vector.broadcast %cst_11 : f32 to vector<10x10xf32>
    %26 = arith.mulf %24, %25 : vector<10x10xf32>
    %cst_12 = arith.constant -1.000000e+30 : f32
    %27 = vector.broadcast %cst_12 : f32 to vector<10x10xf32>
    %28 = arith.select %19, %26, %27 : vector<10x10xi1>, vector<10x10xf32>
    %cst_13 = arith.constant dense<0xFF800000> : vector<10xf32>
    %29 = vector.multi_reduction <maximumf>, %28, %cst_13 [1] : vector<10x10xf32> to vector<10xf32>
    %30 = vector.shape_cast %29 : vector<10xf32> to vector<10x1xf32>
    %31 = vector.broadcast %30 : vector<10x1xf32> to vector<10x10xf32>
    %32 = arith.subf %28, %31 : vector<10x10xf32>
    %33 = math.exp %32 : vector<10x10xf32>
    %cst_14 = arith.constant dense<0.000000e+00> : vector<10xf32>
    %34 = vector.multi_reduction <add>, %33, %cst_14 [1] : vector<10x10xf32> to vector<10xf32>
    %35 = vector.shape_cast %34 : vector<10xf32> to vector<10x1xf32>
    %cst_15 = arith.constant dense<0.000000e+00> : vector<10x8xf32>
    %36 = tpu.matmul %33, %23, %cst_15 {dimension_numbers = #tpu.dot_dimension_numbers<[1], [0], [0], [1], [0, 0, 1, 1], [], []>} : vector<10x10xf32>, vector<10x8xf32>, vector<10x8xf32> -> vector<10x8xf32>
    %37 = tpu.reciprocal %35 {approx = true} : vector<10x1xf32> -> vector<10x1xf32>
    %38 = vector.broadcast %37 : vector<10x1xf32> to vector<10x8xf32>
    %39 = arith.mulf %36, %38 : vector<10x8xf32>
    %c0_16 = arith.constant 0 : index
    %c0_17 = arith.constant 0 : index
    %40 = vector.load %arg4[%c0_16, %c0_17] : memref<32x32xf32, #tpu.memory_space<vmem>>, vector<8x32xf32>
    %cst_18 = arith.constant dense<0.000000e+00> : vector<10x32xf32>
    %41 = tpu.matmul %39, %40, %cst_18 {dimension_numbers = #tpu.dot_dimension_numbers<[1], [0], [0], [1], [0, 0, 1, 1], [], []>} : vector<10x8xf32>, vector<8x32xf32>, vector<10x32xf32> -> vector<10x32xf32>
    %42 = arith.addf %20, %41 : vector<10x32xf32>
    %43 = vector.extract_strided_slice %16 {offsets = [0, 8], sizes = [10, 8], strides = [1, 1]} : vector<10x96xf32> to vector<10x8xf32>
    %44 = vector.extract_strided_slice %16 {offsets = [0, 40], sizes = [10, 8], strides = [1, 1]} : vector<10x96xf32> to vector<10x8xf32>
    %45 = vector.extract_strided_slice %16 {offsets = [0, 72], sizes = [10, 8], strides = [1, 1]} : vector<10x96xf32> to vector<10x8xf32>
    %cst_19 = arith.constant dense<0.000000e+00> : vector<10x10xf32>
    %46 = tpu.matmul %43, %44, %cst_19 {dimension_numbers = #tpu.dot_dimension_numbers<[1], [1], [0], [0], [0, 0, 1, 0], [], []>} : vector<10x8xf32>, vector<10x8xf32>, vector<10x10xf32> -> vector<10x10xf32>
    %cst_20 = arith.constant 0.353553385 : f32
    %47 = vector.broadcast %cst_20 : f32 to vector<10x10xf32>
    %48 = arith.mulf %46, %47 : vector<10x10xf32>
    %cst_21 = arith.constant -1.000000e+30 : f32
    %49 = vector.broadcast %cst_21 : f32 to vector<10x10xf32>
    %50 = arith.select %19, %48, %49 : vector<10x10xi1>, vector<10x10xf32>
    %cst_22 = arith.constant dense<0xFF800000> : vector<10xf32>
    %51 = vector.multi_reduction <maximumf>, %50, %cst_22 [1] : vector<10x10xf32> to vector<10xf32>
    %52 = vector.shape_cast %51 : vector<10xf32> to vector<10x1xf32>
    %53 = vector.broadcast %52 : vector<10x1xf32> to vector<10x10xf32>
    %54 = arith.subf %50, %53 : vector<10x10xf32>
    %55 = math.exp %54 : vector<10x10xf32>
    %cst_23 = arith.constant dense<0.000000e+00> : vector<10xf32>
    %56 = vector.multi_reduction <add>, %55, %cst_23 [1] : vector<10x10xf32> to vector<10xf32>
    %57 = vector.shape_cast %56 : vector<10xf32> to vector<10x1xf32>
    %cst_24 = arith.constant dense<0.000000e+00> : vector<10x8xf32>
    %58 = tpu.matmul %55, %45, %cst_24 {dimension_numbers = #tpu.dot_dimension_numbers<[1], [0], [0], [1], [0, 0, 1, 1], [], []>} : vector<10x10xf32>, vector<10x8xf32>, vector<10x8xf32> -> vector<10x8xf32>
    %59 = tpu.reciprocal %57 {approx = true} : vector<10x1xf32> -> vector<10x1xf32>
    %60 = vector.broadcast %59 : vector<10x1xf32> to vector<10x8xf32>
    %61 = arith.mulf %58, %60 : vector<10x8xf32>
    %c8 = arith.constant 8 : index
    %c0_25 = arith.constant 0 : index
    %62 = vector.load %arg4[%c8, %c0_25] : memref<32x32xf32, #tpu.memory_space<vmem>>, vector<8x32xf32>
    %cst_26 = arith.constant dense<0.000000e+00> : vector<10x32xf32>
    %63 = tpu.matmul %61, %62, %cst_26 {dimension_numbers = #tpu.dot_dimension_numbers<[1], [0], [0], [1], [0, 0, 1, 1], [], []>} : vector<10x8xf32>, vector<8x32xf32>, vector<10x32xf32> -> vector<10x32xf32>
    %64 = arith.addf %42, %63 : vector<10x32xf32>
    %65 = vector.extract_strided_slice %16 {offsets = [0, 16], sizes = [10, 8], strides = [1, 1]} : vector<10x96xf32> to vector<10x8xf32>
    %66 = vector.extract_strided_slice %16 {offsets = [0, 48], sizes = [10, 8], strides = [1, 1]} : vector<10x96xf32> to vector<10x8xf32>
    %67 = vector.extract_strided_slice %16 {offsets = [0, 80], sizes = [10, 8], strides = [1, 1]} : vector<10x96xf32> to vector<10x8xf32>
    %cst_27 = arith.constant dense<0.000000e+00> : vector<10x10xf32>
    %68 = tpu.matmul %65, %66, %cst_27 {dimension_numbers = #tpu.dot_dimension_numbers<[1], [1], [0], [0], [0, 0, 1, 0], [], []>} : vector<10x8xf32>, vector<10x8xf32>, vector<10x10xf32> -> vector<10x10xf32>
    %cst_28 = arith.constant 0.353553385 : f32
    %69 = vector.broadcast %cst_28 : f32 to vector<10x10xf32>
    %70 = arith.mulf %68, %69 : vector<10x10xf32>
    %cst_29 = arith.constant -1.000000e+30 : f32
    %71 = vector.broadcast %cst_29 : f32 to vector<10x10xf32>
    %72 = arith.select %19, %70, %71 : vector<10x10xi1>, vector<10x10xf32>
    %cst_30 = arith.constant dense<0xFF800000> : vector<10xf32>
    %73 = vector.multi_reduction <maximumf>, %72, %cst_30 [1] : vector<10x10xf32> to vector<10xf32>
    %74 = vector.shape_cast %73 : vector<10xf32> to vector<10x1xf32>
    %75 = vector.broadcast %74 : vector<10x1xf32> to vector<10x10xf32>
    %76 = arith.subf %72, %75 : vector<10x10xf32>
    %77 = math.exp %76 : vector<10x10xf32>
    %cst_31 = arith.constant dense<0.000000e+00> : vector<10xf32>
    %78 = vector.multi_reduction <add>, %77, %cst_31 [1] : vector<10x10xf32> to vector<10xf32>
    %79 = vector.shape_cast %78 : vector<10xf32> to vector<10x1xf32>
    %cst_32 = arith.constant dense<0.000000e+00> : vector<10x8xf32>
    %80 = tpu.matmul %77, %67, %cst_32 {dimension_numbers = #tpu.dot_dimension_numbers<[1], [0], [0], [1], [0, 0, 1, 1], [], []>} : vector<10x10xf32>, vector<10x8xf32>, vector<10x8xf32> -> vector<10x8xf32>
    %81 = tpu.reciprocal %79 {approx = true} : vector<10x1xf32> -> vector<10x1xf32>
    %82 = vector.broadcast %81 : vector<10x1xf32> to vector<10x8xf32>
    %83 = arith.mulf %80, %82 : vector<10x8xf32>
    %c16 = arith.constant 16 : index
    %c0_33 = arith.constant 0 : index
    %84 = vector.load %arg4[%c16, %c0_33] : memref<32x32xf32, #tpu.memory_space<vmem>>, vector<8x32xf32>
    %cst_34 = arith.constant dense<0.000000e+00> : vector<10x32xf32>
    %85 = tpu.matmul %83, %84, %cst_34 {dimension_numbers = #tpu.dot_dimension_numbers<[1], [0], [0], [1], [0, 0, 1, 1], [], []>} : vector<10x8xf32>, vector<8x32xf32>, vector<10x32xf32> -> vector<10x32xf32>
    %86 = arith.addf %64, %85 : vector<10x32xf32>
    %87 = vector.extract_strided_slice %16 {offsets = [0, 24], sizes = [10, 8], strides = [1, 1]} : vector<10x96xf32> to vector<10x8xf32>
    %88 = vector.extract_strided_slice %16 {offsets = [0, 56], sizes = [10, 8], strides = [1, 1]} : vector<10x96xf32> to vector<10x8xf32>
    %89 = vector.extract_strided_slice %16 {offsets = [0, 88], sizes = [10, 8], strides = [1, 1]} : vector<10x96xf32> to vector<10x8xf32>
    %cst_35 = arith.constant dense<0.000000e+00> : vector<10x10xf32>
    %90 = tpu.matmul %87, %88, %cst_35 {dimension_numbers = #tpu.dot_dimension_numbers<[1], [1], [0], [0], [0, 0, 1, 0], [], []>} : vector<10x8xf32>, vector<10x8xf32>, vector<10x10xf32> -> vector<10x10xf32>
    %cst_36 = arith.constant 0.353553385 : f32
    %91 = vector.broadcast %cst_36 : f32 to vector<10x10xf32>
    %92 = arith.mulf %90, %91 : vector<10x10xf32>
    %cst_37 = arith.constant -1.000000e+30 : f32
    %93 = vector.broadcast %cst_37 : f32 to vector<10x10xf32>
    %94 = arith.select %19, %92, %93 : vector<10x10xi1>, vector<10x10xf32>
    %cst_38 = arith.constant dense<0xFF800000> : vector<10xf32>
    %95 = vector.multi_reduction <maximumf>, %94, %cst_38 [1] : vector<10x10xf32> to vector<10xf32>
    %96 = vector.shape_cast %95 : vector<10xf32> to vector<10x1xf32>
    %97 = vector.broadcast %96 : vector<10x1xf32> to vector<10x10xf32>
    %98 = arith.subf %94, %97 : vector<10x10xf32>
    %99 = math.exp %98 : vector<10x10xf32>
    %cst_39 = arith.constant dense<0.000000e+00> : vector<10xf32>
    %100 = vector.multi_reduction <add>, %99, %cst_39 [1] : vector<10x10xf32> to vector<10xf32>
    %101 = vector.shape_cast %100 : vector<10xf32> to vector<10x1xf32>
    %cst_40 = arith.constant dense<0.000000e+00> : vector<10x8xf32>
    %102 = tpu.matmul %99, %89, %cst_40 {dimension_numbers = #tpu.dot_dimension_numbers<[1], [0], [0], [1], [0, 0, 1, 1], [], []>} : vector<10x10xf32>, vector<10x8xf32>, vector<10x8xf32> -> vector<10x8xf32>
    %103 = tpu.reciprocal %101 {approx = true} : vector<10x1xf32> -> vector<10x1xf32>
    %104 = vector.broadcast %103 : vector<10x1xf32> to vector<10x8xf32>
    %105 = arith.mulf %102, %104 : vector<10x8xf32>
    %c24 = arith.constant 24 : index
    %c0_41 = arith.constant 0 : index
    %106 = vector.load %arg4[%c24, %c0_41] : memref<32x32xf32, #tpu.memory_space<vmem>>, vector<8x32xf32>
    %cst_42 = arith.constant dense<0.000000e+00> : vector<10x32xf32>
    %107 = tpu.matmul %105, %106, %cst_42 {dimension_numbers = #tpu.dot_dimension_numbers<[1], [0], [0], [1], [0, 0, 1, 1], [], []>} : vector<10x8xf32>, vector<8x32xf32>, vector<10x32xf32> -> vector<10x32xf32>
    %108 = arith.addf %86, %107 : vector<10x32xf32>
    %109 = arith.addf %1, %108 : vector<10x32xf32>
    %110 = arith.mulf %109, %109 : vector<10x32xf32>
    %cst_43 = arith.constant dense<0.000000e+00> : vector<10xf32>
    %111 = vector.multi_reduction <add>, %110, %cst_43 [1] : vector<10x32xf32> to vector<10xf32>
    %112 = vector.shape_cast %111 : vector<10xf32> to vector<10x1xf32>
    %cst_44 = arith.constant 3.200000e+01 : f32
    %113 = vector.broadcast %cst_44 : f32 to vector<10x1xf32>
    %114 = arith.divf %112, %113 : vector<10x1xf32>
    %cst_45 = arith.constant 9.99999997E-7 : f32
    %115 = vector.broadcast %cst_45 : f32 to vector<10x1xf32>
    %116 = arith.addf %114, %115 : vector<10x1xf32>
    %117 = math.rsqrt %116 : vector<10x1xf32>
    %118 = vector.broadcast %117 : vector<10x1xf32> to vector<10x32xf32>
    %119 = arith.mulf %109, %118 : vector<10x32xf32>
    %c0_46 = arith.constant 0 : index
    %c0_47 = arith.constant 0 : index
    %120 = vector.load %arg5[%c0_46, %c0_47] : memref<1x32xf32, #tpu.memory_space<vmem>>, vector<1x32xf32>
    %121 = vector.broadcast %120 : vector<1x32xf32> to vector<10x32xf32>
    %122 = arith.mulf %119, %121 : vector<10x32xf32>
    %c0_48 = arith.constant 0 : index
    %c0_49 = arith.constant 0 : index
    %123 = vector.load %arg6[%c0_48, %c0_49] : memref<32x128xf32, #tpu.memory_space<vmem>>, vector<32x128xf32>
    %cst_50 = arith.constant dense<0.000000e+00> : vector<10x128xf32>
    %124 = tpu.matmul %122, %123, %cst_50 {dimension_numbers = #tpu.dot_dimension_numbers<[1], [0], [0], [1], [0, 0, 1, 1], [], []>} : vector<10x32xf32>, vector<32x128xf32>, vector<10x128xf32> -> vector<10x128xf32>
    %125 = vector.extract_strided_slice %124 {offsets = [0, 0], sizes = [10, 64], strides = [1, 1]} : vector<10x128xf32> to vector<10x64xf32>
    %126 = vector.extract_strided_slice %124 {offsets = [0, 64], sizes = [10, 64], strides = [1, 1]} : vector<10x128xf32> to vector<10x64xf32>
    %127 = arith.negf %125 : vector<10x64xf32>
    %128 = math.exp %127 : vector<10x64xf32>
    %cst_51 = arith.constant 1.000000e+00 : f32
    %129 = vector.broadcast %cst_51 : f32 to vector<10x64xf32>
    %130 = arith.addf %129, %128 : vector<10x64xf32>
    %131 = arith.divf %129, %130 : vector<10x64xf32>
    %132 = arith.mulf %125, %131 : vector<10x64xf32>
    %133 = arith.mulf %132, %126 : vector<10x64xf32>
    %c0_52 = arith.constant 0 : index
    %c0_53 = arith.constant 0 : index
    %134 = vector.load %arg7[%c0_52, %c0_53] : memref<64x32xf32, #tpu.memory_space<vmem>>, vector<64x32xf32>
    %cst_54 = arith.constant dense<0.000000e+00> : vector<10x32xf32>
    %135 = tpu.matmul %133, %134, %cst_54 {dimension_numbers = #tpu.dot_dimension_numbers<[1], [0], [0], [1], [0, 0, 1, 1], [], []>} : vector<10x64xf32>, vector<64x32xf32>, vector<10x32xf32> -> vector<10x32xf32>
    %136 = arith.addf %109, %135 : vector<10x32xf32>
    %c0_55 = arith.constant 0 : index
    %c0_56 = arith.constant 0 : index
    %c0_57 = arith.constant 0 : index
    %137 = vector.load %arg8[%c0_55, %c0_56, %c0_57] : memref<1x10x32xf32, #tpu.memory_space<vmem>>, vector<1x10x32xf32>
    %138 = vector.shape_cast %137 : vector<1x10x32xf32> to vector<10x32xf32>
    %139 = vector.shape_cast %136 : vector<10x32xf32> to vector<1x10x32xf32>
    tpu.vector_store %arg8[%c0_55, %c0_56, %c0_57], %139 {strides = array<i32>} : memref<1x10x32xf32, #tpu.memory_space<vmem>>, vector<1x10x32xf32>,
    return
  }
  func.func @transform_0(%arg0: i32) -> (i32, i32, i32) {
    %c0_i32 = arith.constant 0 : i32
    %c0_i32_0 = arith.constant 0 : i32
    %c0_i32_1 = arith.constant 0 : i32
    return %arg0, %c0_i32, %c0_i32_0 : i32, i32, i32
  }
  func.func @transform_1(%arg0: i32) -> (i32, i32) {
    %c0_i32 = arith.constant 0 : i32
    %c0_i32_0 = arith.constant 0 : i32
    %c0_i32_1 = arith.constant 0 : i32
    return %c0_i32, %c0_i32_0 : i32, i32
  }
  func.func @transform_2(%arg0: i32) -> (i32, i32) {
    %c0_i32 = arith.constant 0 : i32
    %c0_i32_0 = arith.constant 0 : i32
    %c0_i32_1 = arith.constant 0 : i32
    return %c0_i32, %c0_i32_0 : i32, i32
  }
  func.func @transform_3(%arg0: i32) -> (i32, i32) {
    %c0_i32 = arith.constant 0 : i32
    %c0_i32_0 = arith.constant 0 : i32
    %c0_i32_1 = arith.constant 0 : i32
    return %c0_i32, %c0_i32_0 : i32, i32
  }
  func.func @transform_4(%arg0: i32) -> (i32, i32) {
    %c0_i32 = arith.constant 0 : i32
    %c0_i32_0 = arith.constant 0 : i32
    %c0_i32_1 = arith.constant 0 : i32
    return %c0_i32, %c0_i32_0 : i32, i32
  }
  func.func @transform_5(%arg0: i32) -> (i32, i32) {
    %c0_i32 = arith.constant 0 : i32
    %c0_i32_0 = arith.constant 0 : i32
    %c0_i32_1 = arith.constant 0 : i32
    return %c0_i32, %c0_i32_0 : i32, i32
  }
  func.func @transform_6(%arg0: i32) -> (i32, i32) {
    %c0_i32 = arith.constant 0 : i32
    %c0_i32_0 = arith.constant 0 : i32
    %c0_i32_1 = arith.constant 0 : i32
    return %c0_i32, %c0_i32_0 : i32, i32
  }
  func.func @transform_7(%arg0: i32) -> (i32, i32, i32) {
    %c0_i32 = arith.constant 0 : i32
    %c0_i32_0 = arith.constant 0 : i32
    %c0_i32_1 = arith.constant 0 : i32
    return %arg0, %c0_i32, %c0_i32_0 : i32, i32, i32
  }
}

module attributes {stable_mosaic.version = 11 : i64} {
  func.func @_tail_kernel(%arg0: i32, %arg1: memref<1x10x32xf32, #tpu.memory_space<vmem>>, %arg2: memref<1x12x16xf32, #tpu.memory_space<vmem>>, %arg3: memref<32x32xf32, #tpu.memory_space<vmem>>, %arg4: memref<1x32xf32, #tpu.memory_space<vmem>>, %arg5: memref<16x64xf32, #tpu.memory_space<vmem>>, %arg6: memref<1x64xf32, #tpu.memory_space<vmem>>, %arg7: memref<32x32xf32, #tpu.memory_space<vmem>>, %arg8: memref<1x32xf32, #tpu.memory_space<vmem>>, %arg9: memref<1x32xf32, #tpu.memory_space<vmem>>, %arg10: memref<1x32xf32, #tpu.memory_space<vmem>>, %arg11: memref<32x128xf32, #tpu.memory_space<vmem>>, %arg12: memref<1x128xf32, #tpu.memory_space<vmem>>, %arg13: memref<64x32xf32, #tpu.memory_space<vmem>>, %arg14: memref<1x32xf32, #tpu.memory_space<vmem>>, %arg15: memref<1x32xf32, #tpu.memory_space<vmem>>, %arg16: memref<1x32xf32, #tpu.memory_space<vmem>>, %arg17: memref<32x1xf32, #tpu.memory_space<vmem>>, %arg18: memref<1x1xf32, #tpu.memory_space<vmem>>, %arg19: memref<1x1x1xf32, #tpu.memory_space<vmem>>) attributes {dimension_semantics = [#tpu.dimension_semantics<parallel>], iteration_bounds = array<i64: 2>, scalar_prefetch = 0 : i64, scratch_operands = 0 : i64, tpu.core_type = #tpu.core_type<tc>, window_params = [{transform_indices = @transform_0, window_bounds = array<i64: 1, 10, 32>}, {transform_indices = @transform_1, window_bounds = array<i64: 1, 12, 16>}, {pipeline_mode = #tpu.pipeline_mode<synchronous>, transform_indices = @transform_2, window_bounds = array<i64: 32, 32>}, {pipeline_mode = #tpu.pipeline_mode<synchronous>, transform_indices = @transform_3, window_bounds = array<i64: 1, 32>}, {pipeline_mode = #tpu.pipeline_mode<synchronous>, transform_indices = @transform_4, window_bounds = array<i64: 16, 64>}, {pipeline_mode = #tpu.pipeline_mode<synchronous>, transform_indices = @transform_5, window_bounds = array<i64: 1, 64>}, {pipeline_mode = #tpu.pipeline_mode<synchronous>, transform_indices = @transform_6, window_bounds = array<i64: 32, 32>}, {pipeline_mode = #tpu.pipeline_mode<synchronous>, transform_indices = @transform_7, window_bounds = array<i64: 1, 32>}, {pipeline_mode = #tpu.pipeline_mode<synchronous>, transform_indices = @transform_8, window_bounds = array<i64: 1, 32>}, {pipeline_mode = #tpu.pipeline_mode<synchronous>, transform_indices = @transform_9, window_bounds = array<i64: 1, 32>}, {pipeline_mode = #tpu.pipeline_mode<synchronous>, transform_indices = @transform_10, window_bounds = array<i64: 32, 128>}, {pipeline_mode = #tpu.pipeline_mode<synchronous>, transform_indices = @transform_11, window_bounds = array<i64: 1, 128>}, {pipeline_mode = #tpu.pipeline_mode<synchronous>, transform_indices = @transform_12, window_bounds = array<i64: 64, 32>}, {pipeline_mode = #tpu.pipeline_mode<synchronous>, transform_indices = @transform_13, window_bounds = array<i64: 1, 32>}, {pipeline_mode = #tpu.pipeline_mode<synchronous>, transform_indices = @transform_14, window_bounds = array<i64: 1, 32>}, {pipeline_mode = #tpu.pipeline_mode<synchronous>, transform_indices = @transform_15, window_bounds = array<i64: 1, 32>}, {pipeline_mode = #tpu.pipeline_mode<synchronous>, transform_indices = @transform_16, window_bounds = array<i64: 32, 1>}, {pipeline_mode = #tpu.pipeline_mode<synchronous>, transform_indices = @transform_17, window_bounds = array<i64: 1, 1>}, {transform_indices = @transform_18, window_bounds = array<i64: 1, 1, 1>}]} {
    %c0 = arith.constant 0 : index
    %c0_0 = arith.constant 0 : index
    %c0_1 = arith.constant 0 : index
    %0 = vector.load %arg1[%c0, %c0_0, %c0_1] : memref<1x10x32xf32, #tpu.memory_space<vmem>>, vector<1x10x32xf32>
    %1 = vector.shape_cast %0 : vector<1x10x32xf32> to vector<10x32xf32>
    %c0_2 = arith.constant 0 : index
    %c0_3 = arith.constant 0 : index
    %c0_4 = arith.constant 0 : index
    %2 = vector.load %arg2[%c0_2, %c0_3, %c0_4] : memref<1x12x16xf32, #tpu.memory_space<vmem>>, vector<1x12x16xf32>
    %3 = vector.shape_cast %2 : vector<1x12x16xf32> to vector<12x16xf32>
    %cst = arith.constant dense<0.000000e+00> : vector<32xf32>
    %4 = vector.multi_reduction <add>, %1, %cst [0] : vector<10x32xf32> to vector<32xf32>
    %5 = vector.shape_cast %4 : vector<32xf32> to vector<1x32xf32>
    %cst_5 = arith.constant 1.000000e+01 : f32
    %6 = vector.broadcast %cst_5 : f32 to vector<1x32xf32>
    %7 = arith.divf %5, %6 : vector<1x32xf32>
    %c0_6 = arith.constant 0 : index
    %c0_7 = arith.constant 0 : index
    %8 = vector.load %arg3[%c0_6, %c0_7] : memref<32x32xf32, #tpu.memory_space<vmem>>, vector<32x32xf32>
    %cst_8 = arith.constant dense<0.000000e+00> : vector<1x32xf32>
    %9 = tpu.matmul %7, %8, %cst_8 {dimension_numbers = #tpu.dot_dimension_numbers<[1], [0], [0], [1], [0, 0, 1, 1], [], []>} : vector<1x32xf32>, vector<32x32xf32>, vector<1x32xf32> -> vector<1x32xf32>
    %c0_9 = arith.constant 0 : index
    %c0_10 = arith.constant 0 : index
    %10 = vector.load %arg4[%c0_9, %c0_10] : memref<1x32xf32, #tpu.memory_space<vmem>>, vector<1x32xf32>
    %11 = arith.addf %9, %10 : vector<1x32xf32>
    %c0_11 = arith.constant 0 : index
    %c0_12 = arith.constant 0 : index
    %12 = vector.load %arg5[%c0_11, %c0_12] : memref<16x64xf32, #tpu.memory_space<vmem>>, vector<16x64xf32>
    %cst_13 = arith.constant dense<0.000000e+00> : vector<12x64xf32>
    %13 = tpu.matmul %3, %12, %cst_13 {dimension_numbers = #tpu.dot_dimension_numbers<[1], [0], [0], [1], [0, 0, 1, 1], [], []>} : vector<12x16xf32>, vector<16x64xf32>, vector<12x64xf32> -> vector<12x64xf32>
    %c0_14 = arith.constant 0 : index
    %c0_15 = arith.constant 0 : index
    %14 = vector.load %arg6[%c0_14, %c0_15] : memref<1x64xf32, #tpu.memory_space<vmem>>, vector<1x64xf32>
    %15 = vector.broadcast %14 : vector<1x64xf32> to vector<12x64xf32>
    %16 = arith.addf %13, %15 : vector<12x64xf32>
    %17 = vector.extract_strided_slice %16 {offsets = [0, 0], sizes = [12, 32], strides = [1, 1]} : vector<12x64xf32> to vector<12x32xf32>
    %18 = vector.extract_strided_slice %16 {offsets = [0, 32], sizes = [12, 32], strides = [1, 1]} : vector<12x64xf32> to vector<12x32xf32>
    %cst_16 = arith.constant 0.000000e+00 : f32
    %19 = vector.broadcast %cst_16 : f32 to vector<1x32xf32>
    %20 = vector.extract_strided_slice %11 {offsets = [0, 0], sizes = [1, 8], strides = [1, 1]} : vector<1x32xf32> to vector<1x8xf32>
    %21 = vector.extract_strided_slice %17 {offsets = [0, 0], sizes = [12, 8], strides = [1, 1]} : vector<12x32xf32> to vector<12x8xf32>
    %22 = vector.extract_strided_slice %18 {offsets = [0, 0], sizes = [12, 8], strides = [1, 1]} : vector<12x32xf32> to vector<12x8xf32>
    %cst_17 = arith.constant dense<0.000000e+00> : vector<1x12xf32>
    %23 = tpu.matmul %20, %21, %cst_17 {dimension_numbers = #tpu.dot_dimension_numbers<[1], [1], [0], [0], [0, 0, 1, 0], [], []>} : vector<1x8xf32>, vector<12x8xf32>, vector<1x12xf32> -> vector<1x12xf32>
    %cst_18 = arith.constant 0.353553385 : f32
    %24 = vector.broadcast %cst_18 : f32 to vector<1x12xf32>
    %25 = arith.mulf %23, %24 : vector<1x12xf32>
    %cst_19 = arith.constant dense<0xFF800000> : vector<1xf32>
    %26 = vector.multi_reduction <maximumf>, %25, %cst_19 [1] : vector<1x12xf32> to vector<1xf32>
    %27 = vector.shape_cast %26 : vector<1xf32> to vector<1x1xf32>
    %28 = vector.broadcast %27 : vector<1x1xf32> to vector<1x12xf32>
    %29 = arith.subf %25, %28 : vector<1x12xf32>
    %30 = math.exp %29 : vector<1x12xf32>
    %cst_20 = arith.constant dense<0.000000e+00> : vector<1xf32>
    %31 = vector.multi_reduction <add>, %30, %cst_20 [1] : vector<1x12xf32> to vector<1xf32>
    %32 = vector.shape_cast %31 : vector<1xf32> to vector<1x1xf32>
    %cst_21 = arith.constant dense<0.000000e+00> : vector<1x8xf32>
    %33 = tpu.matmul %30, %22, %cst_21 {dimension_numbers = #tpu.dot_dimension_numbers<[1], [0], [0], [1], [0, 0, 1, 1], [], []>} : vector<1x12xf32>, vector<12x8xf32>, vector<1x8xf32> -> vector<1x8xf32>
    %34 = tpu.reciprocal %32 {approx = true} : vector<1x1xf32> -> vector<1x1xf32>
    %35 = vector.broadcast %34 : vector<1x1xf32> to vector<1x8xf32>
    %36 = arith.mulf %33, %35 : vector<1x8xf32>
    %c0_22 = arith.constant 0 : index
    %c0_23 = arith.constant 0 : index
    %37 = vector.load %arg7[%c0_22, %c0_23] : memref<32x32xf32, #tpu.memory_space<vmem>>, vector<8x32xf32>
    %cst_24 = arith.constant dense<0.000000e+00> : vector<1x32xf32>
    %38 = tpu.matmul %36, %37, %cst_24 {dimension_numbers = #tpu.dot_dimension_numbers<[1], [0], [0], [1], [0, 0, 1, 1], [], []>} : vector<1x8xf32>, vector<8x32xf32>, vector<1x32xf32> -> vector<1x32xf32>
    %39 = arith.addf %19, %38 : vector<1x32xf32>
    %40 = vector.extract_strided_slice %11 {offsets = [0, 8], sizes = [1, 8], strides = [1, 1]} : vector<1x32xf32> to vector<1x8xf32>
    %41 = vector.extract_strided_slice %17 {offsets = [0, 8], sizes = [12, 8], strides = [1, 1]} : vector<12x32xf32> to vector<12x8xf32>
    %42 = vector.extract_strided_slice %18 {offsets = [0, 8], sizes = [12, 8], strides = [1, 1]} : vector<12x32xf32> to vector<12x8xf32>
    %cst_25 = arith.constant dense<0.000000e+00> : vector<1x12xf32>
    %43 = tpu.matmul %40, %41, %cst_25 {dimension_numbers = #tpu.dot_dimension_numbers<[1], [1], [0], [0], [0, 0, 1, 0], [], []>} : vector<1x8xf32>, vector<12x8xf32>, vector<1x12xf32> -> vector<1x12xf32>
    %cst_26 = arith.constant 0.353553385 : f32
    %44 = vector.broadcast %cst_26 : f32 to vector<1x12xf32>
    %45 = arith.mulf %43, %44 : vector<1x12xf32>
    %cst_27 = arith.constant dense<0xFF800000> : vector<1xf32>
    %46 = vector.multi_reduction <maximumf>, %45, %cst_27 [1] : vector<1x12xf32> to vector<1xf32>
    %47 = vector.shape_cast %46 : vector<1xf32> to vector<1x1xf32>
    %48 = vector.broadcast %47 : vector<1x1xf32> to vector<1x12xf32>
    %49 = arith.subf %45, %48 : vector<1x12xf32>
    %50 = math.exp %49 : vector<1x12xf32>
    %cst_28 = arith.constant dense<0.000000e+00> : vector<1xf32>
    %51 = vector.multi_reduction <add>, %50, %cst_28 [1] : vector<1x12xf32> to vector<1xf32>
    %52 = vector.shape_cast %51 : vector<1xf32> to vector<1x1xf32>
    %cst_29 = arith.constant dense<0.000000e+00> : vector<1x8xf32>
    %53 = tpu.matmul %50, %42, %cst_29 {dimension_numbers = #tpu.dot_dimension_numbers<[1], [0], [0], [1], [0, 0, 1, 1], [], []>} : vector<1x12xf32>, vector<12x8xf32>, vector<1x8xf32> -> vector<1x8xf32>
    %54 = tpu.reciprocal %52 {approx = true} : vector<1x1xf32> -> vector<1x1xf32>
    %55 = vector.broadcast %54 : vector<1x1xf32> to vector<1x8xf32>
    %56 = arith.mulf %53, %55 : vector<1x8xf32>
    %c8 = arith.constant 8 : index
    %c0_30 = arith.constant 0 : index
    %57 = vector.load %arg7[%c8, %c0_30] : memref<32x32xf32, #tpu.memory_space<vmem>>, vector<8x32xf32>
    %cst_31 = arith.constant dense<0.000000e+00> : vector<1x32xf32>
    %58 = tpu.matmul %56, %57, %cst_31 {dimension_numbers = #tpu.dot_dimension_numbers<[1], [0], [0], [1], [0, 0, 1, 1], [], []>} : vector<1x8xf32>, vector<8x32xf32>, vector<1x32xf32> -> vector<1x32xf32>
    %59 = arith.addf %39, %58 : vector<1x32xf32>
    %60 = vector.extract_strided_slice %11 {offsets = [0, 16], sizes = [1, 8], strides = [1, 1]} : vector<1x32xf32> to vector<1x8xf32>
    %61 = vector.extract_strided_slice %17 {offsets = [0, 16], sizes = [12, 8], strides = [1, 1]} : vector<12x32xf32> to vector<12x8xf32>
    %62 = vector.extract_strided_slice %18 {offsets = [0, 16], sizes = [12, 8], strides = [1, 1]} : vector<12x32xf32> to vector<12x8xf32>
    %cst_32 = arith.constant dense<0.000000e+00> : vector<1x12xf32>
    %63 = tpu.matmul %60, %61, %cst_32 {dimension_numbers = #tpu.dot_dimension_numbers<[1], [1], [0], [0], [0, 0, 1, 0], [], []>} : vector<1x8xf32>, vector<12x8xf32>, vector<1x12xf32> -> vector<1x12xf32>
    %cst_33 = arith.constant 0.353553385 : f32
    %64 = vector.broadcast %cst_33 : f32 to vector<1x12xf32>
    %65 = arith.mulf %63, %64 : vector<1x12xf32>
    %cst_34 = arith.constant dense<0xFF800000> : vector<1xf32>
    %66 = vector.multi_reduction <maximumf>, %65, %cst_34 [1] : vector<1x12xf32> to vector<1xf32>
    %67 = vector.shape_cast %66 : vector<1xf32> to vector<1x1xf32>
    %68 = vector.broadcast %67 : vector<1x1xf32> to vector<1x12xf32>
    %69 = arith.subf %65, %68 : vector<1x12xf32>
    %70 = math.exp %69 : vector<1x12xf32>
    %cst_35 = arith.constant dense<0.000000e+00> : vector<1xf32>
    %71 = vector.multi_reduction <add>, %70, %cst_35 [1] : vector<1x12xf32> to vector<1xf32>
    %72 = vector.shape_cast %71 : vector<1xf32> to vector<1x1xf32>
    %cst_36 = arith.constant dense<0.000000e+00> : vector<1x8xf32>
    %73 = tpu.matmul %70, %62, %cst_36 {dimension_numbers = #tpu.dot_dimension_numbers<[1], [0], [0], [1], [0, 0, 1, 1], [], []>} : vector<1x12xf32>, vector<12x8xf32>, vector<1x8xf32> -> vector<1x8xf32>
    %74 = tpu.reciprocal %72 {approx = true} : vector<1x1xf32> -> vector<1x1xf32>
    %75 = vector.broadcast %74 : vector<1x1xf32> to vector<1x8xf32>
    %76 = arith.mulf %73, %75 : vector<1x8xf32>
    %c16 = arith.constant 16 : index
    %c0_37 = arith.constant 0 : index
    %77 = vector.load %arg7[%c16, %c0_37] : memref<32x32xf32, #tpu.memory_space<vmem>>, vector<8x32xf32>
    %cst_38 = arith.constant dense<0.000000e+00> : vector<1x32xf32>
    %78 = tpu.matmul %76, %77, %cst_38 {dimension_numbers = #tpu.dot_dimension_numbers<[1], [0], [0], [1], [0, 0, 1, 1], [], []>} : vector<1x8xf32>, vector<8x32xf32>, vector<1x32xf32> -> vector<1x32xf32>
    %79 = arith.addf %59, %78 : vector<1x32xf32>
    %80 = vector.extract_strided_slice %11 {offsets = [0, 24], sizes = [1, 8], strides = [1, 1]} : vector<1x32xf32> to vector<1x8xf32>
    %81 = vector.extract_strided_slice %17 {offsets = [0, 24], sizes = [12, 8], strides = [1, 1]} : vector<12x32xf32> to vector<12x8xf32>
    %82 = vector.extract_strided_slice %18 {offsets = [0, 24], sizes = [12, 8], strides = [1, 1]} : vector<12x32xf32> to vector<12x8xf32>
    %cst_39 = arith.constant dense<0.000000e+00> : vector<1x12xf32>
    %83 = tpu.matmul %80, %81, %cst_39 {dimension_numbers = #tpu.dot_dimension_numbers<[1], [1], [0], [0], [0, 0, 1, 0], [], []>} : vector<1x8xf32>, vector<12x8xf32>, vector<1x12xf32> -> vector<1x12xf32>
    %cst_40 = arith.constant 0.353553385 : f32
    %84 = vector.broadcast %cst_40 : f32 to vector<1x12xf32>
    %85 = arith.mulf %83, %84 : vector<1x12xf32>
    %cst_41 = arith.constant dense<0xFF800000> : vector<1xf32>
    %86 = vector.multi_reduction <maximumf>, %85, %cst_41 [1] : vector<1x12xf32> to vector<1xf32>
    %87 = vector.shape_cast %86 : vector<1xf32> to vector<1x1xf32>
    %88 = vector.broadcast %87 : vector<1x1xf32> to vector<1x12xf32>
    %89 = arith.subf %85, %88 : vector<1x12xf32>
    %90 = math.exp %89 : vector<1x12xf32>
    %cst_42 = arith.constant dense<0.000000e+00> : vector<1xf32>
    %91 = vector.multi_reduction <add>, %90, %cst_42 [1] : vector<1x12xf32> to vector<1xf32>
    %92 = vector.shape_cast %91 : vector<1xf32> to vector<1x1xf32>
    %cst_43 = arith.constant dense<0.000000e+00> : vector<1x8xf32>
    %93 = tpu.matmul %90, %82, %cst_43 {dimension_numbers = #tpu.dot_dimension_numbers<[1], [0], [0], [1], [0, 0, 1, 1], [], []>} : vector<1x12xf32>, vector<12x8xf32>, vector<1x8xf32> -> vector<1x8xf32>
    %94 = tpu.reciprocal %92 {approx = true} : vector<1x1xf32> -> vector<1x1xf32>
    %95 = vector.broadcast %94 : vector<1x1xf32> to vector<1x8xf32>
    %96 = arith.mulf %93, %95 : vector<1x8xf32>
    %c24 = arith.constant 24 : index
    %c0_44 = arith.constant 0 : index
    %97 = vector.load %arg7[%c24, %c0_44] : memref<32x32xf32, #tpu.memory_space<vmem>>, vector<8x32xf32>
    %cst_45 = arith.constant dense<0.000000e+00> : vector<1x32xf32>
    %98 = tpu.matmul %96, %97, %cst_45 {dimension_numbers = #tpu.dot_dimension_numbers<[1], [0], [0], [1], [0, 0, 1, 1], [], []>} : vector<1x8xf32>, vector<8x32xf32>, vector<1x32xf32> -> vector<1x32xf32>
    %99 = arith.addf %79, %98 : vector<1x32xf32>
    %c0_46 = arith.constant 0 : index
    %c0_47 = arith.constant 0 : index
    %100 = vector.load %arg8[%c0_46, %c0_47] : memref<1x32xf32, #tpu.memory_space<vmem>>, vector<1x32xf32>
    %101 = arith.addf %99, %100 : vector<1x32xf32>
    %102 = arith.addf %101, %7 : vector<1x32xf32>
    %cst_48 = arith.constant dense<0.000000e+00> : vector<1xf32>
    %103 = vector.multi_reduction <add>, %102, %cst_48 [1] : vector<1x32xf32> to vector<1xf32>
    %104 = vector.shape_cast %103 : vector<1xf32> to vector<1x1xf32>
    %cst_49 = arith.constant 3.200000e+01 : f32
    %105 = vector.broadcast %cst_49 : f32 to vector<1x1xf32>
    %106 = arith.divf %104, %105 : vector<1x1xf32>
    %107 = vector.broadcast %106 : vector<1x1xf32> to vector<1x32xf32>
    %108 = arith.subf %102, %107 : vector<1x32xf32>
    %109 = arith.mulf %108, %108 : vector<1x32xf32>
    %cst_50 = arith.constant dense<0.000000e+00> : vector<1xf32>
    %110 = vector.multi_reduction <add>, %109, %cst_50 [1] : vector<1x32xf32> to vector<1xf32>
    %111 = vector.shape_cast %110 : vector<1xf32> to vector<1x1xf32>
    %cst_51 = arith.constant 3.200000e+01 : f32
    %112 = vector.broadcast %cst_51 : f32 to vector<1x1xf32>
    %113 = arith.divf %111, %112 : vector<1x1xf32>
    %114 = vector.broadcast %106 : vector<1x1xf32> to vector<1x32xf32>
    %115 = arith.subf %102, %114 : vector<1x32xf32>
    %cst_52 = arith.constant 9.99999974E-6 : f32
    %116 = vector.broadcast %cst_52 : f32 to vector<1x1xf32>
    %117 = arith.addf %113, %116 : vector<1x1xf32>
    %118 = math.rsqrt %117 : vector<1x1xf32>
    %119 = vector.broadcast %118 : vector<1x1xf32> to vector<1x32xf32>
    %120 = arith.mulf %115, %119 : vector<1x32xf32>
    %c0_53 = arith.constant 0 : index
    %c0_54 = arith.constant 0 : index
    %121 = vector.load %arg9[%c0_53, %c0_54] : memref<1x32xf32, #tpu.memory_space<vmem>>, vector<1x32xf32>
    %122 = arith.mulf %120, %121 : vector<1x32xf32>
    %c0_55 = arith.constant 0 : index
    %c0_56 = arith.constant 0 : index
    %123 = vector.load %arg10[%c0_55, %c0_56] : memref<1x32xf32, #tpu.memory_space<vmem>>, vector<1x32xf32>
    %124 = arith.addf %122, %123 : vector<1x32xf32>
    %c0_57 = arith.constant 0 : index
    %c0_58 = arith.constant 0 : index
    %125 = vector.load %arg11[%c0_57, %c0_58] : memref<32x128xf32, #tpu.memory_space<vmem>>, vector<32x128xf32>
    %cst_59 = arith.constant dense<0.000000e+00> : vector<1x128xf32>
    %126 = tpu.matmul %124, %125, %cst_59 {dimension_numbers = #tpu.dot_dimension_numbers<[1], [0], [0], [1], [0, 0, 1, 1], [], []>} : vector<1x32xf32>, vector<32x128xf32>, vector<1x128xf32> -> vector<1x128xf32>
    %c0_60 = arith.constant 0 : index
    %c0_61 = arith.constant 0 : index
    %127 = vector.load %arg12[%c0_60, %c0_61] : memref<1x128xf32, #tpu.memory_space<vmem>>, vector<1x128xf32>
    %128 = arith.addf %126, %127 : vector<1x128xf32>
    %129 = vector.extract_strided_slice %128 {offsets = [0, 0], sizes = [1, 64], strides = [1, 1]} : vector<1x128xf32> to vector<1x64xf32>
    %130 = vector.extract_strided_slice %128 {offsets = [0, 64], sizes = [1, 64], strides = [1, 1]} : vector<1x128xf32> to vector<1x64xf32>
    %131 = arith.mulf %130, %130 : vector<1x64xf32>
    %132 = arith.mulf %130, %131 : vector<1x64xf32>
    %cst_62 = arith.constant 4.471500e-02 : f32
    %133 = vector.broadcast %cst_62 : f32 to vector<1x64xf32>
    %134 = arith.mulf %133, %132 : vector<1x64xf32>
    %135 = arith.addf %130, %134 : vector<1x64xf32>
    %cst_63 = arith.constant 0.797884583 : f32
    %136 = vector.broadcast %cst_63 : f32 to vector<1x64xf32>
    %137 = arith.mulf %136, %135 : vector<1x64xf32>
    %138 = math.tanh %137 : vector<1x64xf32>
    %cst_64 = arith.constant 1.000000e+00 : f32
    %139 = vector.broadcast %cst_64 : f32 to vector<1x64xf32>
    %140 = arith.addf %139, %138 : vector<1x64xf32>
    %cst_65 = arith.constant 5.000000e-01 : f32
    %141 = vector.broadcast %cst_65 : f32 to vector<1x64xf32>
    %142 = arith.mulf %141, %140 : vector<1x64xf32>
    %143 = arith.mulf %130, %142 : vector<1x64xf32>
    %144 = arith.mulf %129, %143 : vector<1x64xf32>
    %c0_66 = arith.constant 0 : index
    %c0_67 = arith.constant 0 : index
    %145 = vector.load %arg13[%c0_66, %c0_67] : memref<64x32xf32, #tpu.memory_space<vmem>>, vector<64x32xf32>
    %cst_68 = arith.constant dense<0.000000e+00> : vector<1x32xf32>
    %146 = tpu.matmul %144, %145, %cst_68 {dimension_numbers = #tpu.dot_dimension_numbers<[1], [0], [0], [1], [0, 0, 1, 1], [], []>} : vector<1x64xf32>, vector<64x32xf32>, vector<1x32xf32> -> vector<1x32xf32>
    %c0_69 = arith.constant 0 : index
    %c0_70 = arith.constant 0 : index
    %147 = vector.load %arg14[%c0_69, %c0_70] : memref<1x32xf32, #tpu.memory_space<vmem>>, vector<1x32xf32>
    %148 = arith.addf %146, %147 : vector<1x32xf32>
    %149 = arith.addf %102, %148 : vector<1x32xf32>
    %cst_71 = arith.constant dense<0.000000e+00> : vector<1xf32>
    %150 = vector.multi_reduction <add>, %149, %cst_71 [1] : vector<1x32xf32> to vector<1xf32>
    %151 = vector.shape_cast %150 : vector<1xf32> to vector<1x1xf32>
    %cst_72 = arith.constant 3.200000e+01 : f32
    %152 = vector.broadcast %cst_72 : f32 to vector<1x1xf32>
    %153 = arith.divf %151, %152 : vector<1x1xf32>
    %154 = vector.broadcast %153 : vector<1x1xf32> to vector<1x32xf32>
    %155 = arith.subf %149, %154 : vector<1x32xf32>
    %156 = arith.mulf %155, %155 : vector<1x32xf32>
    %cst_73 = arith.constant dense<0.000000e+00> : vector<1xf32>
    %157 = vector.multi_reduction <add>, %156, %cst_73 [1] : vector<1x32xf32> to vector<1xf32>
    %158 = vector.shape_cast %157 : vector<1xf32> to vector<1x1xf32>
    %cst_74 = arith.constant 3.200000e+01 : f32
    %159 = vector.broadcast %cst_74 : f32 to vector<1x1xf32>
    %160 = arith.divf %158, %159 : vector<1x1xf32>
    %161 = vector.broadcast %153 : vector<1x1xf32> to vector<1x32xf32>
    %162 = arith.subf %149, %161 : vector<1x32xf32>
    %cst_75 = arith.constant 9.99999974E-6 : f32
    %163 = vector.broadcast %cst_75 : f32 to vector<1x1xf32>
    %164 = arith.addf %160, %163 : vector<1x1xf32>
    %165 = math.rsqrt %164 : vector<1x1xf32>
    %166 = vector.broadcast %165 : vector<1x1xf32> to vector<1x32xf32>
    %167 = arith.mulf %162, %166 : vector<1x32xf32>
    %c0_76 = arith.constant 0 : index
    %c0_77 = arith.constant 0 : index
    %168 = vector.load %arg15[%c0_76, %c0_77] : memref<1x32xf32, #tpu.memory_space<vmem>>, vector<1x32xf32>
    %169 = arith.mulf %167, %168 : vector<1x32xf32>
    %c0_78 = arith.constant 0 : index
    %c0_79 = arith.constant 0 : index
    %170 = vector.load %arg16[%c0_78, %c0_79] : memref<1x32xf32, #tpu.memory_space<vmem>>, vector<1x32xf32>
    %171 = arith.addf %169, %170 : vector<1x32xf32>
    %c0_80 = arith.constant 0 : index
    %c0_81 = arith.constant 0 : index
    %172 = vector.load %arg17[%c0_80, %c0_81] : memref<32x1xf32, #tpu.memory_space<vmem>>, vector<32x1xf32>
    %cst_82 = arith.constant dense<0.000000e+00> : vector<1x1xf32>
    %173 = tpu.matmul %171, %172, %cst_82 {dimension_numbers = #tpu.dot_dimension_numbers<[1], [0], [0], [1], [0, 0, 1, 1], [], []>} : vector<1x32xf32>, vector<32x1xf32>, vector<1x1xf32> -> vector<1x1xf32>
    %c0_83 = arith.constant 0 : index
    %c0_84 = arith.constant 0 : index
    %174 = vector.load %arg18[%c0_83, %c0_84] : memref<1x1xf32, #tpu.memory_space<vmem>>, vector<1x1xf32>
    %175 = arith.addf %173, %174 : vector<1x1xf32>
    %c0_85 = arith.constant 0 : index
    %c0_86 = arith.constant 0 : index
    %c0_87 = arith.constant 0 : index
    %176 = vector.load %arg19[%c0_85, %c0_86, %c0_87] : memref<1x1x1xf32, #tpu.memory_space<vmem>>, vector<1x1x1xf32>
    %177 = vector.shape_cast %176 : vector<1x1x1xf32> to vector<1x1xf32>
    %178 = vector.shape_cast %175 : vector<1x1xf32> to vector<1x1x1xf32>
    tpu.vector_store %arg19[%c0_85, %c0_86, %c0_87], %178 {strides = array<i32>} : memref<1x1x1xf32, #tpu.memory_space<vmem>>, vector<1x1x1xf32>,
    return
  }
  func.func @transform_0(%arg0: i32) -> (i32, i32, i32) {
    %c0_i32 = arith.constant 0 : i32
    %c0_i32_0 = arith.constant 0 : i32
    %c0_i32_1 = arith.constant 0 : i32
    return %arg0, %c0_i32, %c0_i32_0 : i32, i32, i32
  }
  func.func @transform_1(%arg0: i32) -> (i32, i32, i32) {
    %c0_i32 = arith.constant 0 : i32
    %c0_i32_0 = arith.constant 0 : i32
    %c0_i32_1 = arith.constant 0 : i32
    return %arg0, %c0_i32, %c0_i32_0 : i32, i32, i32
  }
  func.func @transform_2(%arg0: i32) -> (i32, i32) {
    %c0_i32 = arith.constant 0 : i32
    %c0_i32_0 = arith.constant 0 : i32
    %c0_i32_1 = arith.constant 0 : i32
    return %c0_i32, %c0_i32_0 : i32, i32
  }
  func.func @transform_3(%arg0: i32) -> (i32, i32) {
    %c0_i32 = arith.constant 0 : i32
    %c0_i32_0 = arith.constant 0 : i32
    %c0_i32_1 = arith.constant 0 : i32
    return %c0_i32, %c0_i32_0 : i32, i32
  }
  func.func @transform_4(%arg0: i32) -> (i32, i32) {
    %c0_i32 = arith.constant 0 : i32
    %c0_i32_0 = arith.constant 0 : i32
    %c0_i32_1 = arith.constant 0 : i32
    return %c0_i32, %c0_i32_0 : i32, i32
  }
  func.func @transform_5(%arg0: i32) -> (i32, i32) {
    %c0_i32 = arith.constant 0 : i32
    %c0_i32_0 = arith.constant 0 : i32
    %c0_i32_1 = arith.constant 0 : i32
    return %c0_i32, %c0_i32_0 : i32, i32
  }
  func.func @transform_6(%arg0: i32) -> (i32, i32) {
    %c0_i32 = arith.constant 0 : i32
    %c0_i32_0 = arith.constant 0 : i32
    %c0_i32_1 = arith.constant 0 : i32
    return %c0_i32, %c0_i32_0 : i32, i32
  }
  func.func @transform_7(%arg0: i32) -> (i32, i32) {
    %c0_i32 = arith.constant 0 : i32
    %c0_i32_0 = arith.constant 0 : i32
    %c0_i32_1 = arith.constant 0 : i32
    return %c0_i32, %c0_i32_0 : i32, i32
  }
  func.func @transform_8(%arg0: i32) -> (i32, i32) {
    %c0_i32 = arith.constant 0 : i32
    %c0_i32_0 = arith.constant 0 : i32
    %c0_i32_1 = arith.constant 0 : i32
    return %c0_i32, %c0_i32_0 : i32, i32
  }
  func.func @transform_9(%arg0: i32) -> (i32, i32) {
    %c0_i32 = arith.constant 0 : i32
    %c0_i32_0 = arith.constant 0 : i32
    %c0_i32_1 = arith.constant 0 : i32
    return %c0_i32, %c0_i32_0 : i32, i32
  }
  func.func @transform_10(%arg0: i32) -> (i32, i32) {
    %c0_i32 = arith.constant 0 : i32
    %c0_i32_0 = arith.constant 0 : i32
    %c0_i32_1 = arith.constant 0 : i32
    return %c0_i32, %c0_i32_0 : i32, i32
  }
  func.func @transform_11(%arg0: i32) -> (i32, i32) {
    %c0_i32 = arith.constant 0 : i32
    %c0_i32_0 = arith.constant 0 : i32
    %c0_i32_1 = arith.constant 0 : i32
    return %c0_i32, %c0_i32_0 : i32, i32
  }
  func.func @transform_12(%arg0: i32) -> (i32, i32) {
    %c0_i32 = arith.constant 0 : i32
    %c0_i32_0 = arith.constant 0 : i32
    %c0_i32_1 = arith.constant 0 : i32
    return %c0_i32, %c0_i32_0 : i32, i32
  }
  func.func @transform_13(%arg0: i32) -> (i32, i32) {
    %c0_i32 = arith.constant 0 : i32
    %c0_i32_0 = arith.constant 0 : i32
    %c0_i32_1 = arith.constant 0 : i32
    return %c0_i32, %c0_i32_0 : i32, i32
  }
  func.func @transform_14(%arg0: i32) -> (i32, i32) {
    %c0_i32 = arith.constant 0 : i32
    %c0_i32_0 = arith.constant 0 : i32
    %c0_i32_1 = arith.constant 0 : i32
    return %c0_i32, %c0_i32_0 : i32, i32
  }
  func.func @transform_15(%arg0: i32) -> (i32, i32) {
    %c0_i32 = arith.constant 0 : i32
    %c0_i32_0 = arith.constant 0 : i32
    %c0_i32_1 = arith.constant 0 : i32
    return %c0_i32, %c0_i32_0 : i32, i32
  }
  func.func @transform_16(%arg0: i32) -> (i32, i32) {
    %c0_i32 = arith.constant 0 : i32
    %c0_i32_0 = arith.constant 0 : i32
    %c0_i32_1 = arith.constant 0 : i32
    return %c0_i32, %c0_i32_0 : i32, i32
  }
  func.func @transform_17(%arg0: i32) -> (i32, i32) {
    %c0_i32 = arith.constant 0 : i32
    %c0_i32_0 = arith.constant 0 : i32
    %c0_i32_1 = arith.constant 0 : i32
    return %c0_i32, %c0_i32_0 : i32, i32
  }
  func.func @transform_18(%arg0: i32) -> (i32, i32, i32) {
    %c0_i32 = arith.constant 0 : i32
    %c0_i32_0 = arith.constant 0 : i32
    %c0_i32_1 = arith.constant 0 : i32
    return %arg0, %c0_i32, %c0_i32_0 : i32, i32, i32
  }
}

</mosaic_0001>

<llo_original>
// kernel: cross_jamba_both_forward.4
$region0: #{cross_jamba_both_forward.4}
  #allocation0 [shape = 'u32[]', space=smem, size = 0x4, offset = 0x4, fixed_abs, tag = 'smem constant byte address 0x4 - core index']
  #allocation1 [shape = 'u32[144,128]{1,0:T(1,128)}', space=vmem, size = 0x12000, scoped, tag = 'internal scratch']
  %s0 = inlined_call_operand.vmem [shape: f32[2,10,32], index: 0, kind: input, shape index: {}]
  %s1 = inlined_call_operand.vmem [shape: f32[1,32], index: 1, kind: input, shape index: {}]
  %s2 = inlined_call_operand.vmem [shape: f32[32,96], index: 2, kind: input, shape index: {}]
  %s3 = inlined_call_operand.vmem [shape: f32[32,32], index: 3, kind: input, shape index: {}]
  %s4 = inlined_call_operand.vmem [shape: f32[1,32], index: 4, kind: input, shape index: {}]
  %s5 = inlined_call_operand.vmem [shape: f32[32,128], index: 5, kind: input, shape index: {}]
  %s6 = inlined_call_operand.vmem [shape: f32[64,32], index: 6, kind: input, shape index: {}]
  %s7 = inlined_call_operand.vmem [shape: f32[2,10,32], index: 7, kind: output, shape index: {}]
  %s8 = sld [smem:[#allocation0]]
  $region61: #{cross_jamba_both_forward.4} parent=0
    _
  %s10 = ssub.s32 1, %s8
  %s11 = scalar_select 0, %s10, %s8
  loop: start=0, step=1, limit=4
  $region2: #{cross_jamba_both_forward.4} parent=0 // loop_pre_header
    _
  $region3: #{cross_jamba_both_forward.4} parent=0 // loop_header
    %s13 = sphi 0, %s17
    %p14 = scmp.ge.s32.totalorder %s13, 4
    %s23 = sphi 0, %s25
    %s26 = sphi 0, %s23
    %s27 = sphi 0, %s26
    %s43 = sphi 0, %s27
    %s47 = sphi 0, %s47
    %s49 = sphi 0, %s47
    %s50 = sphi 0, %s49
    %s64 = sphi 0, %s50
    %s68 = sphi 0, %s68
    %s70 = sphi 0, %s68
    %s71 = sphi 0, %s70
    %s85 = sphi 0, %s71
    %s89 = sphi 0, %s89
    %s91 = sphi 0, %s89
    %s92 = sphi 0, %s91
    %s106 = sphi 0, %s92
    %s110 = sphi 0, %s110
    %s112 = sphi 0, %s110
    %s113 = sphi 0, %s112
    %s127 = sphi 0, %s113
    %s131 = sphi 0, %s131
    %s133 = sphi 0, %s131
    %s134 = sphi 0, %s133
    %s148 = sphi 0, %s134
    %s152 = sphi 0, %s152
    %s154 = sphi 0, %s152
    %s155 = sphi 0, %s154
    %s169 = sphi 0, %s155
    %s175 = sphi 0, %s177
    %s178 = sphi 0, %s175
    %s179 = sphi 0, %s178
    %s195 = sphi 0, %s179
  $region4: #{cross_jamba_both_forward.4} parent=0 // loop_header_branch
    %16 = sbr.rel (%p14) target = $region8
  $region5: #{cross_jamba_both_forward.4} parent=0 // loop_body
    %s18 = ssub.s32 %s13, 1
    %s19 = ssub.s32 %s13, 2
    %s20 = sadd.s32 %s13, 1
    %s21 = ssub.s32 %s13, %s20
    %p22 = scmp.eq.s32.totalorder %s21, 0
    %s24 = sadd.s32 %s23, 1
    %s25 = scalar_select %p22, %s23, %s24
    %p28 = pneg %p22
    %p29 = scmp.eq.s32.totalorder %s13, 1
    %p30 = por %p28, %p29
    %p31 = scmp.ne.s32.totalorder %s23, %s26
    %p32 = scmp.eq.s32.totalorder %s13, 0
    %p33 = por %p31, %p32
    %p34 = scmp.ne.s32.totalorder %s23, %s26
    %p35 = scmp.eq.s32.totalorder %s18, 1
    %p36 = por %p34, %p35
    %p37 = scmp.ne.s32.totalorder %s26, %s27
    %p38 = scmp.eq.s32.totalorder %s18, 0
    %p39 = por %p37, %p38
    %p40 = scmp.ne.s32.totalorder %s26, %s27
    %p41 = scmp.eq.s32.totalorder %s19, 1
    %p42 = por %p40, %p41
    %p44 = scmp.ne.s32.totalorder %s27, %s43
    %p45 = scmp.eq.s32.totalorder %s19, 0
    %p46 = por %p44, %p45
    %s48 = sadd.s32 %s47, 1
    %p51 = scmp.eq.s32.totalorder %s13, 1
    %p52 = scmp.ne.s32.totalorder %s47, %s49
    %p53 = scmp.eq.s32.totalorder %s13, 0
    %p54 = por %p52, %p53
    %p55 = scmp.ne.s32.totalorder %s47, %s49
    %p56 = scmp.eq.s32.totalorder %s18, 1
    %p57 = por %p55, %p56
    %p58 = scmp.ne.s32.totalorder %s49, %s50
    %p59 = scmp.eq.s32.totalorder %s18, 0
    %p60 = por %p58, %p59
    %p61 = scmp.ne.s32.totalorder %s49, %s50
    %p62 = scmp.eq.s32.totalorder %s19, 1
    %p63 = por %p61, %p62
    %p65 = scmp.ne.s32.totalorder %s50, %s64
    %p66 = scmp.eq.s32.totalorder %s19, 0
    %p67 = por %p65, %p66
    %s69 = sadd.s32 %s68, 1
    %p72 = scmp.eq.s32.totalorder %s13, 1
    %p73 = scmp.ne.s32.totalorder %s68, %s70
    %p74 = scmp.eq.s32.totalorder %s13, 0
    %p75 = por %p73, %p74
    %p76 = scmp.ne.s32.totalorder %s68, %s70
    %p77 = scmp.eq.s32.totalorder %s18, 1
    %p78 = por %p76, %p77
    %p79 = scmp.ne.s32.totalorder %s70, %s71
    %p80 = scmp.eq.s32.totalorder %s18, 0
    %p81 = por %p79, %p80
    %p82 = scmp.ne.s32.totalorder %s70, %s71
    %p83 = scmp.eq.s32.totalorder %s19, 1
    %p84 = por %p82, %p83
    %p86 = scmp.ne.s32.totalorder %s71, %s85
    %p87 = scmp.eq.s32.totalorder %s19, 0
    %p88 = por %p86, %p87
    %s90 = sadd.s32 %s89, 1
    %p93 = scmp.eq.s32.totalorder %s13, 1
    %p94 = scmp.ne.s32.totalorder %s89, %s91
    %p95 = scmp.eq.s32.totalorder %s13, 0
    %p96 = por %p94, %p95
    %p97 = scmp.ne.s32.totalorder %s89, %s91
    %p98 = scmp.eq.s32.totalorder %s18, 1
    %p99 = por %p97, %p98
    %p100 = scmp.ne.s32.totalorder %s91, %s92
    %p101 = scmp.eq.s32.totalorder %s18, 0
    %p102 = por %p100, %p101
    %p103 = scmp.ne.s32.totalorder %s91, %s92
    %p104 = scmp.eq.s32.totalorder %s19, 1
    %p105 = por %p103, %p104
    %p107 = scmp.ne.s32.totalorder %s92, %s106
    %p108 = scmp.eq.s32.totalorder %s19, 0
    %p109 = por %p107, %p108
    %s111 = sadd.s32 %s110, 1
    %p114 = scmp.eq.s32.totalorder %s13, 1
    %p115 = scmp.ne.s32.totalorder %s110, %s112
    %p116 = scmp.eq.s32.totalorder %s13, 0
    %p117 = por %p115, %p116
    %p118 = scmp.ne.s32.totalorder %s110, %s112
    %p119 = scmp.eq.s32.totalorder %s18, 1
    %p120 = por %p118, %p119
    %p121 = scmp.ne.s32.totalorder %s112, %s113
    %p122 = scmp.eq.s32.totalorder %s18, 0
    %p123 = por %p121, %p122
    %p124 = scmp.ne.s32.totalorder %s112, %s113
    %p125 = scmp.eq.s32.totalorder %s19, 1
    %p126 = por %p124, %p125
    %p128 = scmp.ne.s32.totalorder %s113, %s127
    %p129 = scmp.eq.s32.totalorder %s19, 0
    %p130 = por %p128, %p129
    %s132 = sadd.s32 %s131, 1
    %p135 = scmp.eq.s32.totalorder %s13, 1
    %p136 = scmp.ne.s32.totalorder %s131, %s133
    %p137 = scmp.eq.s32.totalorder %s13, 0
    %p138 = por %p136, %p137
    %p139 = scmp.ne.s32.totalorder %s131, %s133
    %p140 = scmp.eq.s32.totalorder %s18, 1
    %p141 = por %p139, %p140
    %p142 = scmp.ne.s32.totalorder %s133, %s134
    %p143 = scmp.eq.s32.totalorder %s18, 0
    %p144 = por %p142, %p143
    %p145 = scmp.ne.s32.totalorder %s133, %s134
    %p146 = scmp.eq.s32.totalorder %s19, 1
    %p147 = por %p145, %p146
    %p149 = scmp.ne.s32.totalorder %s134, %s148
    %p150 = scmp.eq.s32.totalorder %s19, 0
    %p151 = por %p149, %p150
    %s153 = sadd.s32 %s152, 1
    %p156 = scmp.eq.s32.totalorder %s13, 1
    %p157 = scmp.ne.s32.totalorder %s152, %s154
    %p158 = scmp.eq.s32.totalorder %s13, 0
    %p159 = por %p157, %p158
    %p160 = scmp.ne.s32.totalorder %s152, %s154
    %p161 = scmp.eq.s32.totalorder %s18, 1
    %p162 = por %p160, %p161
    %p163 = scmp.ne.s32.totalorder %s154, %s155
    %p164 = scmp.eq.s32.totalorder %s18, 0
    %p165 = por %p163, %p164
    %p166 = scmp.ne.s32.totalorder %s154, %s155
    %p167 = scmp.eq.s32.totalorder %s19, 1
    %p168 = por %p166, %p167
    %p170 = scmp.ne.s32.totalorder %s155, %s169
    %p171 = scmp.eq.s32.totalorder %s19, 0
    %p172 = por %p170, %p171
    %s173 = ssub.s32 %s13, %s20
    %p174 = scmp.eq.s32.totalorder %s173, 0
    %s176 = sadd.s32 %s175, 1
    %s177 = scalar_select %p174, %s175, %s176
    %p180 = pneg %p174
    %p181 = scmp.eq.s32.totalorder %s13, 1
    %p182 = por %p180, %p181
    %p183 = scmp.ne.s32.totalorder %s175, %s178
    %p184 = scmp.eq.s32.totalorder %s13, 0
    %p185 = por %p183, %p184
    %p186 = scmp.ne.s32.totalorder %s175, %s178
    %p187 = scmp.eq.s32.totalorder %s18, 1
    %p188 = por %p186, %p187
    %p189 = scmp.ne.s32.totalorder %s178, %s179
    %p190 = scmp.eq.s32.totalorder %s18, 0
    %p191 = por %p189, %p190
    %p192 = scmp.ne.s32.totalorder %s178, %s179
    %p193 = scmp.eq.s32.totalorder %s19, 1
    %p194 = por %p192, %p193
    %p196 = scmp.ne.s32.totalorder %s179, %s195
    %p197 = scmp.eq.s32.totalorder %s19, 0
    %p198 = por %p196, %p197
    %p199 = scmp.le.s32.totalorder 1, %s13
    %p200 = scmp.lt.s32.totalorder %s13, 3
    %p201 = pnand %p199, %p200
    %p202 = pneg %p201
    // Predicated region
    $region9: #{cross_jamba_both_forward.4} parent=5 // pred_check
      _
    $region10: #{cross_jamba_both_forward.4} parent=5 // pred_check_branch
      %204 = sbr.rel (%p201) target = $region12
    $region11: #{cross_jamba_both_forward.4} parent=5 // pred_region
      %s205 = ssub.s32 %s13, 1
      // Predicated region
      $region13: #{cross_jamba_both_forward.4} parent=11 // pred_check
        %p206 = pneg %p60
      $region14: #{cross_jamba_both_forward.4} parent=11 // pred_check_branch
        %208 = sbr.rel (%p206) target = $region16
      $region15: #{cross_jamba_both_forward.4} parent=11 // pred_region
        _
      $region16: #{cross_jamba_both_forward.4} parent=11 // pred_fallthru
        _
      // Predicated region
      $region17: #{cross_jamba_both_forward.4} parent=11 // pred_check
        %p209 = pneg %p81
      $region18: #{cross_jamba_both_forward.4} parent=11 // pred_check_branch
        %211 = sbr.rel (%p209) target = $region20
      $region19: #{cross_jamba_both_forward.4} parent=11 // pred_region
        _
      $region20: #{cross_jamba_both_forward.4} parent=11 // pred_fallthru
        _
      // Predicated region
      $region21: #{cross_jamba_both_forward.4} parent=11 // pred_check
        %p212 = pneg %p102
      $region22: #{cross_jamba_both_forward.4} parent=11 // pred_check_branch
        %214 = sbr.rel (%p212) target = $region24
      $region23: #{cross_jamba_both_forward.4} parent=11 // pred_region
        _
      $region24: #{cross_jamba_both_forward.4} parent=11 // pred_fallthru
        _
      // Predicated region
      $region25: #{cross_jamba_both_forward.4} parent=11 // pred_check
        %p215 = pneg %p123
      $region26: #{cross_jamba_both_forward.4} parent=11 // pred_check_branch
        %217 = sbr.rel (%p215) target = $region28
      $region27: #{cross_jamba_both_forward.4} parent=11 // pred_region
        _
      $region28: #{cross_jamba_both_forward.4} parent=11 // pred_fallthru
        _
      // Predicated region
      $region29: #{cross_jamba_both_forward.4} parent=11 // pred_check
        %p218 = pneg %p144
      $region30: #{cross_jamba_both_forward.4} parent=11 // pred_check_branch
        %220 = sbr.rel (%p218) target = $region32
      $region31: #{cross_jamba_both_forward.4} parent=11 // pred_region
        _
      $region32: #{cross_jamba_both_forward.4} parent=11 // pred_fallthru
        _
      // Predicated region
      $region33: #{cross_jamba_both_forward.4} parent=11 // pred_check
        %p221 = pneg %p165
      $region34: #{cross_jamba_both_forward.4} parent=11 // pred_check_branch
        %223 = sbr.rel (%p221) target = $region36
      $region35: #{cross_jamba_both_forward.4} parent=11 // pred_region
        _
      $region36: #{cross_jamba_both_forward.4} parent=11 // pred_fallthru
        _
    $region12: #{cross_jamba_both_forward.4} parent=5 // pred_fallthru
      _
    %p224 = scmp.lt.s32.totalorder %s13, 2
    // Predicated region
    $region37: #{cross_jamba_both_forward.4} parent=5 // pred_check
      %p225 = pneg %p224
    $region38: #{cross_jamba_both_forward.4} parent=5 // pred_check_branch
      %227 = sbr.rel (%p225) target = $region40
    $region39: #{cross_jamba_both_forward.4} parent=5 // pred_region
      // Predicated region
      $region41: #{cross_jamba_both_forward.4} parent=39 // pred_check
        %p228 = pneg %p33
      $region42: #{cross_jamba_both_forward.4} parent=39 // pred_check_branch
        %230 = sbr.rel (%p228) target = $region44
      $region43: #{cross_jamba_both_forward.4} parent=39 // pred_region
        %p231 = scmp.lt.s32.totalorder %s13, 1
        %s232 = scalar_select %p231, %s13, 1
        %s233 = smul.addr %s232, 2
        %s234 = smul.addr %s233, 8
        %s235 = scalar_lea.vmem %s0, %s234
      $region44: #{cross_jamba_both_forward.4} parent=39 // pred_fallthru
        _
    $region40: #{cross_jamba_both_forward.4} parent=5 // pred_fallthru
      _
    %p236 = scmp.le.s32.totalorder 1, %s13
    %p237 = scmp.lt.s32.totalorder %s13, 3
    %p238 = pnand %p236, %p237
    %p239 = pneg %p238
    // Predicated region
    $region45: #{cross_jamba_both_forward.4} parent=5 // pred_check
      _
    $region46: #{cross_jamba_both_forward.4} parent=5 // pred_check_branch
      %241 = sbr.rel (%p238) target = $region48
    $region47: #{cross_jamba_both_forward.4} parent=5 // pred_region
      %s242 = ssub.s32 %s13, 1
      %p243 = scmp.lt.s32.totalorder %s18, 1
      %s244 = scalar_select %p243, %s18, 1
      %s245 = smul.addr %s244, 2
      %s246 = smul.addr %s245, 8
      %s247 = scalar_lea.vmem %s0, %s246
      %p248 = pneg %p39
      %p249 = pneg %p36
      %p250 = pneg %p60
      %p251 = pneg %p57
      %p252 = pneg %p81
      %p253 = pneg %p78
      %p254 = pneg %p102
      %p255 = pneg %p99
      %p256 = pneg %p123
      %p257 = pneg %p120
      %p258 = pneg %p144
      %p259 = pneg %p141
      %p260 = pneg %p165
      %p261 = pneg %p162
      %p262 = pneg %p191
      %p263 = pneg %p188
      %p264 = scmp.lt.s32.totalorder %s18, 1
      %s265 = scalar_select %p264, %s18, 1
      %s266 = smul.addr %s265, 2
      %s267 = smul.addr %s266, 8
      %s268 = scalar_lea.vmem %s7, %s267
      %p269 = scmp.lt.s32.totalorder %s18, 1
      %s270 = scalar_select %p269, %s18, 1
      %s271 = smul.addr %s270, 2
      %s272 = smul.addr %s271, 8
      %s273 = scalar_lea.vmem %s0, %s272
      %p274 = scmp.lt.s32.totalorder %s18, 1
      %s275 = scalar_select %p274, %s18, 1
      %s276 = smul.addr %s275, 2
      %s277 = smul.addr %s276, 8
      %s278 = scalar_lea.vmem %s7, %s277
      %v279 = vld [vmem:[%s273] sm:$0xff]
      %v280 = vld [vmem:[%s273 + $0x8] sm:$0x3]
      %v281 = vmul.f32 %v279, %v279
      %v282 = vmul.f32 %v280, %v280
      %vm283 = vcmask 261120
      %v284 = vsel %vm283, %v281, 0.0
      %285 = vadd.xlane.f32.xlu0 %v284
      %v286 = vpop.xlane.xlu0 %285
      %vm287 = vcmask 254976
      %v288 = vsel %vm287, %v282, 0.0
      %289 = vadd.xlane.f32.xlu0 %v288
      %v290 = vpop.xlane.xlu0 %289
      %v291 = vrcp.pop 32.0
      %v292 = vmul.f32 %v286, %v291
      %v293 = vmul.f32 %v290, %v291
      %v294 = vadd.f32 %v292, 1e-06
      %v295 = vadd.f32 %v293, 1e-06
      %v296 = vrsqrt.pop %v294
      %v297 = vrsqrt.pop %v295
      %v298 = vmul.f32 %v279, %v296
      %v299 = vmul.f32 %v280, %v297
      %v300 = vld [vmem:[%s1] sm:$0x1]
      %v302 = vlaneseq
      %v303 = vshrl.u32 %v302, 7
      %v304 = vsub.s32 0, %v303
      %v305 = vrot.slane %v300, %v304
      %v307 = vmul.f32 %v298, %v305
      %v308 = vmul.f32 %v299, %v305
      %v309 = vld [vmem:[%s2] sm:$0xff]
      %v310 = vld [vmem:[%s2 + $0x8] sm:$0xff]
      %v311 = vld [vmem:[%s2 + $0x10] sm:$0xff]
      %v312 = vld [vmem:[%s2 + $0x18] sm:$0xff]
      %v314 = vsel %vm283, %v307, 0
      %v317 = vsel %vm283, %v308, 0
      %319 = vmatprep.subr.mxu0 0.0
      %320 = vmatpush1.msra.mxu0 0.0
      %321 = vmatprep.subr.mxu0 0.0
      %322 = vmatpush1.msra.mxu0 0.0
      %323 = vmatprep.subr.mxu0 0.0
      %324 = vmatpush1.msra.mxu0 0.0
      %325 = vmatprep.subr.mxu0 0.0
      %326 = vmatpush1.msra.mxu0 0.0
      %327 = vmatprep.subr.mxu0 0.0
      %328 = vmatpush1.msra.mxu0 0.0
      %329 = vmatprep.subr.mxu0 0.0
      %330 = vmatpush1.msra.mxu0 0.0
      %331 = vmatprep.subr.mxu0 0.0
      %332 = vmatpush1.msra.mxu0 0.0
      %333 = vmatprep.subr.mxu0 0.0
      %334 = vmatpush1.msra.mxu0 0.0
      %335 = vmatprep.subr.mxu0 0.0
      %336 = vmatpush1.msra.mxu0 0.0
      %337 = vmatprep.subr.mxu0 0.0
      %338 = vmatpush1.msra.mxu0 0.0
      %339 = vmatprep.subr.mxu0 0.0
      %340 = vmatpush1.msra.mxu0 0.0
      %341 = vmatprep.subr.mxu0 0.0
      %342 = vmatpush1.msra.mxu0 0.0
      %343 = vmatprep.subr.mxu0 0.0
      %344 = vmatpush1.msra.mxu0 %v312
      %345 = vmatprep.subr.mxu0 0.0
      %346 = vmatpush1.msra.mxu0 %v311
      %347 = vmatprep.subr.mxu0 0.0
      %348 = vmatpush1.msra.mxu0 %v310
      %349 = vmatprep.subr.mxu0 0.0
      %350 = vmatpush1.msra.mxu0 %v309
      %351 = vmatprep.subr.mxu0 0.0
      %352 = vmatpush2.msra.mxu0 0.0
      %353 = vmatprep.subr.mxu0 0.0
      %354 = vmatpush2.msra.mxu0 0.0
      %355 = vmatprep.subr.mxu0 0.0
      %356 = vmatpush2.msra.mxu0 0.0
      %357 = vmatprep.subr.mxu0 0.0
      %358 = vmatpush2.msra.mxu0 0.0
      %359 = vmatprep.subr.mxu0 0.0
      %360 = vmatpush2.msra.mxu0 0.0
      %361 = vmatprep.subr.mxu0 0.0
      %362 = vmatpush2.msra.mxu0 0.0
      %363 = vmatprep.subr.mxu0 0.0
      %364 = vmatpush2.msra.mxu0 0.0
      %365 = vmatprep.subr.mxu0 0.0
      %366 = vmatpush2.msra.mxu0 0.0
      %367 = vmatprep.subr.mxu0 0.0
      %368 = vmatpush2.msra.mxu0 0.0
      %369 = vmatprep.subr.mxu0 0.0
      %370 = vmatpush2.msra.mxu0 0.0
      %371 = vmatprep.subr.mxu0 0.0
      %372 = vmatpush2.msra.mxu0 0.0
      %373 = vmatprep.subr.mxu0 0.0
      %374 = vmatpush2.msra.mxu0 0.0
      %375 = vmatprep.subr.mxu0 0.0
      %376 = vmatpush2.msra.mxu0 0.0
      %377 = vmatprep.subr.mxu0 0.0
      %378 = vmatpush2.msra.mxu0 0.0
      %379 = vmatprep.subr.mxu0 0.0
      %380 = vmatpush2.msra.mxu0 0.0
      %381 = vmatprep.subr.mxu0 0.0
      %382 = vmatpush2.msra.mxu0 0.0
      %383 = vmatprep.mubr.f32.mxu0 0.0
      %384 = vmatmul.mubr.f32.gmra.mxu0 %v314
      %v385 = vpop.f32.mrf.mxu0
      %v386 = vadd.f32 0.0, %v385
      %v387 = vpop.f32.mrf.mxu0
      %388 = vmatprep.mubr.f32.mxu0 0.0
      %389 = vmatmul.mubr.f32.gmra.mxu0 %v317
      %v390 = vpop.f32.mrf.mxu0
      %v391 = vadd.f32 0.0, %v390
      %v392 = vpop.f32.mrf.mxu0
      %393 = vdwg.mxu0
      %v394 = vlaneseq
      %v395 = vshrl.u32 %v394, 7
      %v396 = vadd.s32 %v395, 8
      %v397 = vlaneseq
      %v398 = vand.u32 %v397, 127
      %vm399 = vcmp.le.s32.totalorder %v398, %v395
      %vm400 = vcmp.le.s32.totalorder %v398, %v396
      %403 = vrot.lane.b32.xlu0 %v386, 96
      %v404 = vpop.permute.xlu0 %403
      %405 = vrot.lane.b32.xlu0 %v391, 96
      %v406 = vpop.permute.xlu0 %405
      %vm407 = vcmask 64512
      %v408 = vsel %vm407, %v386, 0
      %v410 = vsel %vm407, %v391, 0
      %v412 = vsel %vm407, %v404, 0
      %v414 = vsel %vm407, %v406, 0
      %416 = vmatprep.subr.mxu0 0.0
      %417 = vmatpush1.xpose.msra.mxu0 0.0
      %418 = vmatprep.subr.mxu0 0.0
      %419 = vmatpush1.xpose.msra.mxu0 0.0
      %420 = vmatprep.subr.mxu0 0.0
      %421 = vmatpush1.xpose.msra.mxu0 0.0
      %422 = vmatprep.subr.mxu0 0.0
      %423 = vmatpush1.xpose.msra.mxu0 0.0
      %424 = vmatprep.subr.mxu0 0.0
      %425 = vmatpush1.xpose.msra.mxu0 0.0
      %426 = vmatprep.subr.mxu0 0.0
      %427 = vmatpush1.xpose.msra.mxu0 0.0
      %428 = vmatprep.subr.mxu0 0.0
      %429 = vmatpush1.xpose.msra.mxu0 0.0
      %430 = vmatprep.subr.mxu0 0.0
      %431 = vmatpush1.xpose.msra.mxu0 0.0
      %432 = vmatprep.subr.mxu0 0.0
      %433 = vmatpush1.xpose.msra.mxu0 0.0
      %434 = vmatprep.subr.mxu0 0.0
      %435 = vmatpush1.xpose.msra.mxu0 0.0
      %436 = vmatprep.subr.mxu0 0.0
      %437 = vmatpush1.xpose.msra.mxu0 0.0
      %438 = vmatprep.subr.mxu0 0.0
      %439 = vmatpush1.xpose.msra.mxu0 0.0
      %440 = vmatprep.subr.mxu0 0.0
      %441 = vmatpush1.xpose.msra.mxu0 0.0
      %442 = vmatprep.subr.mxu0 0.0
      %443 = vmatpush1.xpose.msra.mxu0 0.0
      %444 = vmatprep.subr.mxu0 0.0
      %445 = vmatpush1.xpose.msra.mxu0 %v414
      %446 = vmatprep.subr.mxu0 0.0
      %447 = vmatpush1.xpose.msra.mxu0 %v412
      %448 = vmatprep.subr.mxu0 0.0
      %449 = vmatpush2.xpose.msra.mxu0 0.0
      %450 = vmatprep.subr.mxu0 0.0
      %451 = vmatpush2.xpose.msra.mxu0 0.0
      %452 = vmatprep.subr.mxu0 0.0
      %453 = vmatpush2.xpose.msra.mxu0 0.0
      %454 = vmatprep.subr.mxu0 0.0
      %455 = vmatpush2.xpose.msra.mxu0 0.0
      %456 = vmatprep.subr.mxu0 0.0
      %457 = vmatpush2.xpose.msra.mxu0 0.0
      %458 = vmatprep.subr.mxu0 0.0
      %459 = vmatpush2.xpose.msra.mxu0 0.0
      %460 = vmatprep.subr.mxu0 0.0
      %461 = vmatpush2.xpose.msra.mxu0 0.0
      %462 = vmatprep.subr.mxu0 0.0
      %463 = vmatpush2.xpose.msra.mxu0 0.0
      %464 = vmatprep.subr.mxu0 0.0
      %465 = vmatpush2.xpose.msra.mxu0 0.0
      %466 = vmatprep.subr.mxu0 0.0
      %467 = vmatpush2.xpose.msra.mxu0 0.0
      %468 = vmatprep.subr.mxu0 0.0
      %469 = vmatpush2.xpose.msra.mxu0 0.0
      %470 = vmatprep.subr.mxu0 0.0
      %471 = vmatpush2.xpose.msra.mxu0 0.0
      %472 = vmatprep.subr.mxu0 0.0
      %473 = vmatpush2.xpose.msra.mxu0 0.0
      %474 = vmatprep.subr.mxu0 0.0
      %475 = vmatpush2.xpose.msra.mxu0 0.0
      %476 = vmatprep.subr.mxu0 0.0
      %477 = vmatpush2.xpose.msra.mxu0 0.0
      %478 = vmatprep.subr.mxu0 0.0
      %479 = vmatpush2.xpose.msra.mxu0 0.0
      %480 = vmatprep.mubr.f32.mxu0 0.0
      %481 = vmatmul.mubr.f32.gmra.mxu0 %v408
      %v482 = vpop.f32.mrf.mxu0
      %v483 = vadd.f32 0.0, %v482
      %v484 = vpop.f32.mrf.mxu0
      %485 = vmatprep.mubr.f32.mxu0 0.0
      %486 = vmatmul.mubr.f32.gmra.mxu0 %v410
      %v487 = vpop.f32.mrf.mxu0
      %v488 = vadd.f32 0.0, %v487
      %v489 = vpop.f32.mrf.mxu0
      %490 = vdwg.mxu0
      %v491 = vmul.f32 %v483, 0.35355338
      %v492 = vmul.f32 %v488, 0.35355338
      %v493 = vsel %vm399, %v491, -1e+30
      %v494 = vsel %vm400, %v492, -1e+30
      %vm495 = vcmask 80896
      %v496 = vsel %vm495, %v493, -inf
      %497 = vmax.xlane.f32.xlu0 %v496
      %v498 = vpop.xlane.xlu0 %497
      %vm499 = vcmask 74752
      %v500 = vsel %vm499, %v494, -inf
      %501 = vmax.xlane.f32.xlu0 %v500
      %v502 = vpop.xlane.xlu0 %501
      %v503 = vsub.f32 %v493, %v498
      %v504 = vsub.f32 %v494, %v502
      %v505 = vmul.f32 %v503, 1.442695
      %v506 = vpow.pop %v505
      %v507 = vmul.f32 %v504, 1.442695
      %v508 = vpow.pop %v507
      %v509 = vsel %vm495, %v506, 0.0
      %510 = vadd.xlane.f32.xlu0 %v509
      %v511 = vpop.xlane.xlu0 %510
      %v512 = vsel %vm499, %v508, 0.0
      %513 = vadd.xlane.f32.xlu0 %v512
      %v514 = vpop.xlane.xlu0 %513
      %515 = vrot.lane.b32.xlu0 %v386, 64
      %v516 = vpop.permute.xlu0 %515
      %517 = vrot.lane.b32.xlu0 %v391, 64
      %v518 = vpop.permute.xlu0 %517
      %v521 = vsel %vm495, %v506, 0
      %v524 = vsel %vm495, %v508, 0
      %vm526 = vcmask 1041408
      %v527 = vsel %vm526, %v518, 0
      %529 = vmatprep.subr.mxu0 0.0
      %530 = vmatpush1.msra.mxu0 0.0
      %531 = vmatprep.subr.mxu0 0.0
      %532 = vmatpush1.msra.mxu0 0.0
      %533 = vmatprep.subr.mxu0 0.0
      %534 = vmatpush1.msra.mxu0 0.0
      %535 = vmatprep.subr.mxu0 0.0
      %536 = vmatpush1.msra.mxu0 0.0
      %537 = vmatprep.subr.mxu0 0.0
      %538 = vmatpush1.msra.mxu0 0.0
      %539 = vmatprep.subr.mxu0 0.0
      %540 = vmatpush1.msra.mxu0 0.0
      %541 = vmatprep.subr.mxu0 0.0
      %542 = vmatpush1.msra.mxu0 0.0
      %543 = vmatprep.subr.mxu0 0.0
      %544 = vmatpush1.msra.mxu0 0.0
      %545 = vmatprep.subr.mxu0 0.0
      %546 = vmatpush1.msra.mxu0 0.0
      %547 = vmatprep.subr.mxu0 0.0
      %548 = vmatpush1.msra.mxu0 0.0
      %549 = vmatprep.subr.mxu0 0.0
      %550 = vmatpush1.msra.mxu0 0.0
      %551 = vmatprep.subr.mxu0 0.0
      %552 = vmatpush1.msra.mxu0 0.0
      %553 = vmatprep.subr.mxu0 0.0
      %554 = vmatpush1.msra.mxu0 0.0
      %555 = vmatprep.subr.mxu0 0.0
      %556 = vmatpush1.msra.mxu0 0.0
      %557 = vmatprep.subr.mxu0 0.0
      %558 = vmatpush1.msra.mxu0 %v527
      %559 = vmatprep.subr.mxu0 0.0
      %560 = vmatpush1.msra.mxu0 %v516
      %561 = vmatprep.subr.mxu0 0.0
      %562 = vmatpush2.msra.mxu0 0.0
      %563 = vmatprep.subr.mxu0 0.0
      %564 = vmatpush2.msra.mxu0 0.0
      %565 = vmatprep.subr.mxu0 0.0
      %566 = vmatpush2.msra.mxu0 0.0
      %567 = vmatprep.subr.mxu0 0.0
      %568 = vmatpush2.msra.mxu0 0.0
      %569 = vmatprep.subr.mxu0 0.0
      %570 = vmatpush2.msra.mxu0 0.0
      %571 = vmatprep.subr.mxu0 0.0
      %572 = vmatpush2.msra.mxu0 0.0
      %573 = vmatprep.subr.mxu0 0.0
      %574 = vmatpush2.msra.mxu0 0.0
      %575 = vmatprep.subr.mxu0 0.0
      %576 = vmatpush2.msra.mxu0 0.0
      %577 = vmatprep.subr.mxu0 0.0
      %578 = vmatpush2.msra.mxu0 0.0
      %579 = vmatprep.subr.mxu0 0.0
      %580 = vmatpush2.msra.mxu0 0.0
      %581 = vmatprep.subr.mxu0 0.0
      %582 = vmatpush2.msra.mxu0 0.0
      %583 = vmatprep.subr.mxu0 0.0
      %584 = vmatpush2.msra.mxu0 0.0
      %585 = vmatprep.subr.mxu0 0.0
      %586 = vmatpush2.msra.mxu0 0.0
      %587 = vmatprep.subr.mxu0 0.0
      %588 = vmatpush2.msra.mxu0 0.0
      %589 = vmatprep.subr.mxu0 0.0
      %590 = vmatpush2.msra.mxu0 0.0
      %591 = vmatprep.subr.mxu0 0.0
      %592 = vmatpush2.msra.mxu0 0.0
      %593 = vmatprep.mubr.f32.mxu0 0.0
      %594 = vmatmul.mubr.f32.gmra.mxu0 %v521
      %v595 = vpop.f32.mrf.mxu0
      %v596 = vadd.f32 0.0, %v595
      %v597 = vpop.f32.mrf.mxu0
      %598 = vmatprep.mubr.f32.mxu0 0.0
      %599 = vmatmul.mubr.f32.gmra.mxu0 %v524
      %v600 = vpop.f32.mrf.mxu0
      %v601 = vadd.f32 0.0, %v600
      %v602 = vpop.f32.mrf.mxu0
      %603 = vdwg.mxu0
      %v604 = vrcp.pop %v511
      %v605 = vrcp.pop %v514
      %v606 = vmul.f32 %v596, %v604
      %v607 = vmul.f32 %v601, %v605
      %v608 = vld [vmem:[%s3] sm:$0xff]
      %609 = vrot.lane.b32.xlu0 %v386, 120
      %v610 = vpop.permute.xlu0 %609
      %611 = vrot.lane.b32.xlu0 %v391, 120
      %v612 = vpop.permute.xlu0 %611
      %613 = vrot.lane.b32.xlu0 %v386, 88
      %v614 = vpop.permute.xlu0 %613
      %615 = vrot.lane.b32.xlu0 %v391, 88
      %v616 = vpop.permute.xlu0 %615
      %v617 = vsel %vm407, %v610, 0
      %v619 = vsel %vm407, %v612, 0
      %v621 = vsel %vm407, %v614, 0
      %v623 = vsel %vm407, %v616, 0
      %625 = vmatprep.subr.mxu0 0.0
      %626 = vmatpush1.xpose.msra.mxu0 0.0
      %627 = vmatprep.subr.mxu0 0.0
      %628 = vmatpush1.xpose.msra.mxu0 0.0
      %629 = vmatprep.subr.mxu0 0.0
      %630 = vmatpush1.xpose.msra.mxu0 0.0
      %631 = vmatprep.subr.mxu0 0.0
      %632 = vmatpush1.xpose.msra.mxu0 0.0
      %633 = vmatprep.subr.mxu0 0.0
      %634 = vmatpush1.xpose.msra.mxu0 0.0
      %635 = vmatprep.subr.mxu0 0.0
      %636 = vmatpush1.xpose.msra.mxu0 0.0
      %637 = vmatprep.subr.mxu0 0.0
      %638 = vmatpush1.xpose.msra.mxu0 0.0
      %639 = vmatprep.subr.mxu0 0.0
      %640 = vmatpush1.xpose.msra.mxu0 0.0
      %641 = vmatprep.subr.mxu0 0.0
      %642 = vmatpush1.xpose.msra.mxu0 0.0
      %643 = vmatprep.subr.mxu0 0.0
      %644 = vmatpush1.xpose.msra.mxu0 0.0
      %645 = vmatprep.subr.mxu0 0.0
      %646 = vmatpush1.xpose.msra.mxu0 0.0
      %647 = vmatprep.subr.mxu0 0.0
      %648 = vmatpush1.xpose.msra.mxu0 0.0
      %649 = vmatprep.subr.mxu0 0.0
      %650 = vmatpush1.xpose.msra.mxu0 0.0
      %651 = vmatprep.subr.mxu0 0.0
      %652 = vmatpush1.xpose.msra.mxu0 0.0
      %653 = vmatprep.subr.mxu0 0.0
      %654 = vmatpush1.xpose.msra.mxu0 %v623
      %655 = vmatprep.subr.mxu0 0.0
      %656 = vmatpush1.xpose.msra.mxu0 %v621
      %657 = vmatprep.subr.mxu0 0.0
      %658 = vmatpush2.xpose.msra.mxu0 0.0
      %659 = vmatprep.subr.mxu0 0.0
      %660 = vmatpush2.xpose.msra.mxu0 0.0
      %661 = vmatprep.subr.mxu0 0.0
      %662 = vmatpush2.xpose.msra.mxu0 0.0
      %663 = vmatprep.subr.mxu0 0.0
      %664 = vmatpush2.xpose.msra.mxu0 0.0
      %665 = vmatprep.subr.mxu0 0.0
      %666 = vmatpush2.xpose.msra.mxu0 0.0
      %667 = vmatprep.subr.mxu0 0.0
      %668 = vmatpush2.xpose.msra.mxu0 0.0
      %669 = vmatprep.subr.mxu0 0.0
      %670 = vmatpush2.xpose.msra.mxu0 0.0
      %671 = vmatprep.subr.mxu0 0.0
      %672 = vmatpush2.xpose.msra.mxu0 0.0
      %673 = vmatprep.subr.mxu0 0.0
      %674 = vmatpush2.xpose.msra.mxu0 0.0
      %675 = vmatprep.subr.mxu0 0.0
      %676 = vmatpush2.xpose.msra.mxu0 0.0
      %677 = vmatprep.subr.mxu0 0.0
      %678 = vmatpush2.xpose.msra.mxu0 0.0
      %679 = vmatprep.subr.mxu0 0.0
      %680 = vmatpush2.xpose.msra.mxu0 0.0
      %681 = vmatprep.subr.mxu0 0.0
      %682 = vmatpush2.xpose.msra.mxu0 0.0
      %683 = vmatprep.subr.mxu0 0.0
      %684 = vmatpush2.xpose.msra.mxu0 0.0
      %685 = vmatprep.subr.mxu0 0.0
      %686 = vmatpush2.xpose.msra.mxu0 0.0
      %687 = vmatprep.subr.mxu0 0.0
      %688 = vmatpush2.xpose.msra.mxu0 0.0
      %689 = vmatprep.mubr.f32.mxu0 0.0
      %690 = vmatmul.mubr.f32.gmra.mxu0 %v617
      %v691 = vpop.f32.mrf.mxu0
      %v692 = vadd.f32 0.0, %v691
      %v693 = vpop.f32.mrf.mxu0
      %694 = vmatprep.mubr.f32.mxu0 0.0
      %695 = vmatmul.mubr.f32.gmra.mxu0 %v619
      %v696 = vpop.f32.mrf.mxu0
      %v697 = vadd.f32 0.0, %v696
      %v698 = vpop.f32.mrf.mxu0
      %699 = vdwg.mxu0
      %v700 = vmul.f32 %v692, 0.35355338
      %v701 = vmul.f32 %v697, 0.35355338
      %v702 = vsel %vm399, %v700, -1e+30
      %v703 = vsel %vm400, %v701, -1e+30
      %v704 = vsel %vm495, %v702, -inf
      %705 = vmax.xlane.f32.xlu0 %v704
      %v706 = vpop.xlane.xlu0 %705
      %v707 = vsel %vm499, %v703, -inf
      %708 = vmax.xlane.f32.xlu0 %v707
      %v709 = vpop.xlane.xlu0 %708
      %v710 = vsub.f32 %v702, %v706
      %v711 = vsub.f32 %v703, %v709
      %v712 = vmul.f32 %v710, 1.442695
      %v713 = vpow.pop %v712
      %v714 = vmul.f32 %v711, 1.442695
      %v715 = vpow.pop %v714
      %v716 = vsel %vm495, %v713, 0.0
      %717 = vadd.xlane.f32.xlu0 %v716
      %v718 = vpop.xlane.xlu0 %717
      %v719 = vsel %vm499, %v715, 0.0
      %720 = vadd.xlane.f32.xlu0 %v719
      %v721 = vpop.xlane.xlu0 %720
      %722 = vrot.lane.b32.xlu0 %v386, 56
      %v723 = vpop.permute.xlu0 %722
      %724 = vrot.lane.b32.xlu0 %v391, 56
      %v725 = vpop.permute.xlu0 %724
      %v728 = vsel %vm495, %v713, 0
      %v731 = vsel %vm495, %v715, 0
      %v733 = vsel %vm526, %v725, 0
      %735 = vmatprep.subr.mxu0 0.0
      %736 = vmatpush1.msra.mxu0 0.0
      %737 = vmatprep.subr.mxu0 0.0
      %738 = vmatpush1.msra.mxu0 0.0
      %739 = vmatprep.subr.mxu0 0.0
      %740 = vmatpush1.msra.mxu0 0.0
      %741 = vmatprep.subr.mxu0 0.0
      %742 = vmatpush1.msra.mxu0 0.0
      %743 = vmatprep.subr.mxu0 0.0
      %744 = vmatpush1.msra.mxu0 0.0
      %745 = vmatprep.subr.mxu0 0.0
      %746 = vmatpush1.msra.mxu0 0.0
      %747 = vmatprep.subr.mxu0 0.0
      %748 = vmatpush1.msra.mxu0 0.0
      %749 = vmatprep.subr.mxu0 0.0
      %750 = vmatpush1.msra.mxu0 0.0
      %751 = vmatprep.subr.mxu0 0.0
      %752 = vmatpush1.msra.mxu0 0.0
      %753 = vmatprep.subr.mxu0 0.0
      %754 = vmatpush1.msra.mxu0 0.0
      %755 = vmatprep.subr.mxu0 0.0
      %756 = vmatpush1.msra.mxu0 0.0
      %757 = vmatprep.subr.mxu0 0.0
      %758 = vmatpush1.msra.mxu0 0.0
      %759 = vmatprep.subr.mxu0 0.0
      %760 = vmatpush1.msra.mxu0 0.0
      %761 = vmatprep.subr.mxu0 0.0
      %762 = vmatpush1.msra.mxu0 0.0
      %763 = vmatprep.subr.mxu0 0.0
      %764 = vmatpush1.msra.mxu0 %v733
      %765 = vmatprep.subr.mxu0 0.0
      %766 = vmatpush1.msra.mxu0 %v723
      %767 = vmatprep.subr.mxu0 0.0
      %768 = vmatpush2.msra.mxu0 0.0
      %769 = vmatprep.subr.mxu0 0.0
      %770 = vmatpush2.msra.mxu0 0.0
      %771 = vmatprep.subr.mxu0 0.0
      %772 = vmatpush2.msra.mxu0 0.0
      %773 = vmatprep.subr.mxu0 0.0
      %774 = vmatpush2.msra.mxu0 0.0
      %775 = vmatprep.subr.mxu0 0.0
      %776 = vmatpush2.msra.mxu0 0.0
      %777 = vmatprep.subr.mxu0 0.0
      %778 = vmatpush2.msra.mxu0 0.0
      %779 = vmatprep.subr.mxu0 0.0
      %780 = vmatpush2.msra.mxu0 0.0
      %781 = vmatprep.subr.mxu0 0.0
      %782 = vmatpush2.msra.mxu0 0.0
      %783 = vmatprep.subr.mxu0 0.0
      %784 = vmatpush2.msra.mxu0 0.0
      %785 = vmatprep.subr.mxu0 0.0
      %786 = vmatpush2.msra.mxu0 0.0
      %787 = vmatprep.subr.mxu0 0.0
      %788 = vmatpush2.msra.mxu0 0.0
      %789 = vmatprep.subr.mxu0 0.0
      %790 = vmatpush2.msra.mxu0 0.0
      %791 = vmatprep.subr.mxu0 0.0
      %792 = vmatpush2.msra.mxu0 0.0
      %793 = vmatprep.subr.mxu0 0.0
      %794 = vmatpush2.msra.mxu0 0.0
      %795 = vmatprep.subr.mxu0 0.0
      %796 = vmatpush2.msra.mxu0 0.0
      %797 = vmatprep.subr.mxu0 0.0
      %798 = vmatpush2.msra.mxu0 0.0
      %799 = vmatprep.mubr.f32.mxu0 0.0
      %800 = vmatmul.mubr.f32.gmra.mxu0 %v728
      %v801 = vpop.f32.mrf.mxu0
      %v802 = vadd.f32 0.0, %v801
      %v803 = vpop.f32.mrf.mxu0
      %804 = vmatprep.mubr.f32.mxu0 0.0
      %805 = vmatmul.mubr.f32.gmra.mxu0 %v731
      %v806 = vpop.f32.mrf.mxu0
      %v807 = vadd.f32 0.0, %v806
      %v808 = vpop.f32.mrf.mxu0
      %809 = vdwg.mxu0
      %v810 = vrcp.pop %v718
      %v811 = vrcp.pop %v721
      %v812 = vmul.f32 %v802, %v810
      %v813 = vmul.f32 %v807, %v811
      %v814 = vld [vmem:[%s3 + $0x8] sm:$0xff]
      %v816 = vsel %vm407, %v812, 0
      %v819 = vsel %vm407, %v813, 0
      %821 = vmatprep.subr.mxu0 0.0
      %822 = vmatpush1.msra.mxu0 0.0
      %823 = vmatprep.subr.mxu0 0.0
      %824 = vmatpush1.msra.mxu0 0.0
      %825 = vmatprep.subr.mxu0 0.0
      %826 = vmatpush1.msra.mxu0 0.0
      %827 = vmatprep.subr.mxu0 0.0
      %828 = vmatpush1.msra.mxu0 0.0
      %829 = vmatprep.subr.mxu0 0.0
      %830 = vmatpush1.msra.mxu0 0.0
      %831 = vmatprep.subr.mxu0 0.0
      %832 = vmatpush1.msra.mxu0 0.0
      %833 = vmatprep.subr.mxu0 0.0
      %834 = vmatpush1.msra.mxu0 0.0
      %835 = vmatprep.subr.mxu0 0.0
      %836 = vmatpush1.msra.mxu0 0.0
      %837 = vmatprep.subr.mxu0 0.0
      %838 = vmatpush1.msra.mxu0 0.0
      %839 = vmatprep.subr.mxu0 0.0
      %840 = vmatpush1.msra.mxu0 0.0
      %841 = vmatprep.subr.mxu0 0.0
      %842 = vmatpush1.msra.mxu0 0.0
      %843 = vmatprep.subr.mxu0 0.0
      %844 = vmatpush1.msra.mxu0 0.0
      %845 = vmatprep.subr.mxu0 0.0
      %846 = vmatpush1.msra.mxu0 0.0
      %847 = vmatprep.subr.mxu0 0.0
      %848 = vmatpush1.msra.mxu0 0.0
      %849 = vmatprep.subr.mxu0 0.0
      %850 = vmatpush1.msra.mxu0 0.0
      %851 = vmatprep.subr.mxu0 0.0
      %852 = vmatpush1.msra.mxu0 %v814
      %853 = vmatprep.subr.mxu0 0.0
      %854 = vmatpush2.msra.mxu0 0.0
      %855 = vmatprep.subr.mxu0 0.0
      %856 = vmatpush2.msra.mxu0 0.0
      %857 = vmatprep.subr.mxu0 0.0
      %858 = vmatpush2.msra.mxu0 0.0
      %859 = vmatprep.subr.mxu0 0.0
      %860 = vmatpush2.msra.mxu0 0.0
      %861 = vmatprep.subr.mxu0 0.0
      %862 = vmatpush2.msra.mxu0 0.0
      %863 = vmatprep.subr.mxu0 0.0
      %864 = vmatpush2.msra.mxu0 0.0
      %865 = vmatprep.subr.mxu0 0.0
      %866 = vmatpush2.msra.mxu0 0.0
      %867 = vmatprep.subr.mxu0 0.0
      %868 = vmatpush2.msra.mxu0 0.0
      %869 = vmatprep.subr.mxu0 0.0
      %870 = vmatpush2.msra.mxu0 0.0
      %871 = vmatprep.subr.mxu0 0.0
      %872 = vmatpush2.msra.mxu0 0.0
      %873 = vmatprep.subr.mxu0 0.0
      %874 = vmatpush2.msra.mxu0 0.0
      %875 = vmatprep.subr.mxu0 0.0
      %876 = vmatpush2.msra.mxu0 0.0
      %877 = vmatprep.subr.mxu0 0.0
      %878 = vmatpush2.msra.mxu0 0.0
      %879 = vmatprep.subr.mxu0 0.0
      %880 = vmatpush2.msra.mxu0 0.0
      %881 = vmatprep.subr.mxu0 0.0
      %882 = vmatpush2.msra.mxu0 0.0
      %883 = vmatprep.subr.mxu0 0.0
      %884 = vmatpush2.msra.mxu0 0.0
      %885 = vmatprep.mubr.f32.mxu0 0.0
      %886 = vmatmul.mubr.f32.gmra.mxu0 %v816
      %v887 = vpop.f32.mrf.mxu0
      %v888 = vadd.f32 0.0, %v887
      %v889 = vpop.f32.mrf.mxu0
      %890 = vmatprep.mubr.f32.mxu0 0.0
      %891 = vmatmul.mubr.f32.gmra.mxu0 %v819
      %v892 = vpop.f32.mrf.mxu0
      %v893 = vadd.f32 0.0, %v892
      %v894 = vpop.f32.mrf.mxu0
      %895 = vdwg.mxu0
      %v897 = vsel %vm407, %v606, 0
      %v900 = vsel %vm407, %v607, 0
      %902 = vmatprep.subr.mxu0 0.0
      %903 = vmatpush1.msra.mxu0 0.0
      %904 = vmatprep.subr.mxu0 0.0
      %905 = vmatpush1.msra.mxu0 0.0
      %906 = vmatprep.subr.mxu0 0.0
      %907 = vmatpush1.msra.mxu0 0.0
      %908 = vmatprep.subr.mxu0 0.0
      %909 = vmatpush1.msra.mxu0 0.0
      %910 = vmatprep.subr.mxu0 0.0
      %911 = vmatpush1.msra.mxu0 0.0
      %912 = vmatprep.subr.mxu0 0.0
      %913 = vmatpush1.msra.mxu0 0.0
      %914 = vmatprep.subr.mxu0 0.0
      %915 = vmatpush1.msra.mxu0 0.0
      %916 = vmatprep.subr.mxu0 0.0
      %917 = vmatpush1.msra.mxu0 0.0
      %918 = vmatprep.subr.mxu0 0.0
      %919 = vmatpush1.msra.mxu0 0.0
      %920 = vmatprep.subr.mxu0 0.0
      %921 = vmatpush1.msra.mxu0 0.0
      %922 = vmatprep.subr.mxu0 0.0
      %923 = vmatpush1.msra.mxu0 0.0
      %924 = vmatprep.subr.mxu0 0.0
      %925 = vmatpush1.msra.mxu0 0.0
      %926 = vmatprep.subr.mxu0 0.0
      %927 = vmatpush1.msra.mxu0 0.0
      %928 = vmatprep.subr.mxu0 0.0
      %929 = vmatpush1.msra.mxu0 0.0
      %930 = vmatprep.subr.mxu0 0.0
      %931 = vmatpush1.msra.mxu0 0.0
      %932 = vmatprep.subr.mxu0 0.0
      %933 = vmatpush1.msra.mxu0 %v608
      %934 = vmatprep.subr.mxu0 0.0
      %935 = vmatpush2.msra.mxu0 0.0
      %936 = vmatprep.subr.mxu0 0.0
      %937 = vmatpush2.msra.mxu0 0.0
      %938 = vmatprep.subr.mxu0 0.0
      %939 = vmatpush2.msra.mxu0 0.0
      %940 = vmatprep.subr.mxu0 0.0
      %941 = vmatpush2.msra.mxu0 0.0
      %942 = vmatprep.subr.mxu0 0.0
      %943 = vmatpush2.msra.mxu0 0.0
      %944 = vmatprep.subr.mxu0 0.0
      %945 = vmatpush2.msra.mxu0 0.0
      %946 = vmatprep.subr.mxu0 0.0
      %947 = vmatpush2.msra.mxu0 0.0
      %948 = vmatprep.subr.mxu0 0.0
      %949 = vmatpush2.msra.mxu0 0.0
      %950 = vmatprep.subr.mxu0 0.0
      %951 = vmatpush2.msra.mxu0 0.0
      %952 = vmatprep.subr.mxu0 0.0
      %953 = vmatpush2.msra.mxu0 0.0
      %954 = vmatprep.subr.mxu0 0.0
      %955 = vmatpush2.msra.mxu0 0.0
      %956 = vmatprep.subr.mxu0 0.0
      %957 = vmatpush2.msra.mxu0 0.0
      %958 = vmatprep.subr.mxu0 0.0
      %959 = vmatpush2.msra.mxu0 0.0
      %960 = vmatprep.subr.mxu0 0.0
      %961 = vmatpush2.msra.mxu0 0.0
      %962 = vmatprep.subr.mxu0 0.0
      %963 = vmatpush2.msra.mxu0 0.0
      %964 = vmatprep.subr.mxu0 0.0
      %965 = vmatpush2.msra.mxu0 0.0
      %966 = vmatprep.mubr.f32.mxu0 0.0
      %967 = vmatmul.mubr.f32.gmra.mxu0 %v897
      %v968 = vpop.f32.mrf.mxu0
      %v969 = vadd.f32 %v888, %v968
      %v970 = vpop.f32.mrf.mxu0
      %971 = vmatprep.mubr.f32.mxu0 0.0
      %972 = vmatmul.mubr.f32.gmra.mxu0 %v900
      %v973 = vpop.f32.mrf.mxu0
      %v974 = vadd.f32 %v893, %v973
      %v975 = vpop.f32.mrf.mxu0
      %976 = vdwg.mxu0
      %977 = vrot.lane.b32.xlu0 %v386, 112
      %v978 = vpop.permute.xlu0 %977
      %979 = vrot.lane.b32.xlu0 %v391, 112
      %v980 = vpop.permute.xlu0 %979
      %981 = vrot.lane.b32.xlu0 %v386, 80
      %v982 = vpop.permute.xlu0 %981
      %983 = vrot.lane.b32.xlu0 %v391, 80
      %v984 = vpop.permute.xlu0 %983
      %v985 = vsel %vm407, %v978, 0
      %v987 = vsel %vm407, %v980, 0
      %v989 = vsel %vm407, %v982, 0
      %v991 = vsel %vm407, %v984, 0
      %993 = vmatprep.subr.mxu0 0.0
      %994 = vmatpush1.xpose.msra.mxu0 0.0
      %995 = vmatprep.subr.mxu0 0.0
      %996 = vmatpush1.xpose.msra.mxu0 0.0
      %997 = vmatprep.subr.mxu0 0.0
      %998 = vmatpush1.xpose.msra.mxu0 0.0
      %999 = vmatprep.subr.mxu0 0.0
      %1000 = vmatpush1.xpose.msra.mxu0 0.0
      %1001 = vmatprep.subr.mxu0 0.0
      %1002 = vmatpush1.xpose.msra.mxu0 0.0
      %1003 = vmatprep.subr.mxu0 0.0
      %1004 = vmatpush1.xpose.msra.mxu0 0.0
      %1005 = vmatprep.subr.mxu0 0.0
      %1006 = vmatpush1.xpose.msra.mxu0 0.0
      %1007 = vmatprep.subr.mxu0 0.0
      %1008 = vmatpush1.xpose.msra.mxu0 0.0
      %1009 = vmatprep.subr.mxu0 0.0
      %1010 = vmatpush1.xpose.msra.mxu0 0.0
      %1011 = vmatprep.subr.mxu0 0.0
      %1012 = vmatpush1.xpose.msra.mxu0 0.0
      %1013 = vmatprep.subr.mxu0 0.0
      %1014 = vmatpush1.xpose.msra.mxu0 0.0
      %1015 = vmatprep.subr.mxu0 0.0
      %1016 = vmatpush1.xpose.msra.mxu0 0.0
      %1017 = vmatprep.subr.mxu0 0.0
      %1018 = vmatpush1.xpose.msra.mxu0 0.0
      %1019 = vmatprep.subr.mxu0 0.0
      %1020 = vmatpush1.xpose.msra.mxu0 0.0
      %1021 = vmatprep.subr.mxu0 0.0
      %1022 = vmatpush1.xpose.msra.mxu0 %v991
      %1023 = vmatprep.subr.mxu0 0.0
      %1024 = vmatpush1.xpose.msra.mxu0 %v989
      %1025 = vmatprep.subr.mxu0 0.0
      %1026 = vmatpush2.xpose.msra.mxu0 0.0
      %1027 = vmatprep.subr.mxu0 0.0
      %1028 = vmatpush2.xpose.msra.mxu0 0.0
      %1029 = vmatprep.subr.mxu0 0.0
      %1030 = vmatpush2.xpose.msra.mxu0 0.0
      %1031 = vmatprep.subr.mxu0 0.0
      %1032 = vmatpush2.xpose.msra.mxu0 0.0
      %1033 = vmatprep.subr.mxu0 0.0
      %1034 = vmatpush2.xpose.msra.mxu0 0.0
      %1035 = vmatprep.subr.mxu0 0.0
      %1036 = vmatpush2.xpose.msra.mxu0 0.0
      %1037 = vmatprep.subr.mxu0 0.0
      %1038 = vmatpush2.xpose.msra.mxu0 0.0
      %1039 = vmatprep.subr.mxu0 0.0
      %1040 = vmatpush2.xpose.msra.mxu0 0.0
      %1041 = vmatprep.subr.mxu0 0.0
      %1042 = vmatpush2.xpose.msra.mxu0 0.0
      %1043 = vmatprep.subr.mxu0 0.0
      %1044 = vmatpush2.xpose.msra.mxu0 0.0
      %1045 = vmatprep.subr.mxu0 0.0
      %1046 = vmatpush2.xpose.msra.mxu0 0.0
      %1047 = vmatprep.subr.mxu0 0.0
      %1048 = vmatpush2.xpose.msra.mxu0 0.0
      %1049 = vmatprep.subr.mxu0 0.0
      %1050 = vmatpush2.xpose.msra.mxu0 0.0
      %1051 = vmatprep.subr.mxu0 0.0
      %1052 = vmatpush2.xpose.msra.mxu0 0.0
      %1053 = vmatprep.subr.mxu0 0.0
      %1054 = vmatpush2.xpose.msra.mxu0 0.0
      %1055 = vmatprep.subr.mxu0 0.0
      %1056 = vmatpush2.xpose.msra.mxu0 0.0
      %1057 = vmatprep.mubr.f32.mxu0 0.0
      %1058 = vmatmul.mubr.f32.gmra.mxu0 %v985
      %v1059 = vpop.f32.mrf.mxu0
      %v1060 = vadd.f32 0.0, %v1059
      %v1061 = vpop.f32.mrf.mxu0
      %1062 = vmatprep.mubr.f32.mxu0 0.0
      %1063 = vmatmul.mubr.f32.gmra.mxu0 %v987
      %v1064 = vpop.f32.mrf.mxu0
      %v1065 = vadd.f32 0.0, %v1064
      %v1066 = vpop.f32.mrf.mxu0
      %1067 = vdwg.mxu0
      %v1068 = vmul.f32 %v1060, 0.35355338
      %v1069 = vmul.f32 %v1065, 0.35355338
      %v1070 = vsel %vm399, %v1068, -1e+30
      %v1071 = vsel %vm400, %v1069, -1e+30
      %v1072 = vsel %vm495, %v1070, -inf
      %1073 = vmax.xlane.f32.xlu0 %v1072
      %v1074 = vpop.xlane.xlu0 %1073
      %v1075 = vsel %vm499, %v1071, -inf
      %1076 = vmax.xlane.f32.xlu0 %v1075
      %v1077 = vpop.xlane.xlu0 %1076
      %v1078 = vsub.f32 %v1070, %v1074
      %v1079 = vsub.f32 %v1071, %v1077
      %v1080 = vmul.f32 %v1078, 1.442695
      %v1081 = vpow.pop %v1080
      %v1082 = vmul.f32 %v1079, 1.442695
      %v1083 = vpow.pop %v1082
      %v1084 = vsel %vm495, %v1081, 0.0
      %1085 = vadd.xlane.f32.xlu0 %v1084
      %v1086 = vpop.xlane.xlu0 %1085
      %v1087 = vsel %vm499, %v1083, 0.0
      %1088 = vadd.xlane.f32.xlu0 %v1087
      %v1089 = vpop.xlane.xlu0 %1088
      %1090 = vrot.lane.b32.xlu0 %v386, 48
      %v1091 = vpop.permute.xlu0 %1090
      %1092 = vrot.lane.b32.xlu0 %v391, 48
      %v1093 = vpop.permute.xlu0 %1092
      %v1096 = vsel %vm495, %v1081, 0
      %v1099 = vsel %vm495, %v1083, 0
      %v1101 = vsel %vm526, %v1093, 0
      %1103 = vmatprep.subr.mxu0 0.0
      %1104 = vmatpush1.msra.mxu0 0.0
      %1105 = vmatprep.subr.mxu0 0.0
      %1106 = vmatpush1.msra.mxu0 0.0
      %1107 = vmatprep.subr.mxu0 0.0
      %1108 = vmatpush1.msra.mxu0 0.0
      %1109 = vmatprep.subr.mxu0 0.0
      %1110 = vmatpush1.msra.mxu0 0.0
      %1111 = vmatprep.subr.mxu0 0.0
      %1112 = vmatpush1.msra.mxu0 0.0
      %1113 = vmatprep.subr.mxu0 0.0
      %1114 = vmatpush1.msra.mxu0 0.0
      %1115 = vmatprep.subr.mxu0 0.0
      %1116 = vmatpush1.msra.mxu0 0.0
      %1117 = vmatprep.subr.mxu0 0.0
      %1118 = vmatpush1.msra.mxu0 0.0
      %1119 = vmatprep.subr.mxu0 0.0
      %1120 = vmatpush1.msra.mxu0 0.0
      %1121 = vmatprep.subr.mxu0 0.0
      %1122 = vmatpush1.msra.mxu0 0.0
      %1123 = vmatprep.subr.mxu0 0.0
      %1124 = vmatpush1.msra.mxu0 0.0
      %1125 = vmatprep.subr.mxu0 0.0
      %1126 = vmatpush1.msra.mxu0 0.0
      %1127 = vmatprep.subr.mxu0 0.0
      %1128 = vmatpush1.msra.mxu0 0.0
      %1129 = vmatprep.subr.mxu0 0.0
      %1130 = vmatpush1.msra.mxu0 0.0
      %1131 = vmatprep.subr.mxu0 0.0
      %1132 = vmatpush1.msra.mxu0 %v1101
      %1133 = vmatprep.subr.mxu0 0.0
      %1134 = vmatpush1.msra.mxu0 %v1091
      %1135 = vmatprep.subr.mxu0 0.0
      %1136 = vmatpush2.msra.mxu0 0.0
      %1137 = vmatprep.subr.mxu0 0.0
      %1138 = vmatpush2.msra.mxu0 0.0
      %1139 = vmatprep.subr.mxu0 0.0
      %1140 = vmatpush2.msra.mxu0 0.0
      %1141 = vmatprep.subr.mxu0 0.0
      %1142 = vmatpush2.msra.mxu0 0.0
      %1143 = vmatprep.subr.mxu0 0.0
      %1144 = vmatpush2.msra.mxu0 0.0
      %1145 = vmatprep.subr.mxu0 0.0
      %1146 = vmatpush2.msra.mxu0 0.0
      %1147 = vmatprep.subr.mxu0 0.0
      %1148 = vmatpush2.msra.mxu0 0.0
      %1149 = vmatprep.subr.mxu0 0.0
      %1150 = vmatpush2.msra.mxu0 0.0
      %1151 = vmatprep.subr.mxu0 0.0
      %1152 = vmatpush2.msra.mxu0 0.0
      %1153 = vmatprep.subr.mxu0 0.0
      %1154 = vmatpush2.msra.mxu0 0.0
      %1155 = vmatprep.subr.mxu0 0.0
      %1156 = vmatpush2.msra.mxu0 0.0
      %1157 = vmatprep.subr.mxu0 0.0
      %1158 = vmatpush2.msra.mxu0 0.0
      %1159 = vmatprep.subr.mxu0 0.0
      %1160 = vmatpush2.msra.mxu0 0.0
      %1161 = vmatprep.subr.mxu0 0.0
      %1162 = vmatpush2.msra.mxu0 0.0
      %1163 = vmatprep.subr.mxu0 0.0
      %1164 = vmatpush2.msra.mxu0 0.0
      %1165 = vmatprep.subr.mxu0 0.0
      %1166 = vmatpush2.msra.mxu0 0.0
      %1167 = vmatprep.mubr.f32.mxu0 0.0
      %1168 = vmatmul.mubr.f32.gmra.mxu0 %v1096
      %v1169 = vpop.f32.mrf.mxu0
      %v1170 = vadd.f32 0.0, %v1169
      %v1171 = vpop.f32.mrf.mxu0
      %1172 = vmatprep.mubr.f32.mxu0 0.0
      %1173 = vmatmul.mubr.f32.gmra.mxu0 %v1099
      %v1174 = vpop.f32.mrf.mxu0
      %v1175 = vadd.f32 0.0, %v1174
      %v1176 = vpop.f32.mrf.mxu0
      %1177 = vdwg.mxu0
      %v1178 = vrcp.pop %v1086
      %v1179 = vrcp.pop %v1089
      %v1180 = vmul.f32 %v1170, %v1178
      %v1181 = vmul.f32 %v1175, %v1179
      %v1182 = vld [vmem:[%s3 + $0x10] sm:$0xff]
      %v1184 = vsel %vm407, %v1180, 0
      %v1187 = vsel %vm407, %v1181, 0
      %1189 = vmatprep.subr.mxu0 0.0
      %1190 = vmatpush1.msra.mxu0 0.0
      %1191 = vmatprep.subr.mxu0 0.0
      %1192 = vmatpush1.msra.mxu0 0.0
      %1193 = vmatprep.subr.mxu0 0.0
      %1194 = vmatpush1.msra.mxu0 0.0
      %1195 = vmatprep.subr.mxu0 0.0
      %1196 = vmatpush1.msra.mxu0 0.0
      %1197 = vmatprep.subr.mxu0 0.0
      %1198 = vmatpush1.msra.mxu0 0.0
      %1199 = vmatprep.subr.mxu0 0.0
      %1200 = vmatpush1.msra.mxu0 0.0
      %1201 = vmatprep.subr.mxu0 0.0
      %1202 = vmatpush1.msra.mxu0 0.0
      %1203 = vmatprep.subr.mxu0 0.0
      %1204 = vmatpush1.msra.mxu0 0.0
      %1205 = vmatprep.subr.mxu0 0.0
      %1206 = vmatpush1.msra.mxu0 0.0
      %1207 = vmatprep.subr.mxu0 0.0
      %1208 = vmatpush1.msra.mxu0 0.0
      %1209 = vmatprep.subr.mxu0 0.0
      %1210 = vmatpush1.msra.mxu0 0.0
      %1211 = vmatprep.subr.mxu0 0.0
      %1212 = vmatpush1.msra.mxu0 0.0
      %1213 = vmatprep.subr.mxu0 0.0
      %1214 = vmatpush1.msra.mxu0 0.0
      %1215 = vmatprep.subr.mxu0 0.0
      %1216 = vmatpush1.msra.mxu0 0.0
      %1217 = vmatprep.subr.mxu0 0.0
      %1218 = vmatpush1.msra.mxu0 0.0
      %1219 = vmatprep.subr.mxu0 0.0
      %1220 = vmatpush1.msra.mxu0 %v1182
      %1221 = vmatprep.subr.mxu0 0.0
      %1222 = vmatpush2.msra.mxu0 0.0
      %1223 = vmatprep.subr.mxu0 0.0
      %1224 = vmatpush2.msra.mxu0 0.0
      %1225 = vmatprep.subr.mxu0 0.0
      %1226 = vmatpush2.msra.mxu0 0.0
      %1227 = vmatprep.subr.mxu0 0.0
      %1228 = vmatpush2.msra.mxu0 0.0
      %1229 = vmatprep.subr.mxu0 0.0
      %1230 = vmatpush2.msra.mxu0 0.0
      %1231 = vmatprep.subr.mxu0 0.0
      %1232 = vmatpush2.msra.mxu0 0.0
      %1233 = vmatprep.subr.mxu0 0.0
      %1234 = vmatpush2.msra.mxu0 0.0
      %1235 = vmatprep.subr.mxu0 0.0
      %1236 = vmatpush2.msra.mxu0 0.0
      %1237 = vmatprep.subr.mxu0 0.0
      %1238 = vmatpush2.msra.mxu0 0.0
      %1239 = vmatprep.subr.mxu0 0.0
      %1240 = vmatpush2.msra.mxu0 0.0
      %1241 = vmatprep.subr.mxu0 0.0
      %1242 = vmatpush2.msra.mxu0 0.0
      %1243 = vmatprep.subr.mxu0 0.0
      %1244 = vmatpush2.msra.mxu0 0.0
      %1245 = vmatprep.subr.mxu0 0.0
      %1246 = vmatpush2.msra.mxu0 0.0
      %1247 = vmatprep.subr.mxu0 0.0
      %1248 = vmatpush2.msra.mxu0 0.0
      %1249 = vmatprep.subr.mxu0 0.0
      %1250 = vmatpush2.msra.mxu0 0.0
      %1251 = vmatprep.subr.mxu0 0.0
      %1252 = vmatpush2.msra.mxu0 0.0
      %1253 = vmatprep.mubr.f32.mxu0 0.0
      %1254 = vmatmul.mubr.f32.gmra.mxu0 %v1184
      %v1255 = vpop.f32.mrf.mxu0
      %v1256 = vadd.f32 0.0, %v1255
      %v1257 = vpop.f32.mrf.mxu0
      %1258 = vmatprep.mubr.f32.mxu0 0.0
      %1259 = vmatmul.mubr.f32.gmra.mxu0 %v1187
      %v1260 = vpop.f32.mrf.mxu0
      %v1261 = vadd.f32 0.0, %v1260
      %v1262 = vpop.f32.mrf.mxu0
      %1263 = vdwg.mxu0
      %v1264 = vadd.f32 %v969, %v1256
      %v1265 = vadd.f32 %v974, %v1261
      %1266 = vrot.lane.b32.xlu0 %v386, 104
      %v1267 = vpop.permute.xlu0 %1266
      %1268 = vrot.lane.b32.xlu0 %v391, 104
      %v1269 = vpop.permute.xlu0 %1268
      %1270 = vrot.lane.b32.xlu0 %v386, 72
      %v1271 = vpop.permute.xlu0 %1270
      %1272 = vrot.lane.b32.xlu0 %v391, 72
      %v1273 = vpop.permute.xlu0 %1272
      %v1274 = vsel %vm407, %v1267, 0
      %v1276 = vsel %vm407, %v1269, 0
      %v1278 = vsel %vm407, %v1271, 0
      %v1280 = vsel %vm407, %v1273, 0
      %1282 = vmatprep.subr.mxu0 0.0
      %1283 = vmatpush1.xpose.msra.mxu0 0.0
      %1284 = vmatprep.subr.mxu0 0.0
      %1285 = vmatpush1.xpose.msra.mxu0 0.0
      %1286 = vmatprep.subr.mxu0 0.0
      %1287 = vmatpush1.xpose.msra.mxu0 0.0
      %1288 = vmatprep.subr.mxu0 0.0
      %1289 = vmatpush1.xpose.msra.mxu0 0.0
      %1290 = vmatprep.subr.mxu0 0.0
      %1291 = vmatpush1.xpose.msra.mxu0 0.0
      %1292 = vmatprep.subr.mxu0 0.0
      %1293 = vmatpush1.xpose.msra.mxu0 0.0
      %1294 = vmatprep.subr.mxu0 0.0
      %1295 = vmatpush1.xpose.msra.mxu0 0.0
      %1296 = vmatprep.subr.mxu0 0.0
      %1297 = vmatpush1.xpose.msra.mxu0 0.0
      %1298 = vmatprep.subr.mxu0 0.0
      %1299 = vmatpush1.xpose.msra.mxu0 0.0
      %1300 = vmatprep.subr.mxu0 0.0
      %1301 = vmatpush1.xpose.msra.mxu0 0.0
      %1302 = vmatprep.subr.mxu0 0.0
      %1303 = vmatpush1.xpose.msra.mxu0 0.0
      %1304 = vmatprep.subr.mxu0 0.0
      %1305 = vmatpush1.xpose.msra.mxu0 0.0
      %1306 = vmatprep.subr.mxu0 0.0
      %1307 = vmatpush1.xpose.msra.mxu0 0.0
      %1308 = vmatprep.subr.mxu0 0.0
      %1309 = vmatpush1.xpose.msra.mxu0 0.0
      %1310 = vmatprep.subr.mxu0 0.0
      %1311 = vmatpush1.xpose.msra.mxu0 %v1280
      %1312 = vmatprep.subr.mxu0 0.0
      %1313 = vmatpush1.xpose.msra.mxu0 %v1278
      %1314 = vmatprep.subr.mxu0 0.0
      %1315 = vmatpush2.xpose.msra.mxu0 0.0
      %1316 = vmatprep.subr.mxu0 0.0
      %1317 = vmatpush2.xpose.msra.mxu0 0.0
      %1318 = vmatprep.subr.mxu0 0.0
      %1319 = vmatpush2.xpose.msra.mxu0 0.0
      %1320 = vmatprep.subr.mxu0 0.0
      %1321 = vmatpush2.xpose.msra.mxu0 0.0
      %1322 = vmatprep.subr.mxu0 0.0
      %1323 = vmatpush2.xpose.msra.mxu0 0.0
      %1324 = vmatprep.subr.mxu0 0.0
      %1325 = vmatpush2.xpose.msra.mxu0 0.0
      %1326 = vmatprep.subr.mxu0 0.0
      %1327 = vmatpush2.xpose.msra.mxu0 0.0
      %1328 = vmatprep.subr.mxu0 0.0
      %1329 = vmatpush2.xpose.msra.mxu0 0.0
      %1330 = vmatprep.subr.mxu0 0.0
      %1331 = vmatpush2.xpose.msra.mxu0 0.0
      %1332 = vmatprep.subr.mxu0 0.0
      %1333 = vmatpush2.xpose.msra.mxu0 0.0
      %1334 = vmatprep.subr.mxu0 0.0
      %1335 = vmatpush2.xpose.msra.mxu0 0.0
      %1336 = vmatprep.subr.mxu0 0.0
      %1337 = vmatpush2.xpose.msra.mxu0 0.0
      %1338 = vmatprep.subr.mxu0 0.0
      %1339 = vmatpush2.xpose.msra.mxu0 0.0
      %1340 = vmatprep.subr.mxu0 0.0
      %1341 = vmatpush2.xpose.msra.mxu0 0.0
      %1342 = vmatprep.subr.mxu0 0.0
      %1343 = vmatpush2.xpose.msra.mxu0 0.0
      %1344 = vmatprep.subr.mxu0 0.0
      %1345 = vmatpush2.xpose.msra.mxu0 0.0
      %1346 = vmatprep.mubr.f32.mxu0 0.0
      %1347 = vmatmul.mubr.f32.gmra.mxu0 %v1274
      %v1348 = vpop.f32.mrf.mxu0
      %v1349 = vadd.f32 0.0, %v1348
      %v1350 = vpop.f32.mrf.mxu0
      %1351 = vmatprep.mubr.f32.mxu0 0.0
      %1352 = vmatmul.mubr.f32.gmra.mxu0 %v1276
      %v1353 = vpop.f32.mrf.mxu0
      %v1354 = vadd.f32 0.0, %v1353
      %v1355 = vpop.f32.mrf.mxu0
      %1356 = vdwg.mxu0
      %v1357 = vmul.f32 %v1349, 0.35355338
      %v1358 = vmul.f32 %v1354, 0.35355338
      %v1359 = vsel %vm399, %v1357, -1e+30
      %v1360 = vsel %vm400, %v1358, -1e+30
      %v1361 = vsel %vm495, %v1359, -inf
      %1362 = vmax.xlane.f32.xlu0 %v1361
      %v1363 = vpop.xlane.xlu0 %1362
      %v1364 = vsel %vm499, %v1360, -inf
      %1365 = vmax.xlane.f32.xlu0 %v1364
      %v1366 = vpop.xlane.xlu0 %1365
      %v1367 = vsub.f32 %v1359, %v1363
      %v1368 = vsub.f32 %v1360, %v1366
      %v1369 = vmul.f32 %v1367, 1.442695
      %v1370 = vpow.pop %v1369
      %v1371 = vmul.f32 %v1368, 1.442695
      %v1372 = vpow.pop %v1371
      %v1373 = vsel %vm495, %v1370, 0.0
      %1374 = vadd.xlane.f32.xlu0 %v1373
      %v1375 = vpop.xlane.xlu0 %1374
      %v1376 = vsel %vm499, %v1372, 0.0
      %1377 = vadd.xlane.f32.xlu0 %v1376
      %v1378 = vpop.xlane.xlu0 %1377
      %1379 = vrot.lane.b32.xlu0 %v386, 40
      %v1380 = vpop.permute.xlu0 %1379
      %1381 = vrot.lane.b32.xlu0 %v391, 40
      %v1382 = vpop.permute.xlu0 %1381
      %v1385 = vsel %vm495, %v1370, 0
      %v1388 = vsel %vm495, %v1372, 0
      %v1390 = vsel %vm526, %v1382, 0
      %1392 = vmatprep.subr.mxu0 0.0
      %1393 = vmatpush1.msra.mxu0 0.0
      %1394 = vmatprep.subr.mxu0 0.0
      %1395 = vmatpush1.msra.mxu0 0.0
      %1396 = vmatprep.subr.mxu0 0.0
      %1397 = vmatpush1.msra.mxu0 0.0
      %1398 = vmatprep.subr.mxu0 0.0
      %1399 = vmatpush1.msra.mxu0 0.0
      %1400 = vmatprep.subr.mxu0 0.0
      %1401 = vmatpush1.msra.mxu0 0.0
      %1402 = vmatprep.subr.mxu0 0.0
      %1403 = vmatpush1.msra.mxu0 0.0
      %1404 = vmatprep.subr.mxu0 0.0
      %1405 = vmatpush1.msra.mxu0 0.0
      %1406 = vmatprep.subr.mxu0 0.0
      %1407 = vmatpush1.msra.mxu0 0.0
      %1408 = vmatprep.subr.mxu0 0.0
      %1409 = vmatpush1.msra.mxu0 0.0
      %1410 = vmatprep.subr.mxu0 0.0
      %1411 = vmatpush1.msra.mxu0 0.0
      %1412 = vmatprep.subr.mxu0 0.0
      %1413 = vmatpush1.msra.mxu0 0.0
      %1414 = vmatprep.subr.mxu0 0.0
      %1415 = vmatpush1.msra.mxu0 0.0
      %1416 = vmatprep.subr.mxu0 0.0
      %1417 = vmatpush1.msra.mxu0 0.0
      %1418 = vmatprep.subr.mxu0 0.0
      %1419 = vmatpush1.msra.mxu0 0.0
      %1420 = vmatprep.subr.mxu0 0.0
      %1421 = vmatpush1.msra.mxu0 %v1390
      %1422 = vmatprep.subr.mxu0 0.0
      %1423 = vmatpush1.msra.mxu0 %v1380
      %1424 = vmatprep.subr.mxu0 0.0
      %1425 = vmatpush2.msra.mxu0 0.0
      %1426 = vmatprep.subr.mxu0 0.0
      %1427 = vmatpush2.msra.mxu0 0.0
      %1428 = vmatprep.subr.mxu0 0.0
      %1429 = vmatpush2.msra.mxu0 0.0
      %1430 = vmatprep.subr.mxu0 0.0
      %1431 = vmatpush2.msra.mxu0 0.0
      %1432 = vmatprep.subr.mxu0 0.0
      %1433 = vmatpush2.msra.mxu0 0.0
      %1434 = vmatprep.subr.mxu0 0.0
      %1435 = vmatpush2.msra.mxu0 0.0
      %1436 = vmatprep.subr.mxu0 0.0
      %1437 = vmatpush2.msra.mxu0 0.0
      %1438 = vmatprep.subr.mxu0 0.0
      %1439 = vmatpush2.msra.mxu0 0.0
      %1440 = vmatprep.subr.mxu0 0.0
      %1441 = vmatpush2.msra.mxu0 0.0
      %1442 = vmatprep.subr.mxu0 0.0
      %1443 = vmatpush2.msra.mxu0 0.0
      %1444 = vmatprep.subr.mxu0 0.0
      %1445 = vmatpush2.msra.mxu0 0.0
      %1446 = vmatprep.subr.mxu0 0.0
      %1447 = vmatpush2.msra.mxu0 0.0
      %1448 = vmatprep.subr.mxu0 0.0
      %1449 = vmatpush2.msra.mxu0 0.0
      %1450 = vmatprep.subr.mxu0 0.0
      %1451 = vmatpush2.msra.mxu0 0.0
      %1452 = vmatprep.subr.mxu0 0.0
      %1453 = vmatpush2.msra.mxu0 0.0
      %1454 = vmatprep.subr.mxu0 0.0
      %1455 = vmatpush2.msra.mxu0 0.0
      %1456 = vmatprep.mubr.f32.mxu0 0.0
      %1457 = vmatmul.mubr.f32.gmra.mxu0 %v1385
      %v1458 = vpop.f32.mrf.mxu0
      %v1459 = vadd.f32 0.0, %v1458
      %v1460 = vpop.f32.mrf.mxu0
      %1461 = vmatprep.mubr.f32.mxu0 0.0
      %1462 = vmatmul.mubr.f32.gmra.mxu0 %v1388
      %v1463 = vpop.f32.mrf.mxu0
      %v1464 = vadd.f32 0.0, %v1463
      %v1465 = vpop.f32.mrf.mxu0
      %1466 = vdwg.mxu0
      %v1467 = vrcp.pop %v1375
      %v1468 = vrcp.pop %v1378
      %v1469 = vmul.f32 %v1459, %v1467
      %v1470 = vmul.f32 %v1464, %v1468
      %v1471 = vld [vmem:[%s3 + $0x18] sm:$0xff]
      %v1473 = vsel %vm407, %v1469, 0
      %v1476 = vsel %vm407, %v1470, 0
      %1478 = vmatprep.subr.mxu0 0.0
      %1479 = vmatpush1.msra.mxu0 0.0
      %1480 = vmatprep.subr.mxu0 0.0
      %1481 = vmatpush1.msra.mxu0 0.0
      %1482 = vmatprep.subr.mxu0 0.0
      %1483 = vmatpush1.msra.mxu0 0.0
      %1484 = vmatprep.subr.mxu0 0.0
      %1485 = vmatpush1.msra.mxu0 0.0
      %1486 = vmatprep.subr.mxu0 0.0
      %1487 = vmatpush1.msra.mxu0 0.0
      %1488 = vmatprep.subr.mxu0 0.0
      %1489 = vmatpush1.msra.mxu0 0.0
      %1490 = vmatprep.subr.mxu0 0.0
      %1491 = vmatpush1.msra.mxu0 0.0
      %1492 = vmatprep.subr.mxu0 0.0
      %1493 = vmatpush1.msra.mxu0 0.0
      %1494 = vmatprep.subr.mxu0 0.0
      %1495 = vmatpush1.msra.mxu0 0.0
      %1496 = vmatprep.subr.mxu0 0.0
      %1497 = vmatpush1.msra.mxu0 0.0
      %1498 = vmatprep.subr.mxu0 0.0
      %1499 = vmatpush1.msra.mxu0 0.0
      %1500 = vmatprep.subr.mxu0 0.0
      %1501 = vmatpush1.msra.mxu0 0.0
      %1502 = vmatprep.subr.mxu0 0.0
      %1503 = vmatpush1.msra.mxu0 0.0
      %1504 = vmatprep.subr.mxu0 0.0
      %1505 = vmatpush1.msra.mxu0 0.0
      %1506 = vmatprep.subr.mxu0 0.0
      %1507 = vmatpush1.msra.mxu0 0.0
      %1508 = vmatprep.subr.mxu0 0.0
      %1509 = vmatpush1.msra.mxu0 %v1471
      %1510 = vmatprep.subr.mxu0 0.0
      %1511 = vmatpush2.msra.mxu0 0.0
      %1512 = vmatprep.subr.mxu0 0.0
      %1513 = vmatpush2.msra.mxu0 0.0
      %1514 = vmatprep.subr.mxu0 0.0
      %1515 = vmatpush2.msra.mxu0 0.0
      %1516 = vmatprep.subr.mxu0 0.0
      %1517 = vmatpush2.msra.mxu0 0.0
      %1518 = vmatprep.subr.mxu0 0.0
      %1519 = vmatpush2.msra.mxu0 0.0
      %1520 = vmatprep.subr.mxu0 0.0
      %1521 = vmatpush2.msra.mxu0 0.0
      %1522 = vmatprep.subr.mxu0 0.0
      %1523 = vmatpush2.msra.mxu0 0.0
      %1524 = vmatprep.subr.mxu0 0.0
      %1525 = vmatpush2.msra.mxu0 0.0
      %1526 = vmatprep.subr.mxu0 0.0
      %1527 = vmatpush2.msra.mxu0 0.0
      %1528 = vmatprep.subr.mxu0 0.0
      %1529 = vmatpush2.msra.mxu0 0.0
      %1530 = vmatprep.subr.mxu0 0.0
      %1531 = vmatpush2.msra.mxu0 0.0
      %1532 = vmatprep.subr.mxu0 0.0
      %1533 = vmatpush2.msra.mxu0 0.0
      %1534 = vmatprep.subr.mxu0 0.0
      %1535 = vmatpush2.msra.mxu0 0.0
      %1536 = vmatprep.subr.mxu0 0.0
      %1537 = vmatpush2.msra.mxu0 0.0
      %1538 = vmatprep.subr.mxu0 0.0
      %1539 = vmatpush2.msra.mxu0 0.0
      %1540 = vmatprep.subr.mxu0 0.0
      %1541 = vmatpush2.msra.mxu0 0.0
      %1542 = vmatprep.mubr.f32.mxu0 0.0
      %1543 = vmatmul.mubr.f32.gmra.mxu0 %v1473
      %v1544 = vpop.f32.mrf.mxu0
      %v1545 = vadd.f32 0.0, %v1544
      %v1546 = vpop.f32.mrf.mxu0
      %1547 = vmatprep.mubr.f32.mxu0 0.0
      %1548 = vmatmul.mubr.f32.gmra.mxu0 %v1476
      %v1549 = vpop.f32.mrf.mxu0
      %v1550 = vadd.f32 0.0, %v1549
      %v1551 = vpop.f32.mrf.mxu0
      %1552 = vdwg.mxu0
      %v1553 = vadd.f32 %v1264, %v1545
      %v1554 = vadd.f32 %v1265, %v1550
      %v1555 = vadd.f32 %v279, %v1553
      %v1556 = vadd.f32 %v280, %v1554
      %v1557 = vmul.f32 %v1555, %v1555
      %v1558 = vmul.f32 %v1556, %v1556
      %v1559 = vsel %vm283, %v1557, 0.0
      %1560 = vadd.xlane.f32.xlu0 %v1559
      %v1561 = vpop.xlane.xlu0 %1560
      %v1562 = vsel %vm287, %v1558, 0.0
      %1563 = vadd.xlane.f32.xlu0 %v1562
      %v1564 = vpop.xlane.xlu0 %1563
      %v1565 = vmul.f32 %v1561, %v291
      %v1566 = vmul.f32 %v1564, %v291
      %v1567 = vadd.f32 %v1565, 1e-06
      %v1568 = vadd.f32 %v1566, 1e-06
      %v1569 = vrsqrt.pop %v1567
      %v1570 = vrsqrt.pop %v1568
      %v1571 = vmul.f32 %v1555, %v1569
      %v1572 = vmul.f32 %v1556, %v1570
      %v1573 = vld [vmem:[%s4] sm:$0x1]
      %v1575 = vlaneseq
      %v1576 = vshrl.u32 %v1575, 7
      %v1577 = vsub.s32 0, %v1576
      %v1578 = vrot.slane %v1573, %v1577
      %v1580 = vmul.f32 %v1571, %v1578
      %v1581 = vmul.f32 %v1572, %v1578
      %v1582 = vld [vmem:[%s5] sm:$0xff]
      %v1583 = vld [vmem:[%s5 + $0x8] sm:$0xff]
      %v1584 = vld [vmem:[%s5 + $0x10] sm:$0xff]
      %v1585 = vld [vmem:[%s5 + $0x18] sm:$0xff]
      %v1587 = vsel %vm283, %v1580, 0
      %v1590 = vsel %vm283, %v1581, 0
      %1592 = vmatprep.subr.mxu0 0.0
      %1593 = vmatpush1.msra.mxu0 0.0
      %1594 = vmatprep.subr.mxu0 0.0
      %1595 = vmatpush1.msra.mxu0 0.0
      %1596 = vmatprep.subr.mxu0 0.0
      %1597 = vmatpush1.msra.mxu0 0.0
      %1598 = vmatprep.subr.mxu0 0.0
      %1599 = vmatpush1.msra.mxu0 0.0
      %1600 = vmatprep.subr.mxu0 0.0
      %1601 = vmatpush1.msra.mxu0 0.0
      %1602 = vmatprep.subr.mxu0 0.0
      %1603 = vmatpush1.msra.mxu0 0.0
      %1604 = vmatprep.subr.mxu0 0.0
      %1605 = vmatpush1.msra.mxu0 0.0
      %1606 = vmatprep.subr.mxu0 0.0
      %1607 = vmatpush1.msra.mxu0 0.0
      %1608 = vmatprep.subr.mxu0 0.0
      %1609 = vmatpush1.msra.mxu0 0.0
      %1610 = vmatprep.subr.mxu0 0.0
      %1611 = vmatpush1.msra.mxu0 0.0
      %1612 = vmatprep.subr.mxu0 0.0
      %1613 = vmatpush1.msra.mxu0 0.0
      %1614 = vmatprep.subr.mxu0 0.0
      %1615 = vmatpush1.msra.mxu0 0.0
      %1616 = vmatprep.subr.mxu0 0.0
      %1617 = vmatpush1.msra.mxu0 %v1585
      %1618 = vmatprep.subr.mxu0 0.0
      %1619 = vmatpush1.msra.mxu0 %v1584
      %1620 = vmatprep.subr.mxu0 0.0
      %1621 = vmatpush1.msra.mxu0 %v1583
      %1622 = vmatprep.subr.mxu0 0.0
      %1623 = vmatpush1.msra.mxu0 %v1582
      %1624 = vmatprep.subr.mxu0 0.0
      %1625 = vmatpush2.msra.mxu0 0.0
      %1626 = vmatprep.subr.mxu0 0.0
      %1627 = vmatpush2.msra.mxu0 0.0
      %1628 = vmatprep.subr.mxu0 0.0
      %1629 = vmatpush2.msra.mxu0 0.0
      %1630 = vmatprep.subr.mxu0 0.0
      %1631 = vmatpush2.msra.mxu0 0.0
      %1632 = vmatprep.subr.mxu0 0.0
      %1633 = vmatpush2.msra.mxu0 0.0
      %1634 = vmatprep.subr.mxu0 0.0
      %1635 = vmatpush2.msra.mxu0 0.0
      %1636 = vmatprep.subr.mxu0 0.0
      %1637 = vmatpush2.msra.mxu0 0.0
      %1638 = vmatprep.subr.mxu0 0.0
      %1639 = vmatpush2.msra.mxu0 0.0
      %1640 = vmatprep.subr.mxu0 0.0
      %1641 = vmatpush2.msra.mxu0 0.0
      %1642 = vmatprep.subr.mxu0 0.0
      %1643 = vmatpush2.msra.mxu0 0.0
      %1644 = vmatprep.subr.mxu0 0.0
      %1645 = vmatpush2.msra.mxu0 0.0
      %1646 = vmatprep.subr.mxu0 0.0
      %1647 = vmatpush2.msra.mxu0 0.0
      %1648 = vmatprep.subr.mxu0 0.0
      %1649 = vmatpush2.msra.mxu0 0.0
      %1650 = vmatprep.subr.mxu0 0.0
      %1651 = vmatpush2.msra.mxu0 0.0
      %1652 = vmatprep.subr.mxu0 0.0
      %1653 = vmatpush2.msra.mxu0 0.0
      %1654 = vmatprep.subr.mxu0 0.0
      %1655 = vmatpush2.msra.mxu0 0.0
      %1656 = vmatprep.mubr.f32.mxu0 0.0
      %1657 = vmatmul.mubr.f32.gmra.mxu0 %v1587
      %v1658 = vpop.f32.mrf.mxu0
      %v1659 = vadd.f32 0.0, %v1658
      %v1660 = vpop.f32.mrf.mxu0
      %1661 = vmatprep.mubr.f32.mxu0 0.0
      %1662 = vmatmul.mubr.f32.gmra.mxu0 %v1590
      %v1663 = vpop.f32.mrf.mxu0
      %v1664 = vadd.f32 0.0, %v1663
      %v1665 = vpop.f32.mrf.mxu0
      %1666 = vdwg.mxu0
      %v1667 = vxor.u32 %v1659, 2147483648
      %v1668 = vxor.u32 %v1664, 2147483648
      %v1669 = vmul.f32 %v1667, 1.442695
      %v1670 = vpow.pop %v1669
      %v1671 = vmul.f32 %v1668, 1.442695
      %v1672 = vpow.pop %v1671
      %v1673 = vadd.f32 %v1670, 1.0
      %v1674 = vadd.f32 %v1672, 1.0
      %v1675 = vrcp.pop %v1673
      %v1676 = vmul.f32 1.0, %v1675
      %v1677 = vrcp.pop %v1674
      %v1678 = vmul.f32 1.0, %v1677
      %v1679 = vmul.f32 %v1659, %v1676
      %v1680 = vmul.f32 %v1664, %v1678
      %1683 = vrot.lane.b32.xlu0 %v1659, 64
      %v1684 = vpop.permute.xlu0 %1683
      %1685 = vrot.lane.b32.xlu0 %v1664, 64
      %v1686 = vpop.permute.xlu0 %1685
      %v1689 = vmul.f32 %v1679, %v1684
      %v1690 = vmul.f32 %v1680, %v1686
      %v1691 = vld [vmem:[%s6] sm:$0xff]
      %v1692 = vld [vmem:[%s6 + $0x8] sm:$0xff]
      %v1693 = vld [vmem:[%s6 + $0x10] sm:$0xff]
      %v1694 = vld [vmem:[%s6 + $0x18] sm:$0xff]
      %v1695 = vld [vmem:[%s6 + $0x20] sm:$0xff]
      %v1696 = vld [vmem:[%s6 + $0x28] sm:$0xff]
      %v1697 = vld [vmem:[%s6 + $0x30] sm:$0xff]
      %v1698 = vld [vmem:[%s6 + $0x38] sm:$0xff]
      %vm1699 = vcmask 523264
      %v1701 = vsel %vm1699, %v1689, 0
      %v1704 = vsel %vm1699, %v1690, 0
      %1706 = vmatprep.subr.mxu0 0.0
      %1707 = vmatpush1.msra.mxu0 0.0
      %1708 = vmatprep.subr.mxu0 0.0
      %1709 = vmatpush1.msra.mxu0 0.0
      %1710 = vmatprep.subr.mxu0 0.0
      %1711 = vmatpush1.msra.mxu0 0.0
      %1712 = vmatprep.subr.mxu0 0.0
      %1713 = vmatpush1.msra.mxu0 0.0
      %1714 = vmatprep.subr.mxu0 0.0
      %1715 = vmatpush1.msra.mxu0 0.0
      %1716 = vmatprep.subr.mxu0 0.0
      %1717 = vmatpush1.msra.mxu0 0.0
      %1718 = vmatprep.subr.mxu0 0.0
      %1719 = vmatpush1.msra.mxu0 0.0
      %1720 = vmatprep.subr.mxu0 0.0
      %1721 = vmatpush1.msra.mxu0 0.0
      %1722 = vmatprep.subr.mxu0 0.0
      %1723 = vmatpush1.msra.mxu0 %v1698
      %1724 = vmatprep.subr.mxu0 0.0
      %1725 = vmatpush1.msra.mxu0 %v1697
      %1726 = vmatprep.subr.mxu0 0.0
      %1727 = vmatpush1.msra.mxu0 %v1696
      %1728 = vmatprep.subr.mxu0 0.0
      %1729 = vmatpush1.msra.mxu0 %v1695
      %1730 = vmatprep.subr.mxu0 0.0
      %1731 = vmatpush1.msra.mxu0 %v1694
      %1732 = vmatprep.subr.mxu0 0.0
      %1733 = vmatpush1.msra.mxu0 %v1693
      %1734 = vmatprep.subr.mxu0 0.0
      %1735 = vmatpush1.msra.mxu0 %v1692
      %1736 = vmatprep.subr.mxu0 0.0
      %1737 = vmatpush1.msra.mxu0 %v1691
      %1738 = vmatprep.subr.mxu0 0.0
      %1739 = vmatpush2.msra.mxu0 0.0
      %1740 = vmatprep.subr.mxu0 0.0
      %1741 = vmatpush2.msra.mxu0 0.0
      %1742 = vmatprep.subr.mxu0 0.0
      %1743 = vmatpush2.msra.mxu0 0.0
      %1744 = vmatprep.subr.mxu0 0.0
      %1745 = vmatpush2.msra.mxu0 0.0
      %1746 = vmatprep.subr.mxu0 0.0
      %1747 = vmatpush2.msra.mxu0 0.0
      %1748 = vmatprep.subr.mxu0 0.0
      %1749 = vmatpush2.msra.mxu0 0.0
      %1750 = vmatprep.subr.mxu0 0.0
      %1751 = vmatpush2.msra.mxu0 0.0
      %1752 = vmatprep.subr.mxu0 0.0
      %1753 = vmatpush2.msra.mxu0 0.0
      %1754 = vmatprep.subr.mxu0 0.0
      %1755 = vmatpush2.msra.mxu0 0.0
      %1756 = vmatprep.subr.mxu0 0.0
      %1757 = vmatpush2.msra.mxu0 0.0
      %1758 = vmatprep.subr.mxu0 0.0
      %1759 = vmatpush2.msra.mxu0 0.0
      %1760 = vmatprep.subr.mxu0 0.0
      %1761 = vmatpush2.msra.mxu0 0.0
      %1762 = vmatprep.subr.mxu0 0.0
      %1763 = vmatpush2.msra.mxu0 0.0
      %1764 = vmatprep.subr.mxu0 0.0
      %1765 = vmatpush2.msra.mxu0 0.0
      %1766 = vmatprep.subr.mxu0 0.0
      %1767 = vmatpush2.msra.mxu0 0.0
      %1768 = vmatprep.subr.mxu0 0.0
      %1769 = vmatpush2.msra.mxu0 0.0
      %1770 = vmatprep.mubr.f32.mxu0 0.0
      %1771 = vmatmul.mubr.f32.gmra.mxu0 %v1701
      %v1772 = vpop.f32.mrf.mxu0
      %v1773 = vadd.f32 0.0, %v1772
      %v1774 = vpop.f32.mrf.mxu0
      %1775 = vmatprep.mubr.f32.mxu0 0.0
      %1776 = vmatmul.mubr.f32.gmra.mxu0 %v1704
      %v1777 = vpop.f32.mrf.mxu0
      %v1778 = vadd.f32 0.0, %v1777
      %v1779 = vpop.f32.mrf.mxu0
      %1780 = vdwg.mxu0
      %v1781 = vadd.f32 %v1555, %v1773
      %v1782 = vadd.f32 %v1556, %v1778
      %1783 = vst.msk [vmem:[%s278] sm:$0xff] %vm283, %v1781
      %1784 = vst.msk [vmem:[%s278 + $0x8] sm:$0x3] %vm287, %v1782
      %p1785 = scmp.lt.s32.totalorder %s18, 1
      %s1786 = scalar_select %p1785, %s18, 1
      %s1787 = smul.addr %s1786, 2
      %s1788 = smul.addr %s1787, 8
      %s1789 = scalar_lea.vmem %s7, %s1788
      // Predicated region
      $region49: #{cross_jamba_both_forward.4} parent=47 // pred_check
        %p1790 = pneg %p188
      $region50: #{cross_jamba_both_forward.4} parent=47 // pred_check_branch
        %1792 = sbr.rel (%p1790) target = $region52
      $region51: #{cross_jamba_both_forward.4} parent=47 // pred_region
        _
      $region52: #{cross_jamba_both_forward.4} parent=47 // pred_fallthru
        _
    $region48: #{cross_jamba_both_forward.4} parent=5 // pred_fallthru
      _
    %p1793 = scmp.le.s32.totalorder 2, %s13
    // Predicated region
    $region53: #{cross_jamba_both_forward.4} parent=5 // pred_check
      %p1794 = pneg %p1793
    $region54: #{cross_jamba_both_forward.4} parent=5 // pred_check_branch
      %1796 = sbr.rel (%p1794) target = $region56
    $region55: #{cross_jamba_both_forward.4} parent=5 // pred_region
      %s1797 = ssub.s32 %s13, 2
      // Predicated region
      $region57: #{cross_jamba_both_forward.4} parent=55 // pred_check
        %p1798 = pneg %p194
      $region58: #{cross_jamba_both_forward.4} parent=55 // pred_check_branch
        %1800 = sbr.rel (%p1798) target = $region60
      $region59: #{cross_jamba_both_forward.4} parent=55 // pred_region
        %p1801 = scmp.lt.s32.totalorder %s19, 1
        %s1802 = scalar_select %p1801, %s19, 1
        %s1803 = smul.addr %s1802, 2
        %s1804 = smul.addr %s1803, 8
        %s1805 = scalar_lea.vmem %s7, %s1804
      $region60: #{cross_jamba_both_forward.4} parent=55 // pred_fallthru
        _
    $region56: #{cross_jamba_both_forward.4} parent=5 // pred_fallthru
      _
  $region6: #{cross_jamba_both_forward.4} parent=0 // loop_footer
    %s17 = sadd.s32 1, %s13
  $region7: #{cross_jamba_both_forward.4} parent=0 // loop_footer_branch
    %12 = sbr.rel target = $region3
  $region8: #{cross_jamba_both_forward.4} parent=0 // loop_exit
    _

// kernel: cross_jamba_both_forward.3
$region0: #{cross_jamba_both_forward.3}
  #allocation0 [shape = 'u32[]', space=smem, size = 0x4, offset = 0x4, fixed_abs, tag = 'smem constant byte address 0x4 - core index']
  #allocation1 [shape = 'u32[144,128]{1,0:T(1,128)}', space=vmem, size = 0x12000, scoped, tag = 'internal scratch']
  %s0 = inlined_call_operand.vmem [shape: f32[2,10,32], index: 0, kind: input, shape index: {}]
  %s1 = inlined_call_operand.vmem [shape: f32[1,32], index: 1, kind: input, shape index: {}]
  %s2 = inlined_call_operand.vmem [shape: f32[32,128], index: 2, kind: input, shape index: {}]
  %s3 = inlined_call_operand.vmem [shape: f32[4,64], index: 3, kind: input, shape index: {}]
  %s4 = inlined_call_operand.vmem [shape: f32[1,64], index: 4, kind: input, shape index: {}]
  %s5 = inlined_call_operand.vmem [shape: f32[64,34], index: 5, kind: input, shape index: {}]
  %s6 = inlined_call_operand.vmem [shape: f32[2,64], index: 6, kind: input, shape index: {}]
  %s7 = inlined_call_operand.vmem [shape: f32[1,64], index: 7, kind: input, shape index: {}]
  %s8 = inlined_call_operand.vmem [shape: f32[16,64], index: 8, kind: input, shape index: {}]
  %s9 = inlined_call_operand.vmem [shape: f32[1,64], index: 9, kind: input, shape index: {}]
  %s10 = inlined_call_operand.vmem [shape: f32[64,32], index: 10, kind: input, shape index: {}]
  %s11 = inlined_call_operand.vmem [shape: f32[1,32], index: 11, kind: input, shape index: {}]
  %s12 = inlined_call_operand.vmem [shape: f32[32,128], index: 12, kind: input, shape index: {}]
  %s13 = inlined_call_operand.vmem [shape: f32[64,32], index: 13, kind: input, shape index: {}]
  %s14 = inlined_call_operand.vmem [shape: f32[2,10,32], index: 14, kind: output, shape index: {}]
  %s15 = sld [smem:[#allocation0]]
  $region89: #{cross_jamba_both_forward.3} parent=0
    _
  %s17 = ssub.s32 1, %s15
  %s18 = scalar_select 0, %s17, %s15
  loop: start=0, step=1, limit=4
  $region2: #{cross_jamba_both_forward.3} parent=0 // loop_pre_header
    _
  $region3: #{cross_jamba_both_forward.3} parent=0 // loop_header
    %s20 = sphi 0, %s24
    %p21 = scmp.ge.s32.totalorder %s20, 4
    %s30 = sphi 0, %s32
    %s33 = sphi 0, %s30
    %s34 = sphi 0, %s33
    %s50 = sphi 0, %s34
    %s54 = sphi 0, %s54
    %s56 = sphi 0, %s54
    %s57 = sphi 0, %s56
    %s71 = sphi 0, %s57
    %s75 = sphi 0, %s75
    %s77 = sphi 0, %s75
    %s78 = sphi 0, %s77
    %s92 = sphi 0, %s78
    %s96 = sphi 0, %s96
    %s98 = sphi 0, %s96
    %s99 = sphi 0, %s98
    %s113 = sphi 0, %s99
    %s117 = sphi 0, %s117
    %s119 = sphi 0, %s117
    %s120 = sphi 0, %s119
    %s134 = sphi 0, %s120
    %s138 = sphi 0, %s138
    %s140 = sphi 0, %s138
    %s141 = sphi 0, %s140
    %s155 = sphi 0, %s141
    %s159 = sphi 0, %s159
    %s161 = sphi 0, %s159
    %s162 = sphi 0, %s161
    %s176 = sphi 0, %s162
    %s180 = sphi 0, %s180
    %s182 = sphi 0, %s180
    %s183 = sphi 0, %s182
    %s197 = sphi 0, %s183
    %s201 = sphi 0, %s201
    %s203 = sphi 0, %s201
    %s204 = sphi 0, %s203
    %s218 = sphi 0, %s204
    %s222 = sphi 0, %s222
    %s224 = sphi 0, %s222
    %s225 = sphi 0, %s224
    %s239 = sphi 0, %s225
    %s243 = sphi 0, %s243
    %s245 = sphi 0, %s243
    %s246 = sphi 0, %s245
    %s260 = sphi 0, %s246
    %s264 = sphi 0, %s264
    %s266 = sphi 0, %s264
    %s267 = sphi 0, %s266
    %s281 = sphi 0, %s267
    %s285 = sphi 0, %s285
    %s287 = sphi 0, %s285
    %s288 = sphi 0, %s287
    %s302 = sphi 0, %s288
    %s306 = sphi 0, %s306
    %s308 = sphi 0, %s306
    %s309 = sphi 0, %s308
    %s323 = sphi 0, %s309
    %s329 = sphi 0, %s331
    %s332 = sphi 0, %s329
    %s333 = sphi 0, %s332
    %s349 = sphi 0, %s333
  $region4: #{cross_jamba_both_forward.3} parent=0 // loop_header_branch
    %23 = sbr.rel (%p21) target = $region8
  $region5: #{cross_jamba_both_forward.3} parent=0 // loop_body
    %s25 = ssub.s32 %s20, 1
    %s26 = ssub.s32 %s20, 2
    %s27 = sadd.s32 %s20, 1
    %s28 = ssub.s32 %s20, %s27
    %p29 = scmp.eq.s32.totalorder %s28, 0
    %s31 = sadd.s32 %s30, 1
    %s32 = scalar_select %p29, %s30, %s31
    %p35 = pneg %p29
    %p36 = scmp.eq.s32.totalorder %s20, 1
    %p37 = por %p35, %p36
    %p38 = scmp.ne.s32.totalorder %s30, %s33
    %p39 = scmp.eq.s32.totalorder %s20, 0
    %p40 = por %p38, %p39
    %p41 = scmp.ne.s32.totalorder %s30, %s33
    %p42 = scmp.eq.s32.totalorder %s25, 1
    %p43 = por %p41, %p42
    %p44 = scmp.ne.s32.totalorder %s33, %s34
    %p45 = scmp.eq.s32.totalorder %s25, 0
    %p46 = por %p44, %p45
    %p47 = scmp.ne.s32.totalorder %s33, %s34
    %p48 = scmp.eq.s32.totalorder %s26, 1
    %p49 = por %p47, %p48
    %p51 = scmp.ne.s32.totalorder %s34, %s50
    %p52 = scmp.eq.s32.totalorder %s26, 0
    %p53 = por %p51, %p52
    %s55 = sadd.s32 %s54, 1
    %p58 = scmp.eq.s32.totalorder %s20, 1
    %p59 = scmp.ne.s32.totalorder %s54, %s56
    %p60 = scmp.eq.s32.totalorder %s20, 0
    %p61 = por %p59, %p60
    %p62 = scmp.ne.s32.totalorder %s54, %s56
    %p63 = scmp.eq.s32.totalorder %s25, 1
    %p64 = por %p62, %p63
    %p65 = scmp.ne.s32.totalorder %s56, %s57
    %p66 = scmp.eq.s32.totalorder %s25, 0
    %p67 = por %p65, %p66
    %p68 = scmp.ne.s32.totalorder %s56, %s57
    %p69 = scmp.eq.s32.totalorder %s26, 1
    %p70 = por %p68, %p69
    %p72 = scmp.ne.s32.totalorder %s57, %s71
    %p73 = scmp.eq.s32.totalorder %s26, 0
    %p74 = por %p72, %p73
    %s76 = sadd.s32 %s75, 1
    %p79 = scmp.eq.s32.totalorder %s20, 1
    %p80 = scmp.ne.s32.totalorder %s75, %s77
    %p81 = scmp.eq.s32.totalorder %s20, 0
    %p82 = por %p80, %p81
    %p83 = scmp.ne.s32.totalorder %s75, %s77
    %p84 = scmp.eq.s32.totalorder %s25, 1
    %p85 = por %p83, %p84
    %p86 = scmp.ne.s32.totalorder %s77, %s78
    %p87 = scmp.eq.s32.totalorder %s25, 0
    %p88 = por %p86, %p87
    %p89 = scmp.ne.s32.totalorder %s77, %s78
    %p90 = scmp.eq.s32.totalorder %s26, 1
    %p91 = por %p89, %p90
    %p93 = scmp.ne.s32.totalorder %s78, %s92
    %p94 = scmp.eq.s32.totalorder %s26, 0
    %p95 = por %p93, %p94
    %s97 = sadd.s32 %s96, 1
    %p100 = scmp.eq.s32.totalorder %s20, 1
    %p101 = scmp.ne.s32.totalorder %s96, %s98
    %p102 = scmp.eq.s32.totalorder %s20, 0
    %p103 = por %p101, %p102
    %p104 = scmp.ne.s32.totalorder %s96, %s98
    %p105 = scmp.eq.s32.totalorder %s25, 1
    %p106 = por %p104, %p105
    %p107 = scmp.ne.s32.totalorder %s98, %s99
    %p108 = scmp.eq.s32.totalorder %s25, 0
    %p109 = por %p107, %p108
    %p110 = scmp.ne.s32.totalorder %s98, %s99
    %p111 = scmp.eq.s32.totalorder %s26, 1
    %p112 = por %p110, %p111
    %p114 = scmp.ne.s32.totalorder %s99, %s113
    %p115 = scmp.eq.s32.totalorder %s26, 0
    %p116 = por %p114, %p115
    %s118 = sadd.s32 %s117, 1
    %p121 = scmp.eq.s32.totalorder %s20, 1
    %p122 = scmp.ne.s32.totalorder %s117, %s119
    %p123 = scmp.eq.s32.totalorder %s20, 0
    %p124 = por %p122, %p123
    %p125 = scmp.ne.s32.totalorder %s117, %s119
    %p126 = scmp.eq.s32.totalorder %s25, 1
    %p127 = por %p125, %p126
    %p128 = scmp.ne.s32.totalorder %s119, %s120
    %p129 = scmp.eq.s32.totalorder %s25, 0
    %p130 = por %p128, %p129
    %p131 = scmp.ne.s32.totalorder %s119, %s120
    %p132 = scmp.eq.s32.totalorder %s26, 1
    %p133 = por %p131, %p132
    %p135 = scmp.ne.s32.totalorder %s120, %s134
    %p136 = scmp.eq.s32.totalorder %s26, 0
    %p137 = por %p135, %p136
    %s139 = sadd.s32 %s138, 1
    %p142 = scmp.eq.s32.totalorder %s20, 1
    %p143 = scmp.ne.s32.totalorder %s138, %s140
    %p144 = scmp.eq.s32.totalorder %s20, 0
    %p145 = por %p143, %p144
    %p146 = scmp.ne.s32.totalorder %s138, %s140
    %p147 = scmp.eq.s32.totalorder %s25, 1
    %p148 = por %p146, %p147
    %p149 = scmp.ne.s32.totalorder %s140, %s141
    %p150 = scmp.eq.s32.totalorder %s25, 0
    %p151 = por %p149, %p150
    %p152 = scmp.ne.s32.totalorder %s140, %s141
    %p153 = scmp.eq.s32.totalorder %s26, 1
    %p154 = por %p152, %p153
    %p156 = scmp.ne.s32.totalorder %s141, %s155
    %p157 = scmp.eq.s32.totalorder %s26, 0
    %p158 = por %p156, %p157
    %s160 = sadd.s32 %s159, 1
    %p163 = scmp.eq.s32.totalorder %s20, 1
    %p164 = scmp.ne.s32.totalorder %s159, %s161
    %p165 = scmp.eq.s32.totalorder %s20, 0
    %p166 = por %p164, %p165
    %p167 = scmp.ne.s32.totalorder %s159, %s161
    %p168 = scmp.eq.s32.totalorder %s25, 1
    %p169 = por %p167, %p168
    %p170 = scmp.ne.s32.totalorder %s161, %s162
    %p171 = scmp.eq.s32.totalorder %s25, 0
    %p172 = por %p170, %p171
    %p173 = scmp.ne.s32.totalorder %s161, %s162
    %p174 = scmp.eq.s32.totalorder %s26, 1
    %p175 = por %p173, %p174
    %p177 = scmp.ne.s32.totalorder %s162, %s176
    %p178 = scmp.eq.s32.totalorder %s26, 0
    %p179 = por %p177, %p178
    %s181 = sadd.s32 %s180, 1
    %p184 = scmp.eq.s32.totalorder %s20, 1
    %p185 = scmp.ne.s32.totalorder %s180, %s182
    %p186 = scmp.eq.s32.totalorder %s20, 0
    %p187 = por %p185, %p186
    %p188 = scmp.ne.s32.totalorder %s180, %s182
    %p189 = scmp.eq.s32.totalorder %s25, 1
    %p190 = por %p188, %p189
    %p191 = scmp.ne.s32.totalorder %s182, %s183
    %p192 = scmp.eq.s32.totalorder %s25, 0
    %p193 = por %p191, %p192
    %p194 = scmp.ne.s32.totalorder %s182, %s183
    %p195 = scmp.eq.s32.totalorder %s26, 1
    %p196 = por %p194, %p195
    %p198 = scmp.ne.s32.totalorder %s183, %s197
    %p199 = scmp.eq.s32.totalorder %s26, 0
    %p200 = por %p198, %p199
    %s202 = sadd.s32 %s201, 1
    %p205 = scmp.eq.s32.totalorder %s20, 1
    %p206 = scmp.ne.s32.totalorder %s201, %s203
    %p207 = scmp.eq.s32.totalorder %s20, 0
    %p208 = por %p206, %p207
    %p209 = scmp.ne.s32.totalorder %s201, %s203
    %p210 = scmp.eq.s32.totalorder %s25, 1
    %p211 = por %p209, %p210
    %p212 = scmp.ne.s32.totalorder %s203, %s204
    %p213 = scmp.eq.s32.totalorder %s25, 0
    %p214 = por %p212, %p213
    %p215 = scmp.ne.s32.totalorder %s203, %s204
    %p216 = scmp.eq.s32.totalorder %s26, 1
    %p217 = por %p215, %p216
    %p219 = scmp.ne.s32.totalorder %s204, %s218
    %p220 = scmp.eq.s32.totalorder %s26, 0
    %p221 = por %p219, %p220
    %s223 = sadd.s32 %s222, 1
    %p226 = scmp.eq.s32.totalorder %s20, 1
    %p227 = scmp.ne.s32.totalorder %s222, %s224
    %p228 = scmp.eq.s32.totalorder %s20, 0
    %p229 = por %p227, %p228
    %p230 = scmp.ne.s32.totalorder %s222, %s224
    %p231 = scmp.eq.s32.totalorder %s25, 1
    %p232 = por %p230, %p231
    %p233 = scmp.ne.s32.totalorder %s224, %s225
    %p234 = scmp.eq.s32.totalorder %s25, 0
    %p235 = por %p233, %p234
    %p236 = scmp.ne.s32.totalorder %s224, %s225
    %p237 = scmp.eq.s32.totalorder %s26, 1
    %p238 = por %p236, %p237
    %p240 = scmp.ne.s32.totalorder %s225, %s239
    %p241 = scmp.eq.s32.totalorder %s26, 0
    %p242 = por %p240, %p241
    %s244 = sadd.s32 %s243, 1
    %p247 = scmp.eq.s32.totalorder %s20, 1
    %p248 = scmp.ne.s32.totalorder %s243, %s245
    %p249 = scmp.eq.s32.totalorder %s20, 0
    %p250 = por %p248, %p249
    %p251 = scmp.ne.s32.totalorder %s243, %s245
    %p252 = scmp.eq.s32.totalorder %s25, 1
    %p253 = por %p251, %p252
    %p254 = scmp.ne.s32.totalorder %s245, %s246
    %p255 = scmp.eq.s32.totalorder %s25, 0
    %p256 = por %p254, %p255
    %p257 = scmp.ne.s32.totalorder %s245, %s246
    %p258 = scmp.eq.s32.totalorder %s26, 1
    %p259 = por %p257, %p258
    %p261 = scmp.ne.s32.totalorder %s246, %s260
    %p262 = scmp.eq.s32.totalorder %s26, 0
    %p263 = por %p261, %p262
    %s265 = sadd.s32 %s264, 1
    %p268 = scmp.eq.s32.totalorder %s20, 1
    %p269 = scmp.ne.s32.totalorder %s264, %s266
    %p270 = scmp.eq.s32.totalorder %s20, 0
    %p271 = por %p269, %p270
    %p272 = scmp.ne.s32.totalorder %s264, %s266
    %p273 = scmp.eq.s32.totalorder %s25, 1
    %p274 = por %p272, %p273
    %p275 = scmp.ne.s32.totalorder %s266, %s267
    %p276 = scmp.eq.s32.totalorder %s25, 0
    %p277 = por %p275, %p276
    %p278 = scmp.ne.s32.totalorder %s266, %s267
    %p279 = scmp.eq.s32.totalorder %s26, 1
    %p280 = por %p278, %p279
    %p282 = scmp.ne.s32.totalorder %s267, %s281
    %p283 = scmp.eq.s32.totalorder %s26, 0
    %p284 = por %p282, %p283
    %s286 = sadd.s32 %s285, 1
    %p289 = scmp.eq.s32.totalorder %s20, 1
    %p290 = scmp.ne.s32.totalorder %s285, %s287
    %p291 = scmp.eq.s32.totalorder %s20, 0
    %p292 = por %p290, %p291
    %p293 = scmp.ne.s32.totalorder %s285, %s287
    %p294 = scmp.eq.s32.totalorder %s25, 1
    %p295 = por %p293, %p294
    %p296 = scmp.ne.s32.totalorder %s287, %s288
    %p297 = scmp.eq.s32.totalorder %s25, 0
    %p298 = por %p296, %p297
    %p299 = scmp.ne.s32.totalorder %s287, %s288
    %p300 = scmp.eq.s32.totalorder %s26, 1
    %p301 = por %p299, %p300
    %p303 = scmp.ne.s32.totalorder %s288, %s302
    %p304 = scmp.eq.s32.totalorder %s26, 0
    %p305 = por %p303, %p304
    %s307 = sadd.s32 %s306, 1
    %p310 = scmp.eq.s32.totalorder %s20, 1
    %p311 = scmp.ne.s32.totalorder %s306, %s308
    %p312 = scmp.eq.s32.totalorder %s20, 0
    %p313 = por %p311, %p312
    %p314 = scmp.ne.s32.totalorder %s306, %s308
    %p315 = scmp.eq.s32.totalorder %s25, 1
    %p316 = por %p314, %p315
    %p317 = scmp.ne.s32.totalorder %s308, %s309
    %p318 = scmp.eq.s32.totalorder %s25, 0
    %p319 = por %p317, %p318
    %p320 = scmp.ne.s32.totalorder %s308, %s309
    %p321 = scmp.eq.s32.totalorder %s26, 1
    %p322 = por %p320, %p321
    %p324 = scmp.ne.s32.totalorder %s309, %s323
    %p325 = scmp.eq.s32.totalorder %s26, 0
    %p326 = por %p324, %p325
    %s327 = ssub.s32 %s20, %s27
    %p328 = scmp.eq.s32.totalorder %s327, 0
    %s330 = sadd.s32 %s329, 1
    %s331 = scalar_select %p328, %s329, %s330
    %p334 = pneg %p328
    %p335 = scmp.eq.s32.totalorder %s20, 1
    %p336 = por %p334, %p335
    %p337 = scmp.ne.s32.totalorder %s329, %s332
    %p338 = scmp.eq.s32.totalorder %s20, 0
    %p339 = por %p337, %p338
    %p340 = scmp.ne.s32.totalorder %s329, %s332
    %p341 = scmp.eq.s32.totalorder %s25, 1
    %p342 = por %p340, %p341
    %p343 = scmp.ne.s32.totalorder %s332, %s333
    %p344 = scmp.eq.s32.totalorder %s25, 0
    %p345 = por %p343, %p344
    %p346 = scmp.ne.s32.totalorder %s332, %s333
    %p347 = scmp.eq.s32.totalorder %s26, 1
    %p348 = por %p346, %p347
    %p350 = scmp.ne.s32.totalorder %s333, %s349
    %p351 = scmp.eq.s32.totalorder %s26, 0
    %p352 = por %p350, %p351
    %p353 = scmp.le.s32.totalorder 1, %s20
    %p354 = scmp.lt.s32.totalorder %s20, 3
    %p355 = pnand %p353, %p354
    %p356 = pneg %p355
    // Predicated region
    $region9: #{cross_jamba_both_forward.3} parent=5 // pred_check
      _
    $region10: #{cross_jamba_both_forward.3} parent=5 // pred_check_branch
      %358 = sbr.rel (%p355) target = $region12
    $region11: #{cross_jamba_both_forward.3} parent=5 // pred_region
      %s359 = ssub.s32 %s20, 1
      // Predicated region
      $region13: #{cross_jamba_both_forward.3} parent=11 // pred_check
        %p360 = pneg %p67
      $region14: #{cross_jamba_both_forward.3} parent=11 // pred_check_branch
        %362 = sbr.rel (%p360) target = $region16
      $region15: #{cross_jamba_both_forward.3} parent=11 // pred_region
        _
      $region16: #{cross_jamba_both_forward.3} parent=11 // pred_fallthru
        _
      // Predicated region
      $region17: #{cross_jamba_both_forward.3} parent=11 // pred_check
        %p363 = pneg %p88
      $region18: #{cross_jamba_both_forward.3} parent=11 // pred_check_branch
        %365 = sbr.rel (%p363) target = $region20
      $region19: #{cross_jamba_both_forward.3} parent=11 // pred_region
        _
      $region20: #{cross_jamba_both_forward.3} parent=11 // pred_fallthru
        _
      // Predicated region
      $region21: #{cross_jamba_both_forward.3} parent=11 // pred_check
        %p366 = pneg %p109
      $region22: #{cross_jamba_both_forward.3} parent=11 // pred_check_branch
        %368 = sbr.rel (%p366) target = $region24
      $region23: #{cross_jamba_both_forward.3} parent=11 // pred_region
        _
      $region24: #{cross_jamba_both_forward.3} parent=11 // pred_fallthru
        _
      // Predicated region
      $region25: #{cross_jamba_both_forward.3} parent=11 // pred_check
        %p369 = pneg %p130
      $region26: #{cross_jamba_both_forward.3} parent=11 // pred_check_branch
        %371 = sbr.rel (%p369) target = $region28
      $region27: #{cross_jamba_both_forward.3} parent=11 // pred_region
        _
      $region28: #{cross_jamba_both_forward.3} parent=11 // pred_fallthru
        _
      // Predicated region
      $region29: #{cross_jamba_both_forward.3} parent=11 // pred_check
        %p372 = pneg %p151
      $region30: #{cross_jamba_both_forward.3} parent=11 // pred_check_branch
        %374 = sbr.rel (%p372) target = $region32
      $region31: #{cross_jamba_both_forward.3} parent=11 // pred_region
        _
      $region32: #{cross_jamba_both_forward.3} parent=11 // pred_fallthru
        _
      // Predicated region
      $region33: #{cross_jamba_both_forward.3} parent=11 // pred_check
        %p375 = pneg %p172
      $region34: #{cross_jamba_both_forward.3} parent=11 // pred_check_branch
        %377 = sbr.rel (%p375) target = $region36
      $region35: #{cross_jamba_both_forward.3} parent=11 // pred_region
        _
      $region36: #{cross_jamba_both_forward.3} parent=11 // pred_fallthru
        _
      // Predicated region
      $region37: #{cross_jamba_both_forward.3} parent=11 // pred_check
        %p378 = pneg %p193
      $region38: #{cross_jamba_both_forward.3} parent=11 // pred_check_branch
        %380 = sbr.rel (%p378) target = $region40
      $region39: #{cross_jamba_both_forward.3} parent=11 // pred_region
        _
      $region40: #{cross_jamba_both_forward.3} parent=11 // pred_fallthru
        _
      // Predicated region
      $region41: #{cross_jamba_both_forward.3} parent=11 // pred_check
        %p381 = pneg %p214
      $region42: #{cross_jamba_both_forward.3} parent=11 // pred_check_branch
        %383 = sbr.rel (%p381) target = $region44
      $region43: #{cross_jamba_both_forward.3} parent=11 // pred_region
        _
      $region44: #{cross_jamba_both_forward.3} parent=11 // pred_fallthru
        _
      // Predicated region
      $region45: #{cross_jamba_both_forward.3} parent=11 // pred_check
        %p384 = pneg %p235
      $region46: #{cross_jamba_both_forward.3} parent=11 // pred_check_branch
        %386 = sbr.rel (%p384) target = $region48
      $region47: #{cross_jamba_both_forward.3} parent=11 // pred_region
        _
      $region48: #{cross_jamba_both_forward.3} parent=11 // pred_fallthru
        _
      // Predicated region
      $region49: #{cross_jamba_both_forward.3} parent=11 // pred_check
        %p387 = pneg %p256
      $region50: #{cross_jamba_both_forward.3} parent=11 // pred_check_branch
        %389 = sbr.rel (%p387) target = $region52
      $region51: #{cross_jamba_both_forward.3} parent=11 // pred_region
        _
      $region52: #{cross_jamba_both_forward.3} parent=11 // pred_fallthru
        _
      // Predicated region
      $region53: #{cross_jamba_both_forward.3} parent=11 // pred_check
        %p390 = pneg %p277
      $region54: #{cross_jamba_both_forward.3} parent=11 // pred_check_branch
        %392 = sbr.rel (%p390) target = $region56
      $region55: #{cross_jamba_both_forward.3} parent=11 // pred_region
        _
      $region56: #{cross_jamba_both_forward.3} parent=11 // pred_fallthru
        _
      // Predicated region
      $region57: #{cross_jamba_both_forward.3} parent=11 // pred_check
        %p393 = pneg %p298
      $region58: #{cross_jamba_both_forward.3} parent=11 // pred_check_branch
        %395 = sbr.rel (%p393) target = $region60
      $region59: #{cross_jamba_both_forward.3} parent=11 // pred_region
        _
      $region60: #{cross_jamba_both_forward.3} parent=11 // pred_fallthru
        _
      // Predicated region
      $region61: #{cross_jamba_both_forward.3} parent=11 // pred_check
        %p396 = pneg %p319
      $region62: #{cross_jamba_both_forward.3} parent=11 // pred_check_branch
        %398 = sbr.rel (%p396) target = $region64
      $region63: #{cross_jamba_both_forward.3} parent=11 // pred_region
        _
      $region64: #{cross_jamba_both_forward.3} parent=11 // pred_fallthru
        _
    $region12: #{cross_jamba_both_forward.3} parent=5 // pred_fallthru
      _
    %p399 = scmp.lt.s32.totalorder %s20, 2
    // Predicated region
    $region65: #{cross_jamba_both_forward.3} parent=5 // pred_check
      %p400 = pneg %p399
    $region66: #{cross_jamba_both_forward.3} parent=5 // pred_check_branch
      %402 = sbr.rel (%p400) target = $region68
    $region67: #{cross_jamba_both_forward.3} parent=5 // pred_region
      // Predicated region
      $region69: #{cross_jamba_both_forward.3} parent=67 // pred_check
        %p403 = pneg %p40
      $region70: #{cross_jamba_both_forward.3} parent=67 // pred_check_branch
        %405 = sbr.rel (%p403) target = $region72
      $region71: #{cross_jamba_both_forward.3} parent=67 // pred_region
        %p406 = scmp.lt.s32.totalorder %s20, 1
        %s407 = scalar_select %p406, %s20, 1
        %s408 = smul.addr %s407, 2
        %s409 = smul.addr %s408, 8
        %s410 = scalar_lea.vmem %s0, %s409
      $region72: #{cross_jamba_both_forward.3} parent=67 // pred_fallthru
        _
    $region68: #{cross_jamba_both_forward.3} parent=5 // pred_fallthru
      _
    %p411 = scmp.le.s32.totalorder 1, %s20
    %p412 = scmp.lt.s32.totalorder %s20, 3
    %p413 = pnand %p411, %p412
    %p414 = pneg %p413
    // Predicated region
    $region73: #{cross_jamba_both_forward.3} parent=5 // pred_check
      _
    $region74: #{cross_jamba_both_forward.3} parent=5 // pred_check_branch
      %416 = sbr.rel (%p413) target = $region76
    $region75: #{cross_jamba_both_forward.3} parent=5 // pred_region
      %s417 = ssub.s32 %s20, 1
      %p418 = scmp.lt.s32.totalorder %s25, 1
      %s419 = scalar_select %p418, %s25, 1
      %s420 = smul.addr %s419, 2
      %s421 = smul.addr %s420, 8
      %s422 = scalar_lea.vmem %s0, %s421
      %p423 = pneg %p46
      %p424 = pneg %p43
      %p425 = pneg %p67
      %p426 = pneg %p64
      %p427 = pneg %p88
      %p428 = pneg %p85
      %p429 = pneg %p109
      %p430 = pneg %p106
      %p431 = pneg %p130
      %p432 = pneg %p127
      %p433 = pneg %p151
      %p434 = pneg %p148
      %p435 = pneg %p172
      %p436 = pneg %p169
      %p437 = pneg %p193
      %p438 = pneg %p190
      %p439 = pneg %p214
      %p440 = pneg %p211
      %p441 = pneg %p235
      %p442 = pneg %p232
      %p443 = pneg %p256
      %p444 = pneg %p253
      %p445 = pneg %p277
      %p446 = pneg %p274
      %p447 = pneg %p298
      %p448 = pneg %p295
      %p449 = pneg %p319
      %p450 = pneg %p316
      %p451 = pneg %p345
      %p452 = pneg %p342
      %p453 = scmp.lt.s32.totalorder %s25, 1
      %s454 = scalar_select %p453, %s25, 1
      %s455 = smul.addr %s454, 2
      %s456 = smul.addr %s455, 8
      %s457 = scalar_lea.vmem %s14, %s456
      %p458 = scmp.lt.s32.totalorder %s25, 1
      %s459 = scalar_select %p458, %s25, 1
      %s460 = smul.addr %s459, 2
      %s461 = smul.addr %s460, 8
      %s462 = scalar_lea.vmem %s0, %s461
      %p463 = scmp.lt.s32.totalorder %s25, 1
      %s464 = scalar_select %p463, %s25, 1
      %s465 = smul.addr %s464, 2
      %s466 = smul.addr %s465, 8
      %s467 = scalar_lea.vmem %s14, %s466
      %v468 = vld [vmem:[%s462] sm:$0xff]
      %v469 = vld [vmem:[%s462 + $0x8] sm:$0x3]
      %v470 = vmul.f32 %v468, %v468
      %v471 = vmul.f32 %v469, %v469
      %vm472 = vcmask 261120
      %v473 = vsel %vm472, %v470, 0.0
      %474 = vadd.xlane.f32.xlu0 %v473
      %v475 = vpop.xlane.xlu0 %474
      %vm476 = vcmask 254976
      %v477 = vsel %vm476, %v471, 0.0
      %478 = vadd.xlane.f32.xlu0 %v477
      %v479 = vpop.xlane.xlu0 %478
      %v480 = vrcp.pop 32.0
      %v481 = vmul.f32 %v475, %v480
      %v482 = vmul.f32 %v479, %v480
      %v483 = vadd.f32 %v481, 1e-06
      %v484 = vadd.f32 %v482, 1e-06
      %v485 = vrsqrt.pop %v483
      %v486 = vrsqrt.pop %v484
      %v487 = vmul.f32 %v468, %v485
      %v488 = vmul.f32 %v469, %v486
      %v489 = vld [vmem:[%s1] sm:$0x1]
      %v491 = vlaneseq
      %v492 = vshrl.u32 %v491, 7
      %v493 = vsub.s32 0, %v492
      %v494 = vrot.slane %v489, %v493
      %v496 = vmul.f32 %v487, %v494
      %v497 = vmul.f32 %v488, %v494
      %v498 = vld [vmem:[%s2] sm:$0xff]
      %v499 = vld [vmem:[%s2 + $0x8] sm:$0xff]
      %v500 = vld [vmem:[%s2 + $0x10] sm:$0xff]
      %v501 = vld [vmem:[%s2 + $0x18] sm:$0xff]
      %v503 = vsel %vm472, %v496, 0
      %v506 = vsel %vm472, %v497, 0
      %508 = vmatprep.subr.mxu0 0.0
      %509 = vmatpush1.msra.mxu0 0.0
      %510 = vmatprep.subr.mxu0 0.0
      %511 = vmatpush1.msra.mxu0 0.0
      %512 = vmatprep.subr.mxu0 0.0
      %513 = vmatpush1.msra.mxu0 0.0
      %514 = vmatprep.subr.mxu0 0.0
      %515 = vmatpush1.msra.mxu0 0.0
      %516 = vmatprep.subr.mxu0 0.0
      %517 = vmatpush1.msra.mxu0 0.0
      %518 = vmatprep.subr.mxu0 0.0
      %519 = vmatpush1.msra.mxu0 0.0
      %520 = vmatprep.subr.mxu0 0.0
      %521 = vmatpush1.msra.mxu0 0.0
      %522 = vmatprep.subr.mxu0 0.0
      %523 = vmatpush1.msra.mxu0 0.0
      %524 = vmatprep.subr.mxu0 0.0
      %525 = vmatpush1.msra.mxu0 0.0
      %526 = vmatprep.subr.mxu0 0.0
      %527 = vmatpush1.msra.mxu0 0.0
      %528 = vmatprep.subr.mxu0 0.0
      %529 = vmatpush1.msra.mxu0 0.0
      %530 = vmatprep.subr.mxu0 0.0
      %531 = vmatpush1.msra.mxu0 0.0
      %532 = vmatprep.subr.mxu0 0.0
      %533 = vmatpush1.msra.mxu0 %v501
      %534 = vmatprep.subr.mxu0 0.0
      %535 = vmatpush1.msra.mxu0 %v500
      %536 = vmatprep.subr.mxu0 0.0
      %537 = vmatpush1.msra.mxu0 %v499
      %538 = vmatprep.subr.mxu0 0.0
      %539 = vmatpush1.msra.mxu0 %v498
      %540 = vmatprep.subr.mxu0 0.0
      %541 = vmatpush2.msra.mxu0 0.0
      %542 = vmatprep.subr.mxu0 0.0
      %543 = vmatpush2.msra.mxu0 0.0
      %544 = vmatprep.subr.mxu0 0.0
      %545 = vmatpush2.msra.mxu0 0.0
      %546 = vmatprep.subr.mxu0 0.0
      %547 = vmatpush2.msra.mxu0 0.0
      %548 = vmatprep.subr.mxu0 0.0
      %549 = vmatpush2.msra.mxu0 0.0
      %550 = vmatprep.subr.mxu0 0.0
      %551 = vmatpush2.msra.mxu0 0.0
      %552 = vmatprep.subr.mxu0 0.0
      %553 = vmatpush2.msra.mxu0 0.0
      %554 = vmatprep.subr.mxu0 0.0
      %555 = vmatpush2.msra.mxu0 0.0
      %556 = vmatprep.subr.mxu0 0.0
      %557 = vmatpush2.msra.mxu0 0.0
      %558 = vmatprep.subr.mxu0 0.0
      %559 = vmatpush2.msra.mxu0 0.0
      %560 = vmatprep.subr.mxu0 0.0
      %561 = vmatpush2.msra.mxu0 0.0
      %562 = vmatprep.subr.mxu0 0.0
      %563 = vmatpush2.msra.mxu0 0.0
      %564 = vmatprep.subr.mxu0 0.0
      %565 = vmatpush2.msra.mxu0 0.0
      %566 = vmatprep.subr.mxu0 0.0
      %567 = vmatpush2.msra.mxu0 0.0
      %568 = vmatprep.subr.mxu0 0.0
      %569 = vmatpush2.msra.mxu0 0.0
      %570 = vmatprep.subr.mxu0 0.0
      %571 = vmatpush2.msra.mxu0 0.0
      %572 = vmatprep.mubr.f32.mxu0 0.0
      %573 = vmatmul.mubr.f32.gmra.mxu0 %v503
      %v574 = vpop.f32.mrf.mxu0
      %v575 = vadd.f32 0.0, %v574
      %v576 = vpop.f32.mrf.mxu0
      %577 = vmatprep.mubr.f32.mxu0 0.0
      %578 = vmatmul.mubr.f32.gmra.mxu0 %v506
      %v579 = vpop.f32.mrf.mxu0
      %v580 = vadd.f32 0.0, %v579
      %v581 = vpop.f32.mrf.mxu0
      %582 = vdwg.mxu0
      %v583 = vld [vmem:[%s4] sm:$0x1]
      %v585 = vlaneseq
      %v586 = vshrl.u32 %v585, 7
      %v587 = vsub.s32 0, %v586
      %v588 = vrot.slane %v583, %v587
      %v590 = vadd.f32 %v588, 0.0
      %v592 = vrot.slane %v575, 5
      %vm594 = vcmask 1042432
      %v595 = vsel %vm594, 0.0, %v592
      %v596 = vld [vmem:[%s3] sm:$0x1]
      %v597 = vlaneseq
      %v598 = vshrl.u32 %v597, 7
      %v599 = vsub.s32 0, %v598
      %v600 = vrot.slane %v596, %v599
      %v601 = vmul.f32 %v595, %v600
      %v602 = vmul.f32 %v592, %v600
      %v603 = vadd.f32 %v590, %v601
      %v604 = vadd.f32 %v590, %v602
      %v605 = vrot.slane %v575, 6
      %vm607 = vcmask 1041408
      %v608 = vsel %vm607, 0.0, %v605
      %v609 = vld [vmem:[%s3 + $0x1] sm:$0x1]
      %v610 = vlaneseq
      %v611 = vshrl.u32 %v610, 7
      %v612 = vsub.s32 0, %v611
      %v613 = vrot.slane %v609, %v612
      %v614 = vmul.f32 %v608, %v613
      %v615 = vmul.f32 %v605, %v613
      %v616 = vadd.f32 %v603, %v614
      %v617 = vadd.f32 %v604, %v615
      %vm619 = vcmask 1040384
      %v620 = vrot.slane %v575, 7
      %v621 = vrot.slane %v580, 7
      %v622 = vsel %vm619, %v620, %v621
      %v625 = vsel %vm619, 0.0, %v620
      %v626 = vld [vmem:[%s3 + $0x2] sm:$0x1]
      %v627 = vlaneseq
      %v628 = vshrl.u32 %v627, 7
      %v629 = vsub.s32 0, %v628
      %v630 = vrot.slane %v626, %v629
      %v631 = vmul.f32 %v625, %v630
      %v632 = vmul.f32 %v622, %v630
      %v633 = vadd.f32 %v616, %v631
      %v634 = vadd.f32 %v617, %v632
      %v635 = vld [vmem:[%s3 + $0x3] sm:$0x1]
      %v636 = vlaneseq
      %v637 = vshrl.u32 %v636, 7
      %v638 = vsub.s32 0, %v637
      %v639 = vrot.slane %v635, %v638
      %v640 = vmul.f32 %v575, %v639
      %v641 = vmul.f32 %v580, %v639
      %v642 = vadd.f32 %v633, %v640
      %v643 = vadd.f32 %v634, %v641
      %v644 = vxor.u32 %v642, 2147483648
      %v645 = vxor.u32 %v643, 2147483648
      %v646 = vmul.f32 %v644, 1.442695
      %v647 = vpow.pop %v646
      %v648 = vmul.f32 %v645, 1.442695
      %v649 = vpow.pop %v648
      %v650 = vadd.f32 %v647, 1.0
      %v651 = vadd.f32 %v649, 1.0
      %v652 = vrcp.pop %v650
      %v653 = vmul.f32 1.0, %v652
      %v654 = vrcp.pop %v651
      %v655 = vmul.f32 1.0, %v654
      %v656 = vmul.f32 %v642, %v653
      %v657 = vmul.f32 %v643, %v655
      %v658 = vld [vmem:[%s5] sm:$0xff]
      %v659 = vld [vmem:[%s5 + $0x8] sm:$0xff]
      %v660 = vld [vmem:[%s5 + $0x10] sm:$0xff]
      %v661 = vld [vmem:[%s5 + $0x18] sm:$0xff]
      %v662 = vld [vmem:[%s5 + $0x20] sm:$0xff]
      %v663 = vld [vmem:[%s5 + $0x28] sm:$0xff]
      %v664 = vld [vmem:[%s5 + $0x30] sm:$0xff]
      %v665 = vld [vmem:[%s5 + $0x38] sm:$0xff]
      %vm666 = vcmask 523264
      %v668 = vsel %vm666, %v656, 0
      %v671 = vsel %vm666, %v657, 0
      %673 = vmatprep.subr.mxu0 0.0
      %674 = vmatpush1.msra.mxu0 0.0
      %675 = vmatprep.subr.mxu0 0.0
      %676 = vmatpush1.msra.mxu0 0.0
      %677 = vmatprep.subr.mxu0 0.0
      %678 = vmatpush1.msra.mxu0 0.0
      %679 = vmatprep.subr.mxu0 0.0
      %680 = vmatpush1.msra.mxu0 0.0
      %681 = vmatprep.subr.mxu0 0.0
      %682 = vmatpush1.msra.mxu0 0.0
      %683 = vmatprep.subr.mxu0 0.0
      %684 = vmatpush1.msra.mxu0 0.0
      %685 = vmatprep.subr.mxu0 0.0
      %686 = vmatpush1.msra.mxu0 0.0
      %687 = vmatprep.subr.mxu0 0.0
      %688 = vmatpush1.msra.mxu0 0.0
      %689 = vmatprep.subr.mxu0 0.0
      %690 = vmatpush1.msra.mxu0 %v665
      %691 = vmatprep.subr.mxu0 0.0
      %692 = vmatpush1.msra.mxu0 %v664
      %693 = vmatprep.subr.mxu0 0.0
      %694 = vmatpush1.msra.mxu0 %v663
      %695 = vmatprep.subr.mxu0 0.0
      %696 = vmatpush1.msra.mxu0 %v662
      %697 = vmatprep.subr.mxu0 0.0
      %698 = vmatpush1.msra.mxu0 %v661
      %699 = vmatprep.subr.mxu0 0.0
      %700 = vmatpush1.msra.mxu0 %v660
      %701 = vmatprep.subr.mxu0 0.0
      %702 = vmatpush1.msra.mxu0 %v659
      %703 = vmatprep.subr.mxu0 0.0
      %704 = vmatpush1.msra.mxu0 %v658
      %705 = vmatprep.subr.mxu0 0.0
      %706 = vmatpush2.msra.mxu0 0.0
      %707 = vmatprep.subr.mxu0 0.0
      %708 = vmatpush2.msra.mxu0 0.0
      %709 = vmatprep.subr.mxu0 0.0
      %710 = vmatpush2.msra.mxu0 0.0
      %711 = vmatprep.subr.mxu0 0.0
      %712 = vmatpush2.msra.mxu0 0.0
      %713 = vmatprep.subr.mxu0 0.0
      %714 = vmatpush2.msra.mxu0 0.0
      %715 = vmatprep.subr.mxu0 0.0
      %716 = vmatpush2.msra.mxu0 0.0
      %717 = vmatprep.subr.mxu0 0.0
      %718 = vmatpush2.msra.mxu0 0.0
      %719 = vmatprep.subr.mxu0 0.0
      %720 = vmatpush2.msra.mxu0 0.0
      %721 = vmatprep.subr.mxu0 0.0
      %722 = vmatpush2.msra.mxu0 0.0
      %723 = vmatprep.subr.mxu0 0.0
      %724 = vmatpush2.msra.mxu0 0.0
      %725 = vmatprep.subr.mxu0 0.0
      %726 = vmatpush2.msra.mxu0 0.0
      %727 = vmatprep.subr.mxu0 0.0
      %728 = vmatpush2.msra.mxu0 0.0
      %729 = vmatprep.subr.mxu0 0.0
      %730 = vmatpush2.msra.mxu0 0.0
      %731 = vmatprep.subr.mxu0 0.0
      %732 = vmatpush2.msra.mxu0 0.0
      %733 = vmatprep.subr.mxu0 0.0
      %734 = vmatpush2.msra.mxu0 0.0
      %735 = vmatprep.subr.mxu0 0.0
      %736 = vmatpush2.msra.mxu0 0.0
      %737 = vmatprep.mubr.f32.mxu0 0.0
      %738 = vmatmul.mubr.f32.gmra.mxu0 %v668
      %v739 = vpop.f32.mrf.mxu0
      %v740 = vadd.f32 0.0, %v739
      %v741 = vpop.f32.mrf.mxu0
      %742 = vmatprep.mubr.f32.mxu0 0.0
      %743 = vmatmul.mubr.f32.gmra.mxu0 %v671
      %v744 = vpop.f32.mrf.mxu0
      %v745 = vadd.f32 0.0, %v744
      %v746 = vpop.f32.mrf.mxu0
      %747 = vdwg.mxu0
      %v748 = vld [vmem:[%s6] sm:$0x3]
      %v749 = vld [vmem:[%s7] sm:$0x1]
      %v751 = vlaneseq
      %v752 = vshrl.u32 %v751, 7
      %v753 = vsub.s32 0, %v752
      %v754 = vrot.slane %v749, %v753
      %758 = vrot.lane.b32.xlu0 %v740, 96
      %v759 = vpop.permute.xlu0 %758
      %760 = vrot.lane.b32.xlu0 %v745, 96
      %v761 = vpop.permute.xlu0 %760
      %vm762 = vcmask 15360
      %v763 = vsel %vm762, %v759, 0
      %v765 = vsel %vm762, %v761, 0
      %v768 = vsel %vm607, %v748, 0
      %770 = vmatprep.subr.mxu0 0.0
      %771 = vmatpush1.msra.mxu0 0.0
      %772 = vmatprep.subr.mxu0 0.0
      %773 = vmatpush1.msra.mxu0 0.0
      %774 = vmatprep.subr.mxu0 0.0
      %775 = vmatpush1.msra.mxu0 0.0
      %776 = vmatprep.subr.mxu0 0.0
      %777 = vmatpush1.msra.mxu0 0.0
      %778 = vmatprep.subr.mxu0 0.0
      %779 = vmatpush1.msra.mxu0 0.0
      %780 = vmatprep.subr.mxu0 0.0
      %781 = vmatpush1.msra.mxu0 0.0
      %782 = vmatprep.subr.mxu0 0.0
      %783 = vmatpush1.msra.mxu0 0.0
      %784 = vmatprep.subr.mxu0 0.0
      %785 = vmatpush1.msra.mxu0 0.0
      %786 = vmatprep.subr.mxu0 0.0
      %787 = vmatpush1.msra.mxu0 0.0
      %788 = vmatprep.subr.mxu0 0.0
      %789 = vmatpush1.msra.mxu0 0.0
      %790 = vmatprep.subr.mxu0 0.0
      %791 = vmatpush1.msra.mxu0 0.0
      %792 = vmatprep.subr.mxu0 0.0
      %793 = vmatpush1.msra.mxu0 0.0
      %794 = vmatprep.subr.mxu0 0.0
      %795 = vmatpush1.msra.mxu0 0.0
      %796 = vmatprep.subr.mxu0 0.0
      %797 = vmatpush1.msra.mxu0 0.0
      %798 = vmatprep.subr.mxu0 0.0
      %799 = vmatpush1.msra.mxu0 0.0
      %800 = vmatprep.subr.mxu0 0.0
      %801 = vmatpush1.msra.mxu0 %v768
      %802 = vmatprep.subr.mxu0 0.0
      %803 = vmatpush2.msra.mxu0 0.0
      %804 = vmatprep.subr.mxu0 0.0
      %805 = vmatpush2.msra.mxu0 0.0
      %806 = vmatprep.subr.mxu0 0.0
      %807 = vmatpush2.msra.mxu0 0.0
      %808 = vmatprep.subr.mxu0 0.0
      %809 = vmatpush2.msra.mxu0 0.0
      %810 = vmatprep.subr.mxu0 0.0
      %811 = vmatpush2.msra.mxu0 0.0
      %812 = vmatprep.subr.mxu0 0.0
      %813 = vmatpush2.msra.mxu0 0.0
      %814 = vmatprep.subr.mxu0 0.0
      %815 = vmatpush2.msra.mxu0 0.0
      %816 = vmatprep.subr.mxu0 0.0
      %817 = vmatpush2.msra.mxu0 0.0
      %818 = vmatprep.subr.mxu0 0.0
      %819 = vmatpush2.msra.mxu0 0.0
      %820 = vmatprep.subr.mxu0 0.0
      %821 = vmatpush2.msra.mxu0 0.0
      %822 = vmatprep.subr.mxu0 0.0
      %823 = vmatpush2.msra.mxu0 0.0
      %824 = vmatprep.subr.mxu0 0.0
      %825 = vmatpush2.msra.mxu0 0.0
      %826 = vmatprep.subr.mxu0 0.0
      %827 = vmatpush2.msra.mxu0 0.0
      %828 = vmatprep.subr.mxu0 0.0
      %829 = vmatpush2.msra.mxu0 0.0
      %830 = vmatprep.subr.mxu0 0.0
      %831 = vmatpush2.msra.mxu0 0.0
      %832 = vmatprep.subr.mxu0 0.0
      %833 = vmatpush2.msra.mxu0 0.0
      %834 = vmatprep.mubr.f32.mxu0 0.0
      %835 = vmatmul.mubr.f32.gmra.mxu0 %v763
      %v836 = vpop.f32.mrf.mxu0
      %v837 = vadd.f32 %v754, %v836
      %v838 = vpop.f32.mrf.mxu0
      %839 = vmatprep.mubr.f32.mxu0 0.0
      %840 = vmatmul.mubr.f32.gmra.mxu0 %v765
      %v841 = vpop.f32.mrf.mxu0
      %v842 = vadd.f32 %v754, %v841
      %v843 = vpop.f32.mrf.mxu0
      %844 = vdwg.mxu0
      %v845 = vmax.f32 %v837, 0.0
      %v846 = vmax.f32 %v842, 0.0
      %v847 = vand.u32 2147483647, %v837
      %v848 = vand.u32 2147483647, %v842
      %v849 = vsub.f32 0.0, %v847
      %v850 = vsub.f32 0.0, %v848
      %v851 = vmul.f32 %v849, 1.442695
      %v852 = vpow.pop %v851
      %v853 = vmul.f32 %v850, 1.442695
      %v854 = vpow.pop %v853
      %v855 = vadd.f32 %v852, 1.0
      %v856 = vadd.f32 %v854, 1.0
      %v857 = vlog2.pop %v855
      %v858 = vmul.f32 %v857, 0.6931472
      %v859 = vlog2.pop %v856
      %v860 = vmul.f32 %v859, 0.6931472
      %v861 = vadd.f32 %v845, %v858
      %v862 = vadd.f32 %v846, %v860
      %v863 = vld [vmem:[%s8] sm:$0xff]
      %v864 = vld [vmem:[%s8 + $0x8] sm:$0xff]
      %v865 = vmul.f32 %v861, %v656
      %v866 = vmul.f32 %v862, %v657
      %867 = vxpose.xlu0.b32.start [1/16] %v740, 128
      %868 = vxpose.xlu0.b32.cont [2/16] %v745, 128
      %869 = vxpose.xlu0.b32.cont [3/16] 0.0, 128
      %870 = vxpose.xlu0.b32.cont [4/16] 0.0, 128
      %871 = vxpose.xlu0.b32.cont [5/16] 0.0, 128
      %872 = vxpose.xlu0.b32.cont [6/16] 0.0, 128
      %873 = vxpose.xlu0.b32.cont [7/16] 0.0, 128
      %874 = vxpose.xlu0.b32.cont [8/16] 0.0, 128
      %875 = vxpose.xlu0.b32.cont [9/16] 0.0, 128
      %876 = vxpose.xlu0.b32.cont [10/16] 0.0, 128
      %877 = vxpose.xlu0.b32.cont [11/16] 0.0, 128
      %878 = vxpose.xlu0.b32.cont [12/16] 0.0, 128
      %879 = vxpose.xlu0.b32.cont [13/16] 0.0, 128
      %880 = vxpose.xlu0.b32.cont [14/16] 0.0, 128
      %881 = vxpose.xlu0.b32.cont [15/16] 0.0, 128
      %882 = vxpose.xlu0.b32.end [16/16] 0.0, 128
      %v883 = vpop.trf.xlu0
      %v884 = vpop.trf.xlu0
      %v885 = vpop.trf.xlu0
      %v886 = vpop.trf.xlu0
      %v887 = vpop.trf.xlu0
      %v888 = vpop.trf.xlu0
      %v889 = vpop.trf.xlu0
      %v890 = vpop.trf.xlu0
      %v891 = vpop.trf.xlu0
      %v892 = vpop.trf.xlu0
      %v893 = vpop.trf.xlu0
      %v894 = vpop.trf.xlu0
      %v895 = vpop.trf.xlu0
      %v896 = vpop.trf.xlu0
      %v897 = vpop.trf.xlu0
      %v898 = vpop.trf.xlu0
      %v899 = vlaneseq
      %v900 = vshrl.u32 %v899, 7
      %v901 = vsub.s32 0, %v900
      %v902 = vrot.slane %v861, %v901
      %v903 = vmul.f32 %v902, %v863
      %v904 = vmul.f32 %v902, %v864
      %v905 = vmul.f32 %v903, 1.442695
      %v906 = vpow.pop %v905
      %v907 = vmul.f32 %v904, 1.442695
      %v908 = vpow.pop %v907
      %910 = vset.pattern.permute.xlu0 0
      %911 = vperm.xlu0 %910, %v883
      %v912 = vpop.permute.xlu0 %911
      %915 = vset.pattern.permute.xlu0 0
      %916 = vperm.xlu0 %915, %v884
      %v917 = vpop.permute.xlu0 %916
      %v919 = vlaneseq
      %v920 = vshrl.u32 %v919, 7
      %v921 = vsub.s32 0, %v920
      %v922 = vrot.slane %v865, %v921
      %v923 = vmul.f32 %v912, %v922
      %v924 = vmul.f32 %v917, %v922
      %v925 = vmul.f32 %v906, 0.0
      %v926 = vmul.f32 %v908, 0.0
      %v927 = vadd.f32 %v925, %v923
      %v928 = vadd.f32 %v926, %v924
      %929 = vrot.lane.b32.xlu0 %v740, 112
      %v930 = vpop.permute.xlu0 %929
      %vm931 = vcmask 130048
      %v932 = vsel %vm931, %v930, 0
      %934 = vmatprep.subr.mxu0 0.0
      %935 = vmatpush1.msra.mxu0 0.0
      %936 = vmatprep.subr.mxu0 0.0
      %937 = vmatpush1.msra.mxu0 0.0
      %938 = vmatprep.subr.mxu0 0.0
      %939 = vmatpush1.msra.mxu0 0.0
      %940 = vmatprep.subr.mxu0 0.0
      %941 = vmatpush1.msra.mxu0 0.0
      %942 = vmatprep.subr.mxu0 0.0
      %943 = vmatpush1.msra.mxu0 0.0
      %944 = vmatprep.subr.mxu0 0.0
      %945 = vmatpush1.msra.mxu0 0.0
      %946 = vmatprep.subr.mxu0 0.0
      %947 = vmatpush1.msra.mxu0 0.0
      %948 = vmatprep.subr.mxu0 0.0
      %949 = vmatpush1.msra.mxu0 0.0
      %950 = vmatprep.subr.mxu0 0.0
      %951 = vmatpush1.msra.mxu0 0.0
      %952 = vmatprep.subr.mxu0 0.0
      %953 = vmatpush1.msra.mxu0 0.0
      %954 = vmatprep.subr.mxu0 0.0
      %955 = vmatpush1.msra.mxu0 0.0
      %956 = vmatprep.subr.mxu0 0.0
      %957 = vmatpush1.msra.mxu0 0.0
      %958 = vmatprep.subr.mxu0 0.0
      %959 = vmatpush1.msra.mxu0 0.0
      %960 = vmatprep.subr.mxu0 0.0
      %961 = vmatpush1.msra.mxu0 0.0
      %962 = vmatprep.subr.mxu0 0.0
      %963 = vmatpush1.msra.mxu0 %v928
      %964 = vmatprep.subr.mxu0 0.0
      %965 = vmatpush1.msra.mxu0 %v927
      %966 = vmatprep.subr.mxu0 0.0
      %967 = vmatpush2.msra.mxu0 0.0
      %968 = vmatprep.subr.mxu0 0.0
      %969 = vmatpush2.msra.mxu0 0.0
      %970 = vmatprep.subr.mxu0 0.0
      %971 = vmatpush2.msra.mxu0 0.0
      %972 = vmatprep.subr.mxu0 0.0
      %973 = vmatpush2.msra.mxu0 0.0
      %974 = vmatprep.subr.mxu0 0.0
      %975 = vmatpush2.msra.mxu0 0.0
      %976 = vmatprep.subr.mxu0 0.0
      %977 = vmatpush2.msra.mxu0 0.0
      %978 = vmatprep.subr.mxu0 0.0
      %979 = vmatpush2.msra.mxu0 0.0
      %980 = vmatprep.subr.mxu0 0.0
      %981 = vmatpush2.msra.mxu0 0.0
      %982 = vmatprep.subr.mxu0 0.0
      %983 = vmatpush2.msra.mxu0 0.0
      %984 = vmatprep.subr.mxu0 0.0
      %985 = vmatpush2.msra.mxu0 0.0
      %986 = vmatprep.subr.mxu0 0.0
      %987 = vmatpush2.msra.mxu0 0.0
      %988 = vmatprep.subr.mxu0 0.0
      %989 = vmatpush2.msra.mxu0 0.0
      %990 = vmatprep.subr.mxu0 0.0
      %991 = vmatpush2.msra.mxu0 0.0
      %992 = vmatprep.subr.mxu0 0.0
      %993 = vmatpush2.msra.mxu0 0.0
      %994 = vmatprep.subr.mxu0 0.0
      %995 = vmatpush2.msra.mxu0 0.0
      %996 = vmatprep.subr.mxu0 0.0
      %997 = vmatpush2.msra.mxu0 0.0
      %998 = vmatprep.mubr.f32.mxu0 0.0
      %999 = vmatmul.mubr.f32.gmra.mxu0 %v932
      %v1000 = vpop.f32.mrf.mxu0
      %v1001 = vadd.f32 0.0, %v1000
      %v1002 = vpop.f32.mrf.mxu0
      %1003 = vdwg.mxu0
      %v1004 = vlaneseq
      %v1005 = vshrl.u32 %v1004, 7
      %v1006 = vsub.s32 1, %v1005
      %v1007 = vrot.slane %v861, %v1006
      %v1008 = vmul.f32 %v1007, %v863
      %v1009 = vmul.f32 %v1007, %v864
      %v1010 = vmul.f32 %v1008, 1.442695
      %v1011 = vpow.pop %v1010
      %v1012 = vmul.f32 %v1009, 1.442695
      %v1013 = vpow.pop %v1012
      %1014 = vset.pattern.permute.xlu0 1
      %1015 = vperm.xlu0 %1014, %v883
      %v1016 = vpop.permute.xlu0 %1015
      %1018 = vset.pattern.permute.xlu0 1
      %1019 = vperm.xlu0 %1018, %v884
      %v1020 = vpop.permute.xlu0 %1019
      %v1022 = vlaneseq
      %v1023 = vshrl.u32 %v1022, 7
      %v1024 = vsub.s32 1, %v1023
      %v1025 = vrot.slane %v865, %v1024
      %v1026 = vmul.f32 %v1016, %v1025
      %v1027 = vmul.f32 %v1020, %v1025
      %v1028 = vmul.f32 %v1011, %v927
      %v1029 = vmul.f32 %v1013, %v928
      %v1030 = vadd.f32 %v1028, %v1026
      %v1031 = vadd.f32 %v1029, %v1027
      %v1032 = vrot.slane %v740, 1
      %1033 = vrot.lane.b32.xlu0 %v1032, 112
      %v1034 = vpop.permute.xlu0 %1033
      %v1035 = vsel %vm931, %v1034, 0
      %1037 = vmatprep.subr.mxu0 0.0
      %1038 = vmatpush1.msra.mxu0 0.0
      %1039 = vmatprep.subr.mxu0 0.0
      %1040 = vmatpush1.msra.mxu0 0.0
      %1041 = vmatprep.subr.mxu0 0.0
      %1042 = vmatpush1.msra.mxu0 0.0
      %1043 = vmatprep.subr.mxu0 0.0
      %1044 = vmatpush1.msra.mxu0 0.0
      %1045 = vmatprep.subr.mxu0 0.0
      %1046 = vmatpush1.msra.mxu0 0.0
      %1047 = vmatprep.subr.mxu0 0.0
      %1048 = vmatpush1.msra.mxu0 0.0
      %1049 = vmatprep.subr.mxu0 0.0
      %1050 = vmatpush1.msra.mxu0 0.0
      %1051 = vmatprep.subr.mxu0 0.0
      %1052 = vmatpush1.msra.mxu0 0.0
      %1053 = vmatprep.subr.mxu0 0.0
      %1054 = vmatpush1.msra.mxu0 0.0
      %1055 = vmatprep.subr.mxu0 0.0
      %1056 = vmatpush1.msra.mxu0 0.0
      %1057 = vmatprep.subr.mxu0 0.0
      %1058 = vmatpush1.msra.mxu0 0.0
      %1059 = vmatprep.subr.mxu0 0.0
      %1060 = vmatpush1.msra.mxu0 0.0
      %1061 = vmatprep.subr.mxu0 0.0
      %1062 = vmatpush1.msra.mxu0 0.0
      %1063 = vmatprep.subr.mxu0 0.0
      %1064 = vmatpush1.msra.mxu0 0.0
      %1065 = vmatprep.subr.mxu0 0.0
      %1066 = vmatpush1.msra.mxu0 %v1031
      %1067 = vmatprep.subr.mxu0 0.0
      %1068 = vmatpush1.msra.mxu0 %v1030
      %1069 = vmatprep.subr.mxu0 0.0
      %1070 = vmatpush2.msra.mxu0 0.0
      %1071 = vmatprep.subr.mxu0 0.0
      %1072 = vmatpush2.msra.mxu0 0.0
      %1073 = vmatprep.subr.mxu0 0.0
      %1074 = vmatpush2.msra.mxu0 0.0
      %1075 = vmatprep.subr.mxu0 0.0
      %1076 = vmatpush2.msra.mxu0 0.0
      %1077 = vmatprep.subr.mxu0 0.0
      %1078 = vmatpush2.msra.mxu0 0.0
      %1079 = vmatprep.subr.mxu0 0.0
      %1080 = vmatpush2.msra.mxu0 0.0
      %1081 = vmatprep.subr.mxu0 0.0
      %1082 = vmatpush2.msra.mxu0 0.0
      %1083 = vmatprep.subr.mxu0 0.0
      %1084 = vmatpush2.msra.mxu0 0.0
      %1085 = vmatprep.subr.mxu0 0.0
      %1086 = vmatpush2.msra.mxu0 0.0
      %1087 = vmatprep.subr.mxu0 0.0
      %1088 = vmatpush2.msra.mxu0 0.0
      %1089 = vmatprep.subr.mxu0 0.0
      %1090 = vmatpush2.msra.mxu0 0.0
      %1091 = vmatprep.subr.mxu0 0.0
      %1092 = vmatpush2.msra.mxu0 0.0
      %1093 = vmatprep.subr.mxu0 0.0
      %1094 = vmatpush2.msra.mxu0 0.0
      %1095 = vmatprep.subr.mxu0 0.0
      %1096 = vmatpush2.msra.mxu0 0.0
      %1097 = vmatprep.subr.mxu0 0.0
      %1098 = vmatpush2.msra.mxu0 0.0
      %1099 = vmatprep.subr.mxu0 0.0
      %1100 = vmatpush2.msra.mxu0 0.0
      %1101 = vmatprep.mubr.f32.mxu0 0.0
      %1102 = vmatmul.mubr.f32.gmra.mxu0 %v1035
      %v1103 = vpop.f32.mrf.mxu0
      %v1104 = vadd.f32 0.0, %v1103
      %v1105 = vpop.f32.mrf.mxu0
      %1106 = vdwg.mxu0
      %v1107 = vlaneseq
      %v1108 = vshrl.u32 %v1107, 7
      %v1109 = vsub.s32 2, %v1108
      %v1110 = vrot.slane %v861, %v1109
      %v1111 = vmul.f32 %v1110, %v863
      %v1112 = vmul.f32 %v1110, %v864
      %v1113 = vmul.f32 %v1111, 1.442695
      %v1114 = vpow.pop %v1113
      %v1115 = vmul.f32 %v1112, 1.442695
      %v1116 = vpow.pop %v1115
      %1117 = vset.pattern.permute.xlu0 2
      %1118 = vperm.xlu0 %1117, %v883
      %v1119 = vpop.permute.xlu0 %1118
      %1121 = vset.pattern.permute.xlu0 2
      %1122 = vperm.xlu0 %1121, %v884
      %v1123 = vpop.permute.xlu0 %1122
      %v1125 = vlaneseq
      %v1126 = vshrl.u32 %v1125, 7
      %v1127 = vsub.s32 2, %v1126
      %v1128 = vrot.slane %v865, %v1127
      %v1129 = vmul.f32 %v1119, %v1128
      %v1130 = vmul.f32 %v1123, %v1128
      %v1131 = vmul.f32 %v1114, %v1030
      %v1132 = vmul.f32 %v1116, %v1031
      %v1133 = vadd.f32 %v1131, %v1129
      %v1134 = vadd.f32 %v1132, %v1130
      %v1135 = vrot.slane %v740, 2
      %1136 = vrot.lane.b32.xlu0 %v1135, 112
      %v1137 = vpop.permute.xlu0 %1136
      %v1138 = vsel %vm931, %v1137, 0
      %1140 = vmatprep.subr.mxu0 0.0
      %1141 = vmatpush1.msra.mxu0 0.0
      %1142 = vmatprep.subr.mxu0 0.0
      %1143 = vmatpush1.msra.mxu0 0.0
      %1144 = vmatprep.subr.mxu0 0.0
      %1145 = vmatpush1.msra.mxu0 0.0
      %1146 = vmatprep.subr.mxu0 0.0
      %1147 = vmatpush1.msra.mxu0 0.0
      %1148 = vmatprep.subr.mxu0 0.0
      %1149 = vmatpush1.msra.mxu0 0.0
      %1150 = vmatprep.subr.mxu0 0.0
      %1151 = vmatpush1.msra.mxu0 0.0
      %1152 = vmatprep.subr.mxu0 0.0
      %1153 = vmatpush1.msra.mxu0 0.0
      %1154 = vmatprep.subr.mxu0 0.0
      %1155 = vmatpush1.msra.mxu0 0.0
      %1156 = vmatprep.subr.mxu0 0.0
      %1157 = vmatpush1.msra.mxu0 0.0
      %1158 = vmatprep.subr.mxu0 0.0
      %1159 = vmatpush1.msra.mxu0 0.0
      %1160 = vmatprep.subr.mxu0 0.0
      %1161 = vmatpush1.msra.mxu0 0.0
      %1162 = vmatprep.subr.mxu0 0.0
      %1163 = vmatpush1.msra.mxu0 0.0
      %1164 = vmatprep.subr.mxu0 0.0
      %1165 = vmatpush1.msra.mxu0 0.0
      %1166 = vmatprep.subr.mxu0 0.0
      %1167 = vmatpush1.msra.mxu0 0.0
      %1168 = vmatprep.subr.mxu0 0.0
      %1169 = vmatpush1.msra.mxu0 %v1134
      %1170 = vmatprep.subr.mxu0 0.0
      %1171 = vmatpush1.msra.mxu0 %v1133
      %1172 = vmatprep.subr.mxu0 0.0
      %1173 = vmatpush2.msra.mxu0 0.0
      %1174 = vmatprep.subr.mxu0 0.0
      %1175 = vmatpush2.msra.mxu0 0.0
      %1176 = vmatprep.subr.mxu0 0.0
      %1177 = vmatpush2.msra.mxu0 0.0
      %1178 = vmatprep.subr.mxu0 0.0
      %1179 = vmatpush2.msra.mxu0 0.0
      %1180 = vmatprep.subr.mxu0 0.0
      %1181 = vmatpush2.msra.mxu0 0.0
      %1182 = vmatprep.subr.mxu0 0.0
      %1183 = vmatpush2.msra.mxu0 0.0
      %1184 = vmatprep.subr.mxu0 0.0
      %1185 = vmatpush2.msra.mxu0 0.0
      %1186 = vmatprep.subr.mxu0 0.0
      %1187 = vmatpush2.msra.mxu0 0.0
      %1188 = vmatprep.subr.mxu0 0.0
      %1189 = vmatpush2.msra.mxu0 0.0
      %1190 = vmatprep.subr.mxu0 0.0
      %1191 = vmatpush2.msra.mxu0 0.0
      %1192 = vmatprep.subr.mxu0 0.0
      %1193 = vmatpush2.msra.mxu0 0.0
      %1194 = vmatprep.subr.mxu0 0.0
      %1195 = vmatpush2.msra.mxu0 0.0
      %1196 = vmatprep.subr.mxu0 0.0
      %1197 = vmatpush2.msra.mxu0 0.0
      %1198 = vmatprep.subr.mxu0 0.0
      %1199 = vmatpush2.msra.mxu0 0.0
      %1200 = vmatprep.subr.mxu0 0.0
      %1201 = vmatpush2.msra.mxu0 0.0
      %1202 = vmatprep.subr.mxu0 0.0
      %1203 = vmatpush2.msra.mxu0 0.0
      %1204 = vmatprep.mubr.f32.mxu0 0.0
      %1205 = vmatmul.mubr.f32.gmra.mxu0 %v1138
      %v1206 = vpop.f32.mrf.mxu0
      %v1207 = vadd.f32 0.0, %v1206
      %v1208 = vpop.f32.mrf.mxu0
      %1209 = vdwg.mxu0
      %v1210 = vlaneseq
      %v1211 = vshrl.u32 %v1210, 7
      %v1212 = vsub.s32 3, %v1211
      %v1213 = vrot.slane %v861, %v1212
      %v1214 = vmul.f32 %v1213, %v863
      %v1215 = vmul.f32 %v1213, %v864
      %v1216 = vmul.f32 %v1214, 1.442695
      %v1217 = vpow.pop %v1216
      %v1218 = vmul.f32 %v1215, 1.442695
      %v1219 = vpow.pop %v1218
      %1220 = vset.pattern.permute.xlu0 3
      %1221 = vperm.xlu0 %1220, %v883
      %v1222 = vpop.permute.xlu0 %1221
      %1224 = vset.pattern.permute.xlu0 3
      %1225 = vperm.xlu0 %1224, %v884
      %v1226 = vpop.permute.xlu0 %1225
      %v1228 = vlaneseq
      %v1229 = vshrl.u32 %v1228, 7
      %v1230 = vsub.s32 3, %v1229
      %v1231 = vrot.slane %v865, %v1230
      %v1232 = vmul.f32 %v1222, %v1231
      %v1233 = vmul.f32 %v1226, %v1231
      %v1234 = vmul.f32 %v1217, %v1133
      %v1235 = vmul.f32 %v1219, %v1134
      %v1236 = vadd.f32 %v1234, %v1232
      %v1237 = vadd.f32 %v1235, %v1233
      %v1238 = vrot.slane %v740, 3
      %1239 = vrot.lane.b32.xlu0 %v1238, 112
      %v1240 = vpop.permute.xlu0 %1239
      %v1241 = vsel %vm931, %v1240, 0
      %1243 = vmatprep.subr.mxu0 0.0
      %1244 = vmatpush1.msra.mxu0 0.0
      %1245 = vmatprep.subr.mxu0 0.0
      %1246 = vmatpush1.msra.mxu0 0.0
      %1247 = vmatprep.subr.mxu0 0.0
      %1248 = vmatpush1.msra.mxu0 0.0
      %1249 = vmatprep.subr.mxu0 0.0
      %1250 = vmatpush1.msra.mxu0 0.0
      %1251 = vmatprep.subr.mxu0 0.0
      %1252 = vmatpush1.msra.mxu0 0.0
      %1253 = vmatprep.subr.mxu0 0.0
      %1254 = vmatpush1.msra.mxu0 0.0
      %1255 = vmatprep.subr.mxu0 0.0
      %1256 = vmatpush1.msra.mxu0 0.0
      %1257 = vmatprep.subr.mxu0 0.0
      %1258 = vmatpush1.msra.mxu0 0.0
      %1259 = vmatprep.subr.mxu0 0.0
      %1260 = vmatpush1.msra.mxu0 0.0
      %1261 = vmatprep.subr.mxu0 0.0
      %1262 = vmatpush1.msra.mxu0 0.0
      %1263 = vmatprep.subr.mxu0 0.0
      %1264 = vmatpush1.msra.mxu0 0.0
      %1265 = vmatprep.subr.mxu0 0.0
      %1266 = vmatpush1.msra.mxu0 0.0
      %1267 = vmatprep.subr.mxu0 0.0
      %1268 = vmatpush1.msra.mxu0 0.0
      %1269 = vmatprep.subr.mxu0 0.0
      %1270 = vmatpush1.msra.mxu0 0.0
      %1271 = vmatprep.subr.mxu0 0.0
      %1272 = vmatpush1.msra.mxu0 %v1237
      %1273 = vmatprep.subr.mxu0 0.0
      %1274 = vmatpush1.msra.mxu0 %v1236
      %1275 = vmatprep.subr.mxu0 0.0
      %1276 = vmatpush2.msra.mxu0 0.0
      %1277 = vmatprep.subr.mxu0 0.0
      %1278 = vmatpush2.msra.mxu0 0.0
      %1279 = vmatprep.subr.mxu0 0.0
      %1280 = vmatpush2.msra.mxu0 0.0
      %1281 = vmatprep.subr.mxu0 0.0
      %1282 = vmatpush2.msra.mxu0 0.0
      %1283 = vmatprep.subr.mxu0 0.0
      %1284 = vmatpush2.msra.mxu0 0.0
      %1285 = vmatprep.subr.mxu0 0.0
      %1286 = vmatpush2.msra.mxu0 0.0
      %1287 = vmatprep.subr.mxu0 0.0
      %1288 = vmatpush2.msra.mxu0 0.0
      %1289 = vmatprep.subr.mxu0 0.0
      %1290 = vmatpush2.msra.mxu0 0.0
      %1291 = vmatprep.subr.mxu0 0.0
      %1292 = vmatpush2.msra.mxu0 0.0
      %1293 = vmatprep.subr.mxu0 0.0
      %1294 = vmatpush2.msra.mxu0 0.0
      %1295 = vmatprep.subr.mxu0 0.0
      %1296 = vmatpush2.msra.mxu0 0.0
      %1297 = vmatprep.subr.mxu0 0.0
      %1298 = vmatpush2.msra.mxu0 0.0
      %1299 = vmatprep.subr.mxu0 0.0
      %1300 = vmatpush2.msra.mxu0 0.0
      %1301 = vmatprep.subr.mxu0 0.0
      %1302 = vmatpush2.msra.mxu0 0.0
      %1303 = vmatprep.subr.mxu0 0.0
      %1304 = vmatpush2.msra.mxu0 0.0
      %1305 = vmatprep.subr.mxu0 0.0
      %1306 = vmatpush2.msra.mxu0 0.0
      %1307 = vmatprep.mubr.f32.mxu0 0.0
      %1308 = vmatmul.mubr.f32.gmra.mxu0 %v1241
      %v1309 = vpop.f32.mrf.mxu0
      %v1310 = vadd.f32 0.0, %v1309
      %v1311 = vpop.f32.mrf.mxu0
      %1312 = vdwg.mxu0
      %v1313 = vlaneseq
      %v1314 = vshrl.u32 %v1313, 7
      %v1315 = vsub.s32 4, %v1314
      %v1316 = vrot.slane %v861, %v1315
      %v1317 = vmul.f32 %v1316, %v863
      %v1318 = vmul.f32 %v1316, %v864
      %v1319 = vmul.f32 %v1317, 1.442695
      %v1320 = vpow.pop %v1319
      %v1321 = vmul.f32 %v1318, 1.442695
      %v1322 = vpow.pop %v1321
      %1323 = vset.pattern.permute.xlu0 4
      %1324 = vperm.xlu0 %1323, %v883
      %v1325 = vpop.permute.xlu0 %1324
      %1327 = vset.pattern.permute.xlu0 4
      %1328 = vperm.xlu0 %1327, %v884
      %v1329 = vpop.permute.xlu0 %1328
      %v1331 = vlaneseq
      %v1332 = vshrl.u32 %v1331, 7
      %v1333 = vsub.s32 4, %v1332
      %v1334 = vrot.slane %v865, %v1333
      %v1335 = vmul.f32 %v1325, %v1334
      %v1336 = vmul.f32 %v1329, %v1334
      %v1337 = vmul.f32 %v1320, %v1236
      %v1338 = vmul.f32 %v1322, %v1237
      %v1339 = vadd.f32 %v1337, %v1335
      %v1340 = vadd.f32 %v1338, %v1336
      %v1341 = vrot.slane %v740, 4
      %1342 = vrot.lane.b32.xlu0 %v1341, 112
      %v1343 = vpop.permute.xlu0 %1342
      %v1344 = vsel %vm931, %v1343, 0
      %1346 = vmatprep.subr.mxu0 0.0
      %1347 = vmatpush1.msra.mxu0 0.0
      %1348 = vmatprep.subr.mxu0 0.0
      %1349 = vmatpush1.msra.mxu0 0.0
      %1350 = vmatprep.subr.mxu0 0.0
      %1351 = vmatpush1.msra.mxu0 0.0
      %1352 = vmatprep.subr.mxu0 0.0
      %1353 = vmatpush1.msra.mxu0 0.0
      %1354 = vmatprep.subr.mxu0 0.0
      %1355 = vmatpush1.msra.mxu0 0.0
      %1356 = vmatprep.subr.mxu0 0.0
      %1357 = vmatpush1.msra.mxu0 0.0
      %1358 = vmatprep.subr.mxu0 0.0
      %1359 = vmatpush1.msra.mxu0 0.0
      %1360 = vmatprep.subr.mxu0 0.0
      %1361 = vmatpush1.msra.mxu0 0.0
      %1362 = vmatprep.subr.mxu0 0.0
      %1363 = vmatpush1.msra.mxu0 0.0
      %1364 = vmatprep.subr.mxu0 0.0
      %1365 = vmatpush1.msra.mxu0 0.0
      %1366 = vmatprep.subr.mxu0 0.0
      %1367 = vmatpush1.msra.mxu0 0.0
      %1368 = vmatprep.subr.mxu0 0.0
      %1369 = vmatpush1.msra.mxu0 0.0
      %1370 = vmatprep.subr.mxu0 0.0
      %1371 = vmatpush1.msra.mxu0 0.0
      %1372 = vmatprep.subr.mxu0 0.0
      %1373 = vmatpush1.msra.mxu0 0.0
      %1374 = vmatprep.subr.mxu0 0.0
      %1375 = vmatpush1.msra.mxu0 %v1340
      %1376 = vmatprep.subr.mxu0 0.0
      %1377 = vmatpush1.msra.mxu0 %v1339
      %1378 = vmatprep.subr.mxu0 0.0
      %1379 = vmatpush2.msra.mxu0 0.0
      %1380 = vmatprep.subr.mxu0 0.0
      %1381 = vmatpush2.msra.mxu0 0.0
      %1382 = vmatprep.subr.mxu0 0.0
      %1383 = vmatpush2.msra.mxu0 0.0
      %1384 = vmatprep.subr.mxu0 0.0
      %1385 = vmatpush2.msra.mxu0 0.0
      %1386 = vmatprep.subr.mxu0 0.0
      %1387 = vmatpush2.msra.mxu0 0.0
      %1388 = vmatprep.subr.mxu0 0.0
      %1389 = vmatpush2.msra.mxu0 0.0
      %1390 = vmatprep.subr.mxu0 0.0
      %1391 = vmatpush2.msra.mxu0 0.0
      %1392 = vmatprep.subr.mxu0 0.0
      %1393 = vmatpush2.msra.mxu0 0.0
      %1394 = vmatprep.subr.mxu0 0.0
      %1395 = vmatpush2.msra.mxu0 0.0
      %1396 = vmatprep.subr.mxu0 0.0
      %1397 = vmatpush2.msra.mxu0 0.0
      %1398 = vmatprep.subr.mxu0 0.0
      %1399 = vmatpush2.msra.mxu0 0.0
      %1400 = vmatprep.subr.mxu0 0.0
      %1401 = vmatpush2.msra.mxu0 0.0
      %1402 = vmatprep.subr.mxu0 0.0
      %1403 = vmatpush2.msra.mxu0 0.0
      %1404 = vmatprep.subr.mxu0 0.0
      %1405 = vmatpush2.msra.mxu0 0.0
      %1406 = vmatprep.subr.mxu0 0.0
      %1407 = vmatpush2.msra.mxu0 0.0
      %1408 = vmatprep.subr.mxu0 0.0
      %1409 = vmatpush2.msra.mxu0 0.0
      %1410 = vmatprep.mubr.f32.mxu0 0.0
      %1411 = vmatmul.mubr.f32.gmra.mxu0 %v1344
      %v1412 = vpop.f32.mrf.mxu0
      %v1413 = vadd.f32 0.0, %v1412
      %v1414 = vpop.f32.mrf.mxu0
      %1415 = vdwg.mxu0
      %v1416 = vlaneseq
      %v1417 = vshrl.u32 %v1416, 7
      %v1418 = vsub.s32 5, %v1417
      %v1419 = vrot.slane %v861, %v1418
      %v1420 = vmul.f32 %v1419, %v863
      %v1421 = vmul.f32 %v1419, %v864
      %v1422 = vmul.f32 %v1420, 1.442695
      %v1423 = vpow.pop %v1422
      %v1424 = vmul.f32 %v1421, 1.442695
      %v1425 = vpow.pop %v1424
      %1426 = vset.pattern.permute.xlu0 5
      %1427 = vperm.xlu0 %1426, %v883
      %v1428 = vpop.permute.xlu0 %1427
      %1430 = vset.pattern.permute.xlu0 5
      %1431 = vperm.xlu0 %1430, %v884
      %v1432 = vpop.permute.xlu0 %1431
      %v1434 = vlaneseq
      %v1435 = vshrl.u32 %v1434, 7
      %v1436 = vsub.s32 5, %v1435
      %v1437 = vrot.slane %v865, %v1436
      %v1438 = vmul.f32 %v1428, %v1437
      %v1439 = vmul.f32 %v1432, %v1437
      %v1440 = vmul.f32 %v1423, %v1339
      %v1441 = vmul.f32 %v1425, %v1340
      %v1442 = vadd.f32 %v1440, %v1438
      %v1443 = vadd.f32 %v1441, %v1439
      %v1444 = vrot.slane %v740, 5
      %1445 = vrot.lane.b32.xlu0 %v1444, 112
      %v1446 = vpop.permute.xlu0 %1445
      %v1447 = vsel %vm931, %v1446, 0
      %1449 = vmatprep.subr.mxu0 0.0
      %1450 = vmatpush1.msra.mxu0 0.0
      %1451 = vmatprep.subr.mxu0 0.0
      %1452 = vmatpush1.msra.mxu0 0.0
      %1453 = vmatprep.subr.mxu0 0.0
      %1454 = vmatpush1.msra.mxu0 0.0
      %1455 = vmatprep.subr.mxu0 0.0
      %1456 = vmatpush1.msra.mxu0 0.0
      %1457 = vmatprep.subr.mxu0 0.0
      %1458 = vmatpush1.msra.mxu0 0.0
      %1459 = vmatprep.subr.mxu0 0.0
      %1460 = vmatpush1.msra.mxu0 0.0
      %1461 = vmatprep.subr.mxu0 0.0
      %1462 = vmatpush1.msra.mxu0 0.0
      %1463 = vmatprep.subr.mxu0 0.0
      %1464 = vmatpush1.msra.mxu0 0.0
      %1465 = vmatprep.subr.mxu0 0.0
      %1466 = vmatpush1.msra.mxu0 0.0
      %1467 = vmatprep.subr.mxu0 0.0
      %1468 = vmatpush1.msra.mxu0 0.0
      %1469 = vmatprep.subr.mxu0 0.0
      %1470 = vmatpush1.msra.mxu0 0.0
      %1471 = vmatprep.subr.mxu0 0.0
      %1472 = vmatpush1.msra.mxu0 0.0
      %1473 = vmatprep.subr.mxu0 0.0
      %1474 = vmatpush1.msra.mxu0 0.0
      %1475 = vmatprep.subr.mxu0 0.0
      %1476 = vmatpush1.msra.mxu0 0.0
      %1477 = vmatprep.subr.mxu0 0.0
      %1478 = vmatpush1.msra.mxu0 %v1443
      %1479 = vmatprep.subr.mxu0 0.0
      %1480 = vmatpush1.msra.mxu0 %v1442
      %1481 = vmatprep.subr.mxu0 0.0
      %1482 = vmatpush2.msra.mxu0 0.0
      %1483 = vmatprep.subr.mxu0 0.0
      %1484 = vmatpush2.msra.mxu0 0.0
      %1485 = vmatprep.subr.mxu0 0.0
      %1486 = vmatpush2.msra.mxu0 0.0
      %1487 = vmatprep.subr.mxu0 0.0
      %1488 = vmatpush2.msra.mxu0 0.0
      %1489 = vmatprep.subr.mxu0 0.0
      %1490 = vmatpush2.msra.mxu0 0.0
      %1491 = vmatprep.subr.mxu0 0.0
      %1492 = vmatpush2.msra.mxu0 0.0
      %1493 = vmatprep.subr.mxu0 0.0
      %1494 = vmatpush2.msra.mxu0 0.0
      %1495 = vmatprep.subr.mxu0 0.0
      %1496 = vmatpush2.msra.mxu0 0.0
      %1497 = vmatprep.subr.mxu0 0.0
      %1498 = vmatpush2.msra.mxu0 0.0
      %1499 = vmatprep.subr.mxu0 0.0
      %1500 = vmatpush2.msra.mxu0 0.0
      %1501 = vmatprep.subr.mxu0 0.0
      %1502 = vmatpush2.msra.mxu0 0.0
      %1503 = vmatprep.subr.mxu0 0.0
      %1504 = vmatpush2.msra.mxu0 0.0
      %1505 = vmatprep.subr.mxu0 0.0
      %1506 = vmatpush2.msra.mxu0 0.0
      %1507 = vmatprep.subr.mxu0 0.0
      %1508 = vmatpush2.msra.mxu0 0.0
      %1509 = vmatprep.subr.mxu0 0.0
      %1510 = vmatpush2.msra.mxu0 0.0
      %1511 = vmatprep.subr.mxu0 0.0
      %1512 = vmatpush2.msra.mxu0 0.0
      %1513 = vmatprep.mubr.f32.mxu0 0.0
      %1514 = vmatmul.mubr.f32.gmra.mxu0 %v1447
      %v1515 = vpop.f32.mrf.mxu0
      %v1516 = vadd.f32 0.0, %v1515
      %v1517 = vpop.f32.mrf.mxu0
      %1518 = vdwg.mxu0
      %v1519 = vlaneseq
      %v1520 = vshrl.u32 %v1519, 7
      %v1521 = vsub.s32 6, %v1520
      %v1522 = vrot.slane %v861, %v1521
      %v1523 = vmul.f32 %v1522, %v863
      %v1524 = vmul.f32 %v1522, %v864
      %v1525 = vmul.f32 %v1523, 1.442695
      %v1526 = vpow.pop %v1525
      %v1527 = vmul.f32 %v1524, 1.442695
      %v1528 = vpow.pop %v1527
      %1529 = vset.pattern.permute.xlu0 6
      %1530 = vperm.xlu0 %1529, %v883
      %v1531 = vpop.permute.xlu0 %1530
      %1533 = vset.pattern.permute.xlu0 6
      %1534 = vperm.xlu0 %1533, %v884
      %v1535 = vpop.permute.xlu0 %1534
      %v1537 = vlaneseq
      %v1538 = vshrl.u32 %v1537, 7
      %v1539 = vsub.s32 6, %v1538
      %v1540 = vrot.slane %v865, %v1539
      %v1541 = vmul.f32 %v1531, %v1540
      %v1542 = vmul.f32 %v1535, %v1540
      %v1543 = vmul.f32 %v1526, %v1442
      %v1544 = vmul.f32 %v1528, %v1443
      %v1545 = vadd.f32 %v1543, %v1541
      %v1546 = vadd.f32 %v1544, %v1542
      %v1547 = vrot.slane %v740, 6
      %1548 = vrot.lane.b32.xlu0 %v1547, 112
      %v1549 = vpop.permute.xlu0 %1548
      %v1550 = vsel %vm931, %v1549, 0
      %1552 = vmatprep.subr.mxu0 0.0
      %1553 = vmatpush1.msra.mxu0 0.0
      %1554 = vmatprep.subr.mxu0 0.0
      %1555 = vmatpush1.msra.mxu0 0.0
      %1556 = vmatprep.subr.mxu0 0.0
      %1557 = vmatpush1.msra.mxu0 0.0
      %1558 = vmatprep.subr.mxu0 0.0
      %1559 = vmatpush1.msra.mxu0 0.0
      %1560 = vmatprep.subr.mxu0 0.0
      %1561 = vmatpush1.msra.mxu0 0.0
      %1562 = vmatprep.subr.mxu0 0.0
      %1563 = vmatpush1.msra.mxu0 0.0
      %1564 = vmatprep.subr.mxu0 0.0
      %1565 = vmatpush1.msra.mxu0 0.0
      %1566 = vmatprep.subr.mxu0 0.0
      %1567 = vmatpush1.msra.mxu0 0.0
      %1568 = vmatprep.subr.mxu0 0.0
      %1569 = vmatpush1.msra.mxu0 0.0
      %1570 = vmatprep.subr.mxu0 0.0
      %1571 = vmatpush1.msra.mxu0 0.0
      %1572 = vmatprep.subr.mxu0 0.0
      %1573 = vmatpush1.msra.mxu0 0.0
      %1574 = vmatprep.subr.mxu0 0.0
      %1575 = vmatpush1.msra.mxu0 0.0
      %1576 = vmatprep.subr.mxu0 0.0
      %1577 = vmatpush1.msra.mxu0 0.0
      %1578 = vmatprep.subr.mxu0 0.0
      %1579 = vmatpush1.msra.mxu0 0.0
      %1580 = vmatprep.subr.mxu0 0.0
      %1581 = vmatpush1.msra.mxu0 %v1546
      %1582 = vmatprep.subr.mxu0 0.0
      %1583 = vmatpush1.msra.mxu0 %v1545
      %1584 = vmatprep.subr.mxu0 0.0
      %1585 = vmatpush2.msra.mxu0 0.0
      %1586 = vmatprep.subr.mxu0 0.0
      %1587 = vmatpush2.msra.mxu0 0.0
      %1588 = vmatprep.subr.mxu0 0.0
      %1589 = vmatpush2.msra.mxu0 0.0
      %1590 = vmatprep.subr.mxu0 0.0
      %1591 = vmatpush2.msra.mxu0 0.0
      %1592 = vmatprep.subr.mxu0 0.0
      %1593 = vmatpush2.msra.mxu0 0.0
      %1594 = vmatprep.subr.mxu0 0.0
      %1595 = vmatpush2.msra.mxu0 0.0
      %1596 = vmatprep.subr.mxu0 0.0
      %1597 = vmatpush2.msra.mxu0 0.0
      %1598 = vmatprep.subr.mxu0 0.0
      %1599 = vmatpush2.msra.mxu0 0.0
      %1600 = vmatprep.subr.mxu0 0.0
      %1601 = vmatpush2.msra.mxu0 0.0
      %1602 = vmatprep.subr.mxu0 0.0
      %1603 = vmatpush2.msra.mxu0 0.0
      %1604 = vmatprep.subr.mxu0 0.0
      %1605 = vmatpush2.msra.mxu0 0.0
      %1606 = vmatprep.subr.mxu0 0.0
      %1607 = vmatpush2.msra.mxu0 0.0
      %1608 = vmatprep.subr.mxu0 0.0
      %1609 = vmatpush2.msra.mxu0 0.0
      %1610 = vmatprep.subr.mxu0 0.0
      %1611 = vmatpush2.msra.mxu0 0.0
      %1612 = vmatprep.subr.mxu0 0.0
      %1613 = vmatpush2.msra.mxu0 0.0
      %1614 = vmatprep.subr.mxu0 0.0
      %1615 = vmatpush2.msra.mxu0 0.0
      %1616 = vmatprep.mubr.f32.mxu0 0.0
      %1617 = vmatmul.mubr.f32.gmra.mxu0 %v1550
      %v1618 = vpop.f32.mrf.mxu0
      %v1619 = vadd.f32 0.0, %v1618
      %v1620 = vpop.f32.mrf.mxu0
      %1621 = vdwg.mxu0
      %v1622 = vlaneseq
      %v1623 = vshrl.u32 %v1622, 7
      %v1624 = vsub.s32 7, %v1623
      %v1625 = vrot.slane %v861, %v1624
      %v1626 = vmul.f32 %v1625, %v863
      %v1627 = vmul.f32 %v1625, %v864
      %v1628 = vmul.f32 %v1626, 1.442695
      %v1629 = vpow.pop %v1628
      %v1630 = vmul.f32 %v1627, 1.442695
      %v1631 = vpow.pop %v1630
      %1632 = vset.pattern.permute.xlu0 7
      %1633 = vperm.xlu0 %1632, %v883
      %v1634 = vpop.permute.xlu0 %1633
      %1636 = vset.pattern.permute.xlu0 7
      %1637 = vperm.xlu0 %1636, %v884
      %v1638 = vpop.permute.xlu0 %1637
      %v1640 = vlaneseq
      %v1641 = vshrl.u32 %v1640, 7
      %v1642 = vsub.s32 7, %v1641
      %v1643 = vrot.slane %v865, %v1642
      %v1644 = vmul.f32 %v1634, %v1643
      %v1645 = vmul.f32 %v1638, %v1643
      %v1646 = vmul.f32 %v1629, %v1545
      %v1647 = vmul.f32 %v1631, %v1546
      %v1648 = vadd.f32 %v1646, %v1644
      %v1649 = vadd.f32 %v1647, %v1645
      %v1650 = vrot.slane %v740, 7
      %1651 = vrot.lane.b32.xlu0 %v1650, 112
      %v1652 = vpop.permute.xlu0 %1651
      %v1653 = vsel %vm931, %v1652, 0
      %1655 = vmatprep.subr.mxu0 0.0
      %1656 = vmatpush1.msra.mxu0 0.0
      %1657 = vmatprep.subr.mxu0 0.0
      %1658 = vmatpush1.msra.mxu0 0.0
      %1659 = vmatprep.subr.mxu0 0.0
      %1660 = vmatpush1.msra.mxu0 0.0
      %1661 = vmatprep.subr.mxu0 0.0
      %1662 = vmatpush1.msra.mxu0 0.0
      %1663 = vmatprep.subr.mxu0 0.0
      %1664 = vmatpush1.msra.mxu0 0.0
      %1665 = vmatprep.subr.mxu0 0.0
      %1666 = vmatpush1.msra.mxu0 0.0
      %1667 = vmatprep.subr.mxu0 0.0
      %1668 = vmatpush1.msra.mxu0 0.0
      %1669 = vmatprep.subr.mxu0 0.0
      %1670 = vmatpush1.msra.mxu0 0.0
      %1671 = vmatprep.subr.mxu0 0.0
      %1672 = vmatpush1.msra.mxu0 0.0
      %1673 = vmatprep.subr.mxu0 0.0
      %1674 = vmatpush1.msra.mxu0 0.0
      %1675 = vmatprep.subr.mxu0 0.0
      %1676 = vmatpush1.msra.mxu0 0.0
      %1677 = vmatprep.subr.mxu0 0.0
      %1678 = vmatpush1.msra.mxu0 0.0
      %1679 = vmatprep.subr.mxu0 0.0
      %1680 = vmatpush1.msra.mxu0 0.0
      %1681 = vmatprep.subr.mxu0 0.0
      %1682 = vmatpush1.msra.mxu0 0.0
      %1683 = vmatprep.subr.mxu0 0.0
      %1684 = vmatpush1.msra.mxu0 %v1649
      %1685 = vmatprep.subr.mxu0 0.0
      %1686 = vmatpush1.msra.mxu0 %v1648
      %1687 = vmatprep.subr.mxu0 0.0
      %1688 = vmatpush2.msra.mxu0 0.0
      %1689 = vmatprep.subr.mxu0 0.0
      %1690 = vmatpush2.msra.mxu0 0.0
      %1691 = vmatprep.subr.mxu0 0.0
      %1692 = vmatpush2.msra.mxu0 0.0
      %1693 = vmatprep.subr.mxu0 0.0
      %1694 = vmatpush2.msra.mxu0 0.0
      %1695 = vmatprep.subr.mxu0 0.0
      %1696 = vmatpush2.msra.mxu0 0.0
      %1697 = vmatprep.subr.mxu0 0.0
      %1698 = vmatpush2.msra.mxu0 0.0
      %1699 = vmatprep.subr.mxu0 0.0
      %1700 = vmatpush2.msra.mxu0 0.0
      %1701 = vmatprep.subr.mxu0 0.0
      %1702 = vmatpush2.msra.mxu0 0.0
      %1703 = vmatprep.subr.mxu0 0.0
      %1704 = vmatpush2.msra.mxu0 0.0
      %1705 = vmatprep.subr.mxu0 0.0
      %1706 = vmatpush2.msra.mxu0 0.0
      %1707 = vmatprep.subr.mxu0 0.0
      %1708 = vmatpush2.msra.mxu0 0.0
      %1709 = vmatprep.subr.mxu0 0.0
      %1710 = vmatpush2.msra.mxu0 0.0
      %1711 = vmatprep.subr.mxu0 0.0
      %1712 = vmatpush2.msra.mxu0 0.0
      %1713 = vmatprep.subr.mxu0 0.0
      %1714 = vmatpush2.msra.mxu0 0.0
      %1715 = vmatprep.subr.mxu0 0.0
      %1716 = vmatpush2.msra.mxu0 0.0
      %1717 = vmatprep.subr.mxu0 0.0
      %1718 = vmatpush2.msra.mxu0 0.0
      %1719 = vmatprep.mubr.f32.mxu0 0.0
      %1720 = vmatmul.mubr.f32.gmra.mxu0 %v1653
      %v1721 = vpop.f32.mrf.mxu0
      %v1722 = vadd.f32 0.0, %v1721
      %v1723 = vpop.f32.mrf.mxu0
      %1724 = vdwg.mxu0
      %v1725 = vlaneseq
      %v1726 = vshrl.u32 %v1725, 7
      %v1727 = vsub.s32 0, %v1726
      %v1728 = vrot.slane %v862, %v1727
      %v1729 = vmul.f32 %v1728, %v863
      %v1730 = vmul.f32 %v1728, %v864
      %v1731 = vmul.f32 %v1729, 1.442695
      %v1732 = vpow.pop %v1731
      %v1733 = vmul.f32 %v1730, 1.442695
      %v1734 = vpow.pop %v1733
      %1735 = vset.pattern.permute.xlu0 8
      %1736 = vperm.xlu0 %1735, %v883
      %v1737 = vpop.permute.xlu0 %1736
      %1739 = vset.pattern.permute.xlu0 8
      %1740 = vperm.xlu0 %1739, %v884
      %v1741 = vpop.permute.xlu0 %1740
      %v1743 = vlaneseq
      %v1744 = vshrl.u32 %v1743, 7
      %v1745 = vsub.s32 0, %v1744
      %v1746 = vrot.slane %v866, %v1745
      %v1747 = vmul.f32 %v1737, %v1746
      %v1748 = vmul.f32 %v1741, %v1746
      %v1749 = vmul.f32 %v1732, %v1648
      %v1750 = vmul.f32 %v1734, %v1649
      %v1751 = vadd.f32 %v1749, %v1747
      %v1752 = vadd.f32 %v1750, %v1748
      %1753 = vrot.lane.b32.xlu0 %v745, 112
      %v1754 = vpop.permute.xlu0 %1753
      %v1755 = vsel %vm931, %v1754, 0
      %1757 = vmatprep.subr.mxu0 0.0
      %1758 = vmatpush1.msra.mxu0 0.0
      %1759 = vmatprep.subr.mxu0 0.0
      %1760 = vmatpush1.msra.mxu0 0.0
      %1761 = vmatprep.subr.mxu0 0.0
      %1762 = vmatpush1.msra.mxu0 0.0
      %1763 = vmatprep.subr.mxu0 0.0
      %1764 = vmatpush1.msra.mxu0 0.0
      %1765 = vmatprep.subr.mxu0 0.0
      %1766 = vmatpush1.msra.mxu0 0.0
      %1767 = vmatprep.subr.mxu0 0.0
      %1768 = vmatpush1.msra.mxu0 0.0
      %1769 = vmatprep.subr.mxu0 0.0
      %1770 = vmatpush1.msra.mxu0 0.0
      %1771 = vmatprep.subr.mxu0 0.0
      %1772 = vmatpush1.msra.mxu0 0.0
      %1773 = vmatprep.subr.mxu0 0.0
      %1774 = vmatpush1.msra.mxu0 0.0
      %1775 = vmatprep.subr.mxu0 0.0
      %1776 = vmatpush1.msra.mxu0 0.0
      %1777 = vmatprep.subr.mxu0 0.0
      %1778 = vmatpush1.msra.mxu0 0.0
      %1779 = vmatprep.subr.mxu0 0.0
      %1780 = vmatpush1.msra.mxu0 0.0
      %1781 = vmatprep.subr.mxu0 0.0
      %1782 = vmatpush1.msra.mxu0 0.0
      %1783 = vmatprep.subr.mxu0 0.0
      %1784 = vmatpush1.msra.mxu0 0.0
      %1785 = vmatprep.subr.mxu0 0.0
      %1786 = vmatpush1.msra.mxu0 %v1752
      %1787 = vmatprep.subr.mxu0 0.0
      %1788 = vmatpush1.msra.mxu0 %v1751
      %1789 = vmatprep.subr.mxu0 0.0
      %1790 = vmatpush2.msra.mxu0 0.0
      %1791 = vmatprep.subr.mxu0 0.0
      %1792 = vmatpush2.msra.mxu0 0.0
      %1793 = vmatprep.subr.mxu0 0.0
      %1794 = vmatpush2.msra.mxu0 0.0
      %1795 = vmatprep.subr.mxu0 0.0
      %1796 = vmatpush2.msra.mxu0 0.0
      %1797 = vmatprep.subr.mxu0 0.0
      %1798 = vmatpush2.msra.mxu0 0.0
      %1799 = vmatprep.subr.mxu0 0.0
      %1800 = vmatpush2.msra.mxu0 0.0
      %1801 = vmatprep.subr.mxu0 0.0
      %1802 = vmatpush2.msra.mxu0 0.0
      %1803 = vmatprep.subr.mxu0 0.0
      %1804 = vmatpush2.msra.mxu0 0.0
      %1805 = vmatprep.subr.mxu0 0.0
      %1806 = vmatpush2.msra.mxu0 0.0
      %1807 = vmatprep.subr.mxu0 0.0
      %1808 = vmatpush2.msra.mxu0 0.0
      %1809 = vmatprep.subr.mxu0 0.0
      %1810 = vmatpush2.msra.mxu0 0.0
      %1811 = vmatprep.subr.mxu0 0.0
      %1812 = vmatpush2.msra.mxu0 0.0
      %1813 = vmatprep.subr.mxu0 0.0
      %1814 = vmatpush2.msra.mxu0 0.0
      %1815 = vmatprep.subr.mxu0 0.0
      %1816 = vmatpush2.msra.mxu0 0.0
      %1817 = vmatprep.subr.mxu0 0.0
      %1818 = vmatpush2.msra.mxu0 0.0
      %1819 = vmatprep.subr.mxu0 0.0
      %1820 = vmatpush2.msra.mxu0 0.0
      %1821 = vmatprep.mubr.f32.mxu0 0.0
      %1822 = vmatmul.mubr.f32.gmra.mxu0 %v1755
      %v1823 = vpop.f32.mrf.mxu0
      %v1824 = vadd.f32 0.0, %v1823
      %v1825 = vpop.f32.mrf.mxu0
      %1826 = vdwg.mxu0
      %v1827 = vlaneseq
      %v1828 = vshrl.u32 %v1827, 7
      %v1829 = vsub.s32 1, %v1828
      %v1830 = vrot.slane %v862, %v1829
      %v1831 = vmul.f32 %v1830, %v863
      %v1832 = vmul.f32 %v1830, %v864
      %v1833 = vmul.f32 %v1831, 1.442695
      %v1834 = vpow.pop %v1833
      %v1835 = vmul.f32 %v1832, 1.442695
      %v1836 = vpow.pop %v1835
      %1837 = vset.pattern.permute.xlu0 9
      %1838 = vperm.xlu0 %1837, %v883
      %v1839 = vpop.permute.xlu0 %1838
      %1841 = vset.pattern.permute.xlu0 9
      %1842 = vperm.xlu0 %1841, %v884
      %v1843 = vpop.permute.xlu0 %1842
      %v1845 = vlaneseq
      %v1846 = vshrl.u32 %v1845, 7
      %v1847 = vsub.s32 1, %v1846
      %v1848 = vrot.slane %v866, %v1847
      %v1849 = vmul.f32 %v1839, %v1848
      %v1850 = vmul.f32 %v1843, %v1848
      %v1851 = vmul.f32 %v1834, %v1751
      %v1852 = vmul.f32 %v1836, %v1752
      %v1853 = vadd.f32 %v1851, %v1849
      %v1854 = vadd.f32 %v1852, %v1850
      %v1855 = vrot.slane %v745, 1
      %1856 = vrot.lane.b32.xlu0 %v1855, 112
      %v1857 = vpop.permute.xlu0 %1856
      %v1858 = vsel %vm931, %v1857, 0
      %1860 = vmatprep.subr.mxu0 0.0
      %1861 = vmatpush1.msra.mxu0 0.0
      %1862 = vmatprep.subr.mxu0 0.0
      %1863 = vmatpush1.msra.mxu0 0.0
      %1864 = vmatprep.subr.mxu0 0.0
      %1865 = vmatpush1.msra.mxu0 0.0
      %1866 = vmatprep.subr.mxu0 0.0
      %1867 = vmatpush1.msra.mxu0 0.0
      %1868 = vmatprep.subr.mxu0 0.0
      %1869 = vmatpush1.msra.mxu0 0.0
      %1870 = vmatprep.subr.mxu0 0.0
      %1871 = vmatpush1.msra.mxu0 0.0
      %1872 = vmatprep.subr.mxu0 0.0
      %1873 = vmatpush1.msra.mxu0 0.0
      %1874 = vmatprep.subr.mxu0 0.0
      %1875 = vmatpush1.msra.mxu0 0.0
      %1876 = vmatprep.subr.mxu0 0.0
      %1877 = vmatpush1.msra.mxu0 0.0
      %1878 = vmatprep.subr.mxu0 0.0
      %1879 = vmatpush1.msra.mxu0 0.0
      %1880 = vmatprep.subr.mxu0 0.0
      %1881 = vmatpush1.msra.mxu0 0.0
      %1882 = vmatprep.subr.mxu0 0.0
      %1883 = vmatpush1.msra.mxu0 0.0
      %1884 = vmatprep.subr.mxu0 0.0
      %1885 = vmatpush1.msra.mxu0 0.0
      %1886 = vmatprep.subr.mxu0 0.0
      %1887 = vmatpush1.msra.mxu0 0.0
      %1888 = vmatprep.subr.mxu0 0.0
      %1889 = vmatpush1.msra.mxu0 %v1854
      %1890 = vmatprep.subr.mxu0 0.0
      %1891 = vmatpush1.msra.mxu0 %v1853
      %1892 = vmatprep.subr.mxu0 0.0
      %1893 = vmatpush2.msra.mxu0 0.0
      %1894 = vmatprep.subr.mxu0 0.0
      %1895 = vmatpush2.msra.mxu0 0.0
      %1896 = vmatprep.subr.mxu0 0.0
      %1897 = vmatpush2.msra.mxu0 0.0
      %1898 = vmatprep.subr.mxu0 0.0
      %1899 = vmatpush2.msra.mxu0 0.0
      %1900 = vmatprep.subr.mxu0 0.0
      %1901 = vmatpush2.msra.mxu0 0.0
      %1902 = vmatprep.subr.mxu0 0.0
      %1903 = vmatpush2.msra.mxu0 0.0
      %1904 = vmatprep.subr.mxu0 0.0
      %1905 = vmatpush2.msra.mxu0 0.0
      %1906 = vmatprep.subr.mxu0 0.0
      %1907 = vmatpush2.msra.mxu0 0.0
      %1908 = vmatprep.subr.mxu0 0.0
      %1909 = vmatpush2.msra.mxu0 0.0
      %1910 = vmatprep.subr.mxu0 0.0
      %1911 = vmatpush2.msra.mxu0 0.0
      %1912 = vmatprep.subr.mxu0 0.0
      %1913 = vmatpush2.msra.mxu0 0.0
      %1914 = vmatprep.subr.mxu0 0.0
      %1915 = vmatpush2.msra.mxu0 0.0
      %1916 = vmatprep.subr.mxu0 0.0
      %1917 = vmatpush2.msra.mxu0 0.0
      %1918 = vmatprep.subr.mxu0 0.0
      %1919 = vmatpush2.msra.mxu0 0.0
      %1920 = vmatprep.subr.mxu0 0.0
      %1921 = vmatpush2.msra.mxu0 0.0
      %1922 = vmatprep.subr.mxu0 0.0
      %1923 = vmatpush2.msra.mxu0 0.0
      %1924 = vmatprep.mubr.f32.mxu0 0.0
      %1925 = vmatmul.mubr.f32.gmra.mxu0 %v1858
      %v1926 = vpop.f32.mrf.mxu0
      %v1927 = vadd.f32 0.0, %v1926
      %v1928 = vpop.f32.mrf.mxu0
      %1929 = vdwg.mxu0
      %v1931 = vrot.slane %v1104, 7
      %v1934 = vrot.slane %v1207, 6
      %v1937 = vrot.slane %v1310, 5
      %v1940 = vrot.slane %v1413, 4
      %v1943 = vrot.slane %v1516, 3
      %v1946 = vrot.slane %v1619, 2
      %v1949 = vrot.slane %v1722, 1
      %v1952 = vrot.slane %v1927, 7
      %v1954 = vsel %vm619, %v1001, %v1931
      %v1955 = vsel %vm607, %v1954, %v1934
      %v1956 = vsel %vm594, %v1955, %v1937
      %vm1957 = vcmask 1043456
      %v1958 = vsel %vm1957, %v1956, %v1940
      %vm1959 = vcmask 1044480
      %v1960 = vsel %vm1959, %v1958, %v1943
      %vm1961 = vcmask 1045504
      %v1962 = vsel %vm1961, %v1960, %v1946
      %vm1963 = vcmask 1046528
      %v1964 = vsel %vm1963, %v1962, %v1949
      %v1965 = vsel %vm619, %v1824, %v1952
      %v1966 = vld [vmem:[%s9] sm:$0x1]
      %v1968 = vlaneseq
      %v1969 = vshrl.u32 %v1968, 7
      %v1970 = vsub.s32 0, %v1969
      %v1971 = vrot.slane %v1966, %v1970
      %v1973 = vmul.f32 %v1971, %v656
      %v1974 = vmul.f32 %v1971, %v657
      %v1975 = vadd.f32 %v1964, %v1973
      %v1976 = vadd.f32 %v1965, %v1974
      %v1977 = vxor.u32 %v575, 2147483648
      %v1978 = vxor.u32 %v580, 2147483648
      %v1979 = vmul.f32 %v1977, 1.442695
      %v1980 = vpow.pop %v1979
      %v1981 = vmul.f32 %v1978, 1.442695
      %v1982 = vpow.pop %v1981
      %v1983 = vadd.f32 %v1980, 1.0
      %v1984 = vadd.f32 %v1982, 1.0
      %v1985 = vrcp.pop %v1983
      %v1986 = vmul.f32 1.0, %v1985
      %v1987 = vrcp.pop %v1984
      %v1988 = vmul.f32 1.0, %v1987
      %v1989 = vmul.f32 %v575, %v1986
      %v1990 = vmul.f32 %v580, %v1988
      %1993 = vrot.lane.b32.xlu0 %v1989, 64
      %v1994 = vpop.permute.xlu0 %1993
      %1995 = vrot.lane.b32.xlu0 %v1990, 64
      %v1996 = vpop.permute.xlu0 %1995
      %v1999 = vmul.f32 %v1975, %v1994
      %v2000 = vmul.f32 %v1976, %v1996
      %v2001 = vld [vmem:[%s10] sm:$0xff]
      %v2002 = vld [vmem:[%s10 + $0x8] sm:$0xff]
      %v2003 = vld [vmem:[%s10 + $0x10] sm:$0xff]
      %v2004 = vld [vmem:[%s10 + $0x18] sm:$0xff]
      %v2005 = vld [vmem:[%s10 + $0x20] sm:$0xff]
      %v2006 = vld [vmem:[%s10 + $0x28] sm:$0xff]
      %v2007 = vld [vmem:[%s10 + $0x30] sm:$0xff]
      %v2008 = vld [vmem:[%s10 + $0x38] sm:$0xff]
      %v2010 = vsel %vm666, %v1999, 0
      %v2013 = vsel %vm666, %v2000, 0
      %2015 = vmatprep.subr.mxu0 0.0
      %2016 = vmatpush1.msra.mxu0 0.0
      %2017 = vmatprep.subr.mxu0 0.0
      %2018 = vmatpush1.msra.mxu0 0.0
      %2019 = vmatprep.subr.mxu0 0.0
      %2020 = vmatpush1.msra.mxu0 0.0
      %2021 = vmatprep.subr.mxu0 0.0
      %2022 = vmatpush1.msra.mxu0 0.0
      %2023 = vmatprep.subr.mxu0 0.0
      %2024 = vmatpush1.msra.mxu0 0.0
      %2025 = vmatprep.subr.mxu0 0.0
      %2026 = vmatpush1.msra.mxu0 0.0
      %2027 = vmatprep.subr.mxu0 0.0
      %2028 = vmatpush1.msra.mxu0 0.0
      %2029 = vmatprep.subr.mxu0 0.0
      %2030 = vmatpush1.msra.mxu0 0.0
      %2031 = vmatprep.subr.mxu0 0.0
      %2032 = vmatpush1.msra.mxu0 %v2008
      %2033 = vmatprep.subr.mxu0 0.0
      %2034 = vmatpush1.msra.mxu0 %v2007
      %2035 = vmatprep.subr.mxu0 0.0
      %2036 = vmatpush1.msra.mxu0 %v2006
      %2037 = vmatprep.subr.mxu0 0.0
      %2038 = vmatpush1.msra.mxu0 %v2005
      %2039 = vmatprep.subr.mxu0 0.0
      %2040 = vmatpush1.msra.mxu0 %v2004
      %2041 = vmatprep.subr.mxu0 0.0
      %2042 = vmatpush1.msra.mxu0 %v2003
      %2043 = vmatprep.subr.mxu0 0.0
      %2044 = vmatpush1.msra.mxu0 %v2002
      %2045 = vmatprep.subr.mxu0 0.0
      %2046 = vmatpush1.msra.mxu0 %v2001
      %2047 = vmatprep.subr.mxu0 0.0
      %2048 = vmatpush2.msra.mxu0 0.0
      %2049 = vmatprep.subr.mxu0 0.0
      %2050 = vmatpush2.msra.mxu0 0.0
      %2051 = vmatprep.subr.mxu0 0.0
      %2052 = vmatpush2.msra.mxu0 0.0
      %2053 = vmatprep.subr.mxu0 0.0
      %2054 = vmatpush2.msra.mxu0 0.0
      %2055 = vmatprep.subr.mxu0 0.0
      %2056 = vmatpush2.msra.mxu0 0.0
      %2057 = vmatprep.subr.mxu0 0.0
      %2058 = vmatpush2.msra.mxu0 0.0
      %2059 = vmatprep.subr.mxu0 0.0
      %2060 = vmatpush2.msra.mxu0 0.0
      %2061 = vmatprep.subr.mxu0 0.0
      %2062 = vmatpush2.msra.mxu0 0.0
      %2063 = vmatprep.subr.mxu0 0.0
      %2064 = vmatpush2.msra.mxu0 0.0
      %2065 = vmatprep.subr.mxu0 0.0
      %2066 = vmatpush2.msra.mxu0 0.0
      %2067 = vmatprep.subr.mxu0 0.0
      %2068 = vmatpush2.msra.mxu0 0.0
      %2069 = vmatprep.subr.mxu0 0.0
      %2070 = vmatpush2.msra.mxu0 0.0
      %2071 = vmatprep.subr.mxu0 0.0
      %2072 = vmatpush2.msra.mxu0 0.0
      %2073 = vmatprep.subr.mxu0 0.0
      %2074 = vmatpush2.msra.mxu0 0.0
      %2075 = vmatprep.subr.mxu0 0.0
      %2076 = vmatpush2.msra.mxu0 0.0
      %2077 = vmatprep.subr.mxu0 0.0
      %2078 = vmatpush2.msra.mxu0 0.0
      %2079 = vmatprep.mubr.f32.mxu0 0.0
      %2080 = vmatmul.mubr.f32.gmra.mxu0 %v2010
      %v2081 = vpop.f32.mrf.mxu0
      %v2082 = vadd.f32 0.0, %v2081
      %v2083 = vpop.f32.mrf.mxu0
      %2084 = vmatprep.mubr.f32.mxu0 0.0
      %2085 = vmatmul.mubr.f32.gmra.mxu0 %v2013
      %v2086 = vpop.f32.mrf.mxu0
      %v2087 = vadd.f32 0.0, %v2086
      %v2088 = vpop.f32.mrf.mxu0
      %2089 = vdwg.mxu0
      %v2090 = vadd.f32 %v468, %v2082
      %v2091 = vadd.f32 %v469, %v2087
      %v2092 = vmul.f32 %v2090, %v2090
      %v2093 = vmul.f32 %v2091, %v2091
      %v2094 = vsel %vm472, %v2092, 0.0
      %2095 = vadd.xlane.f32.xlu0 %v2094
      %v2096 = vpop.xlane.xlu0 %2095
      %v2097 = vsel %vm476, %v2093, 0.0
      %2098 = vadd.xlane.f32.xlu0 %v2097
      %v2099 = vpop.xlane.xlu0 %2098
      %v2100 = vmul.f32 %v2096, %v480
      %v2101 = vmul.f32 %v2099, %v480
      %v2102 = vadd.f32 %v2100, 1e-06
      %v2103 = vadd.f32 %v2101, 1e-06
      %v2104 = vrsqrt.pop %v2102
      %v2105 = vrsqrt.pop %v2103
      %v2106 = vmul.f32 %v2090, %v2104
      %v2107 = vmul.f32 %v2091, %v2105
      %v2108 = vld [vmem:[%s11] sm:$0x1]
      %v2110 = vlaneseq
      %v2111 = vshrl.u32 %v2110, 7
      %v2112 = vsub.s32 0, %v2111
      %v2113 = vrot.slane %v2108, %v2112
      %v2115 = vmul.f32 %v2106, %v2113
      %v2116 = vmul.f32 %v2107, %v2113
      %v2117 = vld [vmem:[%s12] sm:$0xff]
      %v2118 = vld [vmem:[%s12 + $0x8] sm:$0xff]
      %v2119 = vld [vmem:[%s12 + $0x10] sm:$0xff]
      %v2120 = vld [vmem:[%s12 + $0x18] sm:$0xff]
      %v2122 = vsel %vm472, %v2115, 0
      %v2125 = vsel %vm472, %v2116, 0
      %2127 = vmatprep.subr.mxu0 0.0
      %2128 = vmatpush1.msra.mxu0 0.0
      %2129 = vmatprep.subr.mxu0 0.0
      %2130 = vmatpush1.msra.mxu0 0.0
      %2131 = vmatprep.subr.mxu0 0.0
      %2132 = vmatpush1.msra.mxu0 0.0
      %2133 = vmatprep.subr.mxu0 0.0
      %2134 = vmatpush1.msra.mxu0 0.0
      %2135 = vmatprep.subr.mxu0 0.0
      %2136 = vmatpush1.msra.mxu0 0.0
      %2137 = vmatprep.subr.mxu0 0.0
      %2138 = vmatpush1.msra.mxu0 0.0
      %2139 = vmatprep.subr.mxu0 0.0
      %2140 = vmatpush1.msra.mxu0 0.0
      %2141 = vmatprep.subr.mxu0 0.0
      %2142 = vmatpush1.msra.mxu0 0.0
      %2143 = vmatprep.subr.mxu0 0.0
      %2144 = vmatpush1.msra.mxu0 0.0
      %2145 = vmatprep.subr.mxu0 0.0
      %2146 = vmatpush1.msra.mxu0 0.0
      %2147 = vmatprep.subr.mxu0 0.0
      %2148 = vmatpush1.msra.mxu0 0.0
      %2149 = vmatprep.subr.mxu0 0.0
      %2150 = vmatpush1.msra.mxu0 0.0
      %2151 = vmatprep.subr.mxu0 0.0
      %2152 = vmatpush1.msra.mxu0 %v2120
      %2153 = vmatprep.subr.mxu0 0.0
      %2154 = vmatpush1.msra.mxu0 %v2119
      %2155 = vmatprep.subr.mxu0 0.0
      %2156 = vmatpush1.msra.mxu0 %v2118
      %2157 = vmatprep.subr.mxu0 0.0
      %2158 = vmatpush1.msra.mxu0 %v2117
      %2159 = vmatprep.subr.mxu0 0.0
      %2160 = vmatpush2.msra.mxu0 0.0
      %2161 = vmatprep.subr.mxu0 0.0
      %2162 = vmatpush2.msra.mxu0 0.0
      %2163 = vmatprep.subr.mxu0 0.0
      %2164 = vmatpush2.msra.mxu0 0.0
      %2165 = vmatprep.subr.mxu0 0.0
      %2166 = vmatpush2.msra.mxu0 0.0
      %2167 = vmatprep.subr.mxu0 0.0
      %2168 = vmatpush2.msra.mxu0 0.0
      %2169 = vmatprep.subr.mxu0 0.0
      %2170 = vmatpush2.msra.mxu0 0.0
      %2171 = vmatprep.subr.mxu0 0.0
      %2172 = vmatpush2.msra.mxu0 0.0
      %2173 = vmatprep.subr.mxu0 0.0
      %2174 = vmatpush2.msra.mxu0 0.0
      %2175 = vmatprep.subr.mxu0 0.0
      %2176 = vmatpush2.msra.mxu0 0.0
      %2177 = vmatprep.subr.mxu0 0.0
      %2178 = vmatpush2.msra.mxu0 0.0
      %2179 = vmatprep.subr.mxu0 0.0
      %2180 = vmatpush2.msra.mxu0 0.0
      %2181 = vmatprep.subr.mxu0 0.0
      %2182 = vmatpush2.msra.mxu0 0.0
      %2183 = vmatprep.subr.mxu0 0.0
      %2184 = vmatpush2.msra.mxu0 0.0
      %2185 = vmatprep.subr.mxu0 0.0
      %2186 = vmatpush2.msra.mxu0 0.0
      %2187 = vmatprep.subr.mxu0 0.0
      %2188 = vmatpush2.msra.mxu0 0.0
      %2189 = vmatprep.subr.mxu0 0.0
      %2190 = vmatpush2.msra.mxu0 0.0
      %2191 = vmatprep.mubr.f32.mxu0 0.0
      %2192 = vmatmul.mubr.f32.gmra.mxu0 %v2122
      %v2193 = vpop.f32.mrf.mxu0
      %v2194 = vadd.f32 0.0, %v2193
      %v2195 = vpop.f32.mrf.mxu0
      %2196 = vmatprep.mubr.f32.mxu0 0.0
      %2197 = vmatmul.mubr.f32.gmra.mxu0 %v2125
      %v2198 = vpop.f32.mrf.mxu0
      %v2199 = vadd.f32 0.0, %v2198
      %v2200 = vpop.f32.mrf.mxu0
      %2201 = vdwg.mxu0
      %v2202 = vxor.u32 %v2194, 2147483648
      %v2203 = vxor.u32 %v2199, 2147483648
      %v2204 = vmul.f32 %v2202, 1.442695
      %v2205 = vpow.pop %v2204
      %v2206 = vmul.f32 %v2203, 1.442695
      %v2207 = vpow.pop %v2206
      %v2208 = vadd.f32 %v2205, 1.0
      %v2209 = vadd.f32 %v2207, 1.0
      %v2210 = vrcp.pop %v2208
      %v2211 = vmul.f32 1.0, %v2210
      %v2212 = vrcp.pop %v2209
      %v2213 = vmul.f32 1.0, %v2212
      %v2214 = vmul.f32 %v2194, %v2211
      %v2215 = vmul.f32 %v2199, %v2213
      %2218 = vrot.lane.b32.xlu0 %v2194, 64
      %v2219 = vpop.permute.xlu0 %2218
      %2220 = vrot.lane.b32.xlu0 %v2199, 64
      %v2221 = vpop.permute.xlu0 %2220
      %v2224 = vmul.f32 %v2214, %v2219
      %v2225 = vmul.f32 %v2215, %v2221
      %v2226 = vld [vmem:[%s13] sm:$0xff]
      %v2227 = vld [vmem:[%s13 + $0x8] sm:$0xff]
      %v2228 = vld [vmem:[%s13 + $0x10] sm:$0xff]
      %v2229 = vld [vmem:[%s13 + $0x18] sm:$0xff]
      %v2230 = vld [vmem:[%s13 + $0x20] sm:$0xff]
      %v2231 = vld [vmem:[%s13 + $0x28] sm:$0xff]
      %v2232 = vld [vmem:[%s13 + $0x30] sm:$0xff]
      %v2233 = vld [vmem:[%s13 + $0x38] sm:$0xff]
      %v2235 = vsel %vm666, %v2224, 0
      %v2238 = vsel %vm666, %v2225, 0
      %2240 = vmatprep.subr.mxu0 0.0
      %2241 = vmatpush1.msra.mxu0 0.0
      %2242 = vmatprep.subr.mxu0 0.0
      %2243 = vmatpush1.msra.mxu0 0.0
      %2244 = vmatprep.subr.mxu0 0.0
      %2245 = vmatpush1.msra.mxu0 0.0
      %2246 = vmatprep.subr.mxu0 0.0
      %2247 = vmatpush1.msra.mxu0 0.0
      %2248 = vmatprep.subr.mxu0 0.0
      %2249 = vmatpush1.msra.mxu0 0.0
      %2250 = vmatprep.subr.mxu0 0.0
      %2251 = vmatpush1.msra.mxu0 0.0
      %2252 = vmatprep.subr.mxu0 0.0
      %2253 = vmatpush1.msra.mxu0 0.0
      %2254 = vmatprep.subr.mxu0 0.0
      %2255 = vmatpush1.msra.mxu0 0.0
      %2256 = vmatprep.subr.mxu0 0.0
      %2257 = vmatpush1.msra.mxu0 %v2233
      %2258 = vmatprep.subr.mxu0 0.0
      %2259 = vmatpush1.msra.mxu0 %v2232
      %2260 = vmatprep.subr.mxu0 0.0
      %2261 = vmatpush1.msra.mxu0 %v2231
      %2262 = vmatprep.subr.mxu0 0.0
      %2263 = vmatpush1.msra.mxu0 %v2230
      %2264 = vmatprep.subr.mxu0 0.0
      %2265 = vmatpush1.msra.mxu0 %v2229
      %2266 = vmatprep.subr.mxu0 0.0
      %2267 = vmatpush1.msra.mxu0 %v2228
      %2268 = vmatprep.subr.mxu0 0.0
      %2269 = vmatpush1.msra.mxu0 %v2227
      %2270 = vmatprep.subr.mxu0 0.0
      %2271 = vmatpush1.msra.mxu0 %v2226
      %2272 = vmatprep.subr.mxu0 0.0
      %2273 = vmatpush2.msra.mxu0 0.0
      %2274 = vmatprep.subr.mxu0 0.0
      %2275 = vmatpush2.msra.mxu0 0.0
      %2276 = vmatprep.subr.mxu0 0.0
      %2277 = vmatpush2.msra.mxu0 0.0
      %2278 = vmatprep.subr.mxu0 0.0
      %2279 = vmatpush2.msra.mxu0 0.0
      %2280 = vmatprep.subr.mxu0 0.0
      %2281 = vmatpush2.msra.mxu0 0.0
      %2282 = vmatprep.subr.mxu0 0.0
      %2283 = vmatpush2.msra.mxu0 0.0
      %2284 = vmatprep.subr.mxu0 0.0
      %2285 = vmatpush2.msra.mxu0 0.0
      %2286 = vmatprep.subr.mxu0 0.0
      %2287 = vmatpush2.msra.mxu0 0.0
      %2288 = vmatprep.subr.mxu0 0.0
      %2289 = vmatpush2.msra.mxu0 0.0
      %2290 = vmatprep.subr.mxu0 0.0
      %2291 = vmatpush2.msra.mxu0 0.0
      %2292 = vmatprep.subr.mxu0 0.0
      %2293 = vmatpush2.msra.mxu0 0.0
      %2294 = vmatprep.subr.mxu0 0.0
      %2295 = vmatpush2.msra.mxu0 0.0
      %2296 = vmatprep.subr.mxu0 0.0
      %2297 = vmatpush2.msra.mxu0 0.0
      %2298 = vmatprep.subr.mxu0 0.0
      %2299 = vmatpush2.msra.mxu0 0.0
      %2300 = vmatprep.subr.mxu0 0.0
      %2301 = vmatpush2.msra.mxu0 0.0
      %2302 = vmatprep.subr.mxu0 0.0
      %2303 = vmatpush2.msra.mxu0 0.0
      %2304 = vmatprep.mubr.f32.mxu0 0.0
      %2305 = vmatmul.mubr.f32.gmra.mxu0 %v2235
      %v2306 = vpop.f32.mrf.mxu0
      %v2307 = vadd.f32 0.0, %v2306
      %v2308 = vpop.f32.mrf.mxu0
      %2309 = vmatprep.mubr.f32.mxu0 0.0
      %2310 = vmatmul.mubr.f32.gmra.mxu0 %v2238
      %v2311 = vpop.f32.mrf.mxu0
      %v2312 = vadd.f32 0.0, %v2311
      %v2313 = vpop.f32.mrf.mxu0
      %2314 = vdwg.mxu0
      %v2315 = vadd.f32 %v2090, %v2307
      %v2316 = vadd.f32 %v2091, %v2312
      %2317 = vst.msk [vmem:[%s467] sm:$0xff] %vm472, %v2315
      %2318 = vst.msk [vmem:[%s467 + $0x8] sm:$0x3] %vm476, %v2316
      %p2319 = scmp.lt.s32.totalorder %s25, 1
      %s2320 = scalar_select %p2319, %s25, 1
      %s2321 = smul.addr %s2320, 2
      %s2322 = smul.addr %s2321, 8
      %s2323 = scalar_lea.vmem %s14, %s2322
      // Predicated region
      $region77: #{cross_jamba_both_forward.3} parent=75 // pred_check
        %p2324 = pneg %p342
      $region78: #{cross_jamba_both_forward.3} parent=75 // pred_check_branch
        %2326 = sbr.rel (%p2324) target = $region80
      $region79: #{cross_jamba_both_forward.3} parent=75 // pred_region
        _
      $region80: #{cross_jamba_both_forward.3} parent=75 // pred_fallthru
        _
    $region76: #{cross_jamba_both_forward.3} parent=5 // pred_fallthru
      _
    %p2327 = scmp.le.s32.totalorder 2, %s20
    // Predicated region
    $region81: #{cross_jamba_both_forward.3} parent=5 // pred_check
      %p2328 = pneg %p2327
    $region82: #{cross_jamba_both_forward.3} parent=5 // pred_check_branch
      %2330 = sbr.rel (%p2328) target = $region84
    $region83: #{cross_jamba_both_forward.3} parent=5 // pred_region
      %s2331 = ssub.s32 %s20, 2
      // Predicated region
      $region85: #{cross_jamba_both_forward.3} parent=83 // pred_check
        %p2332 = pneg %p348
      $region86: #{cross_jamba_both_forward.3} parent=83 // pred_check_branch
        %2334 = sbr.rel (%p2332) target = $region88
      $region87: #{cross_jamba_both_forward.3} parent=83 // pred_region
        %p2335 = scmp.lt.s32.totalorder %s26, 1
        %s2336 = scalar_select %p2335, %s26, 1
        %s2337 = smul.addr %s2336, 2
        %s2338 = smul.addr %s2337, 8
        %s2339 = scalar_lea.vmem %s14, %s2338
      $region88: #{cross_jamba_both_forward.3} parent=83 // pred_fallthru
        _
    $region84: #{cross_jamba_both_forward.3} parent=5 // pred_fallthru
      _
  $region6: #{cross_jamba_both_forward.3} parent=0 // loop_footer
    %s24 = sadd.s32 1, %s20
  $region7: #{cross_jamba_both_forward.3} parent=0 // loop_footer_branch
    %19 = sbr.rel target = $region3
  $region8: #{cross_jamba_both_forward.3} parent=0 // loop_exit
    _

// kernel: cross_jamba_both_forward.5
$region0: #{cross_jamba_both_forward.5}
  #allocation0 [shape = 'u32[]', space=smem, size = 0x4, offset = 0x4, fixed_abs, tag = 'smem constant byte address 0x4 - core index']
  #allocation1 [shape = 'u32[144,128]{1,0:T(1,128)}', space=vmem, size = 0x12000, scoped, tag = 'internal scratch']
  #allocation2 [shape = 'f32[1,1]{1,0:T(1,128)S(1)}', space=vmem, size = 0x200, scoped, tag = 'scoped memory for cross_jamba_both_forward.5']
  %s0 = inlined_call_operand.vmem [shape: f32[2,10,32], index: 0, kind: input, shape index: {}]
  %s1 = inlined_call_operand.vmem [shape: f32[2,12,16], index: 1, kind: input, shape index: {}]
  %s2 = inlined_call_operand.vmem [shape: f32[32,32], index: 2, kind: input, shape index: {}]
  %s3 = inlined_call_operand.vmem [shape: f32[1,32], index: 3, kind: input, shape index: {}]
  %s4 = inlined_call_operand.vmem [shape: f32[16,64], index: 4, kind: input, shape index: {}]
  %s5 = inlined_call_operand.vmem [shape: f32[1,64], index: 5, kind: input, shape index: {}]
  %s6 = inlined_call_operand.vmem [shape: f32[32,32], index: 6, kind: input, shape index: {}]
  %s7 = inlined_call_operand.vmem [shape: f32[1,32], index: 7, kind: input, shape index: {}]
  %s8 = inlined_call_operand.vmem [shape: f32[1,32], index: 8, kind: input, shape index: {}]
  %s9 = inlined_call_operand.vmem [shape: f32[1,32], index: 9, kind: input, shape index: {}]
  %s10 = inlined_call_operand.vmem [shape: f32[32,128], index: 10, kind: input, shape index: {}]
  %s11 = inlined_call_operand.vmem [shape: f32[1,128], index: 11, kind: input, shape index: {}]
  %s12 = inlined_call_operand.vmem [shape: f32[64,32], index: 12, kind: input, shape index: {}]
  %s13 = inlined_call_operand.vmem [shape: f32[1,32], index: 13, kind: input, shape index: {}]
  %s14 = inlined_call_operand.vmem [shape: f32[1,32], index: 14, kind: input, shape index: {}]
  %s15 = inlined_call_operand.vmem [shape: f32[1,32], index: 15, kind: input, shape index: {}]
  %s16 = inlined_call_operand.vmem [shape: f32[32,1], index: 16, kind: input, shape index: {}]
  %s17 = inlined_call_operand.<no memory space> [shape: f32[1,1], index: 17, kind: input, shape index: {}]
  %s18 = inlined_call_operand.vmem [shape: f32[2,1,1], index: 18, kind: output, shape index: {}]
  %s19 = sld [smem:[#allocation0]]
  $region105: #{cross_jamba_both_forward.5} parent=0
    _
  %s21 = ssub.s32 1, %s19
  %s22 = scalar_select 0, %s21, %s19
  %v23 = vstv %s17
  %24 = vst [vmem:[#allocation2] sm:$0x1] %v23
  loop: start=0, step=1, limit=4
  $region2: #{cross_jamba_both_forward.5} parent=0 // loop_pre_header
    _
  $region3: #{cross_jamba_both_forward.5} parent=0 // loop_header
    %s26 = sphi 0, %s30
    %p27 = scmp.ge.s32.totalorder %s26, 4
    %s36 = sphi 0, %s38
    %s39 = sphi 0, %s36
    %s40 = sphi 0, %s39
    %s56 = sphi 0, %s40
    %s62 = sphi 0, %s64
    %s65 = sphi 0, %s62
    %s66 = sphi 0, %s65
    %s82 = sphi 0, %s66
    %s86 = sphi 0, %s86
    %s88 = sphi 0, %s86
    %s89 = sphi 0, %s88
    %s103 = sphi 0, %s89
    %s107 = sphi 0, %s107
    %s109 = sphi 0, %s107
    %s110 = sphi 0, %s109
    %s124 = sphi 0, %s110
    %s128 = sphi 0, %s128
    %s130 = sphi 0, %s128
    %s131 = sphi 0, %s130
    %s145 = sphi 0, %s131
    %s149 = sphi 0, %s149
    %s151 = sphi 0, %s149
    %s152 = sphi 0, %s151
    %s166 = sphi 0, %s152
    %s170 = sphi 0, %s170
    %s172 = sphi 0, %s170
    %s173 = sphi 0, %s172
    %s187 = sphi 0, %s173
    %s191 = sphi 0, %s191
    %s193 = sphi 0, %s191
    %s194 = sphi 0, %s193
    %s208 = sphi 0, %s194
    %s212 = sphi 0, %s212
    %s214 = sphi 0, %s212
    %s215 = sphi 0, %s214
    %s229 = sphi 0, %s215
    %s233 = sphi 0, %s233
    %s235 = sphi 0, %s233
    %s236 = sphi 0, %s235
    %s250 = sphi 0, %s236
    %s254 = sphi 0, %s254
    %s256 = sphi 0, %s254
    %s257 = sphi 0, %s256
    %s271 = sphi 0, %s257
    %s275 = sphi 0, %s275
    %s277 = sphi 0, %s275
    %s278 = sphi 0, %s277
    %s292 = sphi 0, %s278
    %s296 = sphi 0, %s296
    %s298 = sphi 0, %s296
    %s299 = sphi 0, %s298
    %s313 = sphi 0, %s299
    %s317 = sphi 0, %s317
    %s319 = sphi 0, %s317
    %s320 = sphi 0, %s319
    %s334 = sphi 0, %s320
    %s338 = sphi 0, %s338
    %s340 = sphi 0, %s338
    %s341 = sphi 0, %s340
    %s355 = sphi 0, %s341
    %s359 = sphi 0, %s359
    %s361 = sphi 0, %s359
    %s362 = sphi 0, %s361
    %s376 = sphi 0, %s362
    %s380 = sphi 0, %s380
    %s382 = sphi 0, %s380
    %s383 = sphi 0, %s382
    %s397 = sphi 0, %s383
    %s401 = sphi 0, %s401
    %s403 = sphi 0, %s401
    %s404 = sphi 0, %s403
    %s418 = sphi 0, %s404
    %s424 = sphi 0, %s426
    %s427 = sphi 0, %s424
    %s428 = sphi 0, %s427
    %s444 = sphi 0, %s428
  $region4: #{cross_jamba_both_forward.5} parent=0 // loop_header_branch
    %29 = sbr.rel (%p27) target = $region8
  $region5: #{cross_jamba_both_forward.5} parent=0 // loop_body
    %s31 = ssub.s32 %s26, 1
    %s32 = ssub.s32 %s26, 2
    %s33 = sadd.s32 %s26, 1
    %s34 = ssub.s32 %s26, %s33
    %p35 = scmp.eq.s32.totalorder %s34, 0
    %s37 = sadd.s32 %s36, 1
    %s38 = scalar_select %p35, %s36, %s37
    %p41 = pneg %p35
    %p42 = scmp.eq.s32.totalorder %s26, 1
    %p43 = por %p41, %p42
    %p44 = scmp.ne.s32.totalorder %s36, %s39
    %p45 = scmp.eq.s32.totalorder %s26, 0
    %p46 = por %p44, %p45
    %p47 = scmp.ne.s32.totalorder %s36, %s39
    %p48 = scmp.eq.s32.totalorder %s31, 1
    %p49 = por %p47, %p48
    %p50 = scmp.ne.s32.totalorder %s39, %s40
    %p51 = scmp.eq.s32.totalorder %s31, 0
    %p52 = por %p50, %p51
    %p53 = scmp.ne.s32.totalorder %s39, %s40
    %p54 = scmp.eq.s32.totalorder %s32, 1
    %p55 = por %p53, %p54
    %p57 = scmp.ne.s32.totalorder %s40, %s56
    %p58 = scmp.eq.s32.totalorder %s32, 0
    %p59 = por %p57, %p58
    %s60 = ssub.s32 %s26, %s33
    %p61 = scmp.eq.s32.totalorder %s60, 0
    %s63 = sadd.s32 %s62, 1
    %s64 = scalar_select %p61, %s62, %s63
    %p67 = pneg %p61
    %p68 = scmp.eq.s32.totalorder %s26, 1
    %p69 = por %p67, %p68
    %p70 = scmp.ne.s32.totalorder %s62, %s65
    %p71 = scmp.eq.s32.totalorder %s26, 0
    %p72 = por %p70, %p71
    %p73 = scmp.ne.s32.totalorder %s62, %s65
    %p74 = scmp.eq.s32.totalorder %s31, 1
    %p75 = por %p73, %p74
    %p76 = scmp.ne.s32.totalorder %s65, %s66
    %p77 = scmp.eq.s32.totalorder %s31, 0
    %p78 = por %p76, %p77
    %p79 = scmp.ne.s32.totalorder %s65, %s66
    %p80 = scmp.eq.s32.totalorder %s32, 1
    %p81 = por %p79, %p80
    %p83 = scmp.ne.s32.totalorder %s66, %s82
    %p84 = scmp.eq.s32.totalorder %s32, 0
    %p85 = por %p83, %p84
    %s87 = sadd.s32 %s86, 1
    %p90 = scmp.eq.s32.totalorder %s26, 1
    %p91 = scmp.ne.s32.totalorder %s86, %s88
    %p92 = scmp.eq.s32.totalorder %s26, 0
    %p93 = por %p91, %p92
    %p94 = scmp.ne.s32.totalorder %s86, %s88
    %p95 = scmp.eq.s32.totalorder %s31, 1
    %p96 = por %p94, %p95
    %p97 = scmp.ne.s32.totalorder %s88, %s89
    %p98 = scmp.eq.s32.totalorder %s31, 0
    %p99 = por %p97, %p98
    %p100 = scmp.ne.s32.totalorder %s88, %s89
    %p101 = scmp.eq.s32.totalorder %s32, 1
    %p102 = por %p100, %p101
    %p104 = scmp.ne.s32.totalorder %s89, %s103
    %p105 = scmp.eq.s32.totalorder %s32, 0
    %p106 = por %p104, %p105
    %s108 = sadd.s32 %s107, 1
    %p111 = scmp.eq.s32.totalorder %s26, 1
    %p112 = scmp.ne.s32.totalorder %s107, %s109
    %p113 = scmp.eq.s32.totalorder %s26, 0
    %p114 = por %p112, %p113
    %p115 = scmp.ne.s32.totalorder %s107, %s109
    %p116 = scmp.eq.s32.totalorder %s31, 1
    %p117 = por %p115, %p116
    %p118 = scmp.ne.s32.totalorder %s109, %s110
    %p119 = scmp.eq.s32.totalorder %s31, 0
    %p120 = por %p118, %p119
    %p121 = scmp.ne.s32.totalorder %s109, %s110
    %p122 = scmp.eq.s32.totalorder %s32, 1
    %p123 = por %p121, %p122
    %p125 = scmp.ne.s32.totalorder %s110, %s124
    %p126 = scmp.eq.s32.totalorder %s32, 0
    %p127 = por %p125, %p126
    %s129 = sadd.s32 %s128, 1
    %p132 = scmp.eq.s32.totalorder %s26, 1
    %p133 = scmp.ne.s32.totalorder %s128, %s130
    %p134 = scmp.eq.s32.totalorder %s26, 0
    %p135 = por %p133, %p134
    %p136 = scmp.ne.s32.totalorder %s128, %s130
    %p137 = scmp.eq.s32.totalorder %s31, 1
    %p138 = por %p136, %p137
    %p139 = scmp.ne.s32.totalorder %s130, %s131
    %p140 = scmp.eq.s32.totalorder %s31, 0
    %p141 = por %p139, %p140
    %p142 = scmp.ne.s32.totalorder %s130, %s131
    %p143 = scmp.eq.s32.totalorder %s32, 1
    %p144 = por %p142, %p143
    %p146 = scmp.ne.s32.totalorder %s131, %s145
    %p147 = scmp.eq.s32.totalorder %s32, 0
    %p148 = por %p146, %p147
    %s150 = sadd.s32 %s149, 1
    %p153 = scmp.eq.s32.totalorder %s26, 1
    %p154 = scmp.ne.s32.totalorder %s149, %s151
    %p155 = scmp.eq.s32.totalorder %s26, 0
    %p156 = por %p154, %p155
    %p157 = scmp.ne.s32.totalorder %s149, %s151
    %p158 = scmp.eq.s32.totalorder %s31, 1
    %p159 = por %p157, %p158
    %p160 = scmp.ne.s32.totalorder %s151, %s152
    %p161 = scmp.eq.s32.totalorder %s31, 0
    %p162 = por %p160, %p161
    %p163 = scmp.ne.s32.totalorder %s151, %s152
    %p164 = scmp.eq.s32.totalorder %s32, 1
    %p165 = por %p163, %p164
    %p167 = scmp.ne.s32.totalorder %s152, %s166
    %p168 = scmp.eq.s32.totalorder %s32, 0
    %p169 = por %p167, %p168
    %s171 = sadd.s32 %s170, 1
    %p174 = scmp.eq.s32.totalorder %s26, 1
    %p175 = scmp.ne.s32.totalorder %s170, %s172
    %p176 = scmp.eq.s32.totalorder %s26, 0
    %p177 = por %p175, %p176
    %p178 = scmp.ne.s32.totalorder %s170, %s172
    %p179 = scmp.eq.s32.totalorder %s31, 1
    %p180 = por %p178, %p179
    %p181 = scmp.ne.s32.totalorder %s172, %s173
    %p182 = scmp.eq.s32.totalorder %s31, 0
    %p183 = por %p181, %p182
    %p184 = scmp.ne.s32.totalorder %s172, %s173
    %p185 = scmp.eq.s32.totalorder %s32, 1
    %p186 = por %p184, %p185
    %p188 = scmp.ne.s32.totalorder %s173, %s187
    %p189 = scmp.eq.s32.totalorder %s32, 0
    %p190 = por %p188, %p189
    %s192 = sadd.s32 %s191, 1
    %p195 = scmp.eq.s32.totalorder %s26, 1
    %p196 = scmp.ne.s32.totalorder %s191, %s193
    %p197 = scmp.eq.s32.totalorder %s26, 0
    %p198 = por %p196, %p197
    %p199 = scmp.ne.s32.totalorder %s191, %s193
    %p200 = scmp.eq.s32.totalorder %s31, 1
    %p201 = por %p199, %p200
    %p202 = scmp.ne.s32.totalorder %s193, %s194
    %p203 = scmp.eq.s32.totalorder %s31, 0
    %p204 = por %p202, %p203
    %p205 = scmp.ne.s32.totalorder %s193, %s194
    %p206 = scmp.eq.s32.totalorder %s32, 1
    %p207 = por %p205, %p206
    %p209 = scmp.ne.s32.totalorder %s194, %s208
    %p210 = scmp.eq.s32.totalorder %s32, 0
    %p211 = por %p209, %p210
    %s213 = sadd.s32 %s212, 1
    %p216 = scmp.eq.s32.totalorder %s26, 1
    %p217 = scmp.ne.s32.totalorder %s212, %s214
    %p218 = scmp.eq.s32.totalorder %s26, 0
    %p219 = por %p217, %p218
    %p220 = scmp.ne.s32.totalorder %s212, %s214
    %p221 = scmp.eq.s32.totalorder %s31, 1
    %p222 = por %p220, %p221
    %p223 = scmp.ne.s32.totalorder %s214, %s215
    %p224 = scmp.eq.s32.totalorder %s31, 0
    %p225 = por %p223, %p224
    %p226 = scmp.ne.s32.totalorder %s214, %s215
    %p227 = scmp.eq.s32.totalorder %s32, 1
    %p228 = por %p226, %p227
    %p230 = scmp.ne.s32.totalorder %s215, %s229
    %p231 = scmp.eq.s32.totalorder %s32, 0
    %p232 = por %p230, %p231
    %s234 = sadd.s32 %s233, 1
    %p237 = scmp.eq.s32.totalorder %s26, 1
    %p238 = scmp.ne.s32.totalorder %s233, %s235
    %p239 = scmp.eq.s32.totalorder %s26, 0
    %p240 = por %p238, %p239
    %p241 = scmp.ne.s32.totalorder %s233, %s235
    %p242 = scmp.eq.s32.totalorder %s31, 1
    %p243 = por %p241, %p242
    %p244 = scmp.ne.s32.totalorder %s235, %s236
    %p245 = scmp.eq.s32.totalorder %s31, 0
    %p246 = por %p244, %p245
    %p247 = scmp.ne.s32.totalorder %s235, %s236
    %p248 = scmp.eq.s32.totalorder %s32, 1
    %p249 = por %p247, %p248
    %p251 = scmp.ne.s32.totalorder %s236, %s250
    %p252 = scmp.eq.s32.totalorder %s32, 0
    %p253 = por %p251, %p252
    %s255 = sadd.s32 %s254, 1
    %p258 = scmp.eq.s32.totalorder %s26, 1
    %p259 = scmp.ne.s32.totalorder %s254, %s256
    %p260 = scmp.eq.s32.totalorder %s26, 0
    %p261 = por %p259, %p260
    %p262 = scmp.ne.s32.totalorder %s254, %s256
    %p263 = scmp.eq.s32.totalorder %s31, 1
    %p264 = por %p262, %p263
    %p265 = scmp.ne.s32.totalorder %s256, %s257
    %p266 = scmp.eq.s32.totalorder %s31, 0
    %p267 = por %p265, %p266
    %p268 = scmp.ne.s32.totalorder %s256, %s257
    %p269 = scmp.eq.s32.totalorder %s32, 1
    %p270 = por %p268, %p269
    %p272 = scmp.ne.s32.totalorder %s257, %s271
    %p273 = scmp.eq.s32.totalorder %s32, 0
    %p274 = por %p272, %p273
    %s276 = sadd.s32 %s275, 1
    %p279 = scmp.eq.s32.totalorder %s26, 1
    %p280 = scmp.ne.s32.totalorder %s275, %s277
    %p281 = scmp.eq.s32.totalorder %s26, 0
    %p282 = por %p280, %p281
    %p283 = scmp.ne.s32.totalorder %s275, %s277
    %p284 = scmp.eq.s32.totalorder %s31, 1
    %p285 = por %p283, %p284
    %p286 = scmp.ne.s32.totalorder %s277, %s278
    %p287 = scmp.eq.s32.totalorder %s31, 0
    %p288 = por %p286, %p287
    %p289 = scmp.ne.s32.totalorder %s277, %s278
    %p290 = scmp.eq.s32.totalorder %s32, 1
    %p291 = por %p289, %p290
    %p293 = scmp.ne.s32.totalorder %s278, %s292
    %p294 = scmp.eq.s32.totalorder %s32, 0
    %p295 = por %p293, %p294
    %s297 = sadd.s32 %s296, 1
    %p300 = scmp.eq.s32.totalorder %s26, 1
    %p301 = scmp.ne.s32.totalorder %s296, %s298
    %p302 = scmp.eq.s32.totalorder %s26, 0
    %p303 = por %p301, %p302
    %p304 = scmp.ne.s32.totalorder %s296, %s298
    %p305 = scmp.eq.s32.totalorder %s31, 1
    %p306 = por %p304, %p305
    %p307 = scmp.ne.s32.totalorder %s298, %s299
    %p308 = scmp.eq.s32.totalorder %s31, 0
    %p309 = por %p307, %p308
    %p310 = scmp.ne.s32.totalorder %s298, %s299
    %p311 = scmp.eq.s32.totalorder %s32, 1
    %p312 = por %p310, %p311
    %p314 = scmp.ne.s32.totalorder %s299, %s313
    %p315 = scmp.eq.s32.totalorder %s32, 0
    %p316 = por %p314, %p315
    %s318 = sadd.s32 %s317, 1
    %p321 = scmp.eq.s32.totalorder %s26, 1
    %p322 = scmp.ne.s32.totalorder %s317, %s319
    %p323 = scmp.eq.s32.totalorder %s26, 0
    %p324 = por %p322, %p323
    %p325 = scmp.ne.s32.totalorder %s317, %s319
    %p326 = scmp.eq.s32.totalorder %s31, 1
    %p327 = por %p325, %p326
    %p328 = scmp.ne.s32.totalorder %s319, %s320
    %p329 = scmp.eq.s32.totalorder %s31, 0
    %p330 = por %p328, %p329
    %p331 = scmp.ne.s32.totalorder %s319, %s320
    %p332 = scmp.eq.s32.totalorder %s32, 1
    %p333 = por %p331, %p332
    %p335 = scmp.ne.s32.totalorder %s320, %s334
    %p336 = scmp.eq.s32.totalorder %s32, 0
    %p337 = por %p335, %p336
    %s339 = sadd.s32 %s338, 1
    %p342 = scmp.eq.s32.totalorder %s26, 1
    %p343 = scmp.ne.s32.totalorder %s338, %s340
    %p344 = scmp.eq.s32.totalorder %s26, 0
    %p345 = por %p343, %p344
    %p346 = scmp.ne.s32.totalorder %s338, %s340
    %p347 = scmp.eq.s32.totalorder %s31, 1
    %p348 = por %p346, %p347
    %p349 = scmp.ne.s32.totalorder %s340, %s341
    %p350 = scmp.eq.s32.totalorder %s31, 0
    %p351 = por %p349, %p350
    %p352 = scmp.ne.s32.totalorder %s340, %s341
    %p353 = scmp.eq.s32.totalorder %s32, 1
    %p354 = por %p352, %p353
    %p356 = scmp.ne.s32.totalorder %s341, %s355
    %p357 = scmp.eq.s32.totalorder %s32, 0
    %p358 = por %p356, %p357
    %s360 = sadd.s32 %s359, 1
    %p363 = scmp.eq.s32.totalorder %s26, 1
    %p364 = scmp.ne.s32.totalorder %s359, %s361
    %p365 = scmp.eq.s32.totalorder %s26, 0
    %p366 = por %p364, %p365
    %p367 = scmp.ne.s32.totalorder %s359, %s361
    %p368 = scmp.eq.s32.totalorder %s31, 1
    %p369 = por %p367, %p368
    %p370 = scmp.ne.s32.totalorder %s361, %s362
    %p371 = scmp.eq.s32.totalorder %s31, 0
    %p372 = por %p370, %p371
    %p373 = scmp.ne.s32.totalorder %s361, %s362
    %p374 = scmp.eq.s32.totalorder %s32, 1
    %p375 = por %p373, %p374
    %p377 = scmp.ne.s32.totalorder %s362, %s376
    %p378 = scmp.eq.s32.totalorder %s32, 0
    %p379 = por %p377, %p378
    %s381 = sadd.s32 %s380, 1
    %p384 = scmp.eq.s32.totalorder %s26, 1
    %p385 = scmp.ne.s32.totalorder %s380, %s382
    %p386 = scmp.eq.s32.totalorder %s26, 0
    %p387 = por %p385, %p386
    %p388 = scmp.ne.s32.totalorder %s380, %s382
    %p389 = scmp.eq.s32.totalorder %s31, 1
    %p390 = por %p388, %p389
    %p391 = scmp.ne.s32.totalorder %s382, %s383
    %p392 = scmp.eq.s32.totalorder %s31, 0
    %p393 = por %p391, %p392
    %p394 = scmp.ne.s32.totalorder %s382, %s383
    %p395 = scmp.eq.s32.totalorder %s32, 1
    %p396 = por %p394, %p395
    %p398 = scmp.ne.s32.totalorder %s383, %s397
    %p399 = scmp.eq.s32.totalorder %s32, 0
    %p400 = por %p398, %p399
    %s402 = sadd.s32 %s401, 1
    %p405 = scmp.eq.s32.totalorder %s26, 1
    %p406 = scmp.ne.s32.totalorder %s401, %s403
    %p407 = scmp.eq.s32.totalorder %s26, 0
    %p408 = por %p406, %p407
    %p409 = scmp.ne.s32.totalorder %s401, %s403
    %p410 = scmp.eq.s32.totalorder %s31, 1
    %p411 = por %p409, %p410
    %p412 = scmp.ne.s32.totalorder %s403, %s404
    %p413 = scmp.eq.s32.totalorder %s31, 0
    %p414 = por %p412, %p413
    %p415 = scmp.ne.s32.totalorder %s403, %s404
    %p416 = scmp.eq.s32.totalorder %s32, 1
    %p417 = por %p415, %p416
    %p419 = scmp.ne.s32.totalorder %s404, %s418
    %p420 = scmp.eq.s32.totalorder %s32, 0
    %p421 = por %p419, %p420
    %s422 = ssub.s32 %s26, %s33
    %p423 = scmp.eq.s32.totalorder %s422, 0
    %s425 = sadd.s32 %s424, 1
    %s426 = scalar_select %p423, %s424, %s425
    %p429 = pneg %p423
    %p430 = scmp.eq.s32.totalorder %s26, 1
    %p431 = por %p429, %p430
    %p432 = scmp.ne.s32.totalorder %s424, %s427
    %p433 = scmp.eq.s32.totalorder %s26, 0
    %p434 = por %p432, %p433
    %p435 = scmp.ne.s32.totalorder %s424, %s427
    %p436 = scmp.eq.s32.totalorder %s31, 1
    %p437 = por %p435, %p436
    %p438 = scmp.ne.s32.totalorder %s427, %s428
    %p439 = scmp.eq.s32.totalorder %s31, 0
    %p440 = por %p438, %p439
    %p441 = scmp.ne.s32.totalorder %s427, %s428
    %p442 = scmp.eq.s32.totalorder %s32, 1
    %p443 = por %p441, %p442
    %p445 = scmp.ne.s32.totalorder %s428, %s444
    %p446 = scmp.eq.s32.totalorder %s32, 0
    %p447 = por %p445, %p446
    %p448 = scmp.le.s32.totalorder 1, %s26
    %p449 = scmp.lt.s32.totalorder %s26, 3
    %p450 = pnand %p448, %p449
    %p451 = pneg %p450
    // Predicated region
    $region9: #{cross_jamba_both_forward.5} parent=5 // pred_check
      _
    $region10: #{cross_jamba_both_forward.5} parent=5 // pred_check_branch
      %453 = sbr.rel (%p450) target = $region12
    $region11: #{cross_jamba_both_forward.5} parent=5 // pred_region
      %s454 = ssub.s32 %s26, 1
      // Predicated region
      $region13: #{cross_jamba_both_forward.5} parent=11 // pred_check
        %p455 = pneg %p99
      $region14: #{cross_jamba_both_forward.5} parent=11 // pred_check_branch
        %457 = sbr.rel (%p455) target = $region16
      $region15: #{cross_jamba_both_forward.5} parent=11 // pred_region
        _
      $region16: #{cross_jamba_both_forward.5} parent=11 // pred_fallthru
        _
      // Predicated region
      $region17: #{cross_jamba_both_forward.5} parent=11 // pred_check
        %p458 = pneg %p120
      $region18: #{cross_jamba_both_forward.5} parent=11 // pred_check_branch
        %460 = sbr.rel (%p458) target = $region20
      $region19: #{cross_jamba_both_forward.5} parent=11 // pred_region
        _
      $region20: #{cross_jamba_both_forward.5} parent=11 // pred_fallthru
        _
      // Predicated region
      $region21: #{cross_jamba_both_forward.5} parent=11 // pred_check
        %p461 = pneg %p141
      $region22: #{cross_jamba_both_forward.5} parent=11 // pred_check_branch
        %463 = sbr.rel (%p461) target = $region24
      $region23: #{cross_jamba_both_forward.5} parent=11 // pred_region
        _
      $region24: #{cross_jamba_both_forward.5} parent=11 // pred_fallthru
        _
      // Predicated region
      $region25: #{cross_jamba_both_forward.5} parent=11 // pred_check
        %p464 = pneg %p162
      $region26: #{cross_jamba_both_forward.5} parent=11 // pred_check_branch
        %466 = sbr.rel (%p464) target = $region28
      $region27: #{cross_jamba_both_forward.5} parent=11 // pred_region
        _
      $region28: #{cross_jamba_both_forward.5} parent=11 // pred_fallthru
        _
      // Predicated region
      $region29: #{cross_jamba_both_forward.5} parent=11 // pred_check
        %p467 = pneg %p183
      $region30: #{cross_jamba_both_forward.5} parent=11 // pred_check_branch
        %469 = sbr.rel (%p467) target = $region32
      $region31: #{cross_jamba_both_forward.5} parent=11 // pred_region
        _
      $region32: #{cross_jamba_both_forward.5} parent=11 // pred_fallthru
        _
      // Predicated region
      $region33: #{cross_jamba_both_forward.5} parent=11 // pred_check
        %p470 = pneg %p204
      $region34: #{cross_jamba_both_forward.5} parent=11 // pred_check_branch
        %472 = sbr.rel (%p470) target = $region36
      $region35: #{cross_jamba_both_forward.5} parent=11 // pred_region
        _
      $region36: #{cross_jamba_both_forward.5} parent=11 // pred_fallthru
        _
      // Predicated region
      $region37: #{cross_jamba_both_forward.5} parent=11 // pred_check
        %p473 = pneg %p225
      $region38: #{cross_jamba_both_forward.5} parent=11 // pred_check_branch
        %475 = sbr.rel (%p473) target = $region40
      $region39: #{cross_jamba_both_forward.5} parent=11 // pred_region
        _
      $region40: #{cross_jamba_both_forward.5} parent=11 // pred_fallthru
        _
      // Predicated region
      $region41: #{cross_jamba_both_forward.5} parent=11 // pred_check
        %p476 = pneg %p246
      $region42: #{cross_jamba_both_forward.5} parent=11 // pred_check_branch
        %478 = sbr.rel (%p476) target = $region44
      $region43: #{cross_jamba_both_forward.5} parent=11 // pred_region
        _
      $region44: #{cross_jamba_both_forward.5} parent=11 // pred_fallthru
        _
      // Predicated region
      $region45: #{cross_jamba_both_forward.5} parent=11 // pred_check
        %p479 = pneg %p267
      $region46: #{cross_jamba_both_forward.5} parent=11 // pred_check_branch
        %481 = sbr.rel (%p479) target = $region48
      $region47: #{cross_jamba_both_forward.5} parent=11 // pred_region
        _
      $region48: #{cross_jamba_both_forward.5} parent=11 // pred_fallthru
        _
      // Predicated region
      $region49: #{cross_jamba_both_forward.5} parent=11 // pred_check
        %p482 = pneg %p288
      $region50: #{cross_jamba_both_forward.5} parent=11 // pred_check_branch
        %484 = sbr.rel (%p482) target = $region52
      $region51: #{cross_jamba_both_forward.5} parent=11 // pred_region
        _
      $region52: #{cross_jamba_both_forward.5} parent=11 // pred_fallthru
        _
      // Predicated region
      $region53: #{cross_jamba_both_forward.5} parent=11 // pred_check
        %p485 = pneg %p309
      $region54: #{cross_jamba_both_forward.5} parent=11 // pred_check_branch
        %487 = sbr.rel (%p485) target = $region56
      $region55: #{cross_jamba_both_forward.5} parent=11 // pred_region
        _
      $region56: #{cross_jamba_both_forward.5} parent=11 // pred_fallthru
        _
      // Predicated region
      $region57: #{cross_jamba_both_forward.5} parent=11 // pred_check
        %p488 = pneg %p330
      $region58: #{cross_jamba_both_forward.5} parent=11 // pred_check_branch
        %490 = sbr.rel (%p488) target = $region60
      $region59: #{cross_jamba_both_forward.5} parent=11 // pred_region
        _
      $region60: #{cross_jamba_both_forward.5} parent=11 // pred_fallthru
        _
      // Predicated region
      $region61: #{cross_jamba_both_forward.5} parent=11 // pred_check
        %p491 = pneg %p351
      $region62: #{cross_jamba_both_forward.5} parent=11 // pred_check_branch
        %493 = sbr.rel (%p491) target = $region64
      $region63: #{cross_jamba_both_forward.5} parent=11 // pred_region
        _
      $region64: #{cross_jamba_both_forward.5} parent=11 // pred_fallthru
        _
      // Predicated region
      $region65: #{cross_jamba_both_forward.5} parent=11 // pred_check
        %p494 = pneg %p372
      $region66: #{cross_jamba_both_forward.5} parent=11 // pred_check_branch
        %496 = sbr.rel (%p494) target = $region68
      $region67: #{cross_jamba_both_forward.5} parent=11 // pred_region
        _
      $region68: #{cross_jamba_both_forward.5} parent=11 // pred_fallthru
        _
      // Predicated region
      $region69: #{cross_jamba_both_forward.5} parent=11 // pred_check
        %p497 = pneg %p393
      $region70: #{cross_jamba_both_forward.5} parent=11 // pred_check_branch
        %499 = sbr.rel (%p497) target = $region72
      $region71: #{cross_jamba_both_forward.5} parent=11 // pred_region
        _
      $region72: #{cross_jamba_both_forward.5} parent=11 // pred_fallthru
        _
      // Predicated region
      $region73: #{cross_jamba_both_forward.5} parent=11 // pred_check
        %p500 = pneg %p414
      $region74: #{cross_jamba_both_forward.5} parent=11 // pred_check_branch
        %502 = sbr.rel (%p500) target = $region76
      $region75: #{cross_jamba_both_forward.5} parent=11 // pred_region
        _
      $region76: #{cross_jamba_both_forward.5} parent=11 // pred_fallthru
        _
    $region12: #{cross_jamba_both_forward.5} parent=5 // pred_fallthru
      _
    %p503 = scmp.lt.s32.totalorder %s26, 2
    // Predicated region
    $region77: #{cross_jamba_both_forward.5} parent=5 // pred_check
      %p504 = pneg %p503
    $region78: #{cross_jamba_both_forward.5} parent=5 // pred_check_branch
      %506 = sbr.rel (%p504) target = $region80
    $region79: #{cross_jamba_both_forward.5} parent=5 // pred_region
      // Predicated region
      $region81: #{cross_jamba_both_forward.5} parent=79 // pred_check
        %p507 = pneg %p46
      $region82: #{cross_jamba_both_forward.5} parent=79 // pred_check_branch
        %509 = sbr.rel (%p507) target = $region84
      $region83: #{cross_jamba_both_forward.5} parent=79 // pred_region
        %p510 = scmp.lt.s32.totalorder %s26, 1
        %s511 = scalar_select %p510, %s26, 1
        %s512 = smul.addr %s511, 2
        %s513 = smul.addr %s512, 8
        %s514 = scalar_lea.vmem %s0, %s513
      $region84: #{cross_jamba_both_forward.5} parent=79 // pred_fallthru
        _
      // Predicated region
      $region85: #{cross_jamba_both_forward.5} parent=79 // pred_check
        %p515 = pneg %p72
      $region86: #{cross_jamba_both_forward.5} parent=79 // pred_check_branch
        %517 = sbr.rel (%p515) target = $region88
      $region87: #{cross_jamba_both_forward.5} parent=79 // pred_region
        %p518 = scmp.lt.s32.totalorder %s26, 1
        %s519 = scalar_select %p518, %s26, 1
        %s520 = smul.addr %s519, 2
        %s521 = smul.addr %s520, 8
        %s522 = scalar_lea.vmem %s1, %s521
      $region88: #{cross_jamba_both_forward.5} parent=79 // pred_fallthru
        _
    $region80: #{cross_jamba_both_forward.5} parent=5 // pred_fallthru
      _
    %p523 = scmp.le.s32.totalorder 1, %s26
    %p524 = scmp.lt.s32.totalorder %s26, 3
    %p525 = pnand %p523, %p524
    %p526 = pneg %p525
    // Predicated region
    $region89: #{cross_jamba_both_forward.5} parent=5 // pred_check
      _
    $region90: #{cross_jamba_both_forward.5} parent=5 // pred_check_branch
      %528 = sbr.rel (%p525) target = $region92
    $region91: #{cross_jamba_both_forward.5} parent=5 // pred_region
      %s529 = ssub.s32 %s26, 1
      %p530 = scmp.lt.s32.totalorder %s31, 1
      %s531 = scalar_select %p530, %s31, 1
      %s532 = smul.addr %s531, 2
      %s533 = smul.addr %s532, 8
      %s534 = scalar_lea.vmem %s0, %s533
      %p535 = pneg %p52
      %p536 = pneg %p49
      %p537 = scmp.lt.s32.totalorder %s31, 1
      %s538 = scalar_select %p537, %s31, 1
      %s539 = smul.addr %s538, 2
      %s540 = smul.addr %s539, 8
      %s541 = scalar_lea.vmem %s1, %s540
      %p542 = pneg %p78
      %p543 = pneg %p75
      %p544 = pneg %p99
      %p545 = pneg %p96
      %p546 = pneg %p120
      %p547 = pneg %p117
      %p548 = pneg %p141
      %p549 = pneg %p138
      %p550 = pneg %p162
      %p551 = pneg %p159
      %p552 = pneg %p183
      %p553 = pneg %p180
      %p554 = pneg %p204
      %p555 = pneg %p201
      %p556 = pneg %p225
      %p557 = pneg %p222
      %p558 = pneg %p246
      %p559 = pneg %p243
      %p560 = pneg %p267
      %p561 = pneg %p264
      %p562 = pneg %p288
      %p563 = pneg %p285
      %p564 = pneg %p309
      %p565 = pneg %p306
      %p566 = pneg %p330
      %p567 = pneg %p327
      %p568 = pneg %p351
      %p569 = pneg %p348
      %p570 = pneg %p372
      %p571 = pneg %p369
      %p572 = pneg %p393
      %p573 = pneg %p390
      %p574 = pneg %p414
      %p575 = pneg %p411
      %p576 = pneg %p440
      %p577 = pneg %p437
      %p578 = scmp.lt.s32.totalorder %s31, 1
      %s579 = scalar_select %p578, %s31, 1
      %s580 = scalar_lea.vmem %s18, %s579
      %p581 = scmp.lt.s32.totalorder %s31, 1
      %s582 = scalar_select %p581, %s31, 1
      %s583 = smul.addr %s582, 2
      %s584 = smul.addr %s583, 8
      %s585 = scalar_lea.vmem %s0, %s584
      %p586 = scmp.lt.s32.totalorder %s31, 1
      %s587 = scalar_select %p586, %s31, 1
      %s588 = smul.addr %s587, 2
      %s589 = smul.addr %s588, 8
      %s590 = scalar_lea.vmem %s1, %s589
      %p591 = scmp.lt.s32.totalorder %s31, 1
      %s592 = scalar_select %p591, %s31, 1
      %s593 = scalar_lea.vmem %s18, %s592
      %v594 = vld [vmem:[%s585] sm:$0xff]
      %v595 = vld [vmem:[%s585 + $0x8] sm:$0x3]
      %v596 = vld [vmem:[%s590] sm:$0xff]
      %v597 = vld [vmem:[%s590 + $0x8] sm:$0xf]
      %vm598 = vcmask 261120
      %v599 = vsel %vm598, %v594, 0.0
      %vm600 = vcmask 254976
      %v601 = vsel %vm600, %v595, 0.0
      %v602 = vadd.f32 %v599, %v601
      %v603 = vrot.slane %v602, 4
      %v604 = vadd.f32 %v602, %v603
      %v605 = vrot.slane %v604, 2
      %v606 = vadd.f32 %v604, %v605
      %v607 = vrot.slane %v606, 1
      %v608 = vadd.f32 %v606, %v607
      %v609 = vrcp.pop 10.0
      %v610 = vmul.f32 %v608, %v609
      %v611 = vld [vmem:[%s2] sm:$0xff]
      %v612 = vld [vmem:[%s2 + $0x8] sm:$0xff]
      %v613 = vld [vmem:[%s2 + $0x10] sm:$0xff]
      %v614 = vld [vmem:[%s2 + $0x18] sm:$0xff]
      %v615 = vld [vmem:[%s3] sm:$0x1]
      %v617 = vsel %vm598, %v610, 0
      %619 = vmatprep.subr.mxu0 0.0
      %620 = vmatpush1.msra.mxu0 0.0
      %621 = vmatprep.subr.mxu0 0.0
      %622 = vmatpush1.msra.mxu0 0.0
      %623 = vmatprep.subr.mxu0 0.0
      %624 = vmatpush1.msra.mxu0 0.0
      %625 = vmatprep.subr.mxu0 0.0
      %626 = vmatpush1.msra.mxu0 0.0
      %627 = vmatprep.subr.mxu0 0.0
      %628 = vmatpush1.msra.mxu0 0.0
      %629 = vmatprep.subr.mxu0 0.0
      %630 = vmatpush1.msra.mxu0 0.0
      %631 = vmatprep.subr.mxu0 0.0
      %632 = vmatpush1.msra.mxu0 0.0
      %633 = vmatprep.subr.mxu0 0.0
      %634 = vmatpush1.msra.mxu0 0.0
      %635 = vmatprep.subr.mxu0 0.0
      %636 = vmatpush1.msra.mxu0 0.0
      %637 = vmatprep.subr.mxu0 0.0
      %638 = vmatpush1.msra.mxu0 0.0
      %639 = vmatprep.subr.mxu0 0.0
      %640 = vmatpush1.msra.mxu0 0.0
      %641 = vmatprep.subr.mxu0 0.0
      %642 = vmatpush1.msra.mxu0 0.0
      %643 = vmatprep.subr.mxu0 0.0
      %644 = vmatpush1.msra.mxu0 %v614
      %645 = vmatprep.subr.mxu0 0.0
      %646 = vmatpush1.msra.mxu0 %v613
      %647 = vmatprep.subr.mxu0 0.0
      %648 = vmatpush1.msra.mxu0 %v612
      %649 = vmatprep.subr.mxu0 0.0
      %650 = vmatpush1.msra.mxu0 %v611
      %651 = vmatprep.subr.mxu0 0.0
      %652 = vmatpush2.msra.mxu0 0.0
      %653 = vmatprep.subr.mxu0 0.0
      %654 = vmatpush2.msra.mxu0 0.0
      %655 = vmatprep.subr.mxu0 0.0
      %656 = vmatpush2.msra.mxu0 0.0
      %657 = vmatprep.subr.mxu0 0.0
      %658 = vmatpush2.msra.mxu0 0.0
      %659 = vmatprep.subr.mxu0 0.0
      %660 = vmatpush2.msra.mxu0 0.0
      %661 = vmatprep.subr.mxu0 0.0
      %662 = vmatpush2.msra.mxu0 0.0
      %663 = vmatprep.subr.mxu0 0.0
      %664 = vmatpush2.msra.mxu0 0.0
      %665 = vmatprep.subr.mxu0 0.0
      %666 = vmatpush2.msra.mxu0 0.0
      %667 = vmatprep.subr.mxu0 0.0
      %668 = vmatpush2.msra.mxu0 0.0
      %669 = vmatprep.subr.mxu0 0.0
      %670 = vmatpush2.msra.mxu0 0.0
      %671 = vmatprep.subr.mxu0 0.0
      %672 = vmatpush2.msra.mxu0 0.0
      %673 = vmatprep.subr.mxu0 0.0
      %674 = vmatpush2.msra.mxu0 0.0
      %675 = vmatprep.subr.mxu0 0.0
      %676 = vmatpush2.msra.mxu0 0.0
      %677 = vmatprep.subr.mxu0 0.0
      %678 = vmatpush2.msra.mxu0 0.0
      %679 = vmatprep.subr.mxu0 0.0
      %680 = vmatpush2.msra.mxu0 0.0
      %681 = vmatprep.subr.mxu0 0.0
      %682 = vmatpush2.msra.mxu0 0.0
      %683 = vmatprep.mubr.f32.mxu0 0.0
      %684 = vmatmul.mubr.f32.gmra.mxu0 %v617
      %v685 = vpop.f32.mrf.mxu0
      %v686 = vadd.f32 %v615, %v685
      %v687 = vpop.f32.mrf.mxu0
      %688 = vdwg.mxu0
      %v689 = vld [vmem:[%s4] sm:$0xff]
      %v690 = vld [vmem:[%s4 + $0x8] sm:$0xff]
      %v691 = vld [vmem:[%s5] sm:$0x1]
      %v693 = vlaneseq
      %v694 = vshrl.u32 %v693, 7
      %v695 = vsub.s32 0, %v694
      %v696 = vrot.slane %v691, %v695
      %vm698 = vcmask 130048
      %v700 = vsel %vm698, %v596, 0
      %v703 = vsel %vm698, %v597, 0
      %705 = vmatprep.subr.mxu0 0.0
      %706 = vmatpush1.msra.mxu0 0.0
      %707 = vmatprep.subr.mxu0 0.0
      %708 = vmatpush1.msra.mxu0 0.0
      %709 = vmatprep.subr.mxu0 0.0
      %710 = vmatpush1.msra.mxu0 0.0
      %711 = vmatprep.subr.mxu0 0.0
      %712 = vmatpush1.msra.mxu0 0.0
      %713 = vmatprep.subr.mxu0 0.0
      %714 = vmatpush1.msra.mxu0 0.0
      %715 = vmatprep.subr.mxu0 0.0
      %716 = vmatpush1.msra.mxu0 0.0
      %717 = vmatprep.subr.mxu0 0.0
      %718 = vmatpush1.msra.mxu0 0.0
      %719 = vmatprep.subr.mxu0 0.0
      %720 = vmatpush1.msra.mxu0 0.0
      %721 = vmatprep.subr.mxu0 0.0
      %722 = vmatpush1.msra.mxu0 0.0
      %723 = vmatprep.subr.mxu0 0.0
      %724 = vmatpush1.msra.mxu0 0.0
      %725 = vmatprep.subr.mxu0 0.0
      %726 = vmatpush1.msra.mxu0 0.0
      %727 = vmatprep.subr.mxu0 0.0
      %728 = vmatpush1.msra.mxu0 0.0
      %729 = vmatprep.subr.mxu0 0.0
      %730 = vmatpush1.msra.mxu0 0.0
      %731 = vmatprep.subr.mxu0 0.0
      %732 = vmatpush1.msra.mxu0 0.0
      %733 = vmatprep.subr.mxu0 0.0
      %734 = vmatpush1.msra.mxu0 %v690
      %735 = vmatprep.subr.mxu0 0.0
      %736 = vmatpush1.msra.mxu0 %v689
      %737 = vmatprep.subr.mxu0 0.0
      %738 = vmatpush2.msra.mxu0 0.0
      %739 = vmatprep.subr.mxu0 0.0
      %740 = vmatpush2.msra.mxu0 0.0
      %741 = vmatprep.subr.mxu0 0.0
      %742 = vmatpush2.msra.mxu0 0.0
      %743 = vmatprep.subr.mxu0 0.0
      %744 = vmatpush2.msra.mxu0 0.0
      %745 = vmatprep.subr.mxu0 0.0
      %746 = vmatpush2.msra.mxu0 0.0
      %747 = vmatprep.subr.mxu0 0.0
      %748 = vmatpush2.msra.mxu0 0.0
      %749 = vmatprep.subr.mxu0 0.0
      %750 = vmatpush2.msra.mxu0 0.0
      %751 = vmatprep.subr.mxu0 0.0
      %752 = vmatpush2.msra.mxu0 0.0
      %753 = vmatprep.subr.mxu0 0.0
      %754 = vmatpush2.msra.mxu0 0.0
      %755 = vmatprep.subr.mxu0 0.0
      %756 = vmatpush2.msra.mxu0 0.0
      %757 = vmatprep.subr.mxu0 0.0
      %758 = vmatpush2.msra.mxu0 0.0
      %759 = vmatprep.subr.mxu0 0.0
      %760 = vmatpush2.msra.mxu0 0.0
      %761 = vmatprep.subr.mxu0 0.0
      %762 = vmatpush2.msra.mxu0 0.0
      %763 = vmatprep.subr.mxu0 0.0
      %764 = vmatpush2.msra.mxu0 0.0
      %765 = vmatprep.subr.mxu0 0.0
      %766 = vmatpush2.msra.mxu0 0.0
      %767 = vmatprep.subr.mxu0 0.0
      %768 = vmatpush2.msra.mxu0 0.0
      %769 = vmatprep.mubr.f32.mxu0 0.0
      %770 = vmatmul.mubr.f32.gmra.mxu0 %v700
      %v771 = vpop.f32.mrf.mxu0
      %v772 = vadd.f32 %v696, %v771
      %v773 = vpop.f32.mrf.mxu0
      %774 = vmatprep.mubr.f32.mxu0 0.0
      %775 = vmatmul.mubr.f32.gmra.mxu0 %v703
      %v776 = vpop.f32.mrf.mxu0
      %v777 = vadd.f32 %v696, %v776
      %v778 = vpop.f32.mrf.mxu0
      %779 = vdwg.mxu0
      %vm780 = vcmask 64512
      %v782 = vsel %vm780, %v686, 0
      %v785 = vsel %vm780, %v772, 0
      %v788 = vsel %vm780, %v777, 0
      %790 = vmatprep.subr.mxu0 0.0
      %791 = vmatpush1.xpose.msra.mxu0 0.0
      %792 = vmatprep.subr.mxu0 0.0
      %793 = vmatpush1.xpose.msra.mxu0 0.0
      %794 = vmatprep.subr.mxu0 0.0
      %795 = vmatpush1.xpose.msra.mxu0 0.0
      %796 = vmatprep.subr.mxu0 0.0
      %797 = vmatpush1.xpose.msra.mxu0 0.0
      %798 = vmatprep.subr.mxu0 0.0
      %799 = vmatpush1.xpose.msra.mxu0 0.0
      %800 = vmatprep.subr.mxu0 0.0
      %801 = vmatpush1.xpose.msra.mxu0 0.0
      %802 = vmatprep.subr.mxu0 0.0
      %803 = vmatpush1.xpose.msra.mxu0 0.0
      %804 = vmatprep.subr.mxu0 0.0
      %805 = vmatpush1.xpose.msra.mxu0 0.0
      %806 = vmatprep.subr.mxu0 0.0
      %807 = vmatpush1.xpose.msra.mxu0 0.0
      %808 = vmatprep.subr.mxu0 0.0
      %809 = vmatpush1.xpose.msra.mxu0 0.0
      %810 = vmatprep.subr.mxu0 0.0
      %811 = vmatpush1.xpose.msra.mxu0 0.0
      %812 = vmatprep.subr.mxu0 0.0
      %813 = vmatpush1.xpose.msra.mxu0 0.0
      %814 = vmatprep.subr.mxu0 0.0
      %815 = vmatpush1.xpose.msra.mxu0 0.0
      %816 = vmatprep.subr.mxu0 0.0
      %817 = vmatpush1.xpose.msra.mxu0 0.0
      %818 = vmatprep.subr.mxu0 0.0
      %819 = vmatpush1.xpose.msra.mxu0 %v788
      %820 = vmatprep.subr.mxu0 0.0
      %821 = vmatpush1.xpose.msra.mxu0 %v785
      %822 = vmatprep.subr.mxu0 0.0
      %823 = vmatpush2.xpose.msra.mxu0 0.0
      %824 = vmatprep.subr.mxu0 0.0
      %825 = vmatpush2.xpose.msra.mxu0 0.0
      %826 = vmatprep.subr.mxu0 0.0
      %827 = vmatpush2.xpose.msra.mxu0 0.0
      %828 = vmatprep.subr.mxu0 0.0
      %829 = vmatpush2.xpose.msra.mxu0 0.0
      %830 = vmatprep.subr.mxu0 0.0
      %831 = vmatpush2.xpose.msra.mxu0 0.0
      %832 = vmatprep.subr.mxu0 0.0
      %833 = vmatpush2.xpose.msra.mxu0 0.0
      %834 = vmatprep.subr.mxu0 0.0
      %835 = vmatpush2.xpose.msra.mxu0 0.0
      %836 = vmatprep.subr.mxu0 0.0
      %837 = vmatpush2.xpose.msra.mxu0 0.0
      %838 = vmatprep.subr.mxu0 0.0
      %839 = vmatpush2.xpose.msra.mxu0 0.0
      %840 = vmatprep.subr.mxu0 0.0
      %841 = vmatpush2.xpose.msra.mxu0 0.0
      %842 = vmatprep.subr.mxu0 0.0
      %843 = vmatpush2.xpose.msra.mxu0 0.0
      %844 = vmatprep.subr.mxu0 0.0
      %845 = vmatpush2.xpose.msra.mxu0 0.0
      %846 = vmatprep.subr.mxu0 0.0
      %847 = vmatpush2.xpose.msra.mxu0 0.0
      %848 = vmatprep.subr.mxu0 0.0
      %849 = vmatpush2.xpose.msra.mxu0 0.0
      %850 = vmatprep.subr.mxu0 0.0
      %851 = vmatpush2.xpose.msra.mxu0 0.0
      %852 = vmatprep.subr.mxu0 0.0
      %853 = vmatpush2.xpose.msra.mxu0 0.0
      %854 = vmatprep.mubr.f32.mxu0 0.0
      %855 = vmatmul.mubr.f32.gmra.mxu0 %v782
      %v856 = vpop.f32.mrf.mxu0
      %v857 = vadd.f32 0.0, %v856
      %v858 = vpop.f32.mrf.mxu0
      %859 = vdwg.mxu0
      %v860 = vmul.f32 %v857, 0.35355338
      %vm861 = vcmask 90112
      %v862 = vsel %vm861, %v860, -inf
      %863 = vmax.xlane.f32.xlu0 %v862
      %v864 = vpop.xlane.xlu0 %863
      %v865 = vsub.f32 %v860, %v864
      %v866 = vmul.f32 %v865, 1.442695
      %v867 = vpow.pop %v866
      %v868 = vsel %vm861, %v867, 0.0
      %869 = vadd.xlane.f32.xlu0 %v868
      %v870 = vpop.xlane.xlu0 %869
      %871 = vrot.lane.b32.xlu0 %v772, 96
      %v872 = vpop.permute.xlu0 %871
      %873 = vrot.lane.b32.xlu0 %v777, 96
      %v874 = vpop.permute.xlu0 %873
      %vm876 = vcmask 97280
      %v878 = vsel %vm876, %v867, 0
      %vm880 = vcmask 1043456
      %v881 = vsel %vm880, %v874, 0
      %883 = vmatprep.subr.mxu0 0.0
      %884 = vmatpush1.msra.mxu0 0.0
      %885 = vmatprep.subr.mxu0 0.0
      %886 = vmatpush1.msra.mxu0 0.0
      %887 = vmatprep.subr.mxu0 0.0
      %888 = vmatpush1.msra.mxu0 0.0
      %889 = vmatprep.subr.mxu0 0.0
      %890 = vmatpush1.msra.mxu0 0.0
      %891 = vmatprep.subr.mxu0 0.0
      %892 = vmatpush1.msra.mxu0 0.0
      %893 = vmatprep.subr.mxu0 0.0
      %894 = vmatpush1.msra.mxu0 0.0
      %895 = vmatprep.subr.mxu0 0.0
      %896 = vmatpush1.msra.mxu0 0.0
      %897 = vmatprep.subr.mxu0 0.0
      %898 = vmatpush1.msra.mxu0 0.0
      %899 = vmatprep.subr.mxu0 0.0
      %900 = vmatpush1.msra.mxu0 0.0
      %901 = vmatprep.subr.mxu0 0.0
      %902 = vmatpush1.msra.mxu0 0.0
      %903 = vmatprep.subr.mxu0 0.0
      %904 = vmatpush1.msra.mxu0 0.0
      %905 = vmatprep.subr.mxu0 0.0
      %906 = vmatpush1.msra.mxu0 0.0
      %907 = vmatprep.subr.mxu0 0.0
      %908 = vmatpush1.msra.mxu0 0.0
      %909 = vmatprep.subr.mxu0 0.0
      %910 = vmatpush1.msra.mxu0 0.0
      %911 = vmatprep.subr.mxu0 0.0
      %912 = vmatpush1.msra.mxu0 %v881
      %913 = vmatprep.subr.mxu0 0.0
      %914 = vmatpush1.msra.mxu0 %v872
      %915 = vmatprep.subr.mxu0 0.0
      %916 = vmatpush2.msra.mxu0 0.0
      %917 = vmatprep.subr.mxu0 0.0
      %918 = vmatpush2.msra.mxu0 0.0
      %919 = vmatprep.subr.mxu0 0.0
      %920 = vmatpush2.msra.mxu0 0.0
      %921 = vmatprep.subr.mxu0 0.0
      %922 = vmatpush2.msra.mxu0 0.0
      %923 = vmatprep.subr.mxu0 0.0
      %924 = vmatpush2.msra.mxu0 0.0
      %925 = vmatprep.subr.mxu0 0.0
      %926 = vmatpush2.msra.mxu0 0.0
      %927 = vmatprep.subr.mxu0 0.0
      %928 = vmatpush2.msra.mxu0 0.0
      %929 = vmatprep.subr.mxu0 0.0
      %930 = vmatpush2.msra.mxu0 0.0
      %931 = vmatprep.subr.mxu0 0.0
      %932 = vmatpush2.msra.mxu0 0.0
      %933 = vmatprep.subr.mxu0 0.0
      %934 = vmatpush2.msra.mxu0 0.0
      %935 = vmatprep.subr.mxu0 0.0
      %936 = vmatpush2.msra.mxu0 0.0
      %937 = vmatprep.subr.mxu0 0.0
      %938 = vmatpush2.msra.mxu0 0.0
      %939 = vmatprep.subr.mxu0 0.0
      %940 = vmatpush2.msra.mxu0 0.0
      %941 = vmatprep.subr.mxu0 0.0
      %942 = vmatpush2.msra.mxu0 0.0
      %943 = vmatprep.subr.mxu0 0.0
      %944 = vmatpush2.msra.mxu0 0.0
      %945 = vmatprep.subr.mxu0 0.0
      %946 = vmatpush2.msra.mxu0 0.0
      %947 = vmatprep.mubr.f32.mxu0 0.0
      %948 = vmatmul.mubr.f32.gmra.mxu0 %v878
      %v949 = vpop.f32.mrf.mxu0
      %v950 = vadd.f32 0.0, %v949
      %v951 = vpop.f32.mrf.mxu0
      %952 = vdwg.mxu0
      %v953 = vrcp.pop %v870
      %v954 = vmul.f32 %v950, %v953
      %v955 = vld [vmem:[%s6] sm:$0xff]
      %956 = vrot.lane.b32.xlu0 %v686, 120
      %v957 = vpop.permute.xlu0 %956
      %958 = vrot.lane.b32.xlu0 %v772, 120
      %v959 = vpop.permute.xlu0 %958
      %960 = vrot.lane.b32.xlu0 %v777, 120
      %v961 = vpop.permute.xlu0 %960
      %v962 = vsel %vm780, %v957, 0
      %v964 = vsel %vm780, %v959, 0
      %v966 = vsel %vm780, %v961, 0
      %968 = vmatprep.subr.mxu0 0.0
      %969 = vmatpush1.xpose.msra.mxu0 0.0
      %970 = vmatprep.subr.mxu0 0.0
      %971 = vmatpush1.xpose.msra.mxu0 0.0
      %972 = vmatprep.subr.mxu0 0.0
      %973 = vmatpush1.xpose.msra.mxu0 0.0
      %974 = vmatprep.subr.mxu0 0.0
      %975 = vmatpush1.xpose.msra.mxu0 0.0
      %976 = vmatprep.subr.mxu0 0.0
      %977 = vmatpush1.xpose.msra.mxu0 0.0
      %978 = vmatprep.subr.mxu0 0.0
      %979 = vmatpush1.xpose.msra.mxu0 0.0
      %980 = vmatprep.subr.mxu0 0.0
      %981 = vmatpush1.xpose.msra.mxu0 0.0
      %982 = vmatprep.subr.mxu0 0.0
      %983 = vmatpush1.xpose.msra.mxu0 0.0
      %984 = vmatprep.subr.mxu0 0.0
      %985 = vmatpush1.xpose.msra.mxu0 0.0
      %986 = vmatprep.subr.mxu0 0.0
      %987 = vmatpush1.xpose.msra.mxu0 0.0
      %988 = vmatprep.subr.mxu0 0.0
      %989 = vmatpush1.xpose.msra.mxu0 0.0
      %990 = vmatprep.subr.mxu0 0.0
      %991 = vmatpush1.xpose.msra.mxu0 0.0
      %992 = vmatprep.subr.mxu0 0.0
      %993 = vmatpush1.xpose.msra.mxu0 0.0
      %994 = vmatprep.subr.mxu0 0.0
      %995 = vmatpush1.xpose.msra.mxu0 0.0
      %996 = vmatprep.subr.mxu0 0.0
      %997 = vmatpush1.xpose.msra.mxu0 %v966
      %998 = vmatprep.subr.mxu0 0.0
      %999 = vmatpush1.xpose.msra.mxu0 %v964
      %1000 = vmatprep.subr.mxu0 0.0
      %1001 = vmatpush2.xpose.msra.mxu0 0.0
      %1002 = vmatprep.subr.mxu0 0.0
      %1003 = vmatpush2.xpose.msra.mxu0 0.0
      %1004 = vmatprep.subr.mxu0 0.0
      %1005 = vmatpush2.xpose.msra.mxu0 0.0
      %1006 = vmatprep.subr.mxu0 0.0
      %1007 = vmatpush2.xpose.msra.mxu0 0.0
      %1008 = vmatprep.subr.mxu0 0.0
      %1009 = vmatpush2.xpose.msra.mxu0 0.0
      %1010 = vmatprep.subr.mxu0 0.0
      %1011 = vmatpush2.xpose.msra.mxu0 0.0
      %1012 = vmatprep.subr.mxu0 0.0
      %1013 = vmatpush2.xpose.msra.mxu0 0.0
      %1014 = vmatprep.subr.mxu0 0.0
      %1015 = vmatpush2.xpose.msra.mxu0 0.0
      %1016 = vmatprep.subr.mxu0 0.0
      %1017 = vmatpush2.xpose.msra.mxu0 0.0
      %1018 = vmatprep.subr.mxu0 0.0
      %1019 = vmatpush2.xpose.msra.mxu0 0.0
      %1020 = vmatprep.subr.mxu0 0.0
      %1021 = vmatpush2.xpose.msra.mxu0 0.0
      %1022 = vmatprep.subr.mxu0 0.0
      %1023 = vmatpush2.xpose.msra.mxu0 0.0
      %1024 = vmatprep.subr.mxu0 0.0
      %1025 = vmatpush2.xpose.msra.mxu0 0.0
      %1026 = vmatprep.subr.mxu0 0.0
      %1027 = vmatpush2.xpose.msra.mxu0 0.0
      %1028 = vmatprep.subr.mxu0 0.0
      %1029 = vmatpush2.xpose.msra.mxu0 0.0
      %1030 = vmatprep.subr.mxu0 0.0
      %1031 = vmatpush2.xpose.msra.mxu0 0.0
      %1032 = vmatprep.mubr.f32.mxu0 0.0
      %1033 = vmatmul.mubr.f32.gmra.mxu0 %v962
      %v1034 = vpop.f32.mrf.mxu0
      %v1035 = vadd.f32 0.0, %v1034
      %v1036 = vpop.f32.mrf.mxu0
      %1037 = vdwg.mxu0
      %v1038 = vmul.f32 %v1035, 0.35355338
      %v1039 = vsel %vm861, %v1038, -inf
      %1040 = vmax.xlane.f32.xlu0 %v1039
      %v1041 = vpop.xlane.xlu0 %1040
      %v1042 = vsub.f32 %v1038, %v1041
      %v1043 = vmul.f32 %v1042, 1.442695
      %v1044 = vpow.pop %v1043
      %v1045 = vsel %vm861, %v1044, 0.0
      %1046 = vadd.xlane.f32.xlu0 %v1045
      %v1047 = vpop.xlane.xlu0 %1046
      %1048 = vrot.lane.b32.xlu0 %v772, 88
      %v1049 = vpop.permute.xlu0 %1048
      %1050 = vrot.lane.b32.xlu0 %v777, 88
      %v1051 = vpop.permute.xlu0 %1050
      %v1054 = vsel %vm876, %v1044, 0
      %v1056 = vsel %vm880, %v1051, 0
      %1058 = vmatprep.subr.mxu0 0.0
      %1059 = vmatpush1.msra.mxu0 0.0
      %1060 = vmatprep.subr.mxu0 0.0
      %1061 = vmatpush1.msra.mxu0 0.0
      %1062 = vmatprep.subr.mxu0 0.0
      %1063 = vmatpush1.msra.mxu0 0.0
      %1064 = vmatprep.subr.mxu0 0.0
      %1065 = vmatpush1.msra.mxu0 0.0
      %1066 = vmatprep.subr.mxu0 0.0
      %1067 = vmatpush1.msra.mxu0 0.0
      %1068 = vmatprep.subr.mxu0 0.0
      %1069 = vmatpush1.msra.mxu0 0.0
      %1070 = vmatprep.subr.mxu0 0.0
      %1071 = vmatpush1.msra.mxu0 0.0
      %1072 = vmatprep.subr.mxu0 0.0
      %1073 = vmatpush1.msra.mxu0 0.0
      %1074 = vmatprep.subr.mxu0 0.0
      %1075 = vmatpush1.msra.mxu0 0.0
      %1076 = vmatprep.subr.mxu0 0.0
      %1077 = vmatpush1.msra.mxu0 0.0
      %1078 = vmatprep.subr.mxu0 0.0
      %1079 = vmatpush1.msra.mxu0 0.0
      %1080 = vmatprep.subr.mxu0 0.0
      %1081 = vmatpush1.msra.mxu0 0.0
      %1082 = vmatprep.subr.mxu0 0.0
      %1083 = vmatpush1.msra.mxu0 0.0
      %1084 = vmatprep.subr.mxu0 0.0
      %1085 = vmatpush1.msra.mxu0 0.0
      %1086 = vmatprep.subr.mxu0 0.0
      %1087 = vmatpush1.msra.mxu0 %v1056
      %1088 = vmatprep.subr.mxu0 0.0
      %1089 = vmatpush1.msra.mxu0 %v1049
      %1090 = vmatprep.subr.mxu0 0.0
      %1091 = vmatpush2.msra.mxu0 0.0
      %1092 = vmatprep.subr.mxu0 0.0
      %1093 = vmatpush2.msra.mxu0 0.0
      %1094 = vmatprep.subr.mxu0 0.0
      %1095 = vmatpush2.msra.mxu0 0.0
      %1096 = vmatprep.subr.mxu0 0.0
      %1097 = vmatpush2.msra.mxu0 0.0
      %1098 = vmatprep.subr.mxu0 0.0
      %1099 = vmatpush2.msra.mxu0 0.0
      %1100 = vmatprep.subr.mxu0 0.0
      %1101 = vmatpush2.msra.mxu0 0.0
      %1102 = vmatprep.subr.mxu0 0.0
      %1103 = vmatpush2.msra.mxu0 0.0
      %1104 = vmatprep.subr.mxu0 0.0
      %1105 = vmatpush2.msra.mxu0 0.0
      %1106 = vmatprep.subr.mxu0 0.0
      %1107 = vmatpush2.msra.mxu0 0.0
      %1108 = vmatprep.subr.mxu0 0.0
      %1109 = vmatpush2.msra.mxu0 0.0
      %1110 = vmatprep.subr.mxu0 0.0
      %1111 = vmatpush2.msra.mxu0 0.0
      %1112 = vmatprep.subr.mxu0 0.0
      %1113 = vmatpush2.msra.mxu0 0.0
      %1114 = vmatprep.subr.mxu0 0.0
      %1115 = vmatpush2.msra.mxu0 0.0
      %1116 = vmatprep.subr.mxu0 0.0
      %1117 = vmatpush2.msra.mxu0 0.0
      %1118 = vmatprep.subr.mxu0 0.0
      %1119 = vmatpush2.msra.mxu0 0.0
      %1120 = vmatprep.subr.mxu0 0.0
      %1121 = vmatpush2.msra.mxu0 0.0
      %1122 = vmatprep.mubr.f32.mxu0 0.0
      %1123 = vmatmul.mubr.f32.gmra.mxu0 %v1054
      %v1124 = vpop.f32.mrf.mxu0
      %v1125 = vadd.f32 0.0, %v1124
      %v1126 = vpop.f32.mrf.mxu0
      %1127 = vdwg.mxu0
      %v1128 = vrcp.pop %v1047
      %v1129 = vmul.f32 %v1125, %v1128
      %v1130 = vld [vmem:[%s6 + $0x8] sm:$0xff]
      %v1132 = vsel %vm780, %v1129, 0
      %1134 = vmatprep.subr.mxu0 0.0
      %1135 = vmatpush1.msra.mxu0 0.0
      %1136 = vmatprep.subr.mxu0 0.0
      %1137 = vmatpush1.msra.mxu0 0.0
      %1138 = vmatprep.subr.mxu0 0.0
      %1139 = vmatpush1.msra.mxu0 0.0
      %1140 = vmatprep.subr.mxu0 0.0
      %1141 = vmatpush1.msra.mxu0 0.0
      %1142 = vmatprep.subr.mxu0 0.0
      %1143 = vmatpush1.msra.mxu0 0.0
      %1144 = vmatprep.subr.mxu0 0.0
      %1145 = vmatpush1.msra.mxu0 0.0
      %1146 = vmatprep.subr.mxu0 0.0
      %1147 = vmatpush1.msra.mxu0 0.0
      %1148 = vmatprep.subr.mxu0 0.0
      %1149 = vmatpush1.msra.mxu0 0.0
      %1150 = vmatprep.subr.mxu0 0.0
      %1151 = vmatpush1.msra.mxu0 0.0
      %1152 = vmatprep.subr.mxu0 0.0
      %1153 = vmatpush1.msra.mxu0 0.0
      %1154 = vmatprep.subr.mxu0 0.0
      %1155 = vmatpush1.msra.mxu0 0.0
      %1156 = vmatprep.subr.mxu0 0.0
      %1157 = vmatpush1.msra.mxu0 0.0
      %1158 = vmatprep.subr.mxu0 0.0
      %1159 = vmatpush1.msra.mxu0 0.0
      %1160 = vmatprep.subr.mxu0 0.0
      %1161 = vmatpush1.msra.mxu0 0.0
      %1162 = vmatprep.subr.mxu0 0.0
      %1163 = vmatpush1.msra.mxu0 0.0
      %1164 = vmatprep.subr.mxu0 0.0
      %1165 = vmatpush1.msra.mxu0 %v1130
      %1166 = vmatprep.subr.mxu0 0.0
      %1167 = vmatpush2.msra.mxu0 0.0
      %1168 = vmatprep.subr.mxu0 0.0
      %1169 = vmatpush2.msra.mxu0 0.0
      %1170 = vmatprep.subr.mxu0 0.0
      %1171 = vmatpush2.msra.mxu0 0.0
      %1172 = vmatprep.subr.mxu0 0.0
      %1173 = vmatpush2.msra.mxu0 0.0
      %1174 = vmatprep.subr.mxu0 0.0
      %1175 = vmatpush2.msra.mxu0 0.0
      %1176 = vmatprep.subr.mxu0 0.0
      %1177 = vmatpush2.msra.mxu0 0.0
      %1178 = vmatprep.subr.mxu0 0.0
      %1179 = vmatpush2.msra.mxu0 0.0
      %1180 = vmatprep.subr.mxu0 0.0
      %1181 = vmatpush2.msra.mxu0 0.0
      %1182 = vmatprep.subr.mxu0 0.0
      %1183 = vmatpush2.msra.mxu0 0.0
      %1184 = vmatprep.subr.mxu0 0.0
      %1185 = vmatpush2.msra.mxu0 0.0
      %1186 = vmatprep.subr.mxu0 0.0
      %1187 = vmatpush2.msra.mxu0 0.0
      %1188 = vmatprep.subr.mxu0 0.0
      %1189 = vmatpush2.msra.mxu0 0.0
      %1190 = vmatprep.subr.mxu0 0.0
      %1191 = vmatpush2.msra.mxu0 0.0
      %1192 = vmatprep.subr.mxu0 0.0
      %1193 = vmatpush2.msra.mxu0 0.0
      %1194 = vmatprep.subr.mxu0 0.0
      %1195 = vmatpush2.msra.mxu0 0.0
      %1196 = vmatprep.subr.mxu0 0.0
      %1197 = vmatpush2.msra.mxu0 0.0
      %1198 = vmatprep.mubr.f32.mxu0 0.0
      %1199 = vmatmul.mubr.f32.gmra.mxu0 %v1132
      %v1200 = vpop.f32.mrf.mxu0
      %v1201 = vadd.f32 0.0, %v1200
      %v1202 = vpop.f32.mrf.mxu0
      %1203 = vdwg.mxu0
      %v1205 = vsel %vm780, %v954, 0
      %1207 = vmatprep.subr.mxu0 0.0
      %1208 = vmatpush1.msra.mxu0 0.0
      %1209 = vmatprep.subr.mxu0 0.0
      %1210 = vmatpush1.msra.mxu0 0.0
      %1211 = vmatprep.subr.mxu0 0.0
      %1212 = vmatpush1.msra.mxu0 0.0
      %1213 = vmatprep.subr.mxu0 0.0
      %1214 = vmatpush1.msra.mxu0 0.0
      %1215 = vmatprep.subr.mxu0 0.0
      %1216 = vmatpush1.msra.mxu0 0.0
      %1217 = vmatprep.subr.mxu0 0.0
      %1218 = vmatpush1.msra.mxu0 0.0
      %1219 = vmatprep.subr.mxu0 0.0
      %1220 = vmatpush1.msra.mxu0 0.0
      %1221 = vmatprep.subr.mxu0 0.0
      %1222 = vmatpush1.msra.mxu0 0.0
      %1223 = vmatprep.subr.mxu0 0.0
      %1224 = vmatpush1.msra.mxu0 0.0
      %1225 = vmatprep.subr.mxu0 0.0
      %1226 = vmatpush1.msra.mxu0 0.0
      %1227 = vmatprep.subr.mxu0 0.0
      %1228 = vmatpush1.msra.mxu0 0.0
      %1229 = vmatprep.subr.mxu0 0.0
      %1230 = vmatpush1.msra.mxu0 0.0
      %1231 = vmatprep.subr.mxu0 0.0
      %1232 = vmatpush1.msra.mxu0 0.0
      %1233 = vmatprep.subr.mxu0 0.0
      %1234 = vmatpush1.msra.mxu0 0.0
      %1235 = vmatprep.subr.mxu0 0.0
      %1236 = vmatpush1.msra.mxu0 0.0
      %1237 = vmatprep.subr.mxu0 0.0
      %1238 = vmatpush1.msra.mxu0 %v955
      %1239 = vmatprep.subr.mxu0 0.0
      %1240 = vmatpush2.msra.mxu0 0.0
      %1241 = vmatprep.subr.mxu0 0.0
      %1242 = vmatpush2.msra.mxu0 0.0
      %1243 = vmatprep.subr.mxu0 0.0
      %1244 = vmatpush2.msra.mxu0 0.0
      %1245 = vmatprep.subr.mxu0 0.0
      %1246 = vmatpush2.msra.mxu0 0.0
      %1247 = vmatprep.subr.mxu0 0.0
      %1248 = vmatpush2.msra.mxu0 0.0
      %1249 = vmatprep.subr.mxu0 0.0
      %1250 = vmatpush2.msra.mxu0 0.0
      %1251 = vmatprep.subr.mxu0 0.0
      %1252 = vmatpush2.msra.mxu0 0.0
      %1253 = vmatprep.subr.mxu0 0.0
      %1254 = vmatpush2.msra.mxu0 0.0
      %1255 = vmatprep.subr.mxu0 0.0
      %1256 = vmatpush2.msra.mxu0 0.0
      %1257 = vmatprep.subr.mxu0 0.0
      %1258 = vmatpush2.msra.mxu0 0.0
      %1259 = vmatprep.subr.mxu0 0.0
      %1260 = vmatpush2.msra.mxu0 0.0
      %1261 = vmatprep.subr.mxu0 0.0
      %1262 = vmatpush2.msra.mxu0 0.0
      %1263 = vmatprep.subr.mxu0 0.0
      %1264 = vmatpush2.msra.mxu0 0.0
      %1265 = vmatprep.subr.mxu0 0.0
      %1266 = vmatpush2.msra.mxu0 0.0
      %1267 = vmatprep.subr.mxu0 0.0
      %1268 = vmatpush2.msra.mxu0 0.0
      %1269 = vmatprep.subr.mxu0 0.0
      %1270 = vmatpush2.msra.mxu0 0.0
      %1271 = vmatprep.mubr.f32.mxu0 0.0
      %1272 = vmatmul.mubr.f32.gmra.mxu0 %v1205
      %v1273 = vpop.f32.mrf.mxu0
      %v1274 = vadd.f32 %v1201, %v1273
      %v1275 = vpop.f32.mrf.mxu0
      %1276 = vdwg.mxu0
      %1277 = vrot.lane.b32.xlu0 %v686, 112
      %v1278 = vpop.permute.xlu0 %1277
      %1279 = vrot.lane.b32.xlu0 %v772, 112
      %v1280 = vpop.permute.xlu0 %1279
      %1281 = vrot.lane.b32.xlu0 %v777, 112
      %v1282 = vpop.permute.xlu0 %1281
      %v1283 = vsel %vm780, %v1278, 0
      %v1285 = vsel %vm780, %v1280, 0
      %v1287 = vsel %vm780, %v1282, 0
      %1289 = vmatprep.subr.mxu0 0.0
      %1290 = vmatpush1.xpose.msra.mxu0 0.0
      %1291 = vmatprep.subr.mxu0 0.0
      %1292 = vmatpush1.xpose.msra.mxu0 0.0
      %1293 = vmatprep.subr.mxu0 0.0
      %1294 = vmatpush1.xpose.msra.mxu0 0.0
      %1295 = vmatprep.subr.mxu0 0.0
      %1296 = vmatpush1.xpose.msra.mxu0 0.0
      %1297 = vmatprep.subr.mxu0 0.0
      %1298 = vmatpush1.xpose.msra.mxu0 0.0
      %1299 = vmatprep.subr.mxu0 0.0
      %1300 = vmatpush1.xpose.msra.mxu0 0.0
      %1301 = vmatprep.subr.mxu0 0.0
      %1302 = vmatpush1.xpose.msra.mxu0 0.0
      %1303 = vmatprep.subr.mxu0 0.0
      %1304 = vmatpush1.xpose.msra.mxu0 0.0
      %1305 = vmatprep.subr.mxu0 0.0
      %1306 = vmatpush1.xpose.msra.mxu0 0.0
      %1307 = vmatprep.subr.mxu0 0.0
      %1308 = vmatpush1.xpose.msra.mxu0 0.0
      %1309 = vmatprep.subr.mxu0 0.0
      %1310 = vmatpush1.xpose.msra.mxu0 0.0
      %1311 = vmatprep.subr.mxu0 0.0
      %1312 = vmatpush1.xpose.msra.mxu0 0.0
      %1313 = vmatprep.subr.mxu0 0.0
      %1314 = vmatpush1.xpose.msra.mxu0 0.0
      %1315 = vmatprep.subr.mxu0 0.0
      %1316 = vmatpush1.xpose.msra.mxu0 0.0
      %1317 = vmatprep.subr.mxu0 0.0
      %1318 = vmatpush1.xpose.msra.mxu0 %v1287
      %1319 = vmatprep.subr.mxu0 0.0
      %1320 = vmatpush1.xpose.msra.mxu0 %v1285
      %1321 = vmatprep.subr.mxu0 0.0
      %1322 = vmatpush2.xpose.msra.mxu0 0.0
      %1323 = vmatprep.subr.mxu0 0.0
      %1324 = vmatpush2.xpose.msra.mxu0 0.0
      %1325 = vmatprep.subr.mxu0 0.0
      %1326 = vmatpush2.xpose.msra.mxu0 0.0
      %1327 = vmatprep.subr.mxu0 0.0
      %1328 = vmatpush2.xpose.msra.mxu0 0.0
      %1329 = vmatprep.subr.mxu0 0.0
      %1330 = vmatpush2.xpose.msra.mxu0 0.0
      %1331 = vmatprep.subr.mxu0 0.0
      %1332 = vmatpush2.xpose.msra.mxu0 0.0
      %1333 = vmatprep.subr.mxu0 0.0
      %1334 = vmatpush2.xpose.msra.mxu0 0.0
      %1335 = vmatprep.subr.mxu0 0.0
      %1336 = vmatpush2.xpose.msra.mxu0 0.0
      %1337 = vmatprep.subr.mxu0 0.0
      %1338 = vmatpush2.xpose.msra.mxu0 0.0
      %1339 = vmatprep.subr.mxu0 0.0
      %1340 = vmatpush2.xpose.msra.mxu0 0.0
      %1341 = vmatprep.subr.mxu0 0.0
      %1342 = vmatpush2.xpose.msra.mxu0 0.0
      %1343 = vmatprep.subr.mxu0 0.0
      %1344 = vmatpush2.xpose.msra.mxu0 0.0
      %1345 = vmatprep.subr.mxu0 0.0
      %1346 = vmatpush2.xpose.msra.mxu0 0.0
      %1347 = vmatprep.subr.mxu0 0.0
      %1348 = vmatpush2.xpose.msra.mxu0 0.0
      %1349 = vmatprep.subr.mxu0 0.0
      %1350 = vmatpush2.xpose.msra.mxu0 0.0
      %1351 = vmatprep.subr.mxu0 0.0
      %1352 = vmatpush2.xpose.msra.mxu0 0.0
      %1353 = vmatprep.mubr.f32.mxu0 0.0
      %1354 = vmatmul.mubr.f32.gmra.mxu0 %v1283
      %v1355 = vpop.f32.mrf.mxu0
      %v1356 = vadd.f32 0.0, %v1355
      %v1357 = vpop.f32.mrf.mxu0
      %1358 = vdwg.mxu0
      %v1359 = vmul.f32 %v1356, 0.35355338
      %v1360 = vsel %vm861, %v1359, -inf
      %1361 = vmax.xlane.f32.xlu0 %v1360
      %v1362 = vpop.xlane.xlu0 %1361
      %v1363 = vsub.f32 %v1359, %v1362
      %v1364 = vmul.f32 %v1363, 1.442695
      %v1365 = vpow.pop %v1364
      %v1366 = vsel %vm861, %v1365, 0.0
      %1367 = vadd.xlane.f32.xlu0 %v1366
      %v1368 = vpop.xlane.xlu0 %1367
      %1369 = vrot.lane.b32.xlu0 %v772, 80
      %v1370 = vpop.permute.xlu0 %1369
      %1371 = vrot.lane.b32.xlu0 %v777, 80
      %v1372 = vpop.permute.xlu0 %1371
      %v1375 = vsel %vm876, %v1365, 0
      %v1377 = vsel %vm880, %v1372, 0
      %1379 = vmatprep.subr.mxu0 0.0
      %1380 = vmatpush1.msra.mxu0 0.0
      %1381 = vmatprep.subr.mxu0 0.0
      %1382 = vmatpush1.msra.mxu0 0.0
      %1383 = vmatprep.subr.mxu0 0.0
      %1384 = vmatpush1.msra.mxu0 0.0
      %1385 = vmatprep.subr.mxu0 0.0
      %1386 = vmatpush1.msra.mxu0 0.0
      %1387 = vmatprep.subr.mxu0 0.0
      %1388 = vmatpush1.msra.mxu0 0.0
      %1389 = vmatprep.subr.mxu0 0.0
      %1390 = vmatpush1.msra.mxu0 0.0
      %1391 = vmatprep.subr.mxu0 0.0
      %1392 = vmatpush1.msra.mxu0 0.0
      %1393 = vmatprep.subr.mxu0 0.0
      %1394 = vmatpush1.msra.mxu0 0.0
      %1395 = vmatprep.subr.mxu0 0.0
      %1396 = vmatpush1.msra.mxu0 0.0
      %1397 = vmatprep.subr.mxu0 0.0
      %1398 = vmatpush1.msra.mxu0 0.0
      %1399 = vmatprep.subr.mxu0 0.0
      %1400 = vmatpush1.msra.mxu0 0.0
      %1401 = vmatprep.subr.mxu0 0.0
      %1402 = vmatpush1.msra.mxu0 0.0
      %1403 = vmatprep.subr.mxu0 0.0
      %1404 = vmatpush1.msra.mxu0 0.0
      %1405 = vmatprep.subr.mxu0 0.0
      %1406 = vmatpush1.msra.mxu0 0.0
      %1407 = vmatprep.subr.mxu0 0.0
      %1408 = vmatpush1.msra.mxu0 %v1377
      %1409 = vmatprep.subr.mxu0 0.0
      %1410 = vmatpush1.msra.mxu0 %v1370
      %1411 = vmatprep.subr.mxu0 0.0
      %1412 = vmatpush2.msra.mxu0 0.0
      %1413 = vmatprep.subr.mxu0 0.0
      %1414 = vmatpush2.msra.mxu0 0.0
      %1415 = vmatprep.subr.mxu0 0.0
      %1416 = vmatpush2.msra.mxu0 0.0
      %1417 = vmatprep.subr.mxu0 0.0
      %1418 = vmatpush2.msra.mxu0 0.0
      %1419 = vmatprep.subr.mxu0 0.0
      %1420 = vmatpush2.msra.mxu0 0.0
      %1421 = vmatprep.subr.mxu0 0.0
      %1422 = vmatpush2.msra.mxu0 0.0
      %1423 = vmatprep.subr.mxu0 0.0
      %1424 = vmatpush2.msra.mxu0 0.0
      %1425 = vmatprep.subr.mxu0 0.0
      %1426 = vmatpush2.msra.mxu0 0.0
      %1427 = vmatprep.subr.mxu0 0.0
      %1428 = vmatpush2.msra.mxu0 0.0
      %1429 = vmatprep.subr.mxu0 0.0
      %1430 = vmatpush2.msra.mxu0 0.0
      %1431 = vmatprep.subr.mxu0 0.0
      %1432 = vmatpush2.msra.mxu0 0.0
      %1433 = vmatprep.subr.mxu0 0.0
      %1434 = vmatpush2.msra.mxu0 0.0
      %1435 = vmatprep.subr.mxu0 0.0
      %1436 = vmatpush2.msra.mxu0 0.0
      %1437 = vmatprep.subr.mxu0 0.0
      %1438 = vmatpush2.msra.mxu0 0.0
      %1439 = vmatprep.subr.mxu0 0.0
      %1440 = vmatpush2.msra.mxu0 0.0
      %1441 = vmatprep.subr.mxu0 0.0
      %1442 = vmatpush2.msra.mxu0 0.0
      %1443 = vmatprep.mubr.f32.mxu0 0.0
      %1444 = vmatmul.mubr.f32.gmra.mxu0 %v1375
      %v1445 = vpop.f32.mrf.mxu0
      %v1446 = vadd.f32 0.0, %v1445
      %v1447 = vpop.f32.mrf.mxu0
      %1448 = vdwg.mxu0
      %v1449 = vrcp.pop %v1368
      %v1450 = vmul.f32 %v1446, %v1449
      %v1451 = vld [vmem:[%s6 + $0x10] sm:$0xff]
      %v1453 = vsel %vm780, %v1450, 0
      %1455 = vmatprep.subr.mxu0 0.0
      %1456 = vmatpush1.msra.mxu0 0.0
      %1457 = vmatprep.subr.mxu0 0.0
      %1458 = vmatpush1.msra.mxu0 0.0
      %1459 = vmatprep.subr.mxu0 0.0
      %1460 = vmatpush1.msra.mxu0 0.0
      %1461 = vmatprep.subr.mxu0 0.0
      %1462 = vmatpush1.msra.mxu0 0.0
      %1463 = vmatprep.subr.mxu0 0.0
      %1464 = vmatpush1.msra.mxu0 0.0
      %1465 = vmatprep.subr.mxu0 0.0
      %1466 = vmatpush1.msra.mxu0 0.0
      %1467 = vmatprep.subr.mxu0 0.0
      %1468 = vmatpush1.msra.mxu0 0.0
      %1469 = vmatprep.subr.mxu0 0.0
      %1470 = vmatpush1.msra.mxu0 0.0
      %1471 = vmatprep.subr.mxu0 0.0
      %1472 = vmatpush1.msra.mxu0 0.0
      %1473 = vmatprep.subr.mxu0 0.0
      %1474 = vmatpush1.msra.mxu0 0.0
      %1475 = vmatprep.subr.mxu0 0.0
      %1476 = vmatpush1.msra.mxu0 0.0
      %1477 = vmatprep.subr.mxu0 0.0
      %1478 = vmatpush1.msra.mxu0 0.0
      %1479 = vmatprep.subr.mxu0 0.0
      %1480 = vmatpush1.msra.mxu0 0.0
      %1481 = vmatprep.subr.mxu0 0.0
      %1482 = vmatpush1.msra.mxu0 0.0
      %1483 = vmatprep.subr.mxu0 0.0
      %1484 = vmatpush1.msra.mxu0 0.0
      %1485 = vmatprep.subr.mxu0 0.0
      %1486 = vmatpush1.msra.mxu0 %v1451
      %1487 = vmatprep.subr.mxu0 0.0
      %1488 = vmatpush2.msra.mxu0 0.0
      %1489 = vmatprep.subr.mxu0 0.0
      %1490 = vmatpush2.msra.mxu0 0.0
      %1491 = vmatprep.subr.mxu0 0.0
      %1492 = vmatpush2.msra.mxu0 0.0
      %1493 = vmatprep.subr.mxu0 0.0
      %1494 = vmatpush2.msra.mxu0 0.0
      %1495 = vmatprep.subr.mxu0 0.0
      %1496 = vmatpush2.msra.mxu0 0.0
      %1497 = vmatprep.subr.mxu0 0.0
      %1498 = vmatpush2.msra.mxu0 0.0
      %1499 = vmatprep.subr.mxu0 0.0
      %1500 = vmatpush2.msra.mxu0 0.0
      %1501 = vmatprep.subr.mxu0 0.0
      %1502 = vmatpush2.msra.mxu0 0.0
      %1503 = vmatprep.subr.mxu0 0.0
      %1504 = vmatpush2.msra.mxu0 0.0
      %1505 = vmatprep.subr.mxu0 0.0
      %1506 = vmatpush2.msra.mxu0 0.0
      %1507 = vmatprep.subr.mxu0 0.0
      %1508 = vmatpush2.msra.mxu0 0.0
      %1509 = vmatprep.subr.mxu0 0.0
      %1510 = vmatpush2.msra.mxu0 0.0
      %1511 = vmatprep.subr.mxu0 0.0
      %1512 = vmatpush2.msra.mxu0 0.0
      %1513 = vmatprep.subr.mxu0 0.0
      %1514 = vmatpush2.msra.mxu0 0.0
      %1515 = vmatprep.subr.mxu0 0.0
      %1516 = vmatpush2.msra.mxu0 0.0
      %1517 = vmatprep.subr.mxu0 0.0
      %1518 = vmatpush2.msra.mxu0 0.0
      %1519 = vmatprep.mubr.f32.mxu0 0.0
      %1520 = vmatmul.mubr.f32.gmra.mxu0 %v1453
      %v1521 = vpop.f32.mrf.mxu0
      %v1522 = vadd.f32 0.0, %v1521
      %v1523 = vpop.f32.mrf.mxu0
      %1524 = vdwg.mxu0
      %v1525 = vadd.f32 %v1274, %v1522
      %1526 = vrot.lane.b32.xlu0 %v686, 104
      %v1527 = vpop.permute.xlu0 %1526
      %1528 = vrot.lane.b32.xlu0 %v772, 104
      %v1529 = vpop.permute.xlu0 %1528
      %1530 = vrot.lane.b32.xlu0 %v777, 104
      %v1531 = vpop.permute.xlu0 %1530
      %v1532 = vsel %vm780, %v1527, 0
      %v1534 = vsel %vm780, %v1529, 0
      %v1536 = vsel %vm780, %v1531, 0
      %1538 = vmatprep.subr.mxu0 0.0
      %1539 = vmatpush1.xpose.msra.mxu0 0.0
      %1540 = vmatprep.subr.mxu0 0.0
      %1541 = vmatpush1.xpose.msra.mxu0 0.0
      %1542 = vmatprep.subr.mxu0 0.0
      %1543 = vmatpush1.xpose.msra.mxu0 0.0
      %1544 = vmatprep.subr.mxu0 0.0
      %1545 = vmatpush1.xpose.msra.mxu0 0.0
      %1546 = vmatprep.subr.mxu0 0.0
      %1547 = vmatpush1.xpose.msra.mxu0 0.0
      %1548 = vmatprep.subr.mxu0 0.0
      %1549 = vmatpush1.xpose.msra.mxu0 0.0
      %1550 = vmatprep.subr.mxu0 0.0
      %1551 = vmatpush1.xpose.msra.mxu0 0.0
      %1552 = vmatprep.subr.mxu0 0.0
      %1553 = vmatpush1.xpose.msra.mxu0 0.0
      %1554 = vmatprep.subr.mxu0 0.0
      %1555 = vmatpush1.xpose.msra.mxu0 0.0
      %1556 = vmatprep.subr.mxu0 0.0
      %1557 = vmatpush1.xpose.msra.mxu0 0.0
      %1558 = vmatprep.subr.mxu0 0.0
      %1559 = vmatpush1.xpose.msra.mxu0 0.0
      %1560 = vmatprep.subr.mxu0 0.0
      %1561 = vmatpush1.xpose.msra.mxu0 0.0
      %1562 = vmatprep.subr.mxu0 0.0
      %1563 = vmatpush1.xpose.msra.mxu0 0.0
      %1564 = vmatprep.subr.mxu0 0.0
      %1565 = vmatpush1.xpose.msra.mxu0 0.0
      %1566 = vmatprep.subr.mxu0 0.0
      %1567 = vmatpush1.xpose.msra.mxu0 %v1536
      %1568 = vmatprep.subr.mxu0 0.0
      %1569 = vmatpush1.xpose.msra.mxu0 %v1534
      %1570 = vmatprep.subr.mxu0 0.0
      %1571 = vmatpush2.xpose.msra.mxu0 0.0
      %1572 = vmatprep.subr.mxu0 0.0
      %1573 = vmatpush2.xpose.msra.mxu0 0.0
      %1574 = vmatprep.subr.mxu0 0.0
      %1575 = vmatpush2.xpose.msra.mxu0 0.0
      %1576 = vmatprep.subr.mxu0 0.0
      %1577 = vmatpush2.xpose.msra.mxu0 0.0
      %1578 = vmatprep.subr.mxu0 0.0
      %1579 = vmatpush2.xpose.msra.mxu0 0.0
      %1580 = vmatprep.subr.mxu0 0.0
      %1581 = vmatpush2.xpose.msra.mxu0 0.0
      %1582 = vmatprep.subr.mxu0 0.0
      %1583 = vmatpush2.xpose.msra.mxu0 0.0
      %1584 = vmatprep.subr.mxu0 0.0
      %1585 = vmatpush2.xpose.msra.mxu0 0.0
      %1586 = vmatprep.subr.mxu0 0.0
      %1587 = vmatpush2.xpose.msra.mxu0 0.0
      %1588 = vmatprep.subr.mxu0 0.0
      %1589 = vmatpush2.xpose.msra.mxu0 0.0
      %1590 = vmatprep.subr.mxu0 0.0
      %1591 = vmatpush2.xpose.msra.mxu0 0.0
      %1592 = vmatprep.subr.mxu0 0.0
      %1593 = vmatpush2.xpose.msra.mxu0 0.0
      %1594 = vmatprep.subr.mxu0 0.0
      %1595 = vmatpush2.xpose.msra.mxu0 0.0
      %1596 = vmatprep.subr.mxu0 0.0
      %1597 = vmatpush2.xpose.msra.mxu0 0.0
      %1598 = vmatprep.subr.mxu0 0.0
      %1599 = vmatpush2.xpose.msra.mxu0 0.0
      %1600 = vmatprep.subr.mxu0 0.0
      %1601 = vmatpush2.xpose.msra.mxu0 0.0
      %1602 = vmatprep.mubr.f32.mxu0 0.0
      %1603 = vmatmul.mubr.f32.gmra.mxu0 %v1532
      %v1604 = vpop.f32.mrf.mxu0
      %v1605 = vadd.f32 0.0, %v1604
      %v1606 = vpop.f32.mrf.mxu0
      %1607 = vdwg.mxu0
      %v1608 = vmul.f32 %v1605, 0.35355338
      %v1609 = vsel %vm861, %v1608, -inf
      %1610 = vmax.xlane.f32.xlu0 %v1609
      %v1611 = vpop.xlane.xlu0 %1610
      %v1612 = vsub.f32 %v1608, %v1611
      %v1613 = vmul.f32 %v1612, 1.442695
      %v1614 = vpow.pop %v1613
      %v1615 = vsel %vm861, %v1614, 0.0
      %1616 = vadd.xlane.f32.xlu0 %v1615
      %v1617 = vpop.xlane.xlu0 %1616
      %1618 = vrot.lane.b32.xlu0 %v772, 72
      %v1619 = vpop.permute.xlu0 %1618
      %1620 = vrot.lane.b32.xlu0 %v777, 72
      %v1621 = vpop.permute.xlu0 %1620
      %v1624 = vsel %vm876, %v1614, 0
      %v1626 = vsel %vm880, %v1621, 0
      %1628 = vmatprep.subr.mxu0 0.0
      %1629 = vmatpush1.msra.mxu0 0.0
      %1630 = vmatprep.subr.mxu0 0.0
      %1631 = vmatpush1.msra.mxu0 0.0
      %1632 = vmatprep.subr.mxu0 0.0
      %1633 = vmatpush1.msra.mxu0 0.0
      %1634 = vmatprep.subr.mxu0 0.0
      %1635 = vmatpush1.msra.mxu0 0.0
      %1636 = vmatprep.subr.mxu0 0.0
      %1637 = vmatpush1.msra.mxu0 0.0
      %1638 = vmatprep.subr.mxu0 0.0
      %1639 = vmatpush1.msra.mxu0 0.0
      %1640 = vmatprep.subr.mxu0 0.0
      %1641 = vmatpush1.msra.mxu0 0.0
      %1642 = vmatprep.subr.mxu0 0.0
      %1643 = vmatpush1.msra.mxu0 0.0
      %1644 = vmatprep.subr.mxu0 0.0
      %1645 = vmatpush1.msra.mxu0 0.0
      %1646 = vmatprep.subr.mxu0 0.0
      %1647 = vmatpush1.msra.mxu0 0.0
      %1648 = vmatprep.subr.mxu0 0.0
      %1649 = vmatpush1.msra.mxu0 0.0
      %1650 = vmatprep.subr.mxu0 0.0
      %1651 = vmatpush1.msra.mxu0 0.0
      %1652 = vmatprep.subr.mxu0 0.0
      %1653 = vmatpush1.msra.mxu0 0.0
      %1654 = vmatprep.subr.mxu0 0.0
      %1655 = vmatpush1.msra.mxu0 0.0
      %1656 = vmatprep.subr.mxu0 0.0
      %1657 = vmatpush1.msra.mxu0 %v1626
      %1658 = vmatprep.subr.mxu0 0.0
      %1659 = vmatpush1.msra.mxu0 %v1619
      %1660 = vmatprep.subr.mxu0 0.0
      %1661 = vmatpush2.msra.mxu0 0.0
      %1662 = vmatprep.subr.mxu0 0.0
      %1663 = vmatpush2.msra.mxu0 0.0
      %1664 = vmatprep.subr.mxu0 0.0
      %1665 = vmatpush2.msra.mxu0 0.0
      %1666 = vmatprep.subr.mxu0 0.0
      %1667 = vmatpush2.msra.mxu0 0.0
      %1668 = vmatprep.subr.mxu0 0.0
      %1669 = vmatpush2.msra.mxu0 0.0
      %1670 = vmatprep.subr.mxu0 0.0
      %1671 = vmatpush2.msra.mxu0 0.0
      %1672 = vmatprep.subr.mxu0 0.0
      %1673 = vmatpush2.msra.mxu0 0.0
      %1674 = vmatprep.subr.mxu0 0.0
      %1675 = vmatpush2.msra.mxu0 0.0
      %1676 = vmatprep.subr.mxu0 0.0
      %1677 = vmatpush2.msra.mxu0 0.0
      %1678 = vmatprep.subr.mxu0 0.0
      %1679 = vmatpush2.msra.mxu0 0.0
      %1680 = vmatprep.subr.mxu0 0.0
      %1681 = vmatpush2.msra.mxu0 0.0
      %1682 = vmatprep.subr.mxu0 0.0
      %1683 = vmatpush2.msra.mxu0 0.0
      %1684 = vmatprep.subr.mxu0 0.0
      %1685 = vmatpush2.msra.mxu0 0.0
      %1686 = vmatprep.subr.mxu0 0.0
      %1687 = vmatpush2.msra.mxu0 0.0
      %1688 = vmatprep.subr.mxu0 0.0
      %1689 = vmatpush2.msra.mxu0 0.0
      %1690 = vmatprep.subr.mxu0 0.0
      %1691 = vmatpush2.msra.mxu0 0.0
      %1692 = vmatprep.mubr.f32.mxu0 0.0
      %1693 = vmatmul.mubr.f32.gmra.mxu0 %v1624
      %v1694 = vpop.f32.mrf.mxu0
      %v1695 = vadd.f32 0.0, %v1694
      %v1696 = vpop.f32.mrf.mxu0
      %1697 = vdwg.mxu0
      %v1698 = vrcp.pop %v1617
      %v1699 = vmul.f32 %v1695, %v1698
      %v1700 = vld [vmem:[%s6 + $0x18] sm:$0xff]
      %v1702 = vsel %vm780, %v1699, 0
      %1704 = vmatprep.subr.mxu0 0.0
      %1705 = vmatpush1.msra.mxu0 0.0
      %1706 = vmatprep.subr.mxu0 0.0
      %1707 = vmatpush1.msra.mxu0 0.0
      %1708 = vmatprep.subr.mxu0 0.0
      %1709 = vmatpush1.msra.mxu0 0.0
      %1710 = vmatprep.subr.mxu0 0.0
      %1711 = vmatpush1.msra.mxu0 0.0
      %1712 = vmatprep.subr.mxu0 0.0
      %1713 = vmatpush1.msra.mxu0 0.0
      %1714 = vmatprep.subr.mxu0 0.0
      %1715 = vmatpush1.msra.mxu0 0.0
      %1716 = vmatprep.subr.mxu0 0.0
      %1717 = vmatpush1.msra.mxu0 0.0
      %1718 = vmatprep.subr.mxu0 0.0
      %1719 = vmatpush1.msra.mxu0 0.0
      %1720 = vmatprep.subr.mxu0 0.0
      %1721 = vmatpush1.msra.mxu0 0.0
      %1722 = vmatprep.subr.mxu0 0.0
      %1723 = vmatpush1.msra.mxu0 0.0
      %1724 = vmatprep.subr.mxu0 0.0
      %1725 = vmatpush1.msra.mxu0 0.0
      %1726 = vmatprep.subr.mxu0 0.0
      %1727 = vmatpush1.msra.mxu0 0.0
      %1728 = vmatprep.subr.mxu0 0.0
      %1729 = vmatpush1.msra.mxu0 0.0
      %1730 = vmatprep.subr.mxu0 0.0
      %1731 = vmatpush1.msra.mxu0 0.0
      %1732 = vmatprep.subr.mxu0 0.0
      %1733 = vmatpush1.msra.mxu0 0.0
      %1734 = vmatprep.subr.mxu0 0.0
      %1735 = vmatpush1.msra.mxu0 %v1700
      %1736 = vmatprep.subr.mxu0 0.0
      %1737 = vmatpush2.msra.mxu0 0.0
      %1738 = vmatprep.subr.mxu0 0.0
      %1739 = vmatpush2.msra.mxu0 0.0
      %1740 = vmatprep.subr.mxu0 0.0
      %1741 = vmatpush2.msra.mxu0 0.0
      %1742 = vmatprep.subr.mxu0 0.0
      %1743 = vmatpush2.msra.mxu0 0.0
      %1744 = vmatprep.subr.mxu0 0.0
      %1745 = vmatpush2.msra.mxu0 0.0
      %1746 = vmatprep.subr.mxu0 0.0
      %1747 = vmatpush2.msra.mxu0 0.0
      %1748 = vmatprep.subr.mxu0 0.0
      %1749 = vmatpush2.msra.mxu0 0.0
      %1750 = vmatprep.subr.mxu0 0.0
      %1751 = vmatpush2.msra.mxu0 0.0
      %1752 = vmatprep.subr.mxu0 0.0
      %1753 = vmatpush2.msra.mxu0 0.0
      %1754 = vmatprep.subr.mxu0 0.0
      %1755 = vmatpush2.msra.mxu0 0.0
      %1756 = vmatprep.subr.mxu0 0.0
      %1757 = vmatpush2.msra.mxu0 0.0
      %1758 = vmatprep.subr.mxu0 0.0
      %1759 = vmatpush2.msra.mxu0 0.0
      %1760 = vmatprep.subr.mxu0 0.0
      %1761 = vmatpush2.msra.mxu0 0.0
      %1762 = vmatprep.subr.mxu0 0.0
      %1763 = vmatpush2.msra.mxu0 0.0
      %1764 = vmatprep.subr.mxu0 0.0
      %1765 = vmatpush2.msra.mxu0 0.0
      %1766 = vmatprep.subr.mxu0 0.0
      %1767 = vmatpush2.msra.mxu0 0.0
      %1768 = vmatprep.mubr.f32.mxu0 0.0
      %1769 = vmatmul.mubr.f32.gmra.mxu0 %v1702
      %v1770 = vpop.f32.mrf.mxu0
      %v1771 = vadd.f32 0.0, %v1770
      %v1772 = vpop.f32.mrf.mxu0
      %1773 = vdwg.mxu0
      %v1774 = vadd.f32 %v1525, %v1771
      %v1775 = vld [vmem:[%s7] sm:$0x1]
      %v1776 = vadd.f32 %v1774, %v1775
      %v1777 = vadd.f32 %v1776, %v610
      %vm1778 = vcmask 253952
      %v1779 = vsel %vm1778, %v1777, 0.0
      %1780 = vadd.xlane.f32.xlu0 %v1779
      %v1781 = vpop.xlane.xlu0 %1780
      %v1782 = vrcp.pop 32.0
      %v1783 = vmul.f32 %v1781, %v1782
      %v1784 = vsub.f32 %v1777, %v1783
      %v1785 = vmul.f32 %v1784, %v1784
      %v1786 = vsel %vm1778, %v1785, 0.0
      %1787 = vadd.xlane.f32.xlu0 %v1786
      %v1788 = vpop.xlane.xlu0 %1787
      %v1789 = vmul.f32 %v1788, %v1782
      %v1790 = vadd.f32 %v1789, 1e-05
      %v1791 = vrsqrt.pop %v1790
      %v1792 = vmul.f32 %v1784, %v1791
      %v1793 = vld [vmem:[%s8] sm:$0x1]
      %v1794 = vmul.f32 %v1792, %v1793
      %v1795 = vld [vmem:[%s9] sm:$0x1]
      %v1796 = vadd.f32 %v1794, %v1795
      %v1797 = vld [vmem:[%s10] sm:$0xff]
      %v1798 = vld [vmem:[%s10 + $0x8] sm:$0xff]
      %v1799 = vld [vmem:[%s10 + $0x10] sm:$0xff]
      %v1800 = vld [vmem:[%s10 + $0x18] sm:$0xff]
      %v1801 = vld [vmem:[%s11] sm:$0x1]
      %v1803 = vsel %vm598, %v1796, 0
      %1805 = vmatprep.subr.mxu0 0.0
      %1806 = vmatpush1.msra.mxu0 0.0
      %1807 = vmatprep.subr.mxu0 0.0
      %1808 = vmatpush1.msra.mxu0 0.0
      %1809 = vmatprep.subr.mxu0 0.0
      %1810 = vmatpush1.msra.mxu0 0.0
      %1811 = vmatprep.subr.mxu0 0.0
      %1812 = vmatpush1.msra.mxu0 0.0
      %1813 = vmatprep.subr.mxu0 0.0
      %1814 = vmatpush1.msra.mxu0 0.0
      %1815 = vmatprep.subr.mxu0 0.0
      %1816 = vmatpush1.msra.mxu0 0.0
      %1817 = vmatprep.subr.mxu0 0.0
      %1818 = vmatpush1.msra.mxu0 0.0
      %1819 = vmatprep.subr.mxu0 0.0
      %1820 = vmatpush1.msra.mxu0 0.0
      %1821 = vmatprep.subr.mxu0 0.0
      %1822 = vmatpush1.msra.mxu0 0.0
      %1823 = vmatprep.subr.mxu0 0.0
      %1824 = vmatpush1.msra.mxu0 0.0
      %1825 = vmatprep.subr.mxu0 0.0
      %1826 = vmatpush1.msra.mxu0 0.0
      %1827 = vmatprep.subr.mxu0 0.0
      %1828 = vmatpush1.msra.mxu0 0.0
      %1829 = vmatprep.subr.mxu0 0.0
      %1830 = vmatpush1.msra.mxu0 %v1800
      %1831 = vmatprep.subr.mxu0 0.0
      %1832 = vmatpush1.msra.mxu0 %v1799
      %1833 = vmatprep.subr.mxu0 0.0
      %1834 = vmatpush1.msra.mxu0 %v1798
      %1835 = vmatprep.subr.mxu0 0.0
      %1836 = vmatpush1.msra.mxu0 %v1797
      %1837 = vmatprep.subr.mxu0 0.0
      %1838 = vmatpush2.msra.mxu0 0.0
      %1839 = vmatprep.subr.mxu0 0.0
      %1840 = vmatpush2.msra.mxu0 0.0
      %1841 = vmatprep.subr.mxu0 0.0
      %1842 = vmatpush2.msra.mxu0 0.0
      %1843 = vmatprep.subr.mxu0 0.0
      %1844 = vmatpush2.msra.mxu0 0.0
      %1845 = vmatprep.subr.mxu0 0.0
      %1846 = vmatpush2.msra.mxu0 0.0
      %1847 = vmatprep.subr.mxu0 0.0
      %1848 = vmatpush2.msra.mxu0 0.0
      %1849 = vmatprep.subr.mxu0 0.0
      %1850 = vmatpush2.msra.mxu0 0.0
      %1851 = vmatprep.subr.mxu0 0.0
      %1852 = vmatpush2.msra.mxu0 0.0
      %1853 = vmatprep.subr.mxu0 0.0
      %1854 = vmatpush2.msra.mxu0 0.0
      %1855 = vmatprep.subr.mxu0 0.0
      %1856 = vmatpush2.msra.mxu0 0.0
      %1857 = vmatprep.subr.mxu0 0.0
      %1858 = vmatpush2.msra.mxu0 0.0
      %1859 = vmatprep.subr.mxu0 0.0
      %1860 = vmatpush2.msra.mxu0 0.0
      %1861 = vmatprep.subr.mxu0 0.0
      %1862 = vmatpush2.msra.mxu0 0.0
      %1863 = vmatprep.subr.mxu0 0.0
      %1864 = vmatpush2.msra.mxu0 0.0
      %1865 = vmatprep.subr.mxu0 0.0
      %1866 = vmatpush2.msra.mxu0 0.0
      %1867 = vmatprep.subr.mxu0 0.0
      %1868 = vmatpush2.msra.mxu0 0.0
      %1869 = vmatprep.mubr.f32.mxu0 0.0
      %1870 = vmatmul.mubr.f32.gmra.mxu0 %v1803
      %v1871 = vpop.f32.mrf.mxu0
      %v1872 = vadd.f32 %v1801, %v1871
      %v1873 = vpop.f32.mrf.mxu0
      %1874 = vdwg.mxu0
      %v1875 = vmul.f32 %v1872, %v1872
      %v1876 = vmul.f32 %v1872, %v1875
      %v1877 = vmul.f32 %v1876, 0.044715
      %v1878 = vadd.f32 %v1872, %v1877
      %v1879 = vmul.f32 %v1878, 0.7978846
      %v1880 = vtanh.pop %v1879
      %v1881 = vadd.f32 %v1880, 1.0
      %v1882 = vmul.f32 %v1881, 0.5
      %v1883 = vmul.f32 %v1872, %v1882
      %1885 = vrot.lane.b32.xlu0 %v1883, 64
      %v1886 = vpop.permute.xlu0 %1885
      %v1888 = vmul.f32 %v1872, %v1886
      %v1889 = vld [vmem:[%s12] sm:$0xff]
      %v1890 = vld [vmem:[%s12 + $0x8] sm:$0xff]
      %v1891 = vld [vmem:[%s12 + $0x10] sm:$0xff]
      %v1892 = vld [vmem:[%s12 + $0x18] sm:$0xff]
      %v1893 = vld [vmem:[%s12 + $0x20] sm:$0xff]
      %v1894 = vld [vmem:[%s12 + $0x28] sm:$0xff]
      %v1895 = vld [vmem:[%s12 + $0x30] sm:$0xff]
      %v1896 = vld [vmem:[%s12 + $0x38] sm:$0xff]
      %v1897 = vld [vmem:[%s13] sm:$0x1]
      %vm1898 = vcmask 523264
      %v1900 = vsel %vm1898, %v1888, 0
      %1902 = vmatprep.subr.mxu0 0.0
      %1903 = vmatpush1.msra.mxu0 0.0
      %1904 = vmatprep.subr.mxu0 0.0
      %1905 = vmatpush1.msra.mxu0 0.0
      %1906 = vmatprep.subr.mxu0 0.0
      %1907 = vmatpush1.msra.mxu0 0.0
      %1908 = vmatprep.subr.mxu0 0.0
      %1909 = vmatpush1.msra.mxu0 0.0
      %1910 = vmatprep.subr.mxu0 0.0
      %1911 = vmatpush1.msra.mxu0 0.0
      %1912 = vmatprep.subr.mxu0 0.0
      %1913 = vmatpush1.msra.mxu0 0.0
      %1914 = vmatprep.subr.mxu0 0.0
      %1915 = vmatpush1.msra.mxu0 0.0
      %1916 = vmatprep.subr.mxu0 0.0
      %1917 = vmatpush1.msra.mxu0 0.0
      %1918 = vmatprep.subr.mxu0 0.0
      %1919 = vmatpush1.msra.mxu0 %v1896
      %1920 = vmatprep.subr.mxu0 0.0
      %1921 = vmatpush1.msra.mxu0 %v1895
      %1922 = vmatprep.subr.mxu0 0.0
      %1923 = vmatpush1.msra.mxu0 %v1894
      %1924 = vmatprep.subr.mxu0 0.0
      %1925 = vmatpush1.msra.mxu0 %v1893
      %1926 = vmatprep.subr.mxu0 0.0
      %1927 = vmatpush1.msra.mxu0 %v1892
      %1928 = vmatprep.subr.mxu0 0.0
      %1929 = vmatpush1.msra.mxu0 %v1891
      %1930 = vmatprep.subr.mxu0 0.0
      %1931 = vmatpush1.msra.mxu0 %v1890
      %1932 = vmatprep.subr.mxu0 0.0
      %1933 = vmatpush1.msra.mxu0 %v1889
      %1934 = vmatprep.subr.mxu0 0.0
      %1935 = vmatpush2.msra.mxu0 0.0
      %1936 = vmatprep.subr.mxu0 0.0
      %1937 = vmatpush2.msra.mxu0 0.0
      %1938 = vmatprep.subr.mxu0 0.0
      %1939 = vmatpush2.msra.mxu0 0.0
      %1940 = vmatprep.subr.mxu0 0.0
      %1941 = vmatpush2.msra.mxu0 0.0
      %1942 = vmatprep.subr.mxu0 0.0
      %1943 = vmatpush2.msra.mxu0 0.0
      %1944 = vmatprep.subr.mxu0 0.0
      %1945 = vmatpush2.msra.mxu0 0.0
      %1946 = vmatprep.subr.mxu0 0.0
      %1947 = vmatpush2.msra.mxu0 0.0
      %1948 = vmatprep.subr.mxu0 0.0
      %1949 = vmatpush2.msra.mxu0 0.0
      %1950 = vmatprep.subr.mxu0 0.0
      %1951 = vmatpush2.msra.mxu0 0.0
      %1952 = vmatprep.subr.mxu0 0.0
      %1953 = vmatpush2.msra.mxu0 0.0
      %1954 = vmatprep.subr.mxu0 0.0
      %1955 = vmatpush2.msra.mxu0 0.0
      %1956 = vmatprep.subr.mxu0 0.0
      %1957 = vmatpush2.msra.mxu0 0.0
      %1958 = vmatprep.subr.mxu0 0.0
      %1959 = vmatpush2.msra.mxu0 0.0
      %1960 = vmatprep.subr.mxu0 0.0
      %1961 = vmatpush2.msra.mxu0 0.0
      %1962 = vmatprep.subr.mxu0 0.0
      %1963 = vmatpush2.msra.mxu0 0.0
      %1964 = vmatprep.subr.mxu0 0.0
      %1965 = vmatpush2.msra.mxu0 0.0
      %1966 = vmatprep.mubr.f32.mxu0 0.0
      %1967 = vmatmul.mubr.f32.gmra.mxu0 %v1900
      %v1968 = vpop.f32.mrf.mxu0
      %v1969 = vadd.f32 %v1897, %v1968
      %v1970 = vpop.f32.mrf.mxu0
      %1971 = vdwg.mxu0
      %v1972 = vadd.f32 %v1777, %v1969
      %v1973 = vsel %vm1778, %v1972, 0.0
      %1974 = vadd.xlane.f32.xlu0 %v1973
      %v1975 = vpop.xlane.xlu0 %1974
      %v1976 = vmul.f32 %v1975, %v1782
      %v1977 = vsub.f32 %v1972, %v1976
      %v1978 = vmul.f32 %v1977, %v1977
      %v1979 = vsel %vm1778, %v1978, 0.0
      %1980 = vadd.xlane.f32.xlu0 %v1979
      %v1981 = vpop.xlane.xlu0 %1980
      %v1982 = vmul.f32 %v1981, %v1782
      %v1983 = vadd.f32 %v1982, 1e-05
      %v1984 = vrsqrt.pop %v1983
      %v1985 = vmul.f32 %v1977, %v1984
      %v1986 = vld [vmem:[%s14] sm:$0x1]
      %v1987 = vmul.f32 %v1985, %v1986
      %v1988 = vld [vmem:[%s15] sm:$0x1]
      %v1989 = vadd.f32 %v1987, %v1988
      %v1990 = vld [vmem:[%s16] sm:$0xff]
      %v1991 = vld [vmem:[%s16 + $0x8] sm:$0xff]
      %v1992 = vld [vmem:[%s16 + $0x10] sm:$0xff]
      %v1993 = vld [vmem:[%s16 + $0x18] sm:$0xff]
      %v1994 = vld [vmem:[#allocation2] sm:$0x1]
      %v1996 = vsel %vm598, %v1989, 0
      %1998 = vmatprep.subr.mxu0 0.0
      %1999 = vmatpush1.msra.mxu0 0.0
      %2000 = vmatprep.subr.mxu0 0.0
      %2001 = vmatpush1.msra.mxu0 0.0
      %2002 = vmatprep.subr.mxu0 0.0
      %2003 = vmatpush1.msra.mxu0 0.0
      %2004 = vmatprep.subr.mxu0 0.0
      %2005 = vmatpush1.msra.mxu0 0.0
      %2006 = vmatprep.subr.mxu0 0.0
      %2007 = vmatpush1.msra.mxu0 0.0
      %2008 = vmatprep.subr.mxu0 0.0
      %2009 = vmatpush1.msra.mxu0 0.0
      %2010 = vmatprep.subr.mxu0 0.0
      %2011 = vmatpush1.msra.mxu0 0.0
      %2012 = vmatprep.subr.mxu0 0.0
      %2013 = vmatpush1.msra.mxu0 0.0
      %2014 = vmatprep.subr.mxu0 0.0
      %2015 = vmatpush1.msra.mxu0 0.0
      %2016 = vmatprep.subr.mxu0 0.0
      %2017 = vmatpush1.msra.mxu0 0.0
      %2018 = vmatprep.subr.mxu0 0.0
      %2019 = vmatpush1.msra.mxu0 0.0
      %2020 = vmatprep.subr.mxu0 0.0
      %2021 = vmatpush1.msra.mxu0 0.0
      %2022 = vmatprep.subr.mxu0 0.0
      %2023 = vmatpush1.msra.mxu0 %v1993
      %2024 = vmatprep.subr.mxu0 0.0
      %2025 = vmatpush1.msra.mxu0 %v1992
      %2026 = vmatprep.subr.mxu0 0.0
      %2027 = vmatpush1.msra.mxu0 %v1991
      %2028 = vmatprep.subr.mxu0 0.0
      %2029 = vmatpush1.msra.mxu0 %v1990
      %2030 = vmatprep.subr.mxu0 0.0
      %2031 = vmatpush2.msra.mxu0 0.0
      %2032 = vmatprep.subr.mxu0 0.0
      %2033 = vmatpush2.msra.mxu0 0.0
      %2034 = vmatprep.subr.mxu0 0.0
      %2035 = vmatpush2.msra.mxu0 0.0
      %2036 = vmatprep.subr.mxu0 0.0
      %2037 = vmatpush2.msra.mxu0 0.0
      %2038 = vmatprep.subr.mxu0 0.0
      %2039 = vmatpush2.msra.mxu0 0.0
      %2040 = vmatprep.subr.mxu0 0.0
      %2041 = vmatpush2.msra.mxu0 0.0
      %2042 = vmatprep.subr.mxu0 0.0
      %2043 = vmatpush2.msra.mxu0 0.0
      %2044 = vmatprep.subr.mxu0 0.0
      %2045 = vmatpush2.msra.mxu0 0.0
      %2046 = vmatprep.subr.mxu0 0.0
      %2047 = vmatpush2.msra.mxu0 0.0
      %2048 = vmatprep.subr.mxu0 0.0
      %2049 = vmatpush2.msra.mxu0 0.0
      %2050 = vmatprep.subr.mxu0 0.0
      %2051 = vmatpush2.msra.mxu0 0.0
      %2052 = vmatprep.subr.mxu0 0.0
      %2053 = vmatpush2.msra.mxu0 0.0
      %2054 = vmatprep.subr.mxu0 0.0
      %2055 = vmatpush2.msra.mxu0 0.0
      %2056 = vmatprep.subr.mxu0 0.0
      %2057 = vmatpush2.msra.mxu0 0.0
      %2058 = vmatprep.subr.mxu0 0.0
      %2059 = vmatpush2.msra.mxu0 0.0
      %2060 = vmatprep.subr.mxu0 0.0
      %2061 = vmatpush2.msra.mxu0 0.0
      %2062 = vmatprep.mubr.f32.mxu0 0.0
      %2063 = vmatmul.mubr.f32.gmra.mxu0 %v1996
      %v2064 = vpop.f32.mrf.mxu0
      %v2065 = vadd.f32 %v1994, %v2064
      %v2066 = vpop.f32.mrf.mxu0
      %2067 = vdwg.mxu0
      %vm2068 = vcmask 0
      %2069 = vst.msk [vmem:[%s593] sm:$0x1] %vm2068, %v2065
      %p2070 = scmp.lt.s32.totalorder %s31, 1
      %s2071 = scalar_select %p2070, %s31, 1
      %s2072 = scalar_lea.vmem %s18, %s2071
      // Predicated region
      $region93: #{cross_jamba_both_forward.5} parent=91 // pred_check
        %p2073 = pneg %p437
      $region94: #{cross_jamba_both_forward.5} parent=91 // pred_check_branch
        %2075 = sbr.rel (%p2073) target = $region96
      $region95: #{cross_jamba_both_forward.5} parent=91 // pred_region
        _
      $region96: #{cross_jamba_both_forward.5} parent=91 // pred_fallthru
        _
    $region92: #{cross_jamba_both_forward.5} parent=5 // pred_fallthru
      _
    %p2076 = scmp.le.s32.totalorder 2, %s26
    // Predicated region
    $region97: #{cross_jamba_both_forward.5} parent=5 // pred_check
      %p2077 = pneg %p2076
    $region98: #{cross_jamba_both_forward.5} parent=5 // pred_check_branch
      %2079 = sbr.rel (%p2077) target = $region100
    $region99: #{cross_jamba_both_forward.5} parent=5 // pred_region
      %s2080 = ssub.s32 %s26, 2
      // Predicated region
      $region101: #{cross_jamba_both_forward.5} parent=99 // pred_check
        %p2081 = pneg %p443
      $region102: #{cross_jamba_both_forward.5} parent=99 // pred_check_branch
        %2083 = sbr.rel (%p2081) target = $region104
      $region103: #{cross_jamba_both_forward.5} parent=99 // pred_region
        %p2084 = scmp.lt.s32.totalorder %s32, 1
        %s2085 = scalar_select %p2084, %s32, 1
        %s2086 = scalar_lea.vmem %s18, %s2085
      $region104: #{cross_jamba_both_forward.5} parent=99 // pred_fallthru
        _
    $region100: #{cross_jamba_both_forward.5} parent=5 // pred_fallthru
      _
  $region6: #{cross_jamba_both_forward.5} parent=0 // loop_footer
    %s30 = sadd.s32 1, %s26
  $region7: #{cross_jamba_both_forward.5} parent=0 // loop_footer_branch
    %25 = sbr.rel target = $region3
  $region8: #{cross_jamba_both_forward.5} parent=0 // loop_exit
    _

</llo_original>
